<compile_context>
chip_gen: v7x
topology: tpu7x:2x2x1
jax: 0.10.0
libtpu: 0.0.40
codegen_flags: <defaults>
</compile_context>

<pallas_src>
import functools

import jax
import jax.numpy as jnp
import numpy as np
from jax.experimental import pallas as pl
from jax.experimental.pallas import tpu as pltpu

EPS = 1e-5


def _round_up(x, m):
    return (x + m - 1) // m * m


# ---------------------------------------------------------------------------
# Fused Pallas kernel
# ---------------------------------------------------------------------------

def _conv_block(x, w_ref, s_ref):
    """Two-stage banded implicit GEMM: sum_di S_di @ (X @ Wband_di)."""
    taps = s_ref.shape[0]
    l_out = w_ref.shape[1] // taps
    acc = None
    for di in range(taps):
        t = jnp.dot(x, w_ref[:, di * l_out:(di + 1) * l_out],
                    preferred_element_type=jnp.float32)          # [M_in, L_out]
        part = jnp.dot(s_ref[di], t,
                       preferred_element_type=jnp.float32)       # [M_out, L_out]
        acc = part if acc is None else acc + part
    return acc


def _bn_relu(acc, g_ref, bcast_ref, gamma_ref, beta_ref, count):
    """Train-mode BatchNorm (single-pass sum/sumsq) + ReLU, fused epilogue.

    g_ref   : [L_out, Cpad]  0/1 matrix folding (col, chan) lanes -> channel.
    bcast_ref: [Cpad, L_out] 0/1 matrix broadcasting channel -> (col, chan).
    """
    inv = 1.0 / count
    s_lane = jnp.sum(acc, axis=0, keepdims=True)                 # [1, L_out]
    q_lane = jnp.sum(acc * acc, axis=0, keepdims=True)           # [1, L_out]
    s_c = jnp.dot(s_lane, g_ref[...], preferred_element_type=jnp.float32)
    q_c = jnp.dot(q_lane, g_ref[...], preferred_element_type=jnp.float32)
    mean = s_c * inv
    var = jnp.maximum(q_c * inv - mean * mean, 0.0)
    scale_c = gamma_ref[...] * jax.lax.rsqrt(var + EPS)
    shift_c = beta_ref[...] - mean * scale_c
    scale_l = jnp.dot(scale_c, bcast_ref[...], preferred_element_type=jnp.float32)
    shift_l = jnp.dot(shift_c, bcast_ref[...], preferred_element_type=jnp.float32)
    return jnp.maximum(acc * scale_l + shift_l, 0.0)


def encoder_kernel(x0_ref,
                   w1_ref, s1_ref, g1_ref, bc1_ref, ga1_ref, be1_ref,
                   w2_ref, s2_ref, g2_ref, bc2_ref, ga2_ref, be2_ref,
                   w3_ref, s3_ref, g3_ref, bc3_ref, ga3_ref, be3_ref,
                   w4_ref, s4_ref, g4_ref, bc4_ref, ga4_ref, be4_ref,
                   wfc_ref, sfc_ref, bfc_ref,
                   o_ref, *, counts, z_dim):
    layers = ((w1_ref, s1_ref, g1_ref, bc1_ref, ga1_ref, be1_ref),
              (w2_ref, s2_ref, g2_ref, bc2_ref, ga2_ref, be2_ref),
              (w3_ref, s3_ref, g3_ref, bc3_ref, ga3_ref, be3_ref),
              (w4_ref, s4_ref, g4_ref, bc4_ref, ga4_ref, be4_ref))

    x = x0_ref[...]                                              # bf16 [N*H, W*3]
    for (w_ref, s_ref, g_ref, bc_ref, ga_ref, be_ref), count in zip(layers, counts):
        acc = _conv_block(x, w_ref, s_ref)                       # f32 conv output
        x = _bn_relu(acc, g_ref, bc_ref, ga_ref, be_ref, count).astype(jnp.bfloat16)

    # FC heads: same two-stage structure, 4 taps = the 4 feature-map rows.
    z = _conv_block(x, wfc_ref, sfc_ref) + bfc_ref[...]          # [N, Zp] f32
    col = jax.lax.broadcasted_iota(jnp.int32, z.shape, 1)
    o_ref[...] = jnp.where(col >= z_dim, jax.nn.softplus(z) + 1e-6, z)


# ---------------------------------------------------------------------------
# Pallas wrapper
# ---------------------------------------------------------------------------

def _make_index_map(ndim):
    def idx(i):
        return (0,) * ndim
    return idx


def _full_spec(arr):
    return pl.BlockSpec(arr.shape, _make_index_map(arr.ndim))


@functools.partial(jax.jit, static_argnames=("z_dim",))
def encoder_forward(prep, x_nchw, *, z_dim):
    n, cin, h, w = x_nchw.shape
    # Only per-call XLA glue: NCHW -> (rows=(n,h), lanes=(w,c)) bf16.
    x0 = jnp.transpose(x_nchw, (0, 2, 3, 1)).reshape(n * h, w * cin).astype(jnp.bfloat16)

    args = [x0]
    for l in range(1, 5):
        args += [prep[f"w{l}"], prep[f"s{l}"], prep[f"g{l}"], prep[f"bcast{l}"],
                 prep[f"gamma{l}"], prep[f"beta{l}"]]
    args += [prep["wfc"], prep["sfc"], prep["bfc"]]

    counts = tuple(n * (h // (2 ** (l + 1))) * (w // (2 ** (l + 1))) for l in range(4))
    zp = prep["bfc"].shape[1]
    kern = functools.partial(encoder_kernel, counts=counts, z_dim=z_dim)

    out = pl.pallas_call(
        kern,
        out_shape=jax.ShapeDtypeStruct((n, zp), jnp.float32),
        grid=(1,),
        in_specs=[_full_spec(a) for a in args],
        out_specs=pl.BlockSpec((n, zp), lambda i: (0, 0)),
        compiler_params=pltpu.CompilerParams(
            dimension_semantics=("arbitrary",),
            vmem_limit_bytes=32 * 1024 * 1024),
    )(*args)
    return out[:, :z_dim], out[:, z_dim:2 * z_dim]


# ---------------------------------------------------------------------------
# One-time parameter re-layout (host side, numpy)
# ---------------------------------------------------------------------------

def prepare_params(params, z_dim, ef_dim, batch, height, width):
    """Build banded conv weights, row-selection matrices, BN fold/broadcast
    matrices and FC slabs for the fused kernel."""
    prep = {}
    cins = [3, ef_dim, ef_dim * 2, ef_dim * 4]
    couts = [ef_dim, ef_dim * 2, ef_dim * 4, ef_dim * 8]
    h_in, w_in = height, width

    for l in range(4):
        cin, cout = cins[l], couts[l]
        h_out, w_out = h_in // 2, w_in // 2
        l_in, l_out = w_in * cin, w_out * cout
        cstat = _round_up(cout, 128)

        # Banded weight: folds kernel-width, stride-2 and W zero-padding.
        # Conv bias is intentionally dropped: train-mode BN cancels it exactly.
        wt = np.asarray(params[f"conv{l + 1}_w"], np.float32)    # [cout, cin, 5, 5]
        whcat = np.zeros((l_in, 5 * l_out), np.float32)
        for di in range(5):
            for ow in range(w_out):
                base = di * l_out + ow * cout
                for dj in range(5):
                    iw = 2 * ow + dj - 2
                    if 0 <= iw < w_in:
                        whcat[iw * cin:(iw + 1) * cin, base:base + cout] = wt[:, :, di, dj].T
        prep[f"w{l + 1}"] = jnp.asarray(whcat, jnp.bfloat16)

        # Row-selection matrices (stride-2 row taps + H zero-padding).
        m_in, m_out = batch * h_in, batch * h_out
        s = np.zeros((5, m_out, m_in), np.float32)
        for di in range(5):
            for b in range(batch):
                for oh in range(h_out):
                    ih = 2 * oh + di - 2
                    if 0 <= ih < h_in:
                        s[di, b * h_out + oh, b * h_in + ih] = 1.0
        prep[f"s{l + 1}"] = jnp.asarray(s)

        # BN lane<->channel fold / broadcast matrices.
        g = np.zeros((l_out, cstat), np.float32)
        for ow in range(w_out):
            g[ow * cout:(ow + 1) * cout, :cout] = np.eye(cout, dtype=np.float32)
        prep[f"g{l + 1}"] = jnp.asarray(g)
        prep[f"bcast{l + 1}"] = jnp.asarray(np.ascontiguousarray(g.T))

        gam = np.zeros((1, cstat), np.float32)
        gam[0, :cout] = np.asarray(params[f"bn{l + 1}_g"], np.float32)
        bet = np.zeros((1, cstat), np.float32)
        bet[0, :cout] = np.asarray(params[f"bn{l + 1}_b"], np.float32)
        prep[f"gamma{l + 1}"] = jnp.asarray(gam)
        prep[f"beta{l + 1}"] = jnp.asarray(bet)

        h_in, w_in = h_out, w_out

    # FC heads: fold PyTorch's (c, h, w) flatten order into the weight slabs,
    # concatenate [fc_mean | fc_logvar], pad to 128 output lanes.
    c4, hh, ww = couts[3], h_in, w_in
    zp = _round_up(2 * z_dim, 128)
    wm = np.asarray(params["fc_mean_w"], np.float32).reshape(z_dim, c4, hh, ww)
    wl = np.asarray(params["fc_logvar_w"], np.float32).reshape(z_dim, c4, hh, ww)
    wfc = np.zeros((ww * c4, hh * zp), np.float32)
    for hpos in range(hh):
        for wpos in range(ww):
            for c in range(c4):
                row = wpos * c4 + c
                wfc[row, hpos * zp: hpos * zp + z_dim] = wm[:, c, hpos, wpos]
                wfc[row, hpos * zp + z_dim: hpos * zp + 2 * z_dim] = wl[:, c, hpos, wpos]
    prep["wfc"] = jnp.asarray(wfc, jnp.bfloat16)

    sfc = np.zeros((hh, batch, batch * hh), np.float32)
    for hpos in range(hh):
        for b in range(batch):
            sfc[hpos, b, b * hh + hpos] = 1.0
    prep["sfc"] = jnp.asarray(sfc)

    bfc = np.zeros((1, zp), np.float32)
    bfc[0, :z_dim] = np.asarray(params["fc_mean_b"], np.float32)
    bfc[0, z_dim:2 * z_dim] = np.asarray(params["fc_logvar_b"], np.float32)
    prep["bfc"] = jnp.asarray(bfc)
    return prep


# ---------------------------------------------------------------------------
# Parameter init (PyTorch layout) + pure-JAX reference (for validation)
# ---------------------------------------------------------------------------

def init_params(key, z_dim, ef_dim):
    ks = jax.random.split(key, 12)

    def conv_w(k, cout, cin):
        return 0.05 * jax.random.normal(k, (cout, cin, 5, 5), jnp.float32)

    def conv_b(k, cout):
        return 0.01 * jax.random.normal(k, (cout,), jnp.float32)

    params = {}
    cins = [3, ef_dim, ef_dim * 2, ef_dim * 4]
    couts = [ef_dim, ef_dim * 2, ef_dim * 4, ef_dim * 8]
    for li in range(4):
        params[f"conv{li + 1}_w"] = conv_w(ks[2 * li], couts[li], cins[li])
        params[f"conv{li + 1}_b"] = conv_b(ks[2 * li + 1], couts[li])
        params[f"bn{li + 1}_g"] = jnp.ones((couts[li],), jnp.float32)
        params[f"bn{li + 1}_b"] = jnp.zeros((couts[li],), jnp.float32)
    feat = ef_dim * 8 * 4 * 4
    params["fc_mean_w"] = 0.02 * jax.random.normal(ks[8], (z_dim, feat), jnp.float32)
    params["fc_mean_b"] = 0.01 * jax.random.normal(ks[9], (z_dim,), jnp.float32)
    params["fc_logvar_w"] = 0.02 * jax.random.normal(ks[10], (z_dim, feat), jnp.float32)
    params["fc_logvar_b"] = 0.01 * jax.random.normal(ks[11], (z_dim,), jnp.float32)
    return params


def encoder_reference(params, x_nchw, eps=EPS):
    x = x_nchw
    for li in range(1, 5):
        w = params[f"conv{li}_w"]
        b = params[f"conv{li}_b"]
        x = jax.lax.conv_general_dilated(
            x, w, window_strides=(2, 2), padding=((2, 2), (2, 2)),
            dimension_numbers=("NCHW", "OIHW", "NCHW"))
        x = x + b.reshape(1, -1, 1, 1)
        mean = jnp.mean(x, axis=(0, 2, 3), keepdims=True)
        var = jnp.mean((x - mean) ** 2, axis=(0, 2, 3), keepdims=True)
        g = params[f"bn{li}_g"].reshape(1, -1, 1, 1)
        be = params[f"bn{li}_b"].reshape(1, -1, 1, 1)
        x = (x - mean) * jax.lax.rsqrt(var + eps) * g + be
        x = jnp.maximum(x, 0.0)
    n = x.shape[0]
    x = x.reshape(n, -1)
    zm = x @ params["fc_mean_w"].T + params["fc_mean_b"]
    zl = jax.nn.softplus(x @ params["fc_logvar_w"].T + params["fc_logvar_b"]) + 1e-6
    return zm, zl


# ---------------------------------------------------------------------------
# Main
# ---------------------------------------------------------------------------

if __name__ == "__main__":
    # Small configuration: ef_dim=8, z_dim=32.  Input is 64x64 so that after
    # four stride-2 convs the spatial size is 4x4 (matches the fc in-dim).
    Z_DIM, EF_DIM = 32, 8
    BATCH, H, W = 2, 64, 64

    key = jax.random.PRNGKey(0)
    pkey, xkey = jax.random.split(key)
    params = init_params(pkey, Z_DIM, EF_DIM)
    prep = prepare_params(params, Z_DIM, EF_DIM, BATCH, H, W)
    x = jax.random.normal(xkey, (BATCH, 3, H, W), jnp.float32)

    z_mean, z_logvar = encoder_forward(prep, x, z_dim=Z_DIM)
    jax.block_until_ready((z_mean, z_logvar))

    ref_mean, ref_logvar = encoder_reference(params, x)
    # bf16 MXU inputs (f32 accumulation / stats) -> slightly looser tolerance.
    np.testing.assert_allclose(np.asarray(z_mean), np.asarray(ref_mean),
                               rtol=2e-2, atol=2e-2)
    np.testing.assert_allclose(np.asarray(z_logvar), np.asarray(ref_logvar),
                               rtol=2e-2, atol=2e-2)

    assert z_mean.shape == (BATCH, Z_DIM) and z_logvar.shape == (BATCH, Z_DIM)
    print("KERNEL_OK")
</pallas_src>

<mosaic_0001>
module attributes {stable_mosaic.version = 11 : i64} {
  func.func @encoder_kernel(%arg0: i32, %arg1: memref<128x192xbf16, #tpu.memory_space<vmem>>, %arg2: memref<192x1280xbf16, #tpu.memory_space<vmem>>, %arg3: memref<5x64x128xf32, #tpu.memory_space<vmem>>, %arg4: memref<256x128xf32, #tpu.memory_space<vmem>>, %arg5: memref<128x256xf32, #tpu.memory_space<vmem>>, %arg6: memref<1x128xf32, #tpu.memory_space<vmem>>, %arg7: memref<1x128xf32, #tpu.memory_space<vmem>>, %arg8: memref<256x1280xbf16, #tpu.memory_space<vmem>>, %arg9: memref<5x32x64xf32, #tpu.memory_space<vmem>>, %arg10: memref<256x128xf32, #tpu.memory_space<vmem>>, %arg11: memref<128x256xf32, #tpu.memory_space<vmem>>, %arg12: memref<1x128xf32, #tpu.memory_space<vmem>>, %arg13: memref<1x128xf32, #tpu.memory_space<vmem>>, %arg14: memref<256x1280xbf16, #tpu.memory_space<vmem>>, %arg15: memref<5x16x32xf32, #tpu.memory_space<vmem>>, %arg16: memref<256x128xf32, #tpu.memory_space<vmem>>, %arg17: memref<128x256xf32, #tpu.memory_space<vmem>>, %arg18: memref<1x128xf32, #tpu.memory_space<vmem>>, %arg19: memref<1x128xf32, #tpu.memory_space<vmem>>, %arg20: memref<256x1280xbf16, #tpu.memory_space<vmem>>, %arg21: memref<5x8x16xf32, #tpu.memory_space<vmem>>, %arg22: memref<256x128xf32, #tpu.memory_space<vmem>>, %arg23: memref<128x256xf32, #tpu.memory_space<vmem>>, %arg24: memref<1x128xf32, #tpu.memory_space<vmem>>, %arg25: memref<1x128xf32, #tpu.memory_space<vmem>>, %arg26: memref<256x512xbf16, #tpu.memory_space<vmem>>, %arg27: memref<4x2x8xf32, #tpu.memory_space<vmem>>, %arg28: memref<1x128xf32, #tpu.memory_space<vmem>>, %arg29: memref<2x128xf32, #tpu.memory_space<vmem>>) attributes {dimension_semantics = [#tpu.dimension_semantics<arbitrary>], iteration_bounds = array<i64: 1>, scalar_prefetch = 0 : i64, scratch_operands = 0 : i64, tpu.core_type = #tpu.core_type<tc>, window_params = [{pipeline_mode = #tpu.pipeline_mode<synchronous>, transform_indices = @transform_0, window_bounds = array<i64: 128, 192>}, {pipeline_mode = #tpu.pipeline_mode<synchronous>, transform_indices = @transform_1, window_bounds = array<i64: 192, 1280>}, {pipeline_mode = #tpu.pipeline_mode<synchronous>, transform_indices = @transform_2, window_bounds = array<i64: 5, 64, 128>}, {pipeline_mode = #tpu.pipeline_mode<synchronous>, transform_indices = @transform_3, window_bounds = array<i64: 256, 128>}, {pipeline_mode = #tpu.pipeline_mode<synchronous>, transform_indices = @transform_4, window_bounds = array<i64: 128, 256>}, {pipeline_mode = #tpu.pipeline_mode<synchronous>, transform_indices = @transform_5, window_bounds = array<i64: 1, 128>}, {pipeline_mode = #tpu.pipeline_mode<synchronous>, transform_indices = @transform_6, window_bounds = array<i64: 1, 128>}, {pipeline_mode = #tpu.pipeline_mode<synchronous>, transform_indices = @transform_7, window_bounds = array<i64: 256, 1280>}, {pipeline_mode = #tpu.pipeline_mode<synchronous>, transform_indices = @transform_8, window_bounds = array<i64: 5, 32, 64>}, {pipeline_mode = #tpu.pipeline_mode<synchronous>, transform_indices = @transform_9, window_bounds = array<i64: 256, 128>}, {pipeline_mode = #tpu.pipeline_mode<synchronous>, transform_indices = @transform_10, window_bounds = array<i64: 128, 256>}, {pipeline_mode = #tpu.pipeline_mode<synchronous>, transform_indices = @transform_11, window_bounds = array<i64: 1, 128>}, {pipeline_mode = #tpu.pipeline_mode<synchronous>, transform_indices = @transform_12, window_bounds = array<i64: 1, 128>}, {pipeline_mode = #tpu.pipeline_mode<synchronous>, transform_indices = @transform_13, window_bounds = array<i64: 256, 1280>}, {pipeline_mode = #tpu.pipeline_mode<synchronous>, transform_indices = @transform_14, window_bounds = array<i64: 5, 16, 32>}, {pipeline_mode = #tpu.pipeline_mode<synchronous>, transform_indices = @transform_15, window_bounds = array<i64: 256, 128>}, {pipeline_mode = #tpu.pipeline_mode<synchronous>, transform_indices = @transform_16, window_bounds = array<i64: 128, 256>}, {pipeline_mode = #tpu.pipeline_mode<synchronous>, transform_indices = @transform_17, window_bounds = array<i64: 1, 128>}, {pipeline_mode = #tpu.pipeline_mode<synchronous>, transform_indices = @transform_18, window_bounds = array<i64: 1, 128>}, {pipeline_mode = #tpu.pipeline_mode<synchronous>, transform_indices = @transform_19, window_bounds = array<i64: 256, 1280>}, {pipeline_mode = #tpu.pipeline_mode<synchronous>, transform_indices = @transform_20, window_bounds = array<i64: 5, 8, 16>}, {pipeline_mode = #tpu.pipeline_mode<synchronous>, transform_indices = @transform_21, window_bounds = array<i64: 256, 128>}, {pipeline_mode = #tpu.pipeline_mode<synchronous>, transform_indices = @transform_22, window_bounds = array<i64: 128, 256>}, {pipeline_mode = #tpu.pipeline_mode<synchronous>, transform_indices = @transform_23, window_bounds = array<i64: 1, 128>}, {pipeline_mode = #tpu.pipeline_mode<synchronous>, transform_indices = @transform_24, window_bounds = array<i64: 1, 128>}, {pipeline_mode = #tpu.pipeline_mode<synchronous>, transform_indices = @transform_25, window_bounds = array<i64: 256, 512>}, {pipeline_mode = #tpu.pipeline_mode<synchronous>, transform_indices = @transform_26, window_bounds = array<i64: 4, 2, 8>}, {pipeline_mode = #tpu.pipeline_mode<synchronous>, transform_indices = @transform_27, window_bounds = array<i64: 1, 128>}, {pipeline_mode = #tpu.pipeline_mode<synchronous>, transform_indices = @transform_28, window_bounds = array<i64: 2, 128>}]} {
    %c0 = arith.constant 0 : index
    %c0_0 = arith.constant 0 : index
    %0 = vector.load %arg1[%c0, %c0_0] : memref<128x192xbf16, #tpu.memory_space<vmem>>, vector<128x192xbf16>
    %c0_1 = arith.constant 0 : index
    %c0_2 = arith.constant 0 : index
    %1 = vector.load %arg2[%c0_1, %c0_2] : memref<192x1280xbf16, #tpu.memory_space<vmem>>, vector<192x256xbf16>
    %cst = arith.constant dense<0.000000e+00> : vector<128x256xf32>
    %2 = tpu.matmul %0, %1, %cst {dimension_numbers = #tpu.dot_dimension_numbers<[1], [0], [0], [1], [0, 0, 1, 1], [], []>} : vector<128x192xbf16>, vector<192x256xbf16>, vector<128x256xf32> -> vector<128x256xf32>
    %c0_3 = arith.constant 0 : index
    %c0_4 = arith.constant 0 : index
    %c0_5 = arith.constant 0 : index
    %3 = vector.load %arg3[%c0_3, %c0_4, %c0_5] : memref<5x64x128xf32, #tpu.memory_space<vmem>>, vector<1x64x128xf32>
    %4 = vector.shape_cast %3 : vector<1x64x128xf32> to vector<64x128xf32>
    %cst_6 = arith.constant dense<0.000000e+00> : vector<64x256xf32>
    %5 = tpu.matmul %4, %2, %cst_6 {dimension_numbers = #tpu.dot_dimension_numbers<[1], [0], [0], [1], [0, 0, 1, 1], [], []>} : vector<64x128xf32>, vector<128x256xf32>, vector<64x256xf32> -> vector<64x256xf32>
    %c0_7 = arith.constant 0 : index
    %c256 = arith.constant 256 : index
    %6 = vector.load %arg2[%c0_7, %c256] : memref<192x1280xbf16, #tpu.memory_space<vmem>>, vector<192x256xbf16>
    %cst_8 = arith.constant dense<0.000000e+00> : vector<128x256xf32>
    %7 = tpu.matmul %0, %6, %cst_8 {dimension_numbers = #tpu.dot_dimension_numbers<[1], [0], [0], [1], [0, 0, 1, 1], [], []>} : vector<128x192xbf16>, vector<192x256xbf16>, vector<128x256xf32> -> vector<128x256xf32>
    %c1 = arith.constant 1 : index
    %c0_9 = arith.constant 0 : index
    %c0_10 = arith.constant 0 : index
    %8 = vector.load %arg3[%c1, %c0_9, %c0_10] : memref<5x64x128xf32, #tpu.memory_space<vmem>>, vector<1x64x128xf32>
    %9 = vector.shape_cast %8 : vector<1x64x128xf32> to vector<64x128xf32>
    %cst_11 = arith.constant dense<0.000000e+00> : vector<64x256xf32>
    %10 = tpu.matmul %9, %7, %cst_11 {dimension_numbers = #tpu.dot_dimension_numbers<[1], [0], [0], [1], [0, 0, 1, 1], [], []>} : vector<64x128xf32>, vector<128x256xf32>, vector<64x256xf32> -> vector<64x256xf32>
    %11 = arith.addf %5, %10 : vector<64x256xf32>
    %c0_12 = arith.constant 0 : index
    %c512 = arith.constant 512 : index
    %12 = vector.load %arg2[%c0_12, %c512] : memref<192x1280xbf16, #tpu.memory_space<vmem>>, vector<192x256xbf16>
    %cst_13 = arith.constant dense<0.000000e+00> : vector<128x256xf32>
    %13 = tpu.matmul %0, %12, %cst_13 {dimension_numbers = #tpu.dot_dimension_numbers<[1], [0], [0], [1], [0, 0, 1, 1], [], []>} : vector<128x192xbf16>, vector<192x256xbf16>, vector<128x256xf32> -> vector<128x256xf32>
    %c2 = arith.constant 2 : index
    %c0_14 = arith.constant 0 : index
    %c0_15 = arith.constant 0 : index
    %14 = vector.load %arg3[%c2, %c0_14, %c0_15] : memref<5x64x128xf32, #tpu.memory_space<vmem>>, vector<1x64x128xf32>
    %15 = vector.shape_cast %14 : vector<1x64x128xf32> to vector<64x128xf32>
    %cst_16 = arith.constant dense<0.000000e+00> : vector<64x256xf32>
    %16 = tpu.matmul %15, %13, %cst_16 {dimension_numbers = #tpu.dot_dimension_numbers<[1], [0], [0], [1], [0, 0, 1, 1], [], []>} : vector<64x128xf32>, vector<128x256xf32>, vector<64x256xf32> -> vector<64x256xf32>
    %17 = arith.addf %11, %16 : vector<64x256xf32>
    %c0_17 = arith.constant 0 : index
    %c768 = arith.constant 768 : index
    %18 = vector.load %arg2[%c0_17, %c768] : memref<192x1280xbf16, #tpu.memory_space<vmem>>, vector<192x256xbf16>
    %cst_18 = arith.constant dense<0.000000e+00> : vector<128x256xf32>
    %19 = tpu.matmul %0, %18, %cst_18 {dimension_numbers = #tpu.dot_dimension_numbers<[1], [0], [0], [1], [0, 0, 1, 1], [], []>} : vector<128x192xbf16>, vector<192x256xbf16>, vector<128x256xf32> -> vector<128x256xf32>
    %c3 = arith.constant 3 : index
    %c0_19 = arith.constant 0 : index
    %c0_20 = arith.constant 0 : index
    %20 = vector.load %arg3[%c3, %c0_19, %c0_20] : memref<5x64x128xf32, #tpu.memory_space<vmem>>, vector<1x64x128xf32>
    %21 = vector.shape_cast %20 : vector<1x64x128xf32> to vector<64x128xf32>
    %cst_21 = arith.constant dense<0.000000e+00> : vector<64x256xf32>
    %22 = tpu.matmul %21, %19, %cst_21 {dimension_numbers = #tpu.dot_dimension_numbers<[1], [0], [0], [1], [0, 0, 1, 1], [], []>} : vector<64x128xf32>, vector<128x256xf32>, vector<64x256xf32> -> vector<64x256xf32>
    %23 = arith.addf %17, %22 : vector<64x256xf32>
    %c0_22 = arith.constant 0 : index
    %c1024 = arith.constant 1024 : index
    %24 = vector.load %arg2[%c0_22, %c1024] : memref<192x1280xbf16, #tpu.memory_space<vmem>>, vector<192x256xbf16>
    %cst_23 = arith.constant dense<0.000000e+00> : vector<128x256xf32>
    %25 = tpu.matmul %0, %24, %cst_23 {dimension_numbers = #tpu.dot_dimension_numbers<[1], [0], [0], [1], [0, 0, 1, 1], [], []>} : vector<128x192xbf16>, vector<192x256xbf16>, vector<128x256xf32> -> vector<128x256xf32>
    %c4 = arith.constant 4 : index
    %c0_24 = arith.constant 0 : index
    %c0_25 = arith.constant 0 : index
    %26 = vector.load %arg3[%c4, %c0_24, %c0_25] : memref<5x64x128xf32, #tpu.memory_space<vmem>>, vector<1x64x128xf32>
    %27 = vector.shape_cast %26 : vector<1x64x128xf32> to vector<64x128xf32>
    %cst_26 = arith.constant dense<0.000000e+00> : vector<64x256xf32>
    %28 = tpu.matmul %27, %25, %cst_26 {dimension_numbers = #tpu.dot_dimension_numbers<[1], [0], [0], [1], [0, 0, 1, 1], [], []>} : vector<64x128xf32>, vector<128x256xf32>, vector<64x256xf32> -> vector<64x256xf32>
    %29 = arith.addf %23, %28 : vector<64x256xf32>
    %cst_27 = arith.constant dense<0.000000e+00> : vector<256xf32>
    %30 = vector.multi_reduction <add>, %29, %cst_27 [0] : vector<64x256xf32> to vector<256xf32>
    %31 = vector.shape_cast %30 : vector<256xf32> to vector<1x256xf32>
    %32 = arith.mulf %29, %29 : vector<64x256xf32>
    %cst_28 = arith.constant dense<0.000000e+00> : vector<256xf32>
    %33 = vector.multi_reduction <add>, %32, %cst_28 [0] : vector<64x256xf32> to vector<256xf32>
    %34 = vector.shape_cast %33 : vector<256xf32> to vector<1x256xf32>
    %c0_29 = arith.constant 0 : index
    %c0_30 = arith.constant 0 : index
    %35 = vector.load %arg4[%c0_29, %c0_30] : memref<256x128xf32, #tpu.memory_space<vmem>>, vector<256x128xf32>
    %cst_31 = arith.constant dense<0.000000e+00> : vector<1x128xf32>
    %36 = tpu.matmul %31, %35, %cst_31 {dimension_numbers = #tpu.dot_dimension_numbers<[1], [0], [0], [1], [0, 0, 1, 1], [], []>} : vector<1x256xf32>, vector<256x128xf32>, vector<1x128xf32> -> vector<1x128xf32>
    %c0_32 = arith.constant 0 : index
    %c0_33 = arith.constant 0 : index
    %37 = vector.load %arg4[%c0_32, %c0_33] : memref<256x128xf32, #tpu.memory_space<vmem>>, vector<256x128xf32>
    %cst_34 = arith.constant dense<0.000000e+00> : vector<1x128xf32>
    %38 = tpu.matmul %34, %37, %cst_34 {dimension_numbers = #tpu.dot_dimension_numbers<[1], [0], [0], [1], [0, 0, 1, 1], [], []>} : vector<1x256xf32>, vector<256x128xf32>, vector<1x128xf32> -> vector<1x128xf32>
    %cst_35 = arith.constant 4.8828125E-4 : f32
    %39 = vector.broadcast %cst_35 : f32 to vector<1x128xf32>
    %40 = arith.mulf %36, %39 : vector<1x128xf32>
    %cst_36 = arith.constant 4.8828125E-4 : f32
    %41 = vector.broadcast %cst_36 : f32 to vector<1x128xf32>
    %42 = arith.mulf %38, %41 : vector<1x128xf32>
    %43 = arith.mulf %40, %40 : vector<1x128xf32>
    %44 = arith.subf %42, %43 : vector<1x128xf32>
    %cst_37 = arith.constant 0.000000e+00 : f32
    %45 = vector.broadcast %cst_37 : f32 to vector<1x128xf32>
    %46 = arith.maximumf %44, %45 : vector<1x128xf32>
    %c0_38 = arith.constant 0 : index
    %c0_39 = arith.constant 0 : index
    %47 = vector.load %arg6[%c0_38, %c0_39] : memref<1x128xf32, #tpu.memory_space<vmem>>, vector<1x128xf32>
    %cst_40 = arith.constant 9.99999974E-6 : f32
    %48 = vector.broadcast %cst_40 : f32 to vector<1x128xf32>
    %49 = arith.addf %46, %48 : vector<1x128xf32>
    %50 = math.rsqrt %49 : vector<1x128xf32>
    %51 = arith.mulf %47, %50 : vector<1x128xf32>
    %c0_41 = arith.constant 0 : index
    %c0_42 = arith.constant 0 : index
    %52 = vector.load %arg7[%c0_41, %c0_42] : memref<1x128xf32, #tpu.memory_space<vmem>>, vector<1x128xf32>
    %53 = arith.mulf %40, %51 : vector<1x128xf32>
    %54 = arith.subf %52, %53 : vector<1x128xf32>
    %c0_43 = arith.constant 0 : index
    %c0_44 = arith.constant 0 : index
    %55 = vector.load %arg5[%c0_43, %c0_44] : memref<128x256xf32, #tpu.memory_space<vmem>>, vector<128x256xf32>
    %cst_45 = arith.constant dense<0.000000e+00> : vector<1x256xf32>
    %56 = tpu.matmul %51, %55, %cst_45 {dimension_numbers = #tpu.dot_dimension_numbers<[1], [0], [0], [1], [0, 0, 1, 1], [], []>} : vector<1x128xf32>, vector<128x256xf32>, vector<1x256xf32> -> vector<1x256xf32>
    %c0_46 = arith.constant 0 : index
    %c0_47 = arith.constant 0 : index
    %57 = vector.load %arg5[%c0_46, %c0_47] : memref<128x256xf32, #tpu.memory_space<vmem>>, vector<128x256xf32>
    %cst_48 = arith.constant dense<0.000000e+00> : vector<1x256xf32>
    %58 = tpu.matmul %54, %57, %cst_48 {dimension_numbers = #tpu.dot_dimension_numbers<[1], [0], [0], [1], [0, 0, 1, 1], [], []>} : vector<1x128xf32>, vector<128x256xf32>, vector<1x256xf32> -> vector<1x256xf32>
    %59 = vector.broadcast %56 : vector<1x256xf32> to vector<64x256xf32>
    %60 = arith.mulf %29, %59 : vector<64x256xf32>
    %61 = vector.broadcast %58 : vector<1x256xf32> to vector<64x256xf32>
    %62 = arith.addf %60, %61 : vector<64x256xf32>
    %cst_49 = arith.constant 0.000000e+00 : f32
    %63 = vector.broadcast %cst_49 : f32 to vector<64x256xf32>
    %64 = arith.maximumf %62, %63 : vector<64x256xf32>
    %65 = arith.truncf %64 : vector<64x256xf32> to vector<64x256xbf16>
    %c0_50 = arith.constant 0 : index
    %c0_51 = arith.constant 0 : index
    %66 = vector.load %arg8[%c0_50, %c0_51] : memref<256x1280xbf16, #tpu.memory_space<vmem>>, vector<256x256xbf16>
    %cst_52 = arith.constant dense<0.000000e+00> : vector<64x256xf32>
    %67 = tpu.matmul %65, %66, %cst_52 {dimension_numbers = #tpu.dot_dimension_numbers<[1], [0], [0], [1], [0, 0, 1, 1], [], []>} : vector<64x256xbf16>, vector<256x256xbf16>, vector<64x256xf32> -> vector<64x256xf32>
    %c0_53 = arith.constant 0 : index
    %c0_54 = arith.constant 0 : index
    %c0_55 = arith.constant 0 : index
    %68 = vector.load %arg9[%c0_53, %c0_54, %c0_55] : memref<5x32x64xf32, #tpu.memory_space<vmem>>, vector<1x32x64xf32>
    %69 = vector.shape_cast %68 : vector<1x32x64xf32> to vector<32x64xf32>
    %cst_56 = arith.constant dense<0.000000e+00> : vector<32x256xf32>
    %70 = tpu.matmul %69, %67, %cst_56 {dimension_numbers = #tpu.dot_dimension_numbers<[1], [0], [0], [1], [0, 0, 1, 1], [], []>} : vector<32x64xf32>, vector<64x256xf32>, vector<32x256xf32> -> vector<32x256xf32>
    %c0_57 = arith.constant 0 : index
    %c256_58 = arith.constant 256 : index
    %71 = vector.load %arg8[%c0_57, %c256_58] : memref<256x1280xbf16, #tpu.memory_space<vmem>>, vector<256x256xbf16>
    %cst_59 = arith.constant dense<0.000000e+00> : vector<64x256xf32>
    %72 = tpu.matmul %65, %71, %cst_59 {dimension_numbers = #tpu.dot_dimension_numbers<[1], [0], [0], [1], [0, 0, 1, 1], [], []>} : vector<64x256xbf16>, vector<256x256xbf16>, vector<64x256xf32> -> vector<64x256xf32>
    %c1_60 = arith.constant 1 : index
    %c0_61 = arith.constant 0 : index
    %c0_62 = arith.constant 0 : index
    %73 = vector.load %arg9[%c1_60, %c0_61, %c0_62] : memref<5x32x64xf32, #tpu.memory_space<vmem>>, vector<1x32x64xf32>
    %74 = vector.shape_cast %73 : vector<1x32x64xf32> to vector<32x64xf32>
    %cst_63 = arith.constant dense<0.000000e+00> : vector<32x256xf32>
    %75 = tpu.matmul %74, %72, %cst_63 {dimension_numbers = #tpu.dot_dimension_numbers<[1], [0], [0], [1], [0, 0, 1, 1], [], []>} : vector<32x64xf32>, vector<64x256xf32>, vector<32x256xf32> -> vector<32x256xf32>
    %76 = arith.addf %70, %75 : vector<32x256xf32>
    %c0_64 = arith.constant 0 : index
    %c512_65 = arith.constant 512 : index
    %77 = vector.load %arg8[%c0_64, %c512_65] : memref<256x1280xbf16, #tpu.memory_space<vmem>>, vector<256x256xbf16>
    %cst_66 = arith.constant dense<0.000000e+00> : vector<64x256xf32>
    %78 = tpu.matmul %65, %77, %cst_66 {dimension_numbers = #tpu.dot_dimension_numbers<[1], [0], [0], [1], [0, 0, 1, 1], [], []>} : vector<64x256xbf16>, vector<256x256xbf16>, vector<64x256xf32> -> vector<64x256xf32>
    %c2_67 = arith.constant 2 : index
    %c0_68 = arith.constant 0 : index
    %c0_69 = arith.constant 0 : index
    %79 = vector.load %arg9[%c2_67, %c0_68, %c0_69] : memref<5x32x64xf32, #tpu.memory_space<vmem>>, vector<1x32x64xf32>
    %80 = vector.shape_cast %79 : vector<1x32x64xf32> to vector<32x64xf32>
    %cst_70 = arith.constant dense<0.000000e+00> : vector<32x256xf32>
    %81 = tpu.matmul %80, %78, %cst_70 {dimension_numbers = #tpu.dot_dimension_numbers<[1], [0], [0], [1], [0, 0, 1, 1], [], []>} : vector<32x64xf32>, vector<64x256xf32>, vector<32x256xf32> -> vector<32x256xf32>
    %82 = arith.addf %76, %81 : vector<32x256xf32>
    %c0_71 = arith.constant 0 : index
    %c768_72 = arith.constant 768 : index
    %83 = vector.load %arg8[%c0_71, %c768_72] : memref<256x1280xbf16, #tpu.memory_space<vmem>>, vector<256x256xbf16>
    %cst_73 = arith.constant dense<0.000000e+00> : vector<64x256xf32>
    %84 = tpu.matmul %65, %83, %cst_73 {dimension_numbers = #tpu.dot_dimension_numbers<[1], [0], [0], [1], [0, 0, 1, 1], [], []>} : vector<64x256xbf16>, vector<256x256xbf16>, vector<64x256xf32> -> vector<64x256xf32>
    %c3_74 = arith.constant 3 : index
    %c0_75 = arith.constant 0 : index
    %c0_76 = arith.constant 0 : index
    %85 = vector.load %arg9[%c3_74, %c0_75, %c0_76] : memref<5x32x64xf32, #tpu.memory_space<vmem>>, vector<1x32x64xf32>
    %86 = vector.shape_cast %85 : vector<1x32x64xf32> to vector<32x64xf32>
    %cst_77 = arith.constant dense<0.000000e+00> : vector<32x256xf32>
    %87 = tpu.matmul %86, %84, %cst_77 {dimension_numbers = #tpu.dot_dimension_numbers<[1], [0], [0], [1], [0, 0, 1, 1], [], []>} : vector<32x64xf32>, vector<64x256xf32>, vector<32x256xf32> -> vector<32x256xf32>
    %88 = arith.addf %82, %87 : vector<32x256xf32>
    %c0_78 = arith.constant 0 : index
    %c1024_79 = arith.constant 1024 : index
    %89 = vector.load %arg8[%c0_78, %c1024_79] : memref<256x1280xbf16, #tpu.memory_space<vmem>>, vector<256x256xbf16>
    %cst_80 = arith.constant dense<0.000000e+00> : vector<64x256xf32>
    %90 = tpu.matmul %65, %89, %cst_80 {dimension_numbers = #tpu.dot_dimension_numbers<[1], [0], [0], [1], [0, 0, 1, 1], [], []>} : vector<64x256xbf16>, vector<256x256xbf16>, vector<64x256xf32> -> vector<64x256xf32>
    %c4_81 = arith.constant 4 : index
    %c0_82 = arith.constant 0 : index
    %c0_83 = arith.constant 0 : index
    %91 = vector.load %arg9[%c4_81, %c0_82, %c0_83] : memref<5x32x64xf32, #tpu.memory_space<vmem>>, vector<1x32x64xf32>
    %92 = vector.shape_cast %91 : vector<1x32x64xf32> to vector<32x64xf32>
    %cst_84 = arith.constant dense<0.000000e+00> : vector<32x256xf32>
    %93 = tpu.matmul %92, %90, %cst_84 {dimension_numbers = #tpu.dot_dimension_numbers<[1], [0], [0], [1], [0, 0, 1, 1], [], []>} : vector<32x64xf32>, vector<64x256xf32>, vector<32x256xf32> -> vector<32x256xf32>
    %94 = arith.addf %88, %93 : vector<32x256xf32>
    %cst_85 = arith.constant dense<0.000000e+00> : vector<256xf32>
    %95 = vector.multi_reduction <add>, %94, %cst_85 [0] : vector<32x256xf32> to vector<256xf32>
    %96 = vector.shape_cast %95 : vector<256xf32> to vector<1x256xf32>
    %97 = arith.mulf %94, %94 : vector<32x256xf32>
    %cst_86 = arith.constant dense<0.000000e+00> : vector<256xf32>
    %98 = vector.multi_reduction <add>, %97, %cst_86 [0] : vector<32x256xf32> to vector<256xf32>
    %99 = vector.shape_cast %98 : vector<256xf32> to vector<1x256xf32>
    %c0_87 = arith.constant 0 : index
    %c0_88 = arith.constant 0 : index
    %100 = vector.load %arg10[%c0_87, %c0_88] : memref<256x128xf32, #tpu.memory_space<vmem>>, vector<256x128xf32>
    %cst_89 = arith.constant dense<0.000000e+00> : vector<1x128xf32>
    %101 = tpu.matmul %96, %100, %cst_89 {dimension_numbers = #tpu.dot_dimension_numbers<[1], [0], [0], [1], [0, 0, 1, 1], [], []>} : vector<1x256xf32>, vector<256x128xf32>, vector<1x128xf32> -> vector<1x128xf32>
    %c0_90 = arith.constant 0 : index
    %c0_91 = arith.constant 0 : index
    %102 = vector.load %arg10[%c0_90, %c0_91] : memref<256x128xf32, #tpu.memory_space<vmem>>, vector<256x128xf32>
    %cst_92 = arith.constant dense<0.000000e+00> : vector<1x128xf32>
    %103 = tpu.matmul %99, %102, %cst_92 {dimension_numbers = #tpu.dot_dimension_numbers<[1], [0], [0], [1], [0, 0, 1, 1], [], []>} : vector<1x256xf32>, vector<256x128xf32>, vector<1x128xf32> -> vector<1x128xf32>
    %cst_93 = arith.constant 0.001953125 : f32
    %104 = vector.broadcast %cst_93 : f32 to vector<1x128xf32>
    %105 = arith.mulf %101, %104 : vector<1x128xf32>
    %cst_94 = arith.constant 0.001953125 : f32
    %106 = vector.broadcast %cst_94 : f32 to vector<1x128xf32>
    %107 = arith.mulf %103, %106 : vector<1x128xf32>
    %108 = arith.mulf %105, %105 : vector<1x128xf32>
    %109 = arith.subf %107, %108 : vector<1x128xf32>
    %cst_95 = arith.constant 0.000000e+00 : f32
    %110 = vector.broadcast %cst_95 : f32 to vector<1x128xf32>
    %111 = arith.maximumf %109, %110 : vector<1x128xf32>
    %c0_96 = arith.constant 0 : index
    %c0_97 = arith.constant 0 : index
    %112 = vector.load %arg12[%c0_96, %c0_97] : memref<1x128xf32, #tpu.memory_space<vmem>>, vector<1x128xf32>
    %cst_98 = arith.constant 9.99999974E-6 : f32
    %113 = vector.broadcast %cst_98 : f32 to vector<1x128xf32>
    %114 = arith.addf %111, %113 : vector<1x128xf32>
    %115 = math.rsqrt %114 : vector<1x128xf32>
    %116 = arith.mulf %112, %115 : vector<1x128xf32>
    %c0_99 = arith.constant 0 : index
    %c0_100 = arith.constant 0 : index
    %117 = vector.load %arg13[%c0_99, %c0_100] : memref<1x128xf32, #tpu.memory_space<vmem>>, vector<1x128xf32>
    %118 = arith.mulf %105, %116 : vector<1x128xf32>
    %119 = arith.subf %117, %118 : vector<1x128xf32>
    %c0_101 = arith.constant 0 : index
    %c0_102 = arith.constant 0 : index
    %120 = vector.load %arg11[%c0_101, %c0_102] : memref<128x256xf32, #tpu.memory_space<vmem>>, vector<128x256xf32>
    %cst_103 = arith.constant dense<0.000000e+00> : vector<1x256xf32>
    %121 = tpu.matmul %116, %120, %cst_103 {dimension_numbers = #tpu.dot_dimension_numbers<[1], [0], [0], [1], [0, 0, 1, 1], [], []>} : vector<1x128xf32>, vector<128x256xf32>, vector<1x256xf32> -> vector<1x256xf32>
    %c0_104 = arith.constant 0 : index
    %c0_105 = arith.constant 0 : index
    %122 = vector.load %arg11[%c0_104, %c0_105] : memref<128x256xf32, #tpu.memory_space<vmem>>, vector<128x256xf32>
    %cst_106 = arith.constant dense<0.000000e+00> : vector<1x256xf32>
    %123 = tpu.matmul %119, %122, %cst_106 {dimension_numbers = #tpu.dot_dimension_numbers<[1], [0], [0], [1], [0, 0, 1, 1], [], []>} : vector<1x128xf32>, vector<128x256xf32>, vector<1x256xf32> -> vector<1x256xf32>
    %124 = vector.broadcast %121 : vector<1x256xf32> to vector<32x256xf32>
    %125 = arith.mulf %94, %124 : vector<32x256xf32>
    %126 = vector.broadcast %123 : vector<1x256xf32> to vector<32x256xf32>
    %127 = arith.addf %125, %126 : vector<32x256xf32>
    %cst_107 = arith.constant 0.000000e+00 : f32
    %128 = vector.broadcast %cst_107 : f32 to vector<32x256xf32>
    %129 = arith.maximumf %127, %128 : vector<32x256xf32>
    %130 = arith.truncf %129 : vector<32x256xf32> to vector<32x256xbf16>
    %c0_108 = arith.constant 0 : index
    %c0_109 = arith.constant 0 : index
    %131 = vector.load %arg14[%c0_108, %c0_109] : memref<256x1280xbf16, #tpu.memory_space<vmem>>, vector<256x256xbf16>
    %cst_110 = arith.constant dense<0.000000e+00> : vector<32x256xf32>
    %132 = tpu.matmul %130, %131, %cst_110 {dimension_numbers = #tpu.dot_dimension_numbers<[1], [0], [0], [1], [0, 0, 1, 1], [], []>} : vector<32x256xbf16>, vector<256x256xbf16>, vector<32x256xf32> -> vector<32x256xf32>
    %c0_111 = arith.constant 0 : index
    %c0_112 = arith.constant 0 : index
    %c0_113 = arith.constant 0 : index
    %133 = vector.load %arg15[%c0_111, %c0_112, %c0_113] : memref<5x16x32xf32, #tpu.memory_space<vmem>>, vector<1x16x32xf32>
    %134 = vector.shape_cast %133 : vector<1x16x32xf32> to vector<16x32xf32>
    %cst_114 = arith.constant dense<0.000000e+00> : vector<16x256xf32>
    %135 = tpu.matmul %134, %132, %cst_114 {dimension_numbers = #tpu.dot_dimension_numbers<[1], [0], [0], [1], [0, 0, 1, 1], [], []>} : vector<16x32xf32>, vector<32x256xf32>, vector<16x256xf32> -> vector<16x256xf32>
    %c0_115 = arith.constant 0 : index
    %c256_116 = arith.constant 256 : index
    %136 = vector.load %arg14[%c0_115, %c256_116] : memref<256x1280xbf16, #tpu.memory_space<vmem>>, vector<256x256xbf16>
    %cst_117 = arith.constant dense<0.000000e+00> : vector<32x256xf32>
    %137 = tpu.matmul %130, %136, %cst_117 {dimension_numbers = #tpu.dot_dimension_numbers<[1], [0], [0], [1], [0, 0, 1, 1], [], []>} : vector<32x256xbf16>, vector<256x256xbf16>, vector<32x256xf32> -> vector<32x256xf32>
    %c1_118 = arith.constant 1 : index
    %c0_119 = arith.constant 0 : index
    %c0_120 = arith.constant 0 : index
    %138 = vector.load %arg15[%c1_118, %c0_119, %c0_120] : memref<5x16x32xf32, #tpu.memory_space<vmem>>, vector<1x16x32xf32>
    %139 = vector.shape_cast %138 : vector<1x16x32xf32> to vector<16x32xf32>
    %cst_121 = arith.constant dense<0.000000e+00> : vector<16x256xf32>
    %140 = tpu.matmul %139, %137, %cst_121 {dimension_numbers = #tpu.dot_dimension_numbers<[1], [0], [0], [1], [0, 0, 1, 1], [], []>} : vector<16x32xf32>, vector<32x256xf32>, vector<16x256xf32> -> vector<16x256xf32>
    %141 = arith.addf %135, %140 : vector<16x256xf32>
    %c0_122 = arith.constant 0 : index
    %c512_123 = arith.constant 512 : index
    %142 = vector.load %arg14[%c0_122, %c512_123] : memref<256x1280xbf16, #tpu.memory_space<vmem>>, vector<256x256xbf16>
    %cst_124 = arith.constant dense<0.000000e+00> : vector<32x256xf32>
    %143 = tpu.matmul %130, %142, %cst_124 {dimension_numbers = #tpu.dot_dimension_numbers<[1], [0], [0], [1], [0, 0, 1, 1], [], []>} : vector<32x256xbf16>, vector<256x256xbf16>, vector<32x256xf32> -> vector<32x256xf32>
    %c2_125 = arith.constant 2 : index
    %c0_126 = arith.constant 0 : index
    %c0_127 = arith.constant 0 : index
    %144 = vector.load %arg15[%c2_125, %c0_126, %c0_127] : memref<5x16x32xf32, #tpu.memory_space<vmem>>, vector<1x16x32xf32>
    %145 = vector.shape_cast %144 : vector<1x16x32xf32> to vector<16x32xf32>
    %cst_128 = arith.constant dense<0.000000e+00> : vector<16x256xf32>
    %146 = tpu.matmul %145, %143, %cst_128 {dimension_numbers = #tpu.dot_dimension_numbers<[1], [0], [0], [1], [0, 0, 1, 1], [], []>} : vector<16x32xf32>, vector<32x256xf32>, vector<16x256xf32> -> vector<16x256xf32>
    %147 = arith.addf %141, %146 : vector<16x256xf32>
    %c0_129 = arith.constant 0 : index
    %c768_130 = arith.constant 768 : index
    %148 = vector.load %arg14[%c0_129, %c768_130] : memref<256x1280xbf16, #tpu.memory_space<vmem>>, vector<256x256xbf16>
    %cst_131 = arith.constant dense<0.000000e+00> : vector<32x256xf32>
    %149 = tpu.matmul %130, %148, %cst_131 {dimension_numbers = #tpu.dot_dimension_numbers<[1], [0], [0], [1], [0, 0, 1, 1], [], []>} : vector<32x256xbf16>, vector<256x256xbf16>, vector<32x256xf32> -> vector<32x256xf32>
    %c3_132 = arith.constant 3 : index
    %c0_133 = arith.constant 0 : index
    %c0_134 = arith.constant 0 : index
    %150 = vector.load %arg15[%c3_132, %c0_133, %c0_134] : memref<5x16x32xf32, #tpu.memory_space<vmem>>, vector<1x16x32xf32>
    %151 = vector.shape_cast %150 : vector<1x16x32xf32> to vector<16x32xf32>
    %cst_135 = arith.constant dense<0.000000e+00> : vector<16x256xf32>
    %152 = tpu.matmul %151, %149, %cst_135 {dimension_numbers = #tpu.dot_dimension_numbers<[1], [0], [0], [1], [0, 0, 1, 1], [], []>} : vector<16x32xf32>, vector<32x256xf32>, vector<16x256xf32> -> vector<16x256xf32>
    %153 = arith.addf %147, %152 : vector<16x256xf32>
    %c0_136 = arith.constant 0 : index
    %c1024_137 = arith.constant 1024 : index
    %154 = vector.load %arg14[%c0_136, %c1024_137] : memref<256x1280xbf16, #tpu.memory_space<vmem>>, vector<256x256xbf16>
    %cst_138 = arith.constant dense<0.000000e+00> : vector<32x256xf32>
    %155 = tpu.matmul %130, %154, %cst_138 {dimension_numbers = #tpu.dot_dimension_numbers<[1], [0], [0], [1], [0, 0, 1, 1], [], []>} : vector<32x256xbf16>, vector<256x256xbf16>, vector<32x256xf32> -> vector<32x256xf32>
    %c4_139 = arith.constant 4 : index
    %c0_140 = arith.constant 0 : index
    %c0_141 = arith.constant 0 : index
    %156 = vector.load %arg15[%c4_139, %c0_140, %c0_141] : memref<5x16x32xf32, #tpu.memory_space<vmem>>, vector<1x16x32xf32>
    %157 = vector.shape_cast %156 : vector<1x16x32xf32> to vector<16x32xf32>
    %cst_142 = arith.constant dense<0.000000e+00> : vector<16x256xf32>
    %158 = tpu.matmul %157, %155, %cst_142 {dimension_numbers = #tpu.dot_dimension_numbers<[1], [0], [0], [1], [0, 0, 1, 1], [], []>} : vector<16x32xf32>, vector<32x256xf32>, vector<16x256xf32> -> vector<16x256xf32>
    %159 = arith.addf %153, %158 : vector<16x256xf32>
    %cst_143 = arith.constant dense<0.000000e+00> : vector<256xf32>
    %160 = vector.multi_reduction <add>, %159, %cst_143 [0] : vector<16x256xf32> to vector<256xf32>
    %161 = vector.shape_cast %160 : vector<256xf32> to vector<1x256xf32>
    %162 = arith.mulf %159, %159 : vector<16x256xf32>
    %cst_144 = arith.constant dense<0.000000e+00> : vector<256xf32>
    %163 = vector.multi_reduction <add>, %162, %cst_144 [0] : vector<16x256xf32> to vector<256xf32>
    %164 = vector.shape_cast %163 : vector<256xf32> to vector<1x256xf32>
    %c0_145 = arith.constant 0 : index
    %c0_146 = arith.constant 0 : index
    %165 = vector.load %arg16[%c0_145, %c0_146] : memref<256x128xf32, #tpu.memory_space<vmem>>, vector<256x128xf32>
    %cst_147 = arith.constant dense<0.000000e+00> : vector<1x128xf32>
    %166 = tpu.matmul %161, %165, %cst_147 {dimension_numbers = #tpu.dot_dimension_numbers<[1], [0], [0], [1], [0, 0, 1, 1], [], []>} : vector<1x256xf32>, vector<256x128xf32>, vector<1x128xf32> -> vector<1x128xf32>
    %c0_148 = arith.constant 0 : index
    %c0_149 = arith.constant 0 : index
    %167 = vector.load %arg16[%c0_148, %c0_149] : memref<256x128xf32, #tpu.memory_space<vmem>>, vector<256x128xf32>
    %cst_150 = arith.constant dense<0.000000e+00> : vector<1x128xf32>
    %168 = tpu.matmul %164, %167, %cst_150 {dimension_numbers = #tpu.dot_dimension_numbers<[1], [0], [0], [1], [0, 0, 1, 1], [], []>} : vector<1x256xf32>, vector<256x128xf32>, vector<1x128xf32> -> vector<1x128xf32>
    %cst_151 = arith.constant 7.812500e-03 : f32
    %169 = vector.broadcast %cst_151 : f32 to vector<1x128xf32>
    %170 = arith.mulf %166, %169 : vector<1x128xf32>
    %cst_152 = arith.constant 7.812500e-03 : f32
    %171 = vector.broadcast %cst_152 : f32 to vector<1x128xf32>
    %172 = arith.mulf %168, %171 : vector<1x128xf32>
    %173 = arith.mulf %170, %170 : vector<1x128xf32>
    %174 = arith.subf %172, %173 : vector<1x128xf32>
    %cst_153 = arith.constant 0.000000e+00 : f32
    %175 = vector.broadcast %cst_153 : f32 to vector<1x128xf32>
    %176 = arith.maximumf %174, %175 : vector<1x128xf32>
    %c0_154 = arith.constant 0 : index
    %c0_155 = arith.constant 0 : index
    %177 = vector.load %arg18[%c0_154, %c0_155] : memref<1x128xf32, #tpu.memory_space<vmem>>, vector<1x128xf32>
    %cst_156 = arith.constant 9.99999974E-6 : f32
    %178 = vector.broadcast %cst_156 : f32 to vector<1x128xf32>
    %179 = arith.addf %176, %178 : vector<1x128xf32>
    %180 = math.rsqrt %179 : vector<1x128xf32>
    %181 = arith.mulf %177, %180 : vector<1x128xf32>
    %c0_157 = arith.constant 0 : index
    %c0_158 = arith.constant 0 : index
    %182 = vector.load %arg19[%c0_157, %c0_158] : memref<1x128xf32, #tpu.memory_space<vmem>>, vector<1x128xf32>
    %183 = arith.mulf %170, %181 : vector<1x128xf32>
    %184 = arith.subf %182, %183 : vector<1x128xf32>
    %c0_159 = arith.constant 0 : index
    %c0_160 = arith.constant 0 : index
    %185 = vector.load %arg17[%c0_159, %c0_160] : memref<128x256xf32, #tpu.memory_space<vmem>>, vector<128x256xf32>
    %cst_161 = arith.constant dense<0.000000e+00> : vector<1x256xf32>
    %186 = tpu.matmul %181, %185, %cst_161 {dimension_numbers = #tpu.dot_dimension_numbers<[1], [0], [0], [1], [0, 0, 1, 1], [], []>} : vector<1x128xf32>, vector<128x256xf32>, vector<1x256xf32> -> vector<1x256xf32>
    %c0_162 = arith.constant 0 : index
    %c0_163 = arith.constant 0 : index
    %187 = vector.load %arg17[%c0_162, %c0_163] : memref<128x256xf32, #tpu.memory_space<vmem>>, vector<128x256xf32>
    %cst_164 = arith.constant dense<0.000000e+00> : vector<1x256xf32>
    %188 = tpu.matmul %184, %187, %cst_164 {dimension_numbers = #tpu.dot_dimension_numbers<[1], [0], [0], [1], [0, 0, 1, 1], [], []>} : vector<1x128xf32>, vector<128x256xf32>, vector<1x256xf32> -> vector<1x256xf32>
    %189 = vector.broadcast %186 : vector<1x256xf32> to vector<16x256xf32>
    %190 = arith.mulf %159, %189 : vector<16x256xf32>
    %191 = vector.broadcast %188 : vector<1x256xf32> to vector<16x256xf32>
    %192 = arith.addf %190, %191 : vector<16x256xf32>
    %cst_165 = arith.constant 0.000000e+00 : f32
    %193 = vector.broadcast %cst_165 : f32 to vector<16x256xf32>
    %194 = arith.maximumf %192, %193 : vector<16x256xf32>
    %195 = arith.truncf %194 : vector<16x256xf32> to vector<16x256xbf16>
    %c0_166 = arith.constant 0 : index
    %c0_167 = arith.constant 0 : index
    %196 = vector.load %arg20[%c0_166, %c0_167] : memref<256x1280xbf16, #tpu.memory_space<vmem>>, vector<256x256xbf16>
    %cst_168 = arith.constant dense<0.000000e+00> : vector<16x256xf32>
    %197 = tpu.matmul %195, %196, %cst_168 {dimension_numbers = #tpu.dot_dimension_numbers<[1], [0], [0], [1], [0, 0, 1, 1], [], []>} : vector<16x256xbf16>, vector<256x256xbf16>, vector<16x256xf32> -> vector<16x256xf32>
    %c0_169 = arith.constant 0 : index
    %c0_170 = arith.constant 0 : index
    %c0_171 = arith.constant 0 : index
    %198 = vector.load %arg21[%c0_169, %c0_170, %c0_171] : memref<5x8x16xf32, #tpu.memory_space<vmem>>, vector<1x8x16xf32>
    %199 = vector.shape_cast %198 : vector<1x8x16xf32> to vector<8x16xf32>
    %cst_172 = arith.constant dense<0.000000e+00> : vector<8x256xf32>
    %200 = tpu.matmul %199, %197, %cst_172 {dimension_numbers = #tpu.dot_dimension_numbers<[1], [0], [0], [1], [0, 0, 1, 1], [], []>} : vector<8x16xf32>, vector<16x256xf32>, vector<8x256xf32> -> vector<8x256xf32>
    %c0_173 = arith.constant 0 : index
    %c256_174 = arith.constant 256 : index
    %201 = vector.load %arg20[%c0_173, %c256_174] : memref<256x1280xbf16, #tpu.memory_space<vmem>>, vector<256x256xbf16>
    %cst_175 = arith.constant dense<0.000000e+00> : vector<16x256xf32>
    %202 = tpu.matmul %195, %201, %cst_175 {dimension_numbers = #tpu.dot_dimension_numbers<[1], [0], [0], [1], [0, 0, 1, 1], [], []>} : vector<16x256xbf16>, vector<256x256xbf16>, vector<16x256xf32> -> vector<16x256xf32>
    %c1_176 = arith.constant 1 : index
    %c0_177 = arith.constant 0 : index
    %c0_178 = arith.constant 0 : index
    %203 = vector.load %arg21[%c1_176, %c0_177, %c0_178] : memref<5x8x16xf32, #tpu.memory_space<vmem>>, vector<1x8x16xf32>
    %204 = vector.shape_cast %203 : vector<1x8x16xf32> to vector<8x16xf32>
    %cst_179 = arith.constant dense<0.000000e+00> : vector<8x256xf32>
    %205 = tpu.matmul %204, %202, %cst_179 {dimension_numbers = #tpu.dot_dimension_numbers<[1], [0], [0], [1], [0, 0, 1, 1], [], []>} : vector<8x16xf32>, vector<16x256xf32>, vector<8x256xf32> -> vector<8x256xf32>
    %206 = arith.addf %200, %205 : vector<8x256xf32>
    %c0_180 = arith.constant 0 : index
    %c512_181 = arith.constant 512 : index
    %207 = vector.load %arg20[%c0_180, %c512_181] : memref<256x1280xbf16, #tpu.memory_space<vmem>>, vector<256x256xbf16>
    %cst_182 = arith.constant dense<0.000000e+00> : vector<16x256xf32>
    %208 = tpu.matmul %195, %207, %cst_182 {dimension_numbers = #tpu.dot_dimension_numbers<[1], [0], [0], [1], [0, 0, 1, 1], [], []>} : vector<16x256xbf16>, vector<256x256xbf16>, vector<16x256xf32> -> vector<16x256xf32>
    %c2_183 = arith.constant 2 : index
    %c0_184 = arith.constant 0 : index
    %c0_185 = arith.constant 0 : index
    %209 = vector.load %arg21[%c2_183, %c0_184, %c0_185] : memref<5x8x16xf32, #tpu.memory_space<vmem>>, vector<1x8x16xf32>
    %210 = vector.shape_cast %209 : vector<1x8x16xf32> to vector<8x16xf32>
    %cst_186 = arith.constant dense<0.000000e+00> : vector<8x256xf32>
    %211 = tpu.matmul %210, %208, %cst_186 {dimension_numbers = #tpu.dot_dimension_numbers<[1], [0], [0], [1], [0, 0, 1, 1], [], []>} : vector<8x16xf32>, vector<16x256xf32>, vector<8x256xf32> -> vector<8x256xf32>
    %212 = arith.addf %206, %211 : vector<8x256xf32>
    %c0_187 = arith.constant 0 : index
    %c768_188 = arith.constant 768 : index
    %213 = vector.load %arg20[%c0_187, %c768_188] : memref<256x1280xbf16, #tpu.memory_space<vmem>>, vector<256x256xbf16>
    %cst_189 = arith.constant dense<0.000000e+00> : vector<16x256xf32>
    %214 = tpu.matmul %195, %213, %cst_189 {dimension_numbers = #tpu.dot_dimension_numbers<[1], [0], [0], [1], [0, 0, 1, 1], [], []>} : vector<16x256xbf16>, vector<256x256xbf16>, vector<16x256xf32> -> vector<16x256xf32>
    %c3_190 = arith.constant 3 : index
    %c0_191 = arith.constant 0 : index
    %c0_192 = arith.constant 0 : index
    %215 = vector.load %arg21[%c3_190, %c0_191, %c0_192] : memref<5x8x16xf32, #tpu.memory_space<vmem>>, vector<1x8x16xf32>
    %216 = vector.shape_cast %215 : vector<1x8x16xf32> to vector<8x16xf32>
    %cst_193 = arith.constant dense<0.000000e+00> : vector<8x256xf32>
    %217 = tpu.matmul %216, %214, %cst_193 {dimension_numbers = #tpu.dot_dimension_numbers<[1], [0], [0], [1], [0, 0, 1, 1], [], []>} : vector<8x16xf32>, vector<16x256xf32>, vector<8x256xf32> -> vector<8x256xf32>
    %218 = arith.addf %212, %217 : vector<8x256xf32>
    %c0_194 = arith.constant 0 : index
    %c1024_195 = arith.constant 1024 : index
    %219 = vector.load %arg20[%c0_194, %c1024_195] : memref<256x1280xbf16, #tpu.memory_space<vmem>>, vector<256x256xbf16>
    %cst_196 = arith.constant dense<0.000000e+00> : vector<16x256xf32>
    %220 = tpu.matmul %195, %219, %cst_196 {dimension_numbers = #tpu.dot_dimension_numbers<[1], [0], [0], [1], [0, 0, 1, 1], [], []>} : vector<16x256xbf16>, vector<256x256xbf16>, vector<16x256xf32> -> vector<16x256xf32>
    %c4_197 = arith.constant 4 : index
    %c0_198 = arith.constant 0 : index
    %c0_199 = arith.constant 0 : index
    %221 = vector.load %arg21[%c4_197, %c0_198, %c0_199] : memref<5x8x16xf32, #tpu.memory_space<vmem>>, vector<1x8x16xf32>
    %222 = vector.shape_cast %221 : vector<1x8x16xf32> to vector<8x16xf32>
    %cst_200 = arith.constant dense<0.000000e+00> : vector<8x256xf32>
    %223 = tpu.matmul %222, %220, %cst_200 {dimension_numbers = #tpu.dot_dimension_numbers<[1], [0], [0], [1], [0, 0, 1, 1], [], []>} : vector<8x16xf32>, vector<16x256xf32>, vector<8x256xf32> -> vector<8x256xf32>
    %224 = arith.addf %218, %223 : vector<8x256xf32>
    %cst_201 = arith.constant dense<0.000000e+00> : vector<256xf32>
    %225 = vector.multi_reduction <add>, %224, %cst_201 [0] : vector<8x256xf32> to vector<256xf32>
    %226 = vector.shape_cast %225 : vector<256xf32> to vector<1x256xf32>
    %227 = arith.mulf %224, %224 : vector<8x256xf32>
    %cst_202 = arith.constant dense<0.000000e+00> : vector<256xf32>
    %228 = vector.multi_reduction <add>, %227, %cst_202 [0] : vector<8x256xf32> to vector<256xf32>
    %229 = vector.shape_cast %228 : vector<256xf32> to vector<1x256xf32>
    %c0_203 = arith.constant 0 : index
    %c0_204 = arith.constant 0 : index
    %230 = vector.load %arg22[%c0_203, %c0_204] : memref<256x128xf32, #tpu.memory_space<vmem>>, vector<256x128xf32>
    %cst_205 = arith.constant dense<0.000000e+00> : vector<1x128xf32>
    %231 = tpu.matmul %226, %230, %cst_205 {dimension_numbers = #tpu.dot_dimension_numbers<[1], [0], [0], [1], [0, 0, 1, 1], [], []>} : vector<1x256xf32>, vector<256x128xf32>, vector<1x128xf32> -> vector<1x128xf32>
    %c0_206 = arith.constant 0 : index
    %c0_207 = arith.constant 0 : index
    %232 = vector.load %arg22[%c0_206, %c0_207] : memref<256x128xf32, #tpu.memory_space<vmem>>, vector<256x128xf32>
    %cst_208 = arith.constant dense<0.000000e+00> : vector<1x128xf32>
    %233 = tpu.matmul %229, %232, %cst_208 {dimension_numbers = #tpu.dot_dimension_numbers<[1], [0], [0], [1], [0, 0, 1, 1], [], []>} : vector<1x256xf32>, vector<256x128xf32>, vector<1x128xf32> -> vector<1x128xf32>
    %cst_209 = arith.constant 3.125000e-02 : f32
    %234 = vector.broadcast %cst_209 : f32 to vector<1x128xf32>
    %235 = arith.mulf %231, %234 : vector<1x128xf32>
    %cst_210 = arith.constant 3.125000e-02 : f32
    %236 = vector.broadcast %cst_210 : f32 to vector<1x128xf32>
    %237 = arith.mulf %233, %236 : vector<1x128xf32>
    %238 = arith.mulf %235, %235 : vector<1x128xf32>
    %239 = arith.subf %237, %238 : vector<1x128xf32>
    %cst_211 = arith.constant 0.000000e+00 : f32
    %240 = vector.broadcast %cst_211 : f32 to vector<1x128xf32>
    %241 = arith.maximumf %239, %240 : vector<1x128xf32>
    %c0_212 = arith.constant 0 : index
    %c0_213 = arith.constant 0 : index
    %242 = vector.load %arg24[%c0_212, %c0_213] : memref<1x128xf32, #tpu.memory_space<vmem>>, vector<1x128xf32>
    %cst_214 = arith.constant 9.99999974E-6 : f32
    %243 = vector.broadcast %cst_214 : f32 to vector<1x128xf32>
    %244 = arith.addf %241, %243 : vector<1x128xf32>
    %245 = math.rsqrt %244 : vector<1x128xf32>
    %246 = arith.mulf %242, %245 : vector<1x128xf32>
    %c0_215 = arith.constant 0 : index
    %c0_216 = arith.constant 0 : index
    %247 = vector.load %arg25[%c0_215, %c0_216] : memref<1x128xf32, #tpu.memory_space<vmem>>, vector<1x128xf32>
    %248 = arith.mulf %235, %246 : vector<1x128xf32>
    %249 = arith.subf %247, %248 : vector<1x128xf32>
    %c0_217 = arith.constant 0 : index
    %c0_218 = arith.constant 0 : index
    %250 = vector.load %arg23[%c0_217, %c0_218] : memref<128x256xf32, #tpu.memory_space<vmem>>, vector<128x256xf32>
    %cst_219 = arith.constant dense<0.000000e+00> : vector<1x256xf32>
    %251 = tpu.matmul %246, %250, %cst_219 {dimension_numbers = #tpu.dot_dimension_numbers<[1], [0], [0], [1], [0, 0, 1, 1], [], []>} : vector<1x128xf32>, vector<128x256xf32>, vector<1x256xf32> -> vector<1x256xf32>
    %c0_220 = arith.constant 0 : index
    %c0_221 = arith.constant 0 : index
    %252 = vector.load %arg23[%c0_220, %c0_221] : memref<128x256xf32, #tpu.memory_space<vmem>>, vector<128x256xf32>
    %cst_222 = arith.constant dense<0.000000e+00> : vector<1x256xf32>
    %253 = tpu.matmul %249, %252, %cst_222 {dimension_numbers = #tpu.dot_dimension_numbers<[1], [0], [0], [1], [0, 0, 1, 1], [], []>} : vector<1x128xf32>, vector<128x256xf32>, vector<1x256xf32> -> vector<1x256xf32>
    %254 = vector.broadcast %251 : vector<1x256xf32> to vector<8x256xf32>
    %255 = arith.mulf %224, %254 : vector<8x256xf32>
    %256 = vector.broadcast %253 : vector<1x256xf32> to vector<8x256xf32>
    %257 = arith.addf %255, %256 : vector<8x256xf32>
    %cst_223 = arith.constant 0.000000e+00 : f32
    %258 = vector.broadcast %cst_223 : f32 to vector<8x256xf32>
    %259 = arith.maximumf %257, %258 : vector<8x256xf32>
    %260 = arith.truncf %259 : vector<8x256xf32> to vector<8x256xbf16>
    %c0_224 = arith.constant 0 : index
    %c0_225 = arith.constant 0 : index
    %261 = vector.load %arg26[%c0_224, %c0_225] : memref<256x512xbf16, #tpu.memory_space<vmem>>, vector<256x128xbf16>
    %cst_226 = arith.constant dense<0.000000e+00> : vector<8x128xf32>
    %262 = tpu.matmul %260, %261, %cst_226 {dimension_numbers = #tpu.dot_dimension_numbers<[1], [0], [0], [1], [0, 0, 1, 1], [], []>} : vector<8x256xbf16>, vector<256x128xbf16>, vector<8x128xf32> -> vector<8x128xf32>
    %c0_227 = arith.constant 0 : index
    %c0_228 = arith.constant 0 : index
    %c0_229 = arith.constant 0 : index
    %263 = vector.load %arg27[%c0_227, %c0_228, %c0_229] : memref<4x2x8xf32, #tpu.memory_space<vmem>>, vector<1x2x8xf32>
    %264 = vector.shape_cast %263 : vector<1x2x8xf32> to vector<2x8xf32>
    %cst_230 = arith.constant dense<0.000000e+00> : vector<2x128xf32>
    %265 = tpu.matmul %264, %262, %cst_230 {dimension_numbers = #tpu.dot_dimension_numbers<[1], [0], [0], [1], [0, 0, 1, 1], [], []>} : vector<2x8xf32>, vector<8x128xf32>, vector<2x128xf32> -> vector<2x128xf32>
    %c0_231 = arith.constant 0 : index
    %c128 = arith.constant 128 : index
    %266 = vector.load %arg26[%c0_231, %c128] : memref<256x512xbf16, #tpu.memory_space<vmem>>, vector<256x128xbf16>
    %cst_232 = arith.constant dense<0.000000e+00> : vector<8x128xf32>
    %267 = tpu.matmul %260, %266, %cst_232 {dimension_numbers = #tpu.dot_dimension_numbers<[1], [0], [0], [1], [0, 0, 1, 1], [], []>} : vector<8x256xbf16>, vector<256x128xbf16>, vector<8x128xf32> -> vector<8x128xf32>
    %c1_233 = arith.constant 1 : index
    %c0_234 = arith.constant 0 : index
    %c0_235 = arith.constant 0 : index
    %268 = vector.load %arg27[%c1_233, %c0_234, %c0_235] : memref<4x2x8xf32, #tpu.memory_space<vmem>>, vector<1x2x8xf32>
    %269 = vector.shape_cast %268 : vector<1x2x8xf32> to vector<2x8xf32>
    %cst_236 = arith.constant dense<0.000000e+00> : vector<2x128xf32>
    %270 = tpu.matmul %269, %267, %cst_236 {dimension_numbers = #tpu.dot_dimension_numbers<[1], [0], [0], [1], [0, 0, 1, 1], [], []>} : vector<2x8xf32>, vector<8x128xf32>, vector<2x128xf32> -> vector<2x128xf32>
    %271 = arith.addf %265, %270 : vector<2x128xf32>
    %c0_237 = arith.constant 0 : index
    %c256_238 = arith.constant 256 : index
    %272 = vector.load %arg26[%c0_237, %c256_238] : memref<256x512xbf16, #tpu.memory_space<vmem>>, vector<256x128xbf16>
    %cst_239 = arith.constant dense<0.000000e+00> : vector<8x128xf32>
    %273 = tpu.matmul %260, %272, %cst_239 {dimension_numbers = #tpu.dot_dimension_numbers<[1], [0], [0], [1], [0, 0, 1, 1], [], []>} : vector<8x256xbf16>, vector<256x128xbf16>, vector<8x128xf32> -> vector<8x128xf32>
    %c2_240 = arith.constant 2 : index
    %c0_241 = arith.constant 0 : index
    %c0_242 = arith.constant 0 : index
    %274 = vector.load %arg27[%c2_240, %c0_241, %c0_242] : memref<4x2x8xf32, #tpu.memory_space<vmem>>, vector<1x2x8xf32>
    %275 = vector.shape_cast %274 : vector<1x2x8xf32> to vector<2x8xf32>
    %cst_243 = arith.constant dense<0.000000e+00> : vector<2x128xf32>
    %276 = tpu.matmul %275, %273, %cst_243 {dimension_numbers = #tpu.dot_dimension_numbers<[1], [0], [0], [1], [0, 0, 1, 1], [], []>} : vector<2x8xf32>, vector<8x128xf32>, vector<2x128xf32> -> vector<2x128xf32>
    %277 = arith.addf %271, %276 : vector<2x128xf32>
    %c0_244 = arith.constant 0 : index
    %c384 = arith.constant 384 : index
    %278 = vector.load %arg26[%c0_244, %c384] : memref<256x512xbf16, #tpu.memory_space<vmem>>, vector<256x128xbf16>
    %cst_245 = arith.constant dense<0.000000e+00> : vector<8x128xf32>
    %279 = tpu.matmul %260, %278, %cst_245 {dimension_numbers = #tpu.dot_dimension_numbers<[1], [0], [0], [1], [0, 0, 1, 1], [], []>} : vector<8x256xbf16>, vector<256x128xbf16>, vector<8x128xf32> -> vector<8x128xf32>
    %c3_246 = arith.constant 3 : index
    %c0_247 = arith.constant 0 : index
    %c0_248 = arith.constant 0 : index
    %280 = vector.load %arg27[%c3_246, %c0_247, %c0_248] : memref<4x2x8xf32, #tpu.memory_space<vmem>>, vector<1x2x8xf32>
    %281 = vector.shape_cast %280 : vector<1x2x8xf32> to vector<2x8xf32>
    %cst_249 = arith.constant dense<0.000000e+00> : vector<2x128xf32>
    %282 = tpu.matmul %281, %279, %cst_249 {dimension_numbers = #tpu.dot_dimension_numbers<[1], [0], [0], [1], [0, 0, 1, 1], [], []>} : vector<2x8xf32>, vector<8x128xf32>, vector<2x128xf32> -> vector<2x128xf32>
    %283 = arith.addf %277, %282 : vector<2x128xf32>
    %c0_250 = arith.constant 0 : index
    %c0_251 = arith.constant 0 : index
    %284 = vector.load %arg28[%c0_250, %c0_251] : memref<1x128xf32, #tpu.memory_space<vmem>>, vector<1x128xf32>
    %285 = vector.broadcast %284 : vector<1x128xf32> to vector<2x128xf32>
    %286 = arith.addf %283, %285 : vector<2x128xf32>
    %287 = tpu.iota {dimensions = array<i32: 1>} : vector<2x128xi32>
    %c32_i32 = arith.constant 32 : i32
    %288 = vector.broadcast %c32_i32 : i32 to vector<2x128xi32>
    %289 = arith.cmpi sge, %287, %288 : vector<2x128xi32>
    %cst_252 = arith.constant 0.000000e+00 : f32
    %290 = vector.broadcast %cst_252 : f32 to vector<2x128xf32>
    %291 = arith.maximumf %286, %290 : vector<2x128xf32>
    %292 = vector.broadcast %cst_252 : f32 to vector<2x128xf32>
    %293 = arith.subf %286, %292 : vector<2x128xf32>
    %294 = arith.cmpf one, %293, %293 : vector<2x128xf32>
    %295 = vector.broadcast %cst_252 : f32 to vector<2x128xf32>
    %296 = arith.addf %286, %295 : vector<2x128xf32>
    %297 = math.absf %293 : vector<2x128xf32>
    %cst_253 = arith.constant 0.000000e+00 : f32
    %298 = vector.broadcast %cst_253 : f32 to vector<2x128xf32>
    %299 = arith.subf %298, %297 : vector<2x128xf32>
    %300 = math.exp %299 : vector<2x128xf32>
    %301 = math.log1p %300 : vector<2x128xf32>
    %302 = arith.addf %291, %301 : vector<2x128xf32>
    %303 = arith.select %294, %296, %302 : vector<2x128xi1>, vector<2x128xf32>
    %cst_254 = arith.constant 9.99999997E-7 : f32
    %304 = vector.broadcast %cst_254 : f32 to vector<2x128xf32>
    %305 = arith.addf %303, %304 : vector<2x128xf32>
    %306 = arith.select %289, %305, %286 : vector<2x128xi1>, vector<2x128xf32>
    %c0_255 = arith.constant 0 : index
    %c0_256 = arith.constant 0 : index
    %307 = vector.load %arg29[%c0_255, %c0_256] : memref<2x128xf32, #tpu.memory_space<vmem>>, vector<2x128xf32>
    tpu.vector_store %arg29[%c0_255, %c0_256], %306 {strides = array<i32>} : memref<2x128xf32, #tpu.memory_space<vmem>>, vector<2x128xf32>,
    return
  }
  func.func @transform_0(%arg0: i32) -> (i32, i32) {
    %c0_i32 = arith.constant 0 : i32
    %c0_i32_0 = arith.constant 0 : i32
    %c0_i32_1 = arith.constant 0 : i32
    return %c0_i32, %c0_i32_0 : i32, i32
  }
  func.func @transform_1(%arg0: i32) -> (i32, i32) {
    %c0_i32 = arith.constant 0 : i32
    %c0_i32_0 = arith.constant 0 : i32
    %c0_i32_1 = arith.constant 0 : i32
    return %c0_i32, %c0_i32_0 : i32, i32
  }
  func.func @transform_2(%arg0: i32) -> (i32, i32, i32) {
    %c0_i32 = arith.constant 0 : i32
    %c0_i32_0 = arith.constant 0 : i32
    %c0_i32_1 = arith.constant 0 : i32
    %c0_i32_2 = arith.constant 0 : i32
    return %c0_i32, %c0_i32_0, %c0_i32_1 : i32, i32, i32
  }
  func.func @transform_3(%arg0: i32) -> (i32, i32) {
    %c0_i32 = arith.constant 0 : i32
    %c0_i32_0 = arith.constant 0 : i32
    %c0_i32_1 = arith.constant 0 : i32
    return %c0_i32, %c0_i32_0 : i32, i32
  }
  func.func @transform_4(%arg0: i32) -> (i32, i32) {
    %c0_i32 = arith.constant 0 : i32
    %c0_i32_0 = arith.constant 0 : i32
    %c0_i32_1 = arith.constant 0 : i32
    return %c0_i32, %c0_i32_0 : i32, i32
  }
  func.func @transform_5(%arg0: i32) -> (i32, i32) {
    %c0_i32 = arith.constant 0 : i32
    %c0_i32_0 = arith.constant 0 : i32
    %c0_i32_1 = arith.constant 0 : i32
    return %c0_i32, %c0_i32_0 : i32, i32
  }
  func.func @transform_6(%arg0: i32) -> (i32, i32) {
    %c0_i32 = arith.constant 0 : i32
    %c0_i32_0 = arith.constant 0 : i32
    %c0_i32_1 = arith.constant 0 : i32
    return %c0_i32, %c0_i32_0 : i32, i32
  }
  func.func @transform_7(%arg0: i32) -> (i32, i32) {
    %c0_i32 = arith.constant 0 : i32
    %c0_i32_0 = arith.constant 0 : i32
    %c0_i32_1 = arith.constant 0 : i32
    return %c0_i32, %c0_i32_0 : i32, i32
  }
  func.func @transform_8(%arg0: i32) -> (i32, i32, i32) {
    %c0_i32 = arith.constant 0 : i32
    %c0_i32_0 = arith.constant 0 : i32
    %c0_i32_1 = arith.constant 0 : i32
    %c0_i32_2 = arith.constant 0 : i32
    return %c0_i32, %c0_i32_0, %c0_i32_1 : i32, i32, i32
  }
  func.func @transform_9(%arg0: i32) -> (i32, i32) {
    %c0_i32 = arith.constant 0 : i32
    %c0_i32_0 = arith.constant 0 : i32
    %c0_i32_1 = arith.constant 0 : i32
    return %c0_i32, %c0_i32_0 : i32, i32
  }
  func.func @transform_10(%arg0: i32) -> (i32, i32) {
    %c0_i32 = arith.constant 0 : i32
    %c0_i32_0 = arith.constant 0 : i32
    %c0_i32_1 = arith.constant 0 : i32
    return %c0_i32, %c0_i32_0 : i32, i32
  }
  func.func @transform_11(%arg0: i32) -> (i32, i32) {
    %c0_i32 = arith.constant 0 : i32
    %c0_i32_0 = arith.constant 0 : i32
    %c0_i32_1 = arith.constant 0 : i32
    return %c0_i32, %c0_i32_0 : i32, i32
  }
  func.func @transform_12(%arg0: i32) -> (i32, i32) {
    %c0_i32 = arith.constant 0 : i32
    %c0_i32_0 = arith.constant 0 : i32
    %c0_i32_1 = arith.constant 0 : i32
    return %c0_i32, %c0_i32_0 : i32, i32
  }
  func.func @transform_13(%arg0: i32) -> (i32, i32) {
    %c0_i32 = arith.constant 0 : i32
    %c0_i32_0 = arith.constant 0 : i32
    %c0_i32_1 = arith.constant 0 : i32
    return %c0_i32, %c0_i32_0 : i32, i32
  }
  func.func @transform_14(%arg0: i32) -> (i32, i32, i32) {
    %c0_i32 = arith.constant 0 : i32
    %c0_i32_0 = arith.constant 0 : i32
    %c0_i32_1 = arith.constant 0 : i32
    %c0_i32_2 = arith.constant 0 : i32
    return %c0_i32, %c0_i32_0, %c0_i32_1 : i32, i32, i32
  }
  func.func @transform_15(%arg0: i32) -> (i32, i32) {
    %c0_i32 = arith.constant 0 : i32
    %c0_i32_0 = arith.constant 0 : i32
    %c0_i32_1 = arith.constant 0 : i32
    return %c0_i32, %c0_i32_0 : i32, i32
  }
  func.func @transform_16(%arg0: i32) -> (i32, i32) {
    %c0_i32 = arith.constant 0 : i32
    %c0_i32_0 = arith.constant 0 : i32
    %c0_i32_1 = arith.constant 0 : i32
    return %c0_i32, %c0_i32_0 : i32, i32
  }
  func.func @transform_17(%arg0: i32) -> (i32, i32) {
    %c0_i32 = arith.constant 0 : i32
    %c0_i32_0 = arith.constant 0 : i32
    %c0_i32_1 = arith.constant 0 : i32
    return %c0_i32, %c0_i32_0 : i32, i32
  }
  func.func @transform_18(%arg0: i32) -> (i32, i32) {
    %c0_i32 = arith.constant 0 : i32
    %c0_i32_0 = arith.constant 0 : i32
    %c0_i32_1 = arith.constant 0 : i32
    return %c0_i32, %c0_i32_0 : i32, i32
  }
  func.func @transform_19(%arg0: i32) -> (i32, i32) {
    %c0_i32 = arith.constant 0 : i32
    %c0_i32_0 = arith.constant 0 : i32
    %c0_i32_1 = arith.constant 0 : i32
    return %c0_i32, %c0_i32_0 : i32, i32
  }
  func.func @transform_20(%arg0: i32) -> (i32, i32, i32) {
    %c0_i32 = arith.constant 0 : i32
    %c0_i32_0 = arith.constant 0 : i32
    %c0_i32_1 = arith.constant 0 : i32
    %c0_i32_2 = arith.constant 0 : i32
    return %c0_i32, %c0_i32_0, %c0_i32_1 : i32, i32, i32
  }
  func.func @transform_21(%arg0: i32) -> (i32, i32) {
    %c0_i32 = arith.constant 0 : i32
    %c0_i32_0 = arith.constant 0 : i32
    %c0_i32_1 = arith.constant 0 : i32
    return %c0_i32, %c0_i32_0 : i32, i32
  }
  func.func @transform_22(%arg0: i32) -> (i32, i32) {
    %c0_i32 = arith.constant 0 : i32
    %c0_i32_0 = arith.constant 0 : i32
    %c0_i32_1 = arith.constant 0 : i32
    return %c0_i32, %c0_i32_0 : i32, i32
  }
  func.func @transform_23(%arg0: i32) -> (i32, i32) {
    %c0_i32 = arith.constant 0 : i32
    %c0_i32_0 = arith.constant 0 : i32
    %c0_i32_1 = arith.constant 0 : i32
    return %c0_i32, %c0_i32_0 : i32, i32
  }
  func.func @transform_24(%arg0: i32) -> (i32, i32) {
    %c0_i32 = arith.constant 0 : i32
    %c0_i32_0 = arith.constant 0 : i32
    %c0_i32_1 = arith.constant 0 : i32
    return %c0_i32, %c0_i32_0 : i32, i32
  }
  func.func @transform_25(%arg0: i32) -> (i32, i32) {
    %c0_i32 = arith.constant 0 : i32
    %c0_i32_0 = arith.constant 0 : i32
    %c0_i32_1 = arith.constant 0 : i32
    return %c0_i32, %c0_i32_0 : i32, i32
  }
  func.func @transform_26(%arg0: i32) -> (i32, i32, i32) {
    %c0_i32 = arith.constant 0 : i32
    %c0_i32_0 = arith.constant 0 : i32
    %c0_i32_1 = arith.constant 0 : i32
    %c0_i32_2 = arith.constant 0 : i32
    return %c0_i32, %c0_i32_0, %c0_i32_1 : i32, i32, i32
  }
  func.func @transform_27(%arg0: i32) -> (i32, i32) {
    %c0_i32 = arith.constant 0 : i32
    %c0_i32_0 = arith.constant 0 : i32
    %c0_i32_1 = arith.constant 0 : i32
    return %c0_i32, %c0_i32_0 : i32, i32
  }
  func.func @transform_28(%arg0: i32) -> (i32, i32) {
    %c0_i32 = arith.constant 0 : i32
    %c0_i32_0 = arith.constant 0 : i32
    %c0_i32_1 = arith.constant 0 : i32
    return %c0_i32, %c0_i32_0 : i32, i32
  }
}

</mosaic_0001>

<llo_original>
// kernel: encoder_forward.1
$region0: #{encoder_forward.1}
  #allocation0 [shape = 'u32[]', space=smem, size = 0x4, offset = 0x4, fixed_abs, tag = 'smem constant byte address 0x4 - core index']
  #allocation1 [shape = 'u32[144,128]{1,0:T(1,128)}', space=vmem, size = 0x12000, scoped, tag = 'internal scratch']
  %s0 = inlined_call_operand.vmem [shape: bf16[128,192], index: 0, kind: input, shape index: {}]
  %s1 = inlined_call_operand.hbm [shape: bf16[192,1280], index: 1, kind: input, shape index: {}]
  %s2 = inlined_call_operand.hbm [shape: f32[5,64,128], index: 2, kind: input, shape index: {}]
  %s3 = inlined_call_operand.vmem [shape: f32[256,128], index: 3, kind: input, shape index: {}]
  %s4 = inlined_call_operand.hbm [shape: f32[128,256], index: 4, kind: input, shape index: {}]
  %s5 = inlined_call_operand.vmem [shape: f32[1,128], index: 5, kind: input, shape index: {}]
  %s6 = inlined_call_operand.vmem [shape: f32[1,128], index: 6, kind: input, shape index: {}]
  %s7 = inlined_call_operand.vmem [shape: bf16[256,1280], index: 7, kind: input, shape index: {}]
  %s8 = inlined_call_operand.hbm [shape: f32[5,32,64], index: 8, kind: input, shape index: {}]
  %s9 = inlined_call_operand.hbm [shape: f32[256,128], index: 9, kind: input, shape index: {}]
  %s10 = inlined_call_operand.hbm [shape: f32[128,256], index: 10, kind: input, shape index: {}]
  %s11 = inlined_call_operand.vmem [shape: f32[1,128], index: 11, kind: input, shape index: {}]
  %s12 = inlined_call_operand.vmem [shape: f32[1,128], index: 12, kind: input, shape index: {}]
  %s13 = inlined_call_operand.hbm [shape: bf16[256,1280], index: 13, kind: input, shape index: {}]
  %s14 = inlined_call_operand.hbm [shape: f32[5,16,32], index: 14, kind: input, shape index: {}]
  %s15 = inlined_call_operand.hbm [shape: f32[256,128], index: 15, kind: input, shape index: {}]
  %s16 = inlined_call_operand.hbm [shape: f32[128,256], index: 16, kind: input, shape index: {}]
  %s17 = inlined_call_operand.vmem [shape: f32[1,128], index: 17, kind: input, shape index: {}]
  %s18 = inlined_call_operand.vmem [shape: f32[1,128], index: 18, kind: input, shape index: {}]
  %s19 = inlined_call_operand.hbm [shape: bf16[256,1280], index: 19, kind: input, shape index: {}]
  %s20 = inlined_call_operand.hbm [shape: f32[5,8,16], index: 20, kind: input, shape index: {}]
  %s21 = inlined_call_operand.hbm [shape: f32[256,128], index: 21, kind: input, shape index: {}]
  %s22 = inlined_call_operand.hbm [shape: f32[128,256], index: 22, kind: input, shape index: {}]
  %s23 = inlined_call_operand.vmem [shape: f32[1,128], index: 23, kind: input, shape index: {}]
  %s24 = inlined_call_operand.vmem [shape: f32[1,128], index: 24, kind: input, shape index: {}]
  %s25 = inlined_call_operand.hbm [shape: bf16[256,512], index: 25, kind: input, shape index: {}]
  %s26 = inlined_call_operand.vmem [shape: f32[4,2,8], index: 26, kind: input, shape index: {}]
  %s27 = inlined_call_operand.vmem [shape: f32[1,128], index: 27, kind: input, shape index: {}]
  %s28 = inlined_call_operand.vmem [shape: f32[2,128], index: 28, kind: output, shape index: {}]
  %s29 = sld [smem:[#allocation0]]
  $region182: #{encoder_forward.1} parent=0
    _
  %s31 = ssub.s32 1, %s29
  %s32 = scalar_select 0, %s31, %s29
  $region1: #{encoder_forward.1} parent=0
    #allocation2 [shape = 'u8[491520]{0}', space=vmem, size = 0x78000, scoped, tag = 'input window, operand 1, single buffered']
    #allocation3 [shape = 's32[1]{0}', space=sflag, size = 0x4, scoped, tag = 'scoped memory for encoder_forward.1']
    #allocation4 [shape = 'u8[163840]{0}', space=vmem, size = 0x28000, scoped, tag = 'input window, operand 2, single buffered']
    #allocation5 [shape = 's32[1]{0}', space=sflag, size = 0x4, scoped, tag = 'scoped memory for encoder_forward.1']
    #allocation6 [shape = 'u8[131072]{0}', space=vmem, size = 0x20000, scoped, tag = 'input window, operand 4, single buffered']
    #allocation7 [shape = 'u8[81920]{0}', space=vmem, size = 0x14000, scoped, tag = 'input window, operand 8, single buffered']
    #allocation8 [shape = 's32[1]{0}', space=sflag, size = 0x4, scoped, tag = 'scoped memory for encoder_forward.1']
    #allocation9 [shape = 'u8[131072]{0}', space=vmem, size = 0x20000, scoped, tag = 'input window, operand 9, single buffered']
    #allocation10 [shape = 'u8[131072]{0}', space=vmem, size = 0x20000, scoped, tag = 'input window, operand 10, single buffered']
    #allocation11 [shape = 's32[1]{0}', space=sflag, size = 0x4, scoped, tag = 'scoped memory for encoder_forward.1']
    #allocation12 [shape = 'u8[655360]{0}', space=vmem, size = 0xa0000, scoped, tag = 'input window, operand 13, single buffered']
    #allocation13 [shape = 'u8[40960]{0}', space=vmem, size = 0xa000, scoped, tag = 'input window, operand 14, single buffered']
    #allocation14 [shape = 's32[1]{0}', space=sflag, size = 0x4, scoped, tag = 'scoped memory for encoder_forward.1']
    #allocation15 [shape = 'u8[131072]{0}', space=vmem, size = 0x20000, scoped, tag = 'input window, operand 15, single buffered']
    #allocation16 [shape = 'u8[131072]{0}', space=vmem, size = 0x20000, scoped, tag = 'input window, operand 16, single buffered']
    #allocation17 [shape = 's32[1]{0}', space=sflag, size = 0x4, scoped, tag = 'scoped memory for encoder_forward.1']
    #allocation18 [shape = 'u8[655360]{0}', space=vmem, size = 0xa0000, scoped, tag = 'input window, operand 19, single buffered']
    #allocation19 [shape = 'u8[20480]{0}', space=vmem, size = 0x5000, scoped, tag = 'input window, operand 20, single buffered']
    #allocation20 [shape = 's32[1]{0}', space=sflag, size = 0x4, scoped, tag = 'scoped memory for encoder_forward.1']
    #allocation21 [shape = 'u8[131072]{0}', space=vmem, size = 0x20000, scoped, tag = 'input window, operand 21, single buffered']
    #allocation22 [shape = 'u8[131072]{0}', space=vmem, size = 0x20000, scoped, tag = 'input window, operand 22, single buffered']
    #allocation23 [shape = 's32[1]{0}', space=sflag, size = 0x4, scoped, tag = 'scoped memory for encoder_forward.1']
    #allocation24 [shape = 'u8[262144]{0}', space=vmem, size = 0x40000, scoped, tag = 'input window, operand 25, single buffered']
    %33 = vsyncpa [#allocation3], 0
    %34 = vsyncpa [#allocation5], 0
    %35 = vsyncpa [#allocation8], 0
    %36 = vsyncpa [#allocation11], 0
    %37 = vsyncpa [#allocation14], 0
    %38 = vsyncpa [#allocation17], 0
    %39 = vsyncpa [#allocation20], 0
    %40 = vsyncpa [#allocation23], 0
    // Predicated region
    $region2: #{encoder_forward.1} parent=1 // pred_check
      _
    $region3: #{encoder_forward.1} parent=1 // pred_check_branch
      %42 = sbr.rel (0) target = $region5
    $region4: #{encoder_forward.1} parent=1 // pred_region
      _
    $region5: #{encoder_forward.1} parent=1 // pred_fallthru
      _
    // Predicated region
    $region6: #{encoder_forward.1} parent=1 // pred_check
      _
    $region7: #{encoder_forward.1} parent=1 // pred_check_branch
      %44 = sbr.rel (0) target = $region9
    $region8: #{encoder_forward.1} parent=1 // pred_region
      %s46 = ssub.s32 15360, 15360
      %47 = vsyncadd [#allocation3], %s46
      %s48 = sshll.u32 [#allocation2], 4
      %s49 = int_to_ptr.vmem [resolvable:$true] %s48
      %54 = dma.hbm_to_vmem [thread:$0]  %s1, 15360, %s49, [#allocation3], 640, 640, 40
    $region9: #{encoder_forward.1} parent=1 // pred_fallthru
      _
    // Predicated region
    $region10: #{encoder_forward.1} parent=1 // pred_check
      _
    $region11: #{encoder_forward.1} parent=1 // pred_check_branch
      %56 = sbr.rel (0) target = $region13
    $region12: #{encoder_forward.1} parent=1 // pred_region
      %s58 = ssub.s32 5120, 5120
      %59 = vsyncadd [#allocation5], %s58
      %s60 = sshll.u32 [#allocation4], 4
      %s61 = int_to_ptr.vmem [resolvable:$true] %s60
      %66 = dma.hbm_to_vmem [thread:$0]  %s2, 5120, %s61, [#allocation5], 128, 128, 8
    $region13: #{encoder_forward.1} parent=1 // pred_fallthru
      _
    // Predicated region
    $region14: #{encoder_forward.1} parent=1 // pred_check
      _
    $region15: #{encoder_forward.1} parent=1 // pred_check_branch
      %68 = sbr.rel (0) target = $region17
    $region16: #{encoder_forward.1} parent=1 // pred_region
      _
    $region17: #{encoder_forward.1} parent=1 // pred_fallthru
      _
    // Predicated region
    $region18: #{encoder_forward.1} parent=1 // pred_check
      _
    $region19: #{encoder_forward.1} parent=1 // pred_check_branch
      %70 = sbr.rel (0) target = $region21
    $region20: #{encoder_forward.1} parent=1 // pred_region
      %s72 = ssub.s32 4096, 4096
      %73 = vsyncadd [#allocation5], %s72
      %s74 = sshll.u32 [#allocation6], 4
      %s75 = int_to_ptr.vmem [resolvable:$true] %s74
      %80 = dma.hbm_to_vmem [thread:$0]  %s4, 4096, %s75, [#allocation5], 256, 256, 16
    $region21: #{encoder_forward.1} parent=1 // pred_fallthru
      _
    // Predicated region
    $region22: #{encoder_forward.1} parent=1 // pred_check
      _
    $region23: #{encoder_forward.1} parent=1 // pred_check_branch
      %82 = sbr.rel (0) target = $region25
    $region24: #{encoder_forward.1} parent=1 // pred_region
      _
    $region25: #{encoder_forward.1} parent=1 // pred_fallthru
      _
    // Predicated region
    $region26: #{encoder_forward.1} parent=1 // pred_check
      _
    $region27: #{encoder_forward.1} parent=1 // pred_check_branch
      %84 = sbr.rel (0) target = $region29
    $region28: #{encoder_forward.1} parent=1 // pred_region
      _
    $region29: #{encoder_forward.1} parent=1 // pred_fallthru
      _
    // Predicated region
    $region30: #{encoder_forward.1} parent=1 // pred_check
      _
    $region31: #{encoder_forward.1} parent=1 // pred_check_branch
      %86 = sbr.rel (0) target = $region33
    $region32: #{encoder_forward.1} parent=1 // pred_region
      _
    $region33: #{encoder_forward.1} parent=1 // pred_fallthru
      _
    // Predicated region
    $region34: #{encoder_forward.1} parent=1 // pred_check
      _
    $region35: #{encoder_forward.1} parent=1 // pred_check_branch
      %88 = sbr.rel (0) target = $region37
    $region36: #{encoder_forward.1} parent=1 // pred_region
      %s90 = ssub.s32 2560, 2560
      %91 = vsyncadd [#allocation8], %s90
      %s92 = sshll.u32 [#allocation7], 4
      %s93 = int_to_ptr.vmem [resolvable:$true] %s92
      %98 = dma.hbm_to_vmem [thread:$0]  %s8, 2560, %s93, [#allocation8], 128, 128, 8
    $region37: #{encoder_forward.1} parent=1 // pred_fallthru
      _
    // Predicated region
    $region38: #{encoder_forward.1} parent=1 // pred_check
      _
    $region39: #{encoder_forward.1} parent=1 // pred_check_branch
      %100 = sbr.rel (0) target = $region41
    $region40: #{encoder_forward.1} parent=1 // pred_region
      %s102 = ssub.s32 4096, 4096
      %103 = vsyncadd [#allocation8], %s102
      %s104 = sshll.u32 [#allocation9], 4
      %s105 = int_to_ptr.vmem [resolvable:$true] %s104
      %110 = dma.hbm_to_vmem [thread:$0]  %s9, 4096, %s105, [#allocation8], 128, 128, 8
    $region41: #{encoder_forward.1} parent=1 // pred_fallthru
      _
    // Predicated region
    $region42: #{encoder_forward.1} parent=1 // pred_check
      _
    $region43: #{encoder_forward.1} parent=1 // pred_check_branch
      %112 = sbr.rel (0) target = $region45
    $region44: #{encoder_forward.1} parent=1 // pred_region
      %s114 = ssub.s32 4096, 4096
      %115 = vsyncadd [#allocation11], %s114
      %s116 = sshll.u32 [#allocation10], 4
      %s117 = int_to_ptr.vmem [resolvable:$true] %s116
      %122 = dma.hbm_to_vmem [thread:$0]  %s10, 4096, %s117, [#allocation11], 256, 256, 16
    $region45: #{encoder_forward.1} parent=1 // pred_fallthru
      _
    // Predicated region
    $region46: #{encoder_forward.1} parent=1 // pred_check
      _
    $region47: #{encoder_forward.1} parent=1 // pred_check_branch
      %124 = sbr.rel (0) target = $region49
    $region48: #{encoder_forward.1} parent=1 // pred_region
      _
    $region49: #{encoder_forward.1} parent=1 // pred_fallthru
      _
    // Predicated region
    $region50: #{encoder_forward.1} parent=1 // pred_check
      _
    $region51: #{encoder_forward.1} parent=1 // pred_check_branch
      %126 = sbr.rel (0) target = $region53
    $region52: #{encoder_forward.1} parent=1 // pred_region
      _
    $region53: #{encoder_forward.1} parent=1 // pred_fallthru
      _
    // Predicated region
    $region54: #{encoder_forward.1} parent=1 // pred_check
      _
    $region55: #{encoder_forward.1} parent=1 // pred_check_branch
      %128 = sbr.rel (0) target = $region57
    $region56: #{encoder_forward.1} parent=1 // pred_region
      %s130 = ssub.s32 20480, 20480
      %131 = vsyncadd [#allocation11], %s130
      %s132 = sshll.u32 [#allocation12], 4
      %s133 = int_to_ptr.vmem [resolvable:$true] %s132
      %138 = dma.hbm_to_vmem [thread:$0]  %s13, 20480, %s133, [#allocation11], 640, 640, 40
    $region57: #{encoder_forward.1} parent=1 // pred_fallthru
      _
    // Predicated region
    $region58: #{encoder_forward.1} parent=1 // pred_check
      _
    $region59: #{encoder_forward.1} parent=1 // pred_check_branch
      %140 = sbr.rel (0) target = $region61
    $region60: #{encoder_forward.1} parent=1 // pred_region
      %s142 = ssub.s32 1280, 1280
      %143 = vsyncadd [#allocation14], %s142
      %s144 = sshll.u32 [#allocation13], 4
      %s145 = int_to_ptr.vmem [resolvable:$true] %s144
      %150 = dma.hbm_to_vmem [thread:$0]  %s14, 1280, %s145, [#allocation14], 128, 128, 8
    $region61: #{encoder_forward.1} parent=1 // pred_fallthru
      _
    // Predicated region
    $region62: #{encoder_forward.1} parent=1 // pred_check
      _
    $region63: #{encoder_forward.1} parent=1 // pred_check_branch
      %152 = sbr.rel (0) target = $region65
    $region64: #{encoder_forward.1} parent=1 // pred_region
      %s154 = ssub.s32 4096, 4096
      %155 = vsyncadd [#allocation14], %s154
      %s156 = sshll.u32 [#allocation15], 4
      %s157 = int_to_ptr.vmem [resolvable:$true] %s156
      %162 = dma.hbm_to_vmem [thread:$0]  %s15, 4096, %s157, [#allocation14], 128, 128, 8
    $region65: #{encoder_forward.1} parent=1 // pred_fallthru
      _
    // Predicated region
    $region66: #{encoder_forward.1} parent=1 // pred_check
      _
    $region67: #{encoder_forward.1} parent=1 // pred_check_branch
      %164 = sbr.rel (0) target = $region69
    $region68: #{encoder_forward.1} parent=1 // pred_region
      %s166 = ssub.s32 4096, 4096
      %167 = vsyncadd [#allocation17], %s166
      %s168 = sshll.u32 [#allocation16], 4
      %s169 = int_to_ptr.vmem [resolvable:$true] %s168
      %174 = dma.hbm_to_vmem [thread:$0]  %s16, 4096, %s169, [#allocation17], 256, 256, 16
    $region69: #{encoder_forward.1} parent=1 // pred_fallthru
      _
    // Predicated region
    $region70: #{encoder_forward.1} parent=1 // pred_check
      _
    $region71: #{encoder_forward.1} parent=1 // pred_check_branch
      %176 = sbr.rel (0) target = $region73
    $region72: #{encoder_forward.1} parent=1 // pred_region
      _
    $region73: #{encoder_forward.1} parent=1 // pred_fallthru
      _
    // Predicated region
    $region74: #{encoder_forward.1} parent=1 // pred_check
      _
    $region75: #{encoder_forward.1} parent=1 // pred_check_branch
      %178 = sbr.rel (0) target = $region77
    $region76: #{encoder_forward.1} parent=1 // pred_region
      _
    $region77: #{encoder_forward.1} parent=1 // pred_fallthru
      _
    // Predicated region
    $region78: #{encoder_forward.1} parent=1 // pred_check
      _
    $region79: #{encoder_forward.1} parent=1 // pred_check_branch
      %180 = sbr.rel (0) target = $region81
    $region80: #{encoder_forward.1} parent=1 // pred_region
      %s182 = ssub.s32 20480, 20480
      %183 = vsyncadd [#allocation17], %s182
      %s184 = sshll.u32 [#allocation18], 4
      %s185 = int_to_ptr.vmem [resolvable:$true] %s184
      %190 = dma.hbm_to_vmem [thread:$0]  %s19, 20480, %s185, [#allocation17], 640, 640, 40
    $region81: #{encoder_forward.1} parent=1 // pred_fallthru
      _
    // Predicated region
    $region82: #{encoder_forward.1} parent=1 // pred_check
      _
    $region83: #{encoder_forward.1} parent=1 // pred_check_branch
      %192 = sbr.rel (0) target = $region85
    $region84: #{encoder_forward.1} parent=1 // pred_region
      %s194 = ssub.s32 640, 640
      %195 = vsyncadd [#allocation20], %s194
      %s196 = sshll.u32 [#allocation19], 4
      %s197 = int_to_ptr.vmem [resolvable:$true] %s196
      %202 = dma.hbm_to_vmem [thread:$0]  %s20, 640, %s197, [#allocation20], 128, 128, 8
    $region85: #{encoder_forward.1} parent=1 // pred_fallthru
      _
    // Predicated region
    $region86: #{encoder_forward.1} parent=1 // pred_check
      _
    $region87: #{encoder_forward.1} parent=1 // pred_check_branch
      %204 = sbr.rel (0) target = $region89
    $region88: #{encoder_forward.1} parent=1 // pred_region
      %s206 = ssub.s32 4096, 4096
      %207 = vsyncadd [#allocation20], %s206
      %s208 = sshll.u32 [#allocation21], 4
      %s209 = int_to_ptr.vmem [resolvable:$true] %s208
      %214 = dma.hbm_to_vmem [thread:$0]  %s21, 4096, %s209, [#allocation20], 128, 128, 8
    $region89: #{encoder_forward.1} parent=1 // pred_fallthru
      _
    // Predicated region
    $region90: #{encoder_forward.1} parent=1 // pred_check
      _
    $region91: #{encoder_forward.1} parent=1 // pred_check_branch
      %216 = sbr.rel (0) target = $region93
    $region92: #{encoder_forward.1} parent=1 // pred_region
      %s218 = ssub.s32 4096, 4096
      %219 = vsyncadd [#allocation23], %s218
      %s220 = sshll.u32 [#allocation22], 4
      %s221 = int_to_ptr.vmem [resolvable:$true] %s220
      %226 = dma.hbm_to_vmem [thread:$0]  %s22, 4096, %s221, [#allocation23], 256, 256, 16
    $region93: #{encoder_forward.1} parent=1 // pred_fallthru
      _
    // Predicated region
    $region94: #{encoder_forward.1} parent=1 // pred_check
      _
    $region95: #{encoder_forward.1} parent=1 // pred_check_branch
      %228 = sbr.rel (0) target = $region97
    $region96: #{encoder_forward.1} parent=1 // pred_region
      _
    $region97: #{encoder_forward.1} parent=1 // pred_fallthru
      _
    // Predicated region
    $region98: #{encoder_forward.1} parent=1 // pred_check
      _
    $region99: #{encoder_forward.1} parent=1 // pred_check_branch
      %230 = sbr.rel (0) target = $region101
    $region100: #{encoder_forward.1} parent=1 // pred_region
      _
    $region101: #{encoder_forward.1} parent=1 // pred_fallthru
      _
    // Predicated region
    $region102: #{encoder_forward.1} parent=1 // pred_check
      _
    $region103: #{encoder_forward.1} parent=1 // pred_check_branch
      %232 = sbr.rel (0) target = $region105
    $region104: #{encoder_forward.1} parent=1 // pred_region
      %s234 = ssub.s32 8192, 8192
      %235 = vsyncadd [#allocation23], %s234
      %s236 = sshll.u32 [#allocation24], 4
      %s237 = int_to_ptr.vmem [resolvable:$true] %s236
      %242 = dma.hbm_to_vmem [thread:$0]  %s25, 8192, %s237, [#allocation23], 256, 256, 16
    $region105: #{encoder_forward.1} parent=1 // pred_fallthru
      _
    // Predicated region
    $region106: #{encoder_forward.1} parent=1 // pred_check
      _
    $region107: #{encoder_forward.1} parent=1 // pred_check_branch
      %244 = sbr.rel (0) target = $region109
    $region108: #{encoder_forward.1} parent=1 // pred_region
      _
    $region109: #{encoder_forward.1} parent=1 // pred_fallthru
      _
    // Predicated region
    $region110: #{encoder_forward.1} parent=1 // pred_check
      _
    $region111: #{encoder_forward.1} parent=1 // pred_check_branch
      %246 = sbr.rel (0) target = $region113
    $region112: #{encoder_forward.1} parent=1 // pred_region
      _
    $region113: #{encoder_forward.1} parent=1 // pred_fallthru
      _
    // Predicated region
    $region114: #{encoder_forward.1} parent=1 // pred_check
      _
    $region115: #{encoder_forward.1} parent=1 // pred_check_branch
      %248 = sbr.rel (0) target = $region117
    $region116: #{encoder_forward.1} parent=1 // pred_region
      %249 = dma.done [#allocation3], 15360
    $region117: #{encoder_forward.1} parent=1 // pred_fallthru
      _
    // Predicated region
    $region118: #{encoder_forward.1} parent=1 // pred_check
      _
    $region119: #{encoder_forward.1} parent=1 // pred_check_branch
      %251 = sbr.rel (0) target = $region121
    $region120: #{encoder_forward.1} parent=1 // pred_region
      %252 = dma.done [#allocation5], 5120
    $region121: #{encoder_forward.1} parent=1 // pred_fallthru
      _
    // Predicated region
    $region122: #{encoder_forward.1} parent=1 // pred_check
      _
    $region123: #{encoder_forward.1} parent=1 // pred_check_branch
      %254 = sbr.rel (0) target = $region125
    $region124: #{encoder_forward.1} parent=1 // pred_region
      %255 = dma.done [#allocation5], 4096
    $region125: #{encoder_forward.1} parent=1 // pred_fallthru
      _
    // Predicated region
    $region126: #{encoder_forward.1} parent=1 // pred_check
      _
    $region127: #{encoder_forward.1} parent=1 // pred_check_branch
      %257 = sbr.rel (0) target = $region129
    $region128: #{encoder_forward.1} parent=1 // pred_region
      %258 = dma.done [#allocation8], 2560
    $region129: #{encoder_forward.1} parent=1 // pred_fallthru
      _
    // Predicated region
    $region130: #{encoder_forward.1} parent=1 // pred_check
      _
    $region131: #{encoder_forward.1} parent=1 // pred_check_branch
      %260 = sbr.rel (0) target = $region133
    $region132: #{encoder_forward.1} parent=1 // pred_region
      %261 = dma.done [#allocation8], 4096
    $region133: #{encoder_forward.1} parent=1 // pred_fallthru
      _
    // Predicated region
    $region134: #{encoder_forward.1} parent=1 // pred_check
      _
    $region135: #{encoder_forward.1} parent=1 // pred_check_branch
      %263 = sbr.rel (0) target = $region137
    $region136: #{encoder_forward.1} parent=1 // pred_region
      %264 = dma.done [#allocation11], 4096
    $region137: #{encoder_forward.1} parent=1 // pred_fallthru
      _
    // Predicated region
    $region138: #{encoder_forward.1} parent=1 // pred_check
      _
    $region139: #{encoder_forward.1} parent=1 // pred_check_branch
      %266 = sbr.rel (0) target = $region141
    $region140: #{encoder_forward.1} parent=1 // pred_region
      %267 = dma.done [#allocation11], 20480
    $region141: #{encoder_forward.1} parent=1 // pred_fallthru
      _
    // Predicated region
    $region142: #{encoder_forward.1} parent=1 // pred_check
      _
    $region143: #{encoder_forward.1} parent=1 // pred_check_branch
      %269 = sbr.rel (0) target = $region145
    $region144: #{encoder_forward.1} parent=1 // pred_region
      %270 = dma.done [#allocation14], 1280
    $region145: #{encoder_forward.1} parent=1 // pred_fallthru
      _
    // Predicated region
    $region146: #{encoder_forward.1} parent=1 // pred_check
      _
    $region147: #{encoder_forward.1} parent=1 // pred_check_branch
      %272 = sbr.rel (0) target = $region149
    $region148: #{encoder_forward.1} parent=1 // pred_region
      %273 = dma.done [#allocation14], 4096
    $region149: #{encoder_forward.1} parent=1 // pred_fallthru
      _
    // Predicated region
    $region150: #{encoder_forward.1} parent=1 // pred_check
      _
    $region151: #{encoder_forward.1} parent=1 // pred_check_branch
      %275 = sbr.rel (0) target = $region153
    $region152: #{encoder_forward.1} parent=1 // pred_region
      %276 = dma.done [#allocation17], 4096
    $region153: #{encoder_forward.1} parent=1 // pred_fallthru
      _
    // Predicated region
    $region154: #{encoder_forward.1} parent=1 // pred_check
      _
    $region155: #{encoder_forward.1} parent=1 // pred_check_branch
      %278 = sbr.rel (0) target = $region157
    $region156: #{encoder_forward.1} parent=1 // pred_region
      %279 = dma.done [#allocation17], 20480
    $region157: #{encoder_forward.1} parent=1 // pred_fallthru
      _
    // Predicated region
    $region158: #{encoder_forward.1} parent=1 // pred_check
      _
    $region159: #{encoder_forward.1} parent=1 // pred_check_branch
      %281 = sbr.rel (0) target = $region161
    $region160: #{encoder_forward.1} parent=1 // pred_region
      %282 = dma.done [#allocation20], 640
    $region161: #{encoder_forward.1} parent=1 // pred_fallthru
      _
    // Predicated region
    $region162: #{encoder_forward.1} parent=1 // pred_check
      _
    $region163: #{encoder_forward.1} parent=1 // pred_check_branch
      %284 = sbr.rel (0) target = $region165
    $region164: #{encoder_forward.1} parent=1 // pred_region
      %285 = dma.done [#allocation20], 4096
    $region165: #{encoder_forward.1} parent=1 // pred_fallthru
      _
    // Predicated region
    $region166: #{encoder_forward.1} parent=1 // pred_check
      _
    $region167: #{encoder_forward.1} parent=1 // pred_check_branch
      %287 = sbr.rel (0) target = $region169
    $region168: #{encoder_forward.1} parent=1 // pred_region
      %288 = dma.done [#allocation23], 4096
    $region169: #{encoder_forward.1} parent=1 // pred_fallthru
      _
    // Predicated region
    $region170: #{encoder_forward.1} parent=1 // pred_check
      _
    $region171: #{encoder_forward.1} parent=1 // pred_check_branch
      %290 = sbr.rel (0) target = $region173
    $region172: #{encoder_forward.1} parent=1 // pred_region
      %291 = dma.done [#allocation23], 8192
    $region173: #{encoder_forward.1} parent=1 // pred_fallthru
      _
    %v293 = vld [vmem:[%s0] sm:$0xff]
    %v294 = vld [vmem:[%s0 + $0x8] sm:$0xff]
    %v295 = vld [vmem:[%s0 + $0x10] sm:$0xff]
    %v296 = vld [vmem:[%s0 + $0x18] sm:$0xff]
    %v297 = vld [vmem:[%s0 + $0x20] sm:$0xff]
    %v298 = vld [vmem:[%s0 + $0x28] sm:$0xff]
    %v299 = vld [vmem:[%s0 + $0x30] sm:$0xff]
    %v300 = vld [vmem:[%s0 + $0x38] sm:$0xff]
    %v301 = vld [vmem:[%s0 + $0x40] sm:$0xff]
    %v302 = vld [vmem:[%s0 + $0x48] sm:$0xff]
    %v303 = vld [vmem:[%s0 + $0x50] sm:$0xff]
    %v304 = vld [vmem:[%s0 + $0x58] sm:$0xff]
    %v305 = vld [vmem:[%s0 + $0x60] sm:$0xff]
    %v306 = vld [vmem:[%s0 + $0x68] sm:$0xff]
    %v307 = vld [vmem:[%s0 + $0x70] sm:$0xff]
    %v308 = vld [vmem:[%s0 + $0x78] sm:$0xff]
    %v309 = vld [vmem:[#allocation2] sm:$0xff]
    %v310 = vld [vmem:[#allocation2 + $0x28] sm:$0xff]
    %v311 = vld [vmem:[#allocation2 + $0x50] sm:$0xff]
    %v312 = vld [vmem:[#allocation2 + $0x78] sm:$0xff]
    %v313 = vld [vmem:[#allocation2 + $0xa0] sm:$0xff]
    %v314 = vld [vmem:[#allocation2 + $0xc8] sm:$0xff]
    %v315 = vld [vmem:[#allocation2 + $0xf0] sm:$0xff]
    %v316 = vld [vmem:[#allocation2 + $0x118] sm:$0xff]
    %v317 = vld [vmem:[#allocation2 + $0x140] sm:$0xff]
    %v318 = vld [vmem:[#allocation2 + $0x168] sm:$0xff]
    %v319 = vld [vmem:[#allocation2 + $0x190] sm:$0xff]
    %v320 = vld [vmem:[#allocation2 + $0x1b8] sm:$0xff]
    %v321 = vld [vmem:[#allocation2 + $0x1e0] sm:$0xff]
    %v322 = vld [vmem:[#allocation2 + $0x208] sm:$0xff]
    %v323 = vld [vmem:[#allocation2 + $0x230] sm:$0xff]
    %v324 = vld [vmem:[#allocation2 + $0x258] sm:$0xff]
    %v325 = vld [vmem:[#allocation2 + $0x280] sm:$0xff]
    %v326 = vld [vmem:[#allocation2 + $0x2a8] sm:$0xff]
    %v327 = vld [vmem:[#allocation2 + $0x2d0] sm:$0xff]
    %v328 = vld [vmem:[#allocation2 + $0x2f8] sm:$0xff]
    %v329 = vld [vmem:[#allocation2 + $0x320] sm:$0xff]
    %v330 = vld [vmem:[#allocation2 + $0x348] sm:$0xff]
    %v331 = vld [vmem:[#allocation2 + $0x370] sm:$0xff]
    %v332 = vld [vmem:[#allocation2 + $0x398] sm:$0xff]
    %v349 = vunpack.c.l.b16 %v293
    %v350 = vunpack.c.h.b16 %v293
    %v351 = vunpack.c.l.b16 %v294
    %v352 = vunpack.c.h.b16 %v294
    %v353 = vunpack.c.l.b16 %v295
    %v354 = vunpack.c.h.b16 %v295
    %v355 = vunpack.c.l.b16 %v296
    %v356 = vunpack.c.h.b16 %v296
    %v357 = vunpack.c.l.b16 %v297
    %v358 = vunpack.c.h.b16 %v297
    %v359 = vunpack.c.l.b16 %v298
    %v360 = vunpack.c.h.b16 %v298
    %v361 = vunpack.c.l.b16 %v299
    %v362 = vunpack.c.h.b16 %v299
    %v363 = vunpack.c.l.b16 %v300
    %v364 = vunpack.c.h.b16 %v300
    %v365 = vunpack.c.l.b16 %v301
    %v366 = vunpack.c.h.b16 %v301
    %v367 = vunpack.c.l.b16 %v302
    %v368 = vunpack.c.h.b16 %v302
    %v369 = vunpack.c.l.b16 %v303
    %v370 = vunpack.c.h.b16 %v303
    %v371 = vunpack.c.l.b16 %v304
    %v372 = vunpack.c.h.b16 %v304
    %v373 = vunpack.c.l.b16 %v305
    %v374 = vunpack.c.h.b16 %v305
    %v375 = vunpack.c.l.b16 %v306
    %v376 = vunpack.c.h.b16 %v306
    %v377 = vunpack.c.l.b16 %v307
    %v378 = vunpack.c.h.b16 %v307
    %v379 = vunpack.c.l.b16 %v308
    %v380 = vunpack.c.h.b16 %v308
    %v381 = vpack.c.b16 %v351, %v349
    %v382 = vpack.c.b16 %v352, %v350
    %v383 = vpack.c.b16 %v355, %v353
    %v384 = vpack.c.b16 %v356, %v354
    %v385 = vpack.c.b16 %v359, %v357
    %v386 = vpack.c.b16 %v360, %v358
    %v387 = vpack.c.b16 %v363, %v361
    %v388 = vpack.c.b16 %v364, %v362
    %v389 = vpack.c.b16 %v367, %v365
    %v390 = vpack.c.b16 %v368, %v366
    %v391 = vpack.c.b16 %v371, %v369
    %v392 = vpack.c.b16 %v372, %v370
    %v393 = vpack.c.b16 %v375, %v373
    %v394 = vpack.c.b16 %v376, %v374
    %v395 = vpack.c.b16 %v379, %v377
    %v396 = vpack.c.b16 %v380, %v378
    %v429 = vunpack.c.l.b16 %v309
    %v430 = vunpack.c.h.b16 %v309
    %v431 = vunpack.c.l.b16 %v310
    %v432 = vunpack.c.h.b16 %v310
    %v433 = vunpack.c.l.b16 %v311
    %v434 = vunpack.c.h.b16 %v311
    %v435 = vunpack.c.l.b16 %v312
    %v436 = vunpack.c.h.b16 %v312
    %v437 = vunpack.c.l.b16 %v313
    %v438 = vunpack.c.h.b16 %v313
    %v439 = vunpack.c.l.b16 %v314
    %v440 = vunpack.c.h.b16 %v314
    %v441 = vunpack.c.l.b16 %v315
    %v442 = vunpack.c.h.b16 %v315
    %v443 = vunpack.c.l.b16 %v316
    %v444 = vunpack.c.h.b16 %v316
    %v445 = vunpack.c.l.b16 %v317
    %v446 = vunpack.c.h.b16 %v317
    %v447 = vunpack.c.l.b16 %v318
    %v448 = vunpack.c.h.b16 %v318
    %v449 = vunpack.c.l.b16 %v319
    %v450 = vunpack.c.h.b16 %v319
    %v451 = vunpack.c.l.b16 %v320
    %v452 = vunpack.c.h.b16 %v320
    %v453 = vunpack.c.l.b16 %v321
    %v454 = vunpack.c.h.b16 %v321
    %v455 = vunpack.c.l.b16 %v322
    %v456 = vunpack.c.h.b16 %v322
    %v457 = vunpack.c.l.b16 %v323
    %v458 = vunpack.c.h.b16 %v323
    %v459 = vunpack.c.l.b16 %v324
    %v460 = vunpack.c.h.b16 %v324
    %v461 = vunpack.c.l.b16 %v325
    %v462 = vunpack.c.h.b16 %v325
    %v463 = vunpack.c.l.b16 %v326
    %v464 = vunpack.c.h.b16 %v326
    %v465 = vunpack.c.l.b16 %v327
    %v466 = vunpack.c.h.b16 %v327
    %v467 = vunpack.c.l.b16 %v328
    %v468 = vunpack.c.h.b16 %v328
    %v469 = vunpack.c.l.b16 %v329
    %v470 = vunpack.c.h.b16 %v329
    %v471 = vunpack.c.l.b16 %v330
    %v472 = vunpack.c.h.b16 %v330
    %v473 = vunpack.c.l.b16 %v331
    %v474 = vunpack.c.h.b16 %v331
    %v475 = vunpack.c.l.b16 %v332
    %v476 = vunpack.c.h.b16 %v332
    %v477 = vpack.c.b16 %v431, %v429
    %v478 = vpack.c.b16 %v432, %v430
    %v479 = vpack.c.b16 %v435, %v433
    %v480 = vpack.c.b16 %v436, %v434
    %v481 = vpack.c.b16 %v439, %v437
    %v482 = vpack.c.b16 %v440, %v438
    %v483 = vpack.c.b16 %v443, %v441
    %v484 = vpack.c.b16 %v444, %v442
    %v485 = vpack.c.b16 %v447, %v445
    %v486 = vpack.c.b16 %v448, %v446
    %v487 = vpack.c.b16 %v451, %v449
    %v488 = vpack.c.b16 %v452, %v450
    %v489 = vpack.c.b16 %v455, %v453
    %v490 = vpack.c.b16 %v456, %v454
    %v491 = vpack.c.b16 %v459, %v457
    %v492 = vpack.c.b16 %v460, %v458
    %v493 = vpack.c.b16 %v463, %v461
    %v494 = vpack.c.b16 %v464, %v462
    %v495 = vpack.c.b16 %v467, %v465
    %v496 = vpack.c.b16 %v468, %v466
    %v497 = vpack.c.b16 %v471, %v469
    %v498 = vpack.c.b16 %v472, %v470
    %v499 = vpack.c.b16 %v475, %v473
    %v500 = vpack.c.b16 %v476, %v474
    %vm525 = vcmask 523264
    %v527 = vsel %vm525, %v382, 0
    %v530 = vsel %vm525, %v384, 0
    %v533 = vsel %vm525, %v386, 0
    %v536 = vsel %vm525, %v388, 0
    %v539 = vsel %vm525, %v390, 0
    %v542 = vsel %vm525, %v392, 0
    %v545 = vsel %vm525, %v394, 0
    %v548 = vsel %vm525, %v396, 0
    %550 = vmatprep.subr.bf16.mxu0 %v478
    %551 = vmatpush1.bf16.msra.mxu0 %v477
    %552 = vmatprep.subr.bf16.mxu0 %v480
    %553 = vmatpush1.bf16.msra.mxu0 %v479
    %554 = vmatprep.subr.bf16.mxu0 %v482
    %555 = vmatpush1.bf16.msra.mxu0 %v481
    %556 = vmatprep.subr.bf16.mxu0 %v484
    %557 = vmatpush1.bf16.msra.mxu0 %v483
    %558 = vmatprep.subr.bf16.mxu0 %v486
    %559 = vmatpush1.bf16.msra.mxu0 %v485
    %560 = vmatprep.subr.bf16.mxu0 %v488
    %561 = vmatpush1.bf16.msra.mxu0 %v487
    %562 = vmatprep.subr.bf16.mxu0 %v490
    %563 = vmatpush1.bf16.msra.mxu0 %v489
    %564 = vmatprep.subr.bf16.mxu0 %v492
    %565 = vmatpush1.bf16.msra.mxu0 %v491
    %566 = vmatprep.subr.bf16.mxu0 %v494
    %567 = vmatpush1.bf16.msra.mxu0 %v493
    %568 = vmatprep.subr.bf16.mxu0 %v496
    %569 = vmatpush1.bf16.msra.mxu0 %v495
    %570 = vmatprep.subr.bf16.mxu0 %v498
    %571 = vmatpush1.bf16.msra.mxu0 %v497
    %572 = vmatprep.subr.bf16.mxu0 %v500
    %573 = vmatpush1.bf16.msra.mxu0 %v499
    %574 = vmatprep.subr.bf16.mxu0 0
    %575 = vmatpush1.bf16.msra.mxu0 0
    %576 = vmatprep.subr.bf16.mxu0 0
    %577 = vmatpush1.bf16.msra.mxu0 0
    %578 = vmatprep.subr.bf16.mxu0 0
    %579 = vmatpush1.bf16.msra.mxu0 0
    %580 = vmatprep.subr.bf16.mxu0 0
    %581 = vmatpush1.bf16.msra.mxu0 0
    %582 = vmatprep.mubr.bf16.mxu0 %v527
    %583 = vmatmul.mubr.bf16.gmra.mrb[0].mxu0 %v381
    %v584 = vpop.f32.mrb[0].mxu0
    %v585 = vadd.f32 0.0, %v584
    %v586 = vpop.f32.mrb[0].mxu0
    %v587 = vadd.f32 0.0, %v586
    %v588 = vpop.f32.mrb[0].mxu0
    %v589 = vadd.f32 0.0, %v588
    %v590 = vpop.f32.mrb[0].mxu0
    %v591 = vadd.f32 0.0, %v590
    %592 = vmatprep.mubr.bf16.mxu0 %v530
    %593 = vmatmul.mubr.bf16.gmra.mrb[0].mxu0 %v383
    %v594 = vpop.f32.mrb[0].mxu0
    %v595 = vadd.f32 0.0, %v594
    %v596 = vpop.f32.mrb[0].mxu0
    %v597 = vadd.f32 0.0, %v596
    %v598 = vpop.f32.mrb[0].mxu0
    %v599 = vadd.f32 0.0, %v598
    %v600 = vpop.f32.mrb[0].mxu0
    %v601 = vadd.f32 0.0, %v600
    %602 = vmatprep.mubr.bf16.mxu0 %v533
    %603 = vmatmul.mubr.bf16.gmra.mrb[0].mxu0 %v385
    %v604 = vpop.f32.mrb[0].mxu0
    %v605 = vadd.f32 0.0, %v604
    %v606 = vpop.f32.mrb[0].mxu0
    %v607 = vadd.f32 0.0, %v606
    %v608 = vpop.f32.mrb[0].mxu0
    %v609 = vadd.f32 0.0, %v608
    %v610 = vpop.f32.mrb[0].mxu0
    %v611 = vadd.f32 0.0, %v610
    %612 = vmatprep.mubr.bf16.mxu0 %v536
    %613 = vmatmul.mubr.bf16.gmra.mrb[0].mxu0 %v387
    %v614 = vpop.f32.mrb[0].mxu0
    %v615 = vadd.f32 0.0, %v614
    %v616 = vpop.f32.mrb[0].mxu0
    %v617 = vadd.f32 0.0, %v616
    %v618 = vpop.f32.mrb[0].mxu0
    %v619 = vadd.f32 0.0, %v618
    %v620 = vpop.f32.mrb[0].mxu0
    %v621 = vadd.f32 0.0, %v620
    %622 = vmatprep.mubr.bf16.mxu0 %v539
    %623 = vmatmul.mubr.bf16.gmra.mrb[0].mxu0 %v389
    %v624 = vpop.f32.mrb[0].mxu0
    %v625 = vadd.f32 0.0, %v624
    %v626 = vpop.f32.mrb[0].mxu0
    %v627 = vadd.f32 0.0, %v626
    %v628 = vpop.f32.mrb[0].mxu0
    %v629 = vadd.f32 0.0, %v628
    %v630 = vpop.f32.mrb[0].mxu0
    %v631 = vadd.f32 0.0, %v630
    %632 = vmatprep.mubr.bf16.mxu0 %v542
    %633 = vmatmul.mubr.bf16.gmra.mrb[0].mxu0 %v391
    %v634 = vpop.f32.mrb[0].mxu0
    %v635 = vadd.f32 0.0, %v634
    %v636 = vpop.f32.mrb[0].mxu0
    %v637 = vadd.f32 0.0, %v636
    %v638 = vpop.f32.mrb[0].mxu0
    %v639 = vadd.f32 0.0, %v638
    %v640 = vpop.f32.mrb[0].mxu0
    %v641 = vadd.f32 0.0, %v640
    %642 = vmatprep.mubr.bf16.mxu0 %v545
    %643 = vmatmul.mubr.bf16.gmra.mrb[0].mxu0 %v393
    %v644 = vpop.f32.mrb[0].mxu0
    %v645 = vadd.f32 0.0, %v644
    %v646 = vpop.f32.mrb[0].mxu0
    %v647 = vadd.f32 0.0, %v646
    %v648 = vpop.f32.mrb[0].mxu0
    %v649 = vadd.f32 0.0, %v648
    %v650 = vpop.f32.mrb[0].mxu0
    %v651 = vadd.f32 0.0, %v650
    %652 = vmatprep.mubr.bf16.mxu0 %v548
    %653 = vmatmul.mubr.bf16.gmra.mrb[0].mxu0 %v395
    %v654 = vpop.f32.mrb[0].mxu0
    %v655 = vadd.f32 0.0, %v654
    %v656 = vpop.f32.mrb[0].mxu0
    %v657 = vadd.f32 0.0, %v656
    %v658 = vpop.f32.mrb[0].mxu0
    %v659 = vadd.f32 0.0, %v658
    %v660 = vpop.f32.mrb[0].mxu0
    %v661 = vadd.f32 0.0, %v660
    %662 = vdwg.mxu0
    %v663 = vld [vmem:[#allocation4] sm:$0xff]
    %v664 = vld [vmem:[#allocation4 + $0x8] sm:$0xff]
    %v665 = vld [vmem:[#allocation4 + $0x10] sm:$0xff]
    %v666 = vld [vmem:[#allocation4 + $0x18] sm:$0xff]
    %v667 = vld [vmem:[#allocation4 + $0x20] sm:$0xff]
    %v668 = vld [vmem:[#allocation4 + $0x28] sm:$0xff]
    %v669 = vld [vmem:[#allocation4 + $0x30] sm:$0xff]
    %v670 = vld [vmem:[#allocation4 + $0x38] sm:$0xff]
    %v671 = vld [vmem:[#allocation2 + $0x8] sm:$0xff]
    %v672 = vld [vmem:[#allocation2 + $0x30] sm:$0xff]
    %v673 = vld [vmem:[#allocation2 + $0x58] sm:$0xff]
    %v674 = vld [vmem:[#allocation2 + $0x80] sm:$0xff]
    %v675 = vld [vmem:[#allocation2 + $0xa8] sm:$0xff]
    %v676 = vld [vmem:[#allocation2 + $0xd0] sm:$0xff]
    %v677 = vld [vmem:[#allocation2 + $0xf8] sm:$0xff]
    %v678 = vld [vmem:[#allocation2 + $0x120] sm:$0xff]
    %v679 = vld [vmem:[#allocation2 + $0x148] sm:$0xff]
    %v680 = vld [vmem:[#allocation2 + $0x170] sm:$0xff]
    %v681 = vld [vmem:[#allocation2 + $0x198] sm:$0xff]
    %v682 = vld [vmem:[#allocation2 + $0x1c0] sm:$0xff]
    %v683 = vld [vmem:[#allocation2 + $0x1e8] sm:$0xff]
    %v684 = vld [vmem:[#allocation2 + $0x210] sm:$0xff]
    %v685 = vld [vmem:[#allocation2 + $0x238] sm:$0xff]
    %v686 = vld [vmem:[#allocation2 + $0x260] sm:$0xff]
    %v687 = vld [vmem:[#allocation2 + $0x288] sm:$0xff]
    %v688 = vld [vmem:[#allocation2 + $0x2b0] sm:$0xff]
    %v689 = vld [vmem:[#allocation2 + $0x2d8] sm:$0xff]
    %v690 = vld [vmem:[#allocation2 + $0x300] sm:$0xff]
    %v691 = vld [vmem:[#allocation2 + $0x328] sm:$0xff]
    %v692 = vld [vmem:[#allocation2 + $0x350] sm:$0xff]
    %v693 = vld [vmem:[#allocation2 + $0x378] sm:$0xff]
    %v694 = vld [vmem:[#allocation2 + $0x3a0] sm:$0xff]
    %v719 = vunpack.c.l.b16 %v671
    %v720 = vunpack.c.h.b16 %v671
    %v721 = vunpack.c.l.b16 %v672
    %v722 = vunpack.c.h.b16 %v672
    %v723 = vunpack.c.l.b16 %v673
    %v724 = vunpack.c.h.b16 %v673
    %v725 = vunpack.c.l.b16 %v674
    %v726 = vunpack.c.h.b16 %v674
    %v727 = vunpack.c.l.b16 %v675
    %v728 = vunpack.c.h.b16 %v675
    %v729 = vunpack.c.l.b16 %v676
    %v730 = vunpack.c.h.b16 %v676
    %v731 = vunpack.c.l.b16 %v677
    %v732 = vunpack.c.h.b16 %v677
    %v733 = vunpack.c.l.b16 %v678
    %v734 = vunpack.c.h.b16 %v678
    %v735 = vunpack.c.l.b16 %v679
    %v736 = vunpack.c.h.b16 %v679
    %v737 = vunpack.c.l.b16 %v680
    %v738 = vunpack.c.h.b16 %v680
    %v739 = vunpack.c.l.b16 %v681
    %v740 = vunpack.c.h.b16 %v681
    %v741 = vunpack.c.l.b16 %v682
    %v742 = vunpack.c.h.b16 %v682
    %v743 = vunpack.c.l.b16 %v683
    %v744 = vunpack.c.h.b16 %v683
    %v745 = vunpack.c.l.b16 %v684
    %v746 = vunpack.c.h.b16 %v684
    %v747 = vunpack.c.l.b16 %v685
    %v748 = vunpack.c.h.b16 %v685
    %v749 = vunpack.c.l.b16 %v686
    %v750 = vunpack.c.h.b16 %v686
    %v751 = vunpack.c.l.b16 %v687
    %v752 = vunpack.c.h.b16 %v687
    %v753 = vunpack.c.l.b16 %v688
    %v754 = vunpack.c.h.b16 %v688
    %v755 = vunpack.c.l.b16 %v689
    %v756 = vunpack.c.h.b16 %v689
    %v757 = vunpack.c.l.b16 %v690
    %v758 = vunpack.c.h.b16 %v690
    %v759 = vunpack.c.l.b16 %v691
    %v760 = vunpack.c.h.b16 %v691
    %v761 = vunpack.c.l.b16 %v692
    %v762 = vunpack.c.h.b16 %v692
    %v763 = vunpack.c.l.b16 %v693
    %v764 = vunpack.c.h.b16 %v693
    %v765 = vunpack.c.l.b16 %v694
    %v766 = vunpack.c.h.b16 %v694
    %v767 = vpack.c.b16 %v721, %v719
    %v768 = vpack.c.b16 %v722, %v720
    %v769 = vpack.c.b16 %v725, %v723
    %v770 = vpack.c.b16 %v726, %v724
    %v771 = vpack.c.b16 %v729, %v727
    %v772 = vpack.c.b16 %v730, %v728
    %v773 = vpack.c.b16 %v733, %v731
    %v774 = vpack.c.b16 %v734, %v732
    %v775 = vpack.c.b16 %v737, %v735
    %v776 = vpack.c.b16 %v738, %v736
    %v777 = vpack.c.b16 %v741, %v739
    %v778 = vpack.c.b16 %v742, %v740
    %v779 = vpack.c.b16 %v745, %v743
    %v780 = vpack.c.b16 %v746, %v744
    %v781 = vpack.c.b16 %v749, %v747
    %v782 = vpack.c.b16 %v750, %v748
    %v783 = vpack.c.b16 %v753, %v751
    %v784 = vpack.c.b16 %v754, %v752
    %v785 = vpack.c.b16 %v757, %v755
    %v786 = vpack.c.b16 %v758, %v756
    %v787 = vpack.c.b16 %v761, %v759
    %v788 = vpack.c.b16 %v762, %v760
    %v789 = vpack.c.b16 %v765, %v763
    %v790 = vpack.c.b16 %v766, %v764
    %815 = vmatprep.subr.bf16.mxu0 %v768
    %816 = vmatpush1.bf16.msra.mxu0 %v767
    %817 = vmatprep.subr.bf16.mxu0 %v770
    %818 = vmatpush1.bf16.msra.mxu0 %v769
    %819 = vmatprep.subr.bf16.mxu0 %v772
    %820 = vmatpush1.bf16.msra.mxu0 %v771
    %821 = vmatprep.subr.bf16.mxu0 %v774
    %822 = vmatpush1.bf16.msra.mxu0 %v773
    %823 = vmatprep.subr.bf16.mxu0 %v776
    %824 = vmatpush1.bf16.msra.mxu0 %v775
    %825 = vmatprep.subr.bf16.mxu0 %v778
    %826 = vmatpush1.bf16.msra.mxu0 %v777
    %827 = vmatprep.subr.bf16.mxu0 %v780
    %828 = vmatpush1.bf16.msra.mxu0 %v779
    %829 = vmatprep.subr.bf16.mxu0 %v782
    %830 = vmatpush1.bf16.msra.mxu0 %v781
    %831 = vmatprep.subr.bf16.mxu0 %v784
    %832 = vmatpush1.bf16.msra.mxu0 %v783
    %833 = vmatprep.subr.bf16.mxu0 %v786
    %834 = vmatpush1.bf16.msra.mxu0 %v785
    %835 = vmatprep.subr.bf16.mxu0 %v788
    %836 = vmatpush1.bf16.msra.mxu0 %v787
    %837 = vmatprep.subr.bf16.mxu0 %v790
    %838 = vmatpush1.bf16.msra.mxu0 %v789
    %839 = vmatprep.subr.bf16.mxu0 0
    %840 = vmatpush1.bf16.msra.mxu0 0
    %841 = vmatprep.subr.bf16.mxu0 0
    %842 = vmatpush1.bf16.msra.mxu0 0
    %843 = vmatprep.subr.bf16.mxu0 0
    %844 = vmatpush1.bf16.msra.mxu0 0
    %845 = vmatprep.subr.bf16.mxu0 0
    %846 = vmatpush1.bf16.msra.mxu0 0
    %847 = vmatprep.mubr.bf16.mxu0 %v527
    %848 = vmatmul.mubr.bf16.gmra.mrb[0].mxu0 %v381
    %v849 = vpop.f32.mrb[0].mxu0
    %v850 = vadd.f32 0.0, %v849
    %v851 = vpop.f32.mrb[0].mxu0
    %v852 = vadd.f32 0.0, %v851
    %v853 = vpop.f32.mrb[0].mxu0
    %v854 = vadd.f32 0.0, %v853
    %v855 = vpop.f32.mrb[0].mxu0
    %v856 = vadd.f32 0.0, %v855
    %857 = vmatprep.mubr.bf16.mxu0 %v530
    %858 = vmatmul.mubr.bf16.gmra.mrb[0].mxu0 %v383
    %v859 = vpop.f32.mrb[0].mxu0
    %v860 = vadd.f32 0.0, %v859
    %v861 = vpop.f32.mrb[0].mxu0
    %v862 = vadd.f32 0.0, %v861
    %v863 = vpop.f32.mrb[0].mxu0
    %v864 = vadd.f32 0.0, %v863
    %v865 = vpop.f32.mrb[0].mxu0
    %v866 = vadd.f32 0.0, %v865
    %867 = vmatprep.mubr.bf16.mxu0 %v533
    %868 = vmatmul.mubr.bf16.gmra.mrb[0].mxu0 %v385
    %v869 = vpop.f32.mrb[0].mxu0
    %v870 = vadd.f32 0.0, %v869
    %v871 = vpop.f32.mrb[0].mxu0
    %v872 = vadd.f32 0.0, %v871
    %v873 = vpop.f32.mrb[0].mxu0
    %v874 = vadd.f32 0.0, %v873
    %v875 = vpop.f32.mrb[0].mxu0
    %v876 = vadd.f32 0.0, %v875
    %877 = vmatprep.mubr.bf16.mxu0 %v536
    %878 = vmatmul.mubr.bf16.gmra.mrb[0].mxu0 %v387
    %v879 = vpop.f32.mrb[0].mxu0
    %v880 = vadd.f32 0.0, %v879
    %v881 = vpop.f32.mrb[0].mxu0
    %v882 = vadd.f32 0.0, %v881
    %v883 = vpop.f32.mrb[0].mxu0
    %v884 = vadd.f32 0.0, %v883
    %v885 = vpop.f32.mrb[0].mxu0
    %v886 = vadd.f32 0.0, %v885
    %887 = vmatprep.mubr.bf16.mxu0 %v539
    %888 = vmatmul.mubr.bf16.gmra.mrb[0].mxu0 %v389
    %v889 = vpop.f32.mrb[0].mxu0
    %v890 = vadd.f32 0.0, %v889
    %v891 = vpop.f32.mrb[0].mxu0
    %v892 = vadd.f32 0.0, %v891
    %v893 = vpop.f32.mrb[0].mxu0
    %v894 = vadd.f32 0.0, %v893
    %v895 = vpop.f32.mrb[0].mxu0
    %v896 = vadd.f32 0.0, %v895
    %897 = vmatprep.mubr.bf16.mxu0 %v542
    %898 = vmatmul.mubr.bf16.gmra.mrb[0].mxu0 %v391
    %v899 = vpop.f32.mrb[0].mxu0
    %v900 = vadd.f32 0.0, %v899
    %v901 = vpop.f32.mrb[0].mxu0
    %v902 = vadd.f32 0.0, %v901
    %v903 = vpop.f32.mrb[0].mxu0
    %v904 = vadd.f32 0.0, %v903
    %v905 = vpop.f32.mrb[0].mxu0
    %v906 = vadd.f32 0.0, %v905
    %907 = vmatprep.mubr.bf16.mxu0 %v545
    %908 = vmatmul.mubr.bf16.gmra.mrb[0].mxu0 %v393
    %v909 = vpop.f32.mrb[0].mxu0
    %v910 = vadd.f32 0.0, %v909
    %v911 = vpop.f32.mrb[0].mxu0
    %v912 = vadd.f32 0.0, %v911
    %v913 = vpop.f32.mrb[0].mxu0
    %v914 = vadd.f32 0.0, %v913
    %v915 = vpop.f32.mrb[0].mxu0
    %v916 = vadd.f32 0.0, %v915
    %917 = vmatprep.mubr.bf16.mxu0 %v548
    %918 = vmatmul.mubr.bf16.gmra.mrb[0].mxu0 %v395
    %v919 = vpop.f32.mrb[0].mxu0
    %v920 = vadd.f32 0.0, %v919
    %v921 = vpop.f32.mrb[0].mxu0
    %v922 = vadd.f32 0.0, %v921
    %v923 = vpop.f32.mrb[0].mxu0
    %v924 = vadd.f32 0.0, %v923
    %v925 = vpop.f32.mrb[0].mxu0
    %v926 = vadd.f32 0.0, %v925
    %927 = vdwg.mxu0
    %s928 = scalar_lea.vmem [#allocation4], 64
    %v929 = vld [vmem:[%s928] sm:$0xff]
    %v930 = vld [vmem:[%s928 + $0x8] sm:$0xff]
    %v931 = vld [vmem:[%s928 + $0x10] sm:$0xff]
    %v932 = vld [vmem:[%s928 + $0x18] sm:$0xff]
    %v933 = vld [vmem:[%s928 + $0x20] sm:$0xff]
    %v934 = vld [vmem:[%s928 + $0x28] sm:$0xff]
    %v935 = vld [vmem:[%s928 + $0x30] sm:$0xff]
    %v936 = vld [vmem:[%s928 + $0x38] sm:$0xff]
    %937 = vmatprep.subr.mxu0 %v852
    %938 = vmatpush1.msra.mxu0 %v850
    %939 = vmatprep.subr.mxu0 %v856
    %940 = vmatpush1.msra.mxu0 %v854
    %941 = vmatprep.subr.mxu0 %v862
    %942 = vmatpush1.msra.mxu0 %v860
    %943 = vmatprep.subr.mxu0 %v866
    %944 = vmatpush1.msra.mxu0 %v864
    %945 = vmatprep.subr.mxu0 %v872
    %946 = vmatpush1.msra.mxu0 %v870
    %947 = vmatprep.subr.mxu0 %v876
    %948 = vmatpush1.msra.mxu0 %v874
    %949 = vmatprep.subr.mxu0 %v882
    %950 = vmatpush1.msra.mxu0 %v880
    %951 = vmatprep.subr.mxu0 %v886
    %952 = vmatpush1.msra.mxu0 %v884
    %953 = vmatprep.subr.mxu0 %v892
    %954 = vmatpush1.msra.mxu0 %v890
    %955 = vmatprep.subr.mxu0 %v896
    %956 = vmatpush1.msra.mxu0 %v894
    %957 = vmatprep.subr.mxu0 %v902
    %958 = vmatpush1.msra.mxu0 %v900
    %959 = vmatprep.subr.mxu0 %v906
    %960 = vmatpush1.msra.mxu0 %v904
    %961 = vmatprep.subr.mxu0 %v912
    %962 = vmatpush1.msra.mxu0 %v910
    %963 = vmatprep.subr.mxu0 %v916
    %964 = vmatpush1.msra.mxu0 %v914
    %965 = vmatprep.subr.mxu0 %v922
    %966 = vmatpush1.msra.mxu0 %v920
    %967 = vmatprep.subr.mxu0 %v926
    %968 = vmatpush1.msra.mxu0 %v924
    %969 = vmatprep.subr.mxu0 0.0
    %970 = vmatpush1.msra.mxu0 0.0
    %971 = vmatprep.subr.mxu0 0.0
    %972 = vmatpush1.msra.mxu0 0.0
    %973 = vmatprep.subr.mxu0 0.0
    %974 = vmatpush1.msra.mxu0 0.0
    %975 = vmatprep.subr.mxu0 0.0
    %976 = vmatpush1.msra.mxu0 0.0
    %977 = vmatprep.subr.mxu0 0.0
    %978 = vmatpush1.msra.mxu0 0.0
    %979 = vmatprep.subr.mxu0 0.0
    %980 = vmatpush1.msra.mxu0 0.0
    %981 = vmatprep.subr.mxu0 0.0
    %982 = vmatpush1.msra.mxu0 0.0
    %983 = vmatprep.subr.mxu0 0.0
    %984 = vmatpush1.msra.mxu0 0.0
    %985 = vmatprep.subr.mxu0 0.0
    %986 = vmatpush1.msra.mxu0 0.0
    %987 = vmatprep.subr.mxu0 0.0
    %988 = vmatpush1.msra.mxu0 0.0
    %989 = vmatprep.subr.mxu0 0.0
    %990 = vmatpush1.msra.mxu0 0.0
    %991 = vmatprep.subr.mxu0 0.0
    %992 = vmatpush1.msra.mxu0 0.0
    %993 = vmatprep.subr.mxu0 0.0
    %994 = vmatpush1.msra.mxu0 0.0
    %995 = vmatprep.subr.mxu0 0.0
    %996 = vmatpush1.msra.mxu0 0.0
    %997 = vmatprep.subr.mxu0 0.0
    %998 = vmatpush1.msra.mxu0 0.0
    %999 = vmatprep.subr.mxu0 0.0
    %1000 = vmatpush1.msra.mxu0 0.0
    %1001 = vmatprep.mubr.f32.mxu0 0.0
    %1002 = vmatmul.mubr.f32.gmra.mrb[0].mxu0 %v929
    %v1003 = vpop.f32.mrb[0].mxu0
    %v1004 = vadd.f32 0.0, %v1003
    %v1005 = vpop.f32.mrb[0].mxu0
    %v1006 = vadd.f32 0.0, %v1005
    %1007 = vmatprep.mubr.f32.mxu0 0.0
    %1008 = vmatmul.mubr.f32.gmra.mrb[0].mxu0 %v930
    %v1009 = vpop.f32.mrb[0].mxu0
    %v1010 = vadd.f32 0.0, %v1009
    %v1011 = vpop.f32.mrb[0].mxu0
    %v1012 = vadd.f32 0.0, %v1011
    %1013 = vmatprep.mubr.f32.mxu0 0.0
    %1014 = vmatmul.mubr.f32.gmra.mrb[0].mxu0 %v931
    %v1015 = vpop.f32.mrb[0].mxu0
    %v1016 = vadd.f32 0.0, %v1015
    %v1017 = vpop.f32.mrb[0].mxu0
    %v1018 = vadd.f32 0.0, %v1017
    %1019 = vmatprep.mubr.f32.mxu0 0.0
    %1020 = vmatmul.mubr.f32.gmra.mrb[0].mxu0 %v932
    %v1021 = vpop.f32.mrb[0].mxu0
    %v1022 = vadd.f32 0.0, %v1021
    %v1023 = vpop.f32.mrb[0].mxu0
    %v1024 = vadd.f32 0.0, %v1023
    %1025 = vmatprep.mubr.f32.mxu0 0.0
    %1026 = vmatmul.mubr.f32.gmra.mrb[0].mxu0 %v933
    %v1027 = vpop.f32.mrb[0].mxu0
    %v1028 = vadd.f32 0.0, %v1027
    %v1029 = vpop.f32.mrb[0].mxu0
    %v1030 = vadd.f32 0.0, %v1029
    %1031 = vmatprep.mubr.f32.mxu0 0.0
    %1032 = vmatmul.mubr.f32.gmra.mrb[0].mxu0 %v934
    %v1033 = vpop.f32.mrb[0].mxu0
    %v1034 = vadd.f32 0.0, %v1033
    %v1035 = vpop.f32.mrb[0].mxu0
    %v1036 = vadd.f32 0.0, %v1035
    %1037 = vmatprep.mubr.f32.mxu0 0.0
    %1038 = vmatmul.mubr.f32.gmra.mrb[0].mxu0 %v935
    %v1039 = vpop.f32.mrb[0].mxu0
    %v1040 = vadd.f32 0.0, %v1039
    %v1041 = vpop.f32.mrb[0].mxu0
    %v1042 = vadd.f32 0.0, %v1041
    %1043 = vmatprep.mubr.f32.mxu0 0.0
    %1044 = vmatmul.mubr.f32.gmra.mrb[0].mxu0 %v936
    %v1045 = vpop.f32.mrb[0].mxu0
    %v1046 = vadd.f32 0.0, %v1045
    %v1047 = vpop.f32.mrb[0].mxu0
    %v1048 = vadd.f32 0.0, %v1047
    %1049 = vdwg.mxu0
    %1050 = vmatprep.subr.mxu0 %v587
    %1051 = vmatpush1.msra.mxu0 %v585
    %1052 = vmatprep.subr.mxu0 %v591
    %1053 = vmatpush1.msra.mxu0 %v589
    %1054 = vmatprep.subr.mxu0 %v597
    %1055 = vmatpush1.msra.mxu0 %v595
    %1056 = vmatprep.subr.mxu0 %v601
    %1057 = vmatpush1.msra.mxu0 %v599
    %1058 = vmatprep.subr.mxu0 %v607
    %1059 = vmatpush1.msra.mxu0 %v605
    %1060 = vmatprep.subr.mxu0 %v611
    %1061 = vmatpush1.msra.mxu0 %v609
    %1062 = vmatprep.subr.mxu0 %v617
    %1063 = vmatpush1.msra.mxu0 %v615
    %1064 = vmatprep.subr.mxu0 %v621
    %1065 = vmatpush1.msra.mxu0 %v619
    %1066 = vmatprep.subr.mxu0 %v627
    %1067 = vmatpush1.msra.mxu0 %v625
    %1068 = vmatprep.subr.mxu0 %v631
    %1069 = vmatpush1.msra.mxu0 %v629
    %1070 = vmatprep.subr.mxu0 %v637
    %1071 = vmatpush1.msra.mxu0 %v635
    %1072 = vmatprep.subr.mxu0 %v641
    %1073 = vmatpush1.msra.mxu0 %v639
    %1074 = vmatprep.subr.mxu0 %v647
    %1075 = vmatpush1.msra.mxu0 %v645
    %1076 = vmatprep.subr.mxu0 %v651
    %1077 = vmatpush1.msra.mxu0 %v649
    %1078 = vmatprep.subr.mxu0 %v657
    %1079 = vmatpush1.msra.mxu0 %v655
    %1080 = vmatprep.subr.mxu0 %v661
    %1081 = vmatpush1.msra.mxu0 %v659
    %1082 = vmatprep.subr.mxu0 0.0
    %1083 = vmatpush1.msra.mxu0 0.0
    %1084 = vmatprep.subr.mxu0 0.0
    %1085 = vmatpush1.msra.mxu0 0.0
    %1086 = vmatprep.subr.mxu0 0.0
    %1087 = vmatpush1.msra.mxu0 0.0
    %1088 = vmatprep.subr.mxu0 0.0
    %1089 = vmatpush1.msra.mxu0 0.0
    %1090 = vmatprep.subr.mxu0 0.0
    %1091 = vmatpush1.msra.mxu0 0.0
    %1092 = vmatprep.subr.mxu0 0.0
    %1093 = vmatpush1.msra.mxu0 0.0
    %1094 = vmatprep.subr.mxu0 0.0
    %1095 = vmatpush1.msra.mxu0 0.0
    %1096 = vmatprep.subr.mxu0 0.0
    %1097 = vmatpush1.msra.mxu0 0.0
    %1098 = vmatprep.subr.mxu0 0.0
    %1099 = vmatpush1.msra.mxu0 0.0
    %1100 = vmatprep.subr.mxu0 0.0
    %1101 = vmatpush1.msra.mxu0 0.0
    %1102 = vmatprep.subr.mxu0 0.0
    %1103 = vmatpush1.msra.mxu0 0.0
    %1104 = vmatprep.subr.mxu0 0.0
    %1105 = vmatpush1.msra.mxu0 0.0
    %1106 = vmatprep.subr.mxu0 0.0
    %1107 = vmatpush1.msra.mxu0 0.0
    %1108 = vmatprep.subr.mxu0 0.0
    %1109 = vmatpush1.msra.mxu0 0.0
    %1110 = vmatprep.subr.mxu0 0.0
    %1111 = vmatpush1.msra.mxu0 0.0
    %1112 = vmatprep.subr.mxu0 0.0
    %1113 = vmatpush1.msra.mxu0 0.0
    %1114 = vmatprep.mubr.f32.mxu0 0.0
    %1115 = vmatmul.mubr.f32.gmra.mrb[0].mxu0 %v663
    %v1116 = vpop.f32.mrb[0].mxu0
    %v1117 = vadd.f32 %v1004, %v1116
    %v1118 = vpop.f32.mrb[0].mxu0
    %v1119 = vadd.f32 %v1006, %v1118
    %1120 = vmatprep.mubr.f32.mxu0 0.0
    %1121 = vmatmul.mubr.f32.gmra.mrb[0].mxu0 %v664
    %v1122 = vpop.f32.mrb[0].mxu0
    %v1123 = vadd.f32 %v1010, %v1122
    %v1124 = vpop.f32.mrb[0].mxu0
    %v1125 = vadd.f32 %v1012, %v1124
    %1126 = vmatprep.mubr.f32.mxu0 0.0
    %1127 = vmatmul.mubr.f32.gmra.mrb[0].mxu0 %v665
    %v1128 = vpop.f32.mrb[0].mxu0
    %v1129 = vadd.f32 %v1016, %v1128
    %v1130 = vpop.f32.mrb[0].mxu0
    %v1131 = vadd.f32 %v1018, %v1130
    %1132 = vmatprep.mubr.f32.mxu0 0.0
    %1133 = vmatmul.mubr.f32.gmra.mrb[0].mxu0 %v666
    %v1134 = vpop.f32.mrb[0].mxu0
    %v1135 = vadd.f32 %v1022, %v1134
    %v1136 = vpop.f32.mrb[0].mxu0
    %v1137 = vadd.f32 %v1024, %v1136
    %1138 = vmatprep.mubr.f32.mxu0 0.0
    %1139 = vmatmul.mubr.f32.gmra.mrb[0].mxu0 %v667
    %v1140 = vpop.f32.mrb[0].mxu0
    %v1141 = vadd.f32 %v1028, %v1140
    %v1142 = vpop.f32.mrb[0].mxu0
    %v1143 = vadd.f32 %v1030, %v1142
    %1144 = vmatprep.mubr.f32.mxu0 0.0
    %1145 = vmatmul.mubr.f32.gmra.mrb[0].mxu0 %v668
    %v1146 = vpop.f32.mrb[0].mxu0
    %v1147 = vadd.f32 %v1034, %v1146
    %v1148 = vpop.f32.mrb[0].mxu0
    %v1149 = vadd.f32 %v1036, %v1148
    %1150 = vmatprep.mubr.f32.mxu0 0.0
    %1151 = vmatmul.mubr.f32.gmra.mrb[0].mxu0 %v669
    %v1152 = vpop.f32.mrb[0].mxu0
    %v1153 = vadd.f32 %v1040, %v1152
    %v1154 = vpop.f32.mrb[0].mxu0
    %v1155 = vadd.f32 %v1042, %v1154
    %1156 = vmatprep.mubr.f32.mxu0 0.0
    %1157 = vmatmul.mubr.f32.gmra.mrb[0].mxu0 %v670
    %v1158 = vpop.f32.mrb[0].mxu0
    %v1159 = vadd.f32 %v1046, %v1158
    %v1160 = vpop.f32.mrb[0].mxu0
    %v1161 = vadd.f32 %v1048, %v1160
    %1162 = vdwg.mxu0
    %v1163 = vld [vmem:[#allocation2 + $0x10] sm:$0xff]
    %v1164 = vld [vmem:[#allocation2 + $0x38] sm:$0xff]
    %v1165 = vld [vmem:[#allocation2 + $0x60] sm:$0xff]
    %v1166 = vld [vmem:[#allocation2 + $0x88] sm:$0xff]
    %v1167 = vld [vmem:[#allocation2 + $0xb0] sm:$0xff]
    %v1168 = vld [vmem:[#allocation2 + $0xd8] sm:$0xff]
    %v1169 = vld [vmem:[#allocation2 + $0x100] sm:$0xff]
    %v1170 = vld [vmem:[#allocation2 + $0x128] sm:$0xff]
    %v1171 = vld [vmem:[#allocation2 + $0x150] sm:$0xff]
    %v1172 = vld [vmem:[#allocation2 + $0x178] sm:$0xff]
    %v1173 = vld [vmem:[#allocation2 + $0x1a0] sm:$0xff]
    %v1174 = vld [vmem:[#allocation2 + $0x1c8] sm:$0xff]
    %v1175 = vld [vmem:[#allocation2 + $0x1f0] sm:$0xff]
    %v1176 = vld [vmem:[#allocation2 + $0x218] sm:$0xff]
    %v1177 = vld [vmem:[#allocation2 + $0x240] sm:$0xff]
    %v1178 = vld [vmem:[#allocation2 + $0x268] sm:$0xff]
    %v1179 = vld [vmem:[#allocation2 + $0x290] sm:$0xff]
    %v1180 = vld [vmem:[#allocation2 + $0x2b8] sm:$0xff]
    %v1181 = vld [vmem:[#allocation2 + $0x2e0] sm:$0xff]
    %v1182 = vld [vmem:[#allocation2 + $0x308] sm:$0xff]
    %v1183 = vld [vmem:[#allocation2 + $0x330] sm:$0xff]
    %v1184 = vld [vmem:[#allocation2 + $0x358] sm:$0xff]
    %v1185 = vld [vmem:[#allocation2 + $0x380] sm:$0xff]
    %v1186 = vld [vmem:[#allocation2 + $0x3a8] sm:$0xff]
    %v1211 = vunpack.c.l.b16 %v1163
    %v1212 = vunpack.c.h.b16 %v1163
    %v1213 = vunpack.c.l.b16 %v1164
    %v1214 = vunpack.c.h.b16 %v1164
    %v1215 = vunpack.c.l.b16 %v1165
    %v1216 = vunpack.c.h.b16 %v1165
    %v1217 = vunpack.c.l.b16 %v1166
    %v1218 = vunpack.c.h.b16 %v1166
    %v1219 = vunpack.c.l.b16 %v1167
    %v1220 = vunpack.c.h.b16 %v1167
    %v1221 = vunpack.c.l.b16 %v1168
    %v1222 = vunpack.c.h.b16 %v1168
    %v1223 = vunpack.c.l.b16 %v1169
    %v1224 = vunpack.c.h.b16 %v1169
    %v1225 = vunpack.c.l.b16 %v1170
    %v1226 = vunpack.c.h.b16 %v1170
    %v1227 = vunpack.c.l.b16 %v1171
    %v1228 = vunpack.c.h.b16 %v1171
    %v1229 = vunpack.c.l.b16 %v1172
    %v1230 = vunpack.c.h.b16 %v1172
    %v1231 = vunpack.c.l.b16 %v1173
    %v1232 = vunpack.c.h.b16 %v1173
    %v1233 = vunpack.c.l.b16 %v1174
    %v1234 = vunpack.c.h.b16 %v1174
    %v1235 = vunpack.c.l.b16 %v1175
    %v1236 = vunpack.c.h.b16 %v1175
    %v1237 = vunpack.c.l.b16 %v1176
    %v1238 = vunpack.c.h.b16 %v1176
    %v1239 = vunpack.c.l.b16 %v1177
    %v1240 = vunpack.c.h.b16 %v1177
    %v1241 = vunpack.c.l.b16 %v1178
    %v1242 = vunpack.c.h.b16 %v1178
    %v1243 = vunpack.c.l.b16 %v1179
    %v1244 = vunpack.c.h.b16 %v1179
    %v1245 = vunpack.c.l.b16 %v1180
    %v1246 = vunpack.c.h.b16 %v1180
    %v1247 = vunpack.c.l.b16 %v1181
    %v1248 = vunpack.c.h.b16 %v1181
    %v1249 = vunpack.c.l.b16 %v1182
    %v1250 = vunpack.c.h.b16 %v1182
    %v1251 = vunpack.c.l.b16 %v1183
    %v1252 = vunpack.c.h.b16 %v1183
    %v1253 = vunpack.c.l.b16 %v1184
    %v1254 = vunpack.c.h.b16 %v1184
    %v1255 = vunpack.c.l.b16 %v1185
    %v1256 = vunpack.c.h.b16 %v1185
    %v1257 = vunpack.c.l.b16 %v1186
    %v1258 = vunpack.c.h.b16 %v1186
    %v1259 = vpack.c.b16 %v1213, %v1211
    %v1260 = vpack.c.b16 %v1214, %v1212
    %v1261 = vpack.c.b16 %v1217, %v1215
    %v1262 = vpack.c.b16 %v1218, %v1216
    %v1263 = vpack.c.b16 %v1221, %v1219
    %v1264 = vpack.c.b16 %v1222, %v1220
    %v1265 = vpack.c.b16 %v1225, %v1223
    %v1266 = vpack.c.b16 %v1226, %v1224
    %v1267 = vpack.c.b16 %v1229, %v1227
    %v1268 = vpack.c.b16 %v1230, %v1228
    %v1269 = vpack.c.b16 %v1233, %v1231
    %v1270 = vpack.c.b16 %v1234, %v1232
    %v1271 = vpack.c.b16 %v1237, %v1235
    %v1272 = vpack.c.b16 %v1238, %v1236
    %v1273 = vpack.c.b16 %v1241, %v1239
    %v1274 = vpack.c.b16 %v1242, %v1240
    %v1275 = vpack.c.b16 %v1245, %v1243
    %v1276 = vpack.c.b16 %v1246, %v1244
    %v1277 = vpack.c.b16 %v1249, %v1247
    %v1278 = vpack.c.b16 %v1250, %v1248
    %v1279 = vpack.c.b16 %v1253, %v1251
    %v1280 = vpack.c.b16 %v1254, %v1252
    %v1281 = vpack.c.b16 %v1257, %v1255
    %v1282 = vpack.c.b16 %v1258, %v1256
    %1307 = vmatprep.subr.bf16.mxu0 %v1260
    %1308 = vmatpush1.bf16.msra.mxu0 %v1259
    %1309 = vmatprep.subr.bf16.mxu0 %v1262
    %1310 = vmatpush1.bf16.msra.mxu0 %v1261
    %1311 = vmatprep.subr.bf16.mxu0 %v1264
    %1312 = vmatpush1.bf16.msra.mxu0 %v1263
    %1313 = vmatprep.subr.bf16.mxu0 %v1266
    %1314 = vmatpush1.bf16.msra.mxu0 %v1265
    %1315 = vmatprep.subr.bf16.mxu0 %v1268
    %1316 = vmatpush1.bf16.msra.mxu0 %v1267
    %1317 = vmatprep.subr.bf16.mxu0 %v1270
    %1318 = vmatpush1.bf16.msra.mxu0 %v1269
    %1319 = vmatprep.subr.bf16.mxu0 %v1272
    %1320 = vmatpush1.bf16.msra.mxu0 %v1271
    %1321 = vmatprep.subr.bf16.mxu0 %v1274
    %1322 = vmatpush1.bf16.msra.mxu0 %v1273
    %1323 = vmatprep.subr.bf16.mxu0 %v1276
    %1324 = vmatpush1.bf16.msra.mxu0 %v1275
    %1325 = vmatprep.subr.bf16.mxu0 %v1278
    %1326 = vmatpush1.bf16.msra.mxu0 %v1277
    %1327 = vmatprep.subr.bf16.mxu0 %v1280
    %1328 = vmatpush1.bf16.msra.mxu0 %v1279
    %1329 = vmatprep.subr.bf16.mxu0 %v1282
    %1330 = vmatpush1.bf16.msra.mxu0 %v1281
    %1331 = vmatprep.subr.bf16.mxu0 0
    %1332 = vmatpush1.bf16.msra.mxu0 0
    %1333 = vmatprep.subr.bf16.mxu0 0
    %1334 = vmatpush1.bf16.msra.mxu0 0
    %1335 = vmatprep.subr.bf16.mxu0 0
    %1336 = vmatpush1.bf16.msra.mxu0 0
    %1337 = vmatprep.subr.bf16.mxu0 0
    %1338 = vmatpush1.bf16.msra.mxu0 0
    %1339 = vmatprep.mubr.bf16.mxu0 %v527
    %1340 = vmatmul.mubr.bf16.gmra.mrb[0].mxu0 %v381
    %v1341 = vpop.f32.mrb[0].mxu0
    %v1342 = vadd.f32 0.0, %v1341
    %v1343 = vpop.f32.mrb[0].mxu0
    %v1344 = vadd.f32 0.0, %v1343
    %v1345 = vpop.f32.mrb[0].mxu0
    %v1346 = vadd.f32 0.0, %v1345
    %v1347 = vpop.f32.mrb[0].mxu0
    %v1348 = vadd.f32 0.0, %v1347
    %1349 = vmatprep.mubr.bf16.mxu0 %v530
    %1350 = vmatmul.mubr.bf16.gmra.mrb[0].mxu0 %v383
    %v1351 = vpop.f32.mrb[0].mxu0
    %v1352 = vadd.f32 0.0, %v1351
    %v1353 = vpop.f32.mrb[0].mxu0
    %v1354 = vadd.f32 0.0, %v1353
    %v1355 = vpop.f32.mrb[0].mxu0
    %v1356 = vadd.f32 0.0, %v1355
    %v1357 = vpop.f32.mrb[0].mxu0
    %v1358 = vadd.f32 0.0, %v1357
    %1359 = vmatprep.mubr.bf16.mxu0 %v533
    %1360 = vmatmul.mubr.bf16.gmra.mrb[0].mxu0 %v385
    %v1361 = vpop.f32.mrb[0].mxu0
    %v1362 = vadd.f32 0.0, %v1361
    %v1363 = vpop.f32.mrb[0].mxu0
    %v1364 = vadd.f32 0.0, %v1363
    %v1365 = vpop.f32.mrb[0].mxu0
    %v1366 = vadd.f32 0.0, %v1365
    %v1367 = vpop.f32.mrb[0].mxu0
    %v1368 = vadd.f32 0.0, %v1367
    %1369 = vmatprep.mubr.bf16.mxu0 %v536
    %1370 = vmatmul.mubr.bf16.gmra.mrb[0].mxu0 %v387
    %v1371 = vpop.f32.mrb[0].mxu0
    %v1372 = vadd.f32 0.0, %v1371
    %v1373 = vpop.f32.mrb[0].mxu0
    %v1374 = vadd.f32 0.0, %v1373
    %v1375 = vpop.f32.mrb[0].mxu0
    %v1376 = vadd.f32 0.0, %v1375
    %v1377 = vpop.f32.mrb[0].mxu0
    %v1378 = vadd.f32 0.0, %v1377
    %1379 = vmatprep.mubr.bf16.mxu0 %v539
    %1380 = vmatmul.mubr.bf16.gmra.mrb[0].mxu0 %v389
    %v1381 = vpop.f32.mrb[0].mxu0
    %v1382 = vadd.f32 0.0, %v1381
    %v1383 = vpop.f32.mrb[0].mxu0
    %v1384 = vadd.f32 0.0, %v1383
    %v1385 = vpop.f32.mrb[0].mxu0
    %v1386 = vadd.f32 0.0, %v1385
    %v1387 = vpop.f32.mrb[0].mxu0
    %v1388 = vadd.f32 0.0, %v1387
    %1389 = vmatprep.mubr.bf16.mxu0 %v542
    %1390 = vmatmul.mubr.bf16.gmra.mrb[0].mxu0 %v391
    %v1391 = vpop.f32.mrb[0].mxu0
    %v1392 = vadd.f32 0.0, %v1391
    %v1393 = vpop.f32.mrb[0].mxu0
    %v1394 = vadd.f32 0.0, %v1393
    %v1395 = vpop.f32.mrb[0].mxu0
    %v1396 = vadd.f32 0.0, %v1395
    %v1397 = vpop.f32.mrb[0].mxu0
    %v1398 = vadd.f32 0.0, %v1397
    %1399 = vmatprep.mubr.bf16.mxu0 %v545
    %1400 = vmatmul.mubr.bf16.gmra.mrb[0].mxu0 %v393
    %v1401 = vpop.f32.mrb[0].mxu0
    %v1402 = vadd.f32 0.0, %v1401
    %v1403 = vpop.f32.mrb[0].mxu0
    %v1404 = vadd.f32 0.0, %v1403
    %v1405 = vpop.f32.mrb[0].mxu0
    %v1406 = vadd.f32 0.0, %v1405
    %v1407 = vpop.f32.mrb[0].mxu0
    %v1408 = vadd.f32 0.0, %v1407
    %1409 = vmatprep.mubr.bf16.mxu0 %v548
    %1410 = vmatmul.mubr.bf16.gmra.mrb[0].mxu0 %v395
    %v1411 = vpop.f32.mrb[0].mxu0
    %v1412 = vadd.f32 0.0, %v1411
    %v1413 = vpop.f32.mrb[0].mxu0
    %v1414 = vadd.f32 0.0, %v1413
    %v1415 = vpop.f32.mrb[0].mxu0
    %v1416 = vadd.f32 0.0, %v1415
    %v1417 = vpop.f32.mrb[0].mxu0
    %v1418 = vadd.f32 0.0, %v1417
    %1419 = vdwg.mxu0
    %s1420 = scalar_lea.vmem [#allocation4], 128
    %v1421 = vld [vmem:[%s1420] sm:$0xff]
    %v1422 = vld [vmem:[%s1420 + $0x8] sm:$0xff]
    %v1423 = vld [vmem:[%s1420 + $0x10] sm:$0xff]
    %v1424 = vld [vmem:[%s1420 + $0x18] sm:$0xff]
    %v1425 = vld [vmem:[%s1420 + $0x20] sm:$0xff]
    %v1426 = vld [vmem:[%s1420 + $0x28] sm:$0xff]
    %v1427 = vld [vmem:[%s1420 + $0x30] sm:$0xff]
    %v1428 = vld [vmem:[%s1420 + $0x38] sm:$0xff]
    %1429 = vmatprep.subr.mxu0 %v1344
    %1430 = vmatpush1.msra.mxu0 %v1342
    %1431 = vmatprep.subr.mxu0 %v1348
    %1432 = vmatpush1.msra.mxu0 %v1346
    %1433 = vmatprep.subr.mxu0 %v1354
    %1434 = vmatpush1.msra.mxu0 %v1352
    %1435 = vmatprep.subr.mxu0 %v1358
    %1436 = vmatpush1.msra.mxu0 %v1356
    %1437 = vmatprep.subr.mxu0 %v1364
    %1438 = vmatpush1.msra.mxu0 %v1362
    %1439 = vmatprep.subr.mxu0 %v1368
    %1440 = vmatpush1.msra.mxu0 %v1366
    %1441 = vmatprep.subr.mxu0 %v1374
    %1442 = vmatpush1.msra.mxu0 %v1372
    %1443 = vmatprep.subr.mxu0 %v1378
    %1444 = vmatpush1.msra.mxu0 %v1376
    %1445 = vmatprep.subr.mxu0 %v1384
    %1446 = vmatpush1.msra.mxu0 %v1382
    %1447 = vmatprep.subr.mxu0 %v1388
    %1448 = vmatpush1.msra.mxu0 %v1386
    %1449 = vmatprep.subr.mxu0 %v1394
    %1450 = vmatpush1.msra.mxu0 %v1392
    %1451 = vmatprep.subr.mxu0 %v1398
    %1452 = vmatpush1.msra.mxu0 %v1396
    %1453 = vmatprep.subr.mxu0 %v1404
    %1454 = vmatpush1.msra.mxu0 %v1402
    %1455 = vmatprep.subr.mxu0 %v1408
    %1456 = vmatpush1.msra.mxu0 %v1406
    %1457 = vmatprep.subr.mxu0 %v1414
    %1458 = vmatpush1.msra.mxu0 %v1412
    %1459 = vmatprep.subr.mxu0 %v1418
    %1460 = vmatpush1.msra.mxu0 %v1416
    %1461 = vmatprep.subr.mxu0 0.0
    %1462 = vmatpush1.msra.mxu0 0.0
    %1463 = vmatprep.subr.mxu0 0.0
    %1464 = vmatpush1.msra.mxu0 0.0
    %1465 = vmatprep.subr.mxu0 0.0
    %1466 = vmatpush1.msra.mxu0 0.0
    %1467 = vmatprep.subr.mxu0 0.0
    %1468 = vmatpush1.msra.mxu0 0.0
    %1469 = vmatprep.subr.mxu0 0.0
    %1470 = vmatpush1.msra.mxu0 0.0
    %1471 = vmatprep.subr.mxu0 0.0
    %1472 = vmatpush1.msra.mxu0 0.0
    %1473 = vmatprep.subr.mxu0 0.0
    %1474 = vmatpush1.msra.mxu0 0.0
    %1475 = vmatprep.subr.mxu0 0.0
    %1476 = vmatpush1.msra.mxu0 0.0
    %1477 = vmatprep.subr.mxu0 0.0
    %1478 = vmatpush1.msra.mxu0 0.0
    %1479 = vmatprep.subr.mxu0 0.0
    %1480 = vmatpush1.msra.mxu0 0.0
    %1481 = vmatprep.subr.mxu0 0.0
    %1482 = vmatpush1.msra.mxu0 0.0
    %1483 = vmatprep.subr.mxu0 0.0
    %1484 = vmatpush1.msra.mxu0 0.0
    %1485 = vmatprep.subr.mxu0 0.0
    %1486 = vmatpush1.msra.mxu0 0.0
    %1487 = vmatprep.subr.mxu0 0.0
    %1488 = vmatpush1.msra.mxu0 0.0
    %1489 = vmatprep.subr.mxu0 0.0
    %1490 = vmatpush1.msra.mxu0 0.0
    %1491 = vmatprep.subr.mxu0 0.0
    %1492 = vmatpush1.msra.mxu0 0.0
    %1493 = vmatprep.mubr.f32.mxu0 0.0
    %1494 = vmatmul.mubr.f32.gmra.mrb[0].mxu0 %v1421
    %v1495 = vpop.f32.mrb[0].mxu0
    %v1496 = vadd.f32 0.0, %v1495
    %v1497 = vpop.f32.mrb[0].mxu0
    %v1498 = vadd.f32 0.0, %v1497
    %1499 = vmatprep.mubr.f32.mxu0 0.0
    %1500 = vmatmul.mubr.f32.gmra.mrb[0].mxu0 %v1422
    %v1501 = vpop.f32.mrb[0].mxu0
    %v1502 = vadd.f32 0.0, %v1501
    %v1503 = vpop.f32.mrb[0].mxu0
    %v1504 = vadd.f32 0.0, %v1503
    %1505 = vmatprep.mubr.f32.mxu0 0.0
    %1506 = vmatmul.mubr.f32.gmra.mrb[0].mxu0 %v1423
    %v1507 = vpop.f32.mrb[0].mxu0
    %v1508 = vadd.f32 0.0, %v1507
    %v1509 = vpop.f32.mrb[0].mxu0
    %v1510 = vadd.f32 0.0, %v1509
    %1511 = vmatprep.mubr.f32.mxu0 0.0
    %1512 = vmatmul.mubr.f32.gmra.mrb[0].mxu0 %v1424
    %v1513 = vpop.f32.mrb[0].mxu0
    %v1514 = vadd.f32 0.0, %v1513
    %v1515 = vpop.f32.mrb[0].mxu0
    %v1516 = vadd.f32 0.0, %v1515
    %1517 = vmatprep.mubr.f32.mxu0 0.0
    %1518 = vmatmul.mubr.f32.gmra.mrb[0].mxu0 %v1425
    %v1519 = vpop.f32.mrb[0].mxu0
    %v1520 = vadd.f32 0.0, %v1519
    %v1521 = vpop.f32.mrb[0].mxu0
    %v1522 = vadd.f32 0.0, %v1521
    %1523 = vmatprep.mubr.f32.mxu0 0.0
    %1524 = vmatmul.mubr.f32.gmra.mrb[0].mxu0 %v1426
    %v1525 = vpop.f32.mrb[0].mxu0
    %v1526 = vadd.f32 0.0, %v1525
    %v1527 = vpop.f32.mrb[0].mxu0
    %v1528 = vadd.f32 0.0, %v1527
    %1529 = vmatprep.mubr.f32.mxu0 0.0
    %1530 = vmatmul.mubr.f32.gmra.mrb[0].mxu0 %v1427
    %v1531 = vpop.f32.mrb[0].mxu0
    %v1532 = vadd.f32 0.0, %v1531
    %v1533 = vpop.f32.mrb[0].mxu0
    %v1534 = vadd.f32 0.0, %v1533
    %1535 = vmatprep.mubr.f32.mxu0 0.0
    %1536 = vmatmul.mubr.f32.gmra.mrb[0].mxu0 %v1428
    %v1537 = vpop.f32.mrb[0].mxu0
    %v1538 = vadd.f32 0.0, %v1537
    %v1539 = vpop.f32.mrb[0].mxu0
    %v1540 = vadd.f32 0.0, %v1539
    %1541 = vdwg.mxu0
    %v1542 = vadd.f32 %v1117, %v1496
    %v1543 = vadd.f32 %v1119, %v1498
    %v1544 = vadd.f32 %v1123, %v1502
    %v1545 = vadd.f32 %v1125, %v1504
    %v1546 = vadd.f32 %v1129, %v1508
    %v1547 = vadd.f32 %v1131, %v1510
    %v1548 = vadd.f32 %v1135, %v1514
    %v1549 = vadd.f32 %v1137, %v1516
    %v1550 = vadd.f32 %v1141, %v1520
    %v1551 = vadd.f32 %v1143, %v1522
    %v1552 = vadd.f32 %v1147, %v1526
    %v1553 = vadd.f32 %v1149, %v1528
    %v1554 = vadd.f32 %v1153, %v1532
    %v1555 = vadd.f32 %v1155, %v1534
    %v1556 = vadd.f32 %v1159, %v1538
    %v1557 = vadd.f32 %v1161, %v1540
    %v1558 = vld [vmem:[#allocation2 + $0x18] sm:$0xff]
    %v1559 = vld [vmem:[#allocation2 + $0x40] sm:$0xff]
    %v1560 = vld [vmem:[#allocation2 + $0x68] sm:$0xff]
    %v1561 = vld [vmem:[#allocation2 + $0x90] sm:$0xff]
    %v1562 = vld [vmem:[#allocation2 + $0xb8] sm:$0xff]
    %v1563 = vld [vmem:[#allocation2 + $0xe0] sm:$0xff]
    %v1564 = vld [vmem:[#allocation2 + $0x108] sm:$0xff]
    %v1565 = vld [vmem:[#allocation2 + $0x130] sm:$0xff]
    %v1566 = vld [vmem:[#allocation2 + $0x158] sm:$0xff]
    %v1567 = vld [vmem:[#allocation2 + $0x180] sm:$0xff]
    %v1568 = vld [vmem:[#allocation2 + $0x1a8] sm:$0xff]
    %v1569 = vld [vmem:[#allocation2 + $0x1d0] sm:$0xff]
    %v1570 = vld [vmem:[#allocation2 + $0x1f8] sm:$0xff]
    %v1571 = vld [vmem:[#allocation2 + $0x220] sm:$0xff]
    %v1572 = vld [vmem:[#allocation2 + $0x248] sm:$0xff]
    %v1573 = vld [vmem:[#allocation2 + $0x270] sm:$0xff]
    %v1574 = vld [vmem:[#allocation2 + $0x298] sm:$0xff]
    %v1575 = vld [vmem:[#allocation2 + $0x2c0] sm:$0xff]
    %v1576 = vld [vmem:[#allocation2 + $0x2e8] sm:$0xff]
    %v1577 = vld [vmem:[#allocation2 + $0x310] sm:$0xff]
    %v1578 = vld [vmem:[#allocation2 + $0x338] sm:$0xff]
    %v1579 = vld [vmem:[#allocation2 + $0x360] sm:$0xff]
    %v1580 = vld [vmem:[#allocation2 + $0x388] sm:$0xff]
    %v1581 = vld [vmem:[#allocation2 + $0x3b0] sm:$0xff]
    %v1606 = vunpack.c.l.b16 %v1558
    %v1607 = vunpack.c.h.b16 %v1558
    %v1608 = vunpack.c.l.b16 %v1559
    %v1609 = vunpack.c.h.b16 %v1559
    %v1610 = vunpack.c.l.b16 %v1560
    %v1611 = vunpack.c.h.b16 %v1560
    %v1612 = vunpack.c.l.b16 %v1561
    %v1613 = vunpack.c.h.b16 %v1561
    %v1614 = vunpack.c.l.b16 %v1562
    %v1615 = vunpack.c.h.b16 %v1562
    %v1616 = vunpack.c.l.b16 %v1563
    %v1617 = vunpack.c.h.b16 %v1563
    %v1618 = vunpack.c.l.b16 %v1564
    %v1619 = vunpack.c.h.b16 %v1564
    %v1620 = vunpack.c.l.b16 %v1565
    %v1621 = vunpack.c.h.b16 %v1565
    %v1622 = vunpack.c.l.b16 %v1566
    %v1623 = vunpack.c.h.b16 %v1566
    %v1624 = vunpack.c.l.b16 %v1567
    %v1625 = vunpack.c.h.b16 %v1567
    %v1626 = vunpack.c.l.b16 %v1568
    %v1627 = vunpack.c.h.b16 %v1568
    %v1628 = vunpack.c.l.b16 %v1569
    %v1629 = vunpack.c.h.b16 %v1569
    %v1630 = vunpack.c.l.b16 %v1570
    %v1631 = vunpack.c.h.b16 %v1570
    %v1632 = vunpack.c.l.b16 %v1571
    %v1633 = vunpack.c.h.b16 %v1571
    %v1634 = vunpack.c.l.b16 %v1572
    %v1635 = vunpack.c.h.b16 %v1572
    %v1636 = vunpack.c.l.b16 %v1573
    %v1637 = vunpack.c.h.b16 %v1573
    %v1638 = vunpack.c.l.b16 %v1574
    %v1639 = vunpack.c.h.b16 %v1574
    %v1640 = vunpack.c.l.b16 %v1575
    %v1641 = vunpack.c.h.b16 %v1575
    %v1642 = vunpack.c.l.b16 %v1576
    %v1643 = vunpack.c.h.b16 %v1576
    %v1644 = vunpack.c.l.b16 %v1577
    %v1645 = vunpack.c.h.b16 %v1577
    %v1646 = vunpack.c.l.b16 %v1578
    %v1647 = vunpack.c.h.b16 %v1578
    %v1648 = vunpack.c.l.b16 %v1579
    %v1649 = vunpack.c.h.b16 %v1579
    %v1650 = vunpack.c.l.b16 %v1580
    %v1651 = vunpack.c.h.b16 %v1580
    %v1652 = vunpack.c.l.b16 %v1581
    %v1653 = vunpack.c.h.b16 %v1581
    %v1654 = vpack.c.b16 %v1608, %v1606
    %v1655 = vpack.c.b16 %v1609, %v1607
    %v1656 = vpack.c.b16 %v1612, %v1610
    %v1657 = vpack.c.b16 %v1613, %v1611
    %v1658 = vpack.c.b16 %v1616, %v1614
    %v1659 = vpack.c.b16 %v1617, %v1615
    %v1660 = vpack.c.b16 %v1620, %v1618
    %v1661 = vpack.c.b16 %v1621, %v1619
    %v1662 = vpack.c.b16 %v1624, %v1622
    %v1663 = vpack.c.b16 %v1625, %v1623
    %v1664 = vpack.c.b16 %v1628, %v1626
    %v1665 = vpack.c.b16 %v1629, %v1627
    %v1666 = vpack.c.b16 %v1632, %v1630
    %v1667 = vpack.c.b16 %v1633, %v1631
    %v1668 = vpack.c.b16 %v1636, %v1634
    %v1669 = vpack.c.b16 %v1637, %v1635
    %v1670 = vpack.c.b16 %v1640, %v1638
    %v1671 = vpack.c.b16 %v1641, %v1639
    %v1672 = vpack.c.b16 %v1644, %v1642
    %v1673 = vpack.c.b16 %v1645, %v1643
    %v1674 = vpack.c.b16 %v1648, %v1646
    %v1675 = vpack.c.b16 %v1649, %v1647
    %v1676 = vpack.c.b16 %v1652, %v1650
    %v1677 = vpack.c.b16 %v1653, %v1651
    %1702 = vmatprep.subr.bf16.mxu0 %v1655
    %1703 = vmatpush1.bf16.msra.mxu0 %v1654
    %1704 = vmatprep.subr.bf16.mxu0 %v1657
    %1705 = vmatpush1.bf16.msra.mxu0 %v1656
    %1706 = vmatprep.subr.bf16.mxu0 %v1659
    %1707 = vmatpush1.bf16.msra.mxu0 %v1658
    %1708 = vmatprep.subr.bf16.mxu0 %v1661
    %1709 = vmatpush1.bf16.msra.mxu0 %v1660
    %1710 = vmatprep.subr.bf16.mxu0 %v1663
    %1711 = vmatpush1.bf16.msra.mxu0 %v1662
    %1712 = vmatprep.subr.bf16.mxu0 %v1665
    %1713 = vmatpush1.bf16.msra.mxu0 %v1664
    %1714 = vmatprep.subr.bf16.mxu0 %v1667
    %1715 = vmatpush1.bf16.msra.mxu0 %v1666
    %1716 = vmatprep.subr.bf16.mxu0 %v1669
    %1717 = vmatpush1.bf16.msra.mxu0 %v1668
    %1718 = vmatprep.subr.bf16.mxu0 %v1671
    %1719 = vmatpush1.bf16.msra.mxu0 %v1670
    %1720 = vmatprep.subr.bf16.mxu0 %v1673
    %1721 = vmatpush1.bf16.msra.mxu0 %v1672
    %1722 = vmatprep.subr.bf16.mxu0 %v1675
    %1723 = vmatpush1.bf16.msra.mxu0 %v1674
    %1724 = vmatprep.subr.bf16.mxu0 %v1677
    %1725 = vmatpush1.bf16.msra.mxu0 %v1676
    %1726 = vmatprep.subr.bf16.mxu0 0
    %1727 = vmatpush1.bf16.msra.mxu0 0
    %1728 = vmatprep.subr.bf16.mxu0 0
    %1729 = vmatpush1.bf16.msra.mxu0 0
    %1730 = vmatprep.subr.bf16.mxu0 0
    %1731 = vmatpush1.bf16.msra.mxu0 0
    %1732 = vmatprep.subr.bf16.mxu0 0
    %1733 = vmatpush1.bf16.msra.mxu0 0
    %1734 = vmatprep.mubr.bf16.mxu0 %v527
    %1735 = vmatmul.mubr.bf16.gmra.mrb[0].mxu0 %v381
    %v1736 = vpop.f32.mrb[0].mxu0
    %v1737 = vadd.f32 0.0, %v1736
    %v1738 = vpop.f32.mrb[0].mxu0
    %v1739 = vadd.f32 0.0, %v1738
    %v1740 = vpop.f32.mrb[0].mxu0
    %v1741 = vadd.f32 0.0, %v1740
    %v1742 = vpop.f32.mrb[0].mxu0
    %v1743 = vadd.f32 0.0, %v1742
    %1744 = vmatprep.mubr.bf16.mxu0 %v530
    %1745 = vmatmul.mubr.bf16.gmra.mrb[0].mxu0 %v383
    %v1746 = vpop.f32.mrb[0].mxu0
    %v1747 = vadd.f32 0.0, %v1746
    %v1748 = vpop.f32.mrb[0].mxu0
    %v1749 = vadd.f32 0.0, %v1748
    %v1750 = vpop.f32.mrb[0].mxu0
    %v1751 = vadd.f32 0.0, %v1750
    %v1752 = vpop.f32.mrb[0].mxu0
    %v1753 = vadd.f32 0.0, %v1752
    %1754 = vmatprep.mubr.bf16.mxu0 %v533
    %1755 = vmatmul.mubr.bf16.gmra.mrb[0].mxu0 %v385
    %v1756 = vpop.f32.mrb[0].mxu0
    %v1757 = vadd.f32 0.0, %v1756
    %v1758 = vpop.f32.mrb[0].mxu0
    %v1759 = vadd.f32 0.0, %v1758
    %v1760 = vpop.f32.mrb[0].mxu0
    %v1761 = vadd.f32 0.0, %v1760
    %v1762 = vpop.f32.mrb[0].mxu0
    %v1763 = vadd.f32 0.0, %v1762
    %1764 = vmatprep.mubr.bf16.mxu0 %v536
    %1765 = vmatmul.mubr.bf16.gmra.mrb[0].mxu0 %v387
    %v1766 = vpop.f32.mrb[0].mxu0
    %v1767 = vadd.f32 0.0, %v1766
    %v1768 = vpop.f32.mrb[0].mxu0
    %v1769 = vadd.f32 0.0, %v1768
    %v1770 = vpop.f32.mrb[0].mxu0
    %v1771 = vadd.f32 0.0, %v1770
    %v1772 = vpop.f32.mrb[0].mxu0
    %v1773 = vadd.f32 0.0, %v1772
    %1774 = vmatprep.mubr.bf16.mxu0 %v539
    %1775 = vmatmul.mubr.bf16.gmra.mrb[0].mxu0 %v389
    %v1776 = vpop.f32.mrb[0].mxu0
    %v1777 = vadd.f32 0.0, %v1776
    %v1778 = vpop.f32.mrb[0].mxu0
    %v1779 = vadd.f32 0.0, %v1778
    %v1780 = vpop.f32.mrb[0].mxu0
    %v1781 = vadd.f32 0.0, %v1780
    %v1782 = vpop.f32.mrb[0].mxu0
    %v1783 = vadd.f32 0.0, %v1782
    %1784 = vmatprep.mubr.bf16.mxu0 %v542
    %1785 = vmatmul.mubr.bf16.gmra.mrb[0].mxu0 %v391
    %v1786 = vpop.f32.mrb[0].mxu0
    %v1787 = vadd.f32 0.0, %v1786
    %v1788 = vpop.f32.mrb[0].mxu0
    %v1789 = vadd.f32 0.0, %v1788
    %v1790 = vpop.f32.mrb[0].mxu0
    %v1791 = vadd.f32 0.0, %v1790
    %v1792 = vpop.f32.mrb[0].mxu0
    %v1793 = vadd.f32 0.0, %v1792
    %1794 = vmatprep.mubr.bf16.mxu0 %v545
    %1795 = vmatmul.mubr.bf16.gmra.mrb[0].mxu0 %v393
    %v1796 = vpop.f32.mrb[0].mxu0
    %v1797 = vadd.f32 0.0, %v1796
    %v1798 = vpop.f32.mrb[0].mxu0
    %v1799 = vadd.f32 0.0, %v1798
    %v1800 = vpop.f32.mrb[0].mxu0
    %v1801 = vadd.f32 0.0, %v1800
    %v1802 = vpop.f32.mrb[0].mxu0
    %v1803 = vadd.f32 0.0, %v1802
    %1804 = vmatprep.mubr.bf16.mxu0 %v548
    %1805 = vmatmul.mubr.bf16.gmra.mrb[0].mxu0 %v395
    %v1806 = vpop.f32.mrb[0].mxu0
    %v1807 = vadd.f32 0.0, %v1806
    %v1808 = vpop.f32.mrb[0].mxu0
    %v1809 = vadd.f32 0.0, %v1808
    %v1810 = vpop.f32.mrb[0].mxu0
    %v1811 = vadd.f32 0.0, %v1810
    %v1812 = vpop.f32.mrb[0].mxu0
    %v1813 = vadd.f32 0.0, %v1812
    %1814 = vdwg.mxu0
    %s1815 = scalar_lea.vmem [#allocation4], 192
    %v1816 = vld [vmem:[%s1815] sm:$0xff]
    %v1817 = vld [vmem:[%s1815 + $0x8] sm:$0xff]
    %v1818 = vld [vmem:[%s1815 + $0x10] sm:$0xff]
    %v1819 = vld [vmem:[%s1815 + $0x18] sm:$0xff]
    %v1820 = vld [vmem:[%s1815 + $0x20] sm:$0xff]
    %v1821 = vld [vmem:[%s1815 + $0x28] sm:$0xff]
    %v1822 = vld [vmem:[%s1815 + $0x30] sm:$0xff]
    %v1823 = vld [vmem:[%s1815 + $0x38] sm:$0xff]
    %1824 = vmatprep.subr.mxu0 %v1739
    %1825 = vmatpush1.msra.mxu0 %v1737
    %1826 = vmatprep.subr.mxu0 %v1743
    %1827 = vmatpush1.msra.mxu0 %v1741
    %1828 = vmatprep.subr.mxu0 %v1749
    %1829 = vmatpush1.msra.mxu0 %v1747
    %1830 = vmatprep.subr.mxu0 %v1753
    %1831 = vmatpush1.msra.mxu0 %v1751
    %1832 = vmatprep.subr.mxu0 %v1759
    %1833 = vmatpush1.msra.mxu0 %v1757
    %1834 = vmatprep.subr.mxu0 %v1763
    %1835 = vmatpush1.msra.mxu0 %v1761
    %1836 = vmatprep.subr.mxu0 %v1769
    %1837 = vmatpush1.msra.mxu0 %v1767
    %1838 = vmatprep.subr.mxu0 %v1773
    %1839 = vmatpush1.msra.mxu0 %v1771
    %1840 = vmatprep.subr.mxu0 %v1779
    %1841 = vmatpush1.msra.mxu0 %v1777
    %1842 = vmatprep.subr.mxu0 %v1783
    %1843 = vmatpush1.msra.mxu0 %v1781
    %1844 = vmatprep.subr.mxu0 %v1789
    %1845 = vmatpush1.msra.mxu0 %v1787
    %1846 = vmatprep.subr.mxu0 %v1793
    %1847 = vmatpush1.msra.mxu0 %v1791
    %1848 = vmatprep.subr.mxu0 %v1799
    %1849 = vmatpush1.msra.mxu0 %v1797
    %1850 = vmatprep.subr.mxu0 %v1803
    %1851 = vmatpush1.msra.mxu0 %v1801
    %1852 = vmatprep.subr.mxu0 %v1809
    %1853 = vmatpush1.msra.mxu0 %v1807
    %1854 = vmatprep.subr.mxu0 %v1813
    %1855 = vmatpush1.msra.mxu0 %v1811
    %1856 = vmatprep.subr.mxu0 0.0
    %1857 = vmatpush1.msra.mxu0 0.0
    %1858 = vmatprep.subr.mxu0 0.0
    %1859 = vmatpush1.msra.mxu0 0.0
    %1860 = vmatprep.subr.mxu0 0.0
    %1861 = vmatpush1.msra.mxu0 0.0
    %1862 = vmatprep.subr.mxu0 0.0
    %1863 = vmatpush1.msra.mxu0 0.0
    %1864 = vmatprep.subr.mxu0 0.0
    %1865 = vmatpush1.msra.mxu0 0.0
    %1866 = vmatprep.subr.mxu0 0.0
    %1867 = vmatpush1.msra.mxu0 0.0
    %1868 = vmatprep.subr.mxu0 0.0
    %1869 = vmatpush1.msra.mxu0 0.0
    %1870 = vmatprep.subr.mxu0 0.0
    %1871 = vmatpush1.msra.mxu0 0.0
    %1872 = vmatprep.subr.mxu0 0.0
    %1873 = vmatpush1.msra.mxu0 0.0
    %1874 = vmatprep.subr.mxu0 0.0
    %1875 = vmatpush1.msra.mxu0 0.0
    %1876 = vmatprep.subr.mxu0 0.0
    %1877 = vmatpush1.msra.mxu0 0.0
    %1878 = vmatprep.subr.mxu0 0.0
    %1879 = vmatpush1.msra.mxu0 0.0
    %1880 = vmatprep.subr.mxu0 0.0
    %1881 = vmatpush1.msra.mxu0 0.0
    %1882 = vmatprep.subr.mxu0 0.0
    %1883 = vmatpush1.msra.mxu0 0.0
    %1884 = vmatprep.subr.mxu0 0.0
    %1885 = vmatpush1.msra.mxu0 0.0
    %1886 = vmatprep.subr.mxu0 0.0
    %1887 = vmatpush1.msra.mxu0 0.0
    %1888 = vmatprep.mubr.f32.mxu0 0.0
    %1889 = vmatmul.mubr.f32.gmra.mrb[0].mxu0 %v1816
    %v1890 = vpop.f32.mrb[0].mxu0
    %v1891 = vadd.f32 0.0, %v1890
    %v1892 = vpop.f32.mrb[0].mxu0
    %v1893 = vadd.f32 0.0, %v1892
    %1894 = vmatprep.mubr.f32.mxu0 0.0
    %1895 = vmatmul.mubr.f32.gmra.mrb[0].mxu0 %v1817
    %v1896 = vpop.f32.mrb[0].mxu0
    %v1897 = vadd.f32 0.0, %v1896
    %v1898 = vpop.f32.mrb[0].mxu0
    %v1899 = vadd.f32 0.0, %v1898
    %1900 = vmatprep.mubr.f32.mxu0 0.0
    %1901 = vmatmul.mubr.f32.gmra.mrb[0].mxu0 %v1818
    %v1902 = vpop.f32.mrb[0].mxu0
    %v1903 = vadd.f32 0.0, %v1902
    %v1904 = vpop.f32.mrb[0].mxu0
    %v1905 = vadd.f32 0.0, %v1904
    %1906 = vmatprep.mubr.f32.mxu0 0.0
    %1907 = vmatmul.mubr.f32.gmra.mrb[0].mxu0 %v1819
    %v1908 = vpop.f32.mrb[0].mxu0
    %v1909 = vadd.f32 0.0, %v1908
    %v1910 = vpop.f32.mrb[0].mxu0
    %v1911 = vadd.f32 0.0, %v1910
    %1912 = vmatprep.mubr.f32.mxu0 0.0
    %1913 = vmatmul.mubr.f32.gmra.mrb[0].mxu0 %v1820
    %v1914 = vpop.f32.mrb[0].mxu0
    %v1915 = vadd.f32 0.0, %v1914
    %v1916 = vpop.f32.mrb[0].mxu0
    %v1917 = vadd.f32 0.0, %v1916
    %1918 = vmatprep.mubr.f32.mxu0 0.0
    %1919 = vmatmul.mubr.f32.gmra.mrb[0].mxu0 %v1821
    %v1920 = vpop.f32.mrb[0].mxu0
    %v1921 = vadd.f32 0.0, %v1920
    %v1922 = vpop.f32.mrb[0].mxu0
    %v1923 = vadd.f32 0.0, %v1922
    %1924 = vmatprep.mubr.f32.mxu0 0.0
    %1925 = vmatmul.mubr.f32.gmra.mrb[0].mxu0 %v1822
    %v1926 = vpop.f32.mrb[0].mxu0
    %v1927 = vadd.f32 0.0, %v1926
    %v1928 = vpop.f32.mrb[0].mxu0
    %v1929 = vadd.f32 0.0, %v1928
    %1930 = vmatprep.mubr.f32.mxu0 0.0
    %1931 = vmatmul.mubr.f32.gmra.mrb[0].mxu0 %v1823
    %v1932 = vpop.f32.mrb[0].mxu0
    %v1933 = vadd.f32 0.0, %v1932
    %v1934 = vpop.f32.mrb[0].mxu0
    %v1935 = vadd.f32 0.0, %v1934
    %1936 = vdwg.mxu0
    %v1937 = vadd.f32 %v1542, %v1891
    %v1938 = vadd.f32 %v1543, %v1893
    %v1939 = vadd.f32 %v1544, %v1897
    %v1940 = vadd.f32 %v1545, %v1899
    %v1941 = vadd.f32 %v1546, %v1903
    %v1942 = vadd.f32 %v1547, %v1905
    %v1943 = vadd.f32 %v1548, %v1909
    %v1944 = vadd.f32 %v1549, %v1911
    %v1945 = vadd.f32 %v1550, %v1915
    %v1946 = vadd.f32 %v1551, %v1917
    %v1947 = vadd.f32 %v1552, %v1921
    %v1948 = vadd.f32 %v1553, %v1923
    %v1949 = vadd.f32 %v1554, %v1927
    %v1950 = vadd.f32 %v1555, %v1929
    %v1951 = vadd.f32 %v1556, %v1933
    %v1952 = vadd.f32 %v1557, %v1935
    %v1953 = vld [vmem:[#allocation2 + $0x20] sm:$0xff]
    %v1954 = vld [vmem:[#allocation2 + $0x48] sm:$0xff]
    %v1955 = vld [vmem:[#allocation2 + $0x70] sm:$0xff]
    %v1956 = vld [vmem:[#allocation2 + $0x98] sm:$0xff]
    %v1957 = vld [vmem:[#allocation2 + $0xc0] sm:$0xff]
    %v1958 = vld [vmem:[#allocation2 + $0xe8] sm:$0xff]
    %v1959 = vld [vmem:[#allocation2 + $0x110] sm:$0xff]
    %v1960 = vld [vmem:[#allocation2 + $0x138] sm:$0xff]
    %v1961 = vld [vmem:[#allocation2 + $0x160] sm:$0xff]
    %v1962 = vld [vmem:[#allocation2 + $0x188] sm:$0xff]
    %v1963 = vld [vmem:[#allocation2 + $0x1b0] sm:$0xff]
    %v1964 = vld [vmem:[#allocation2 + $0x1d8] sm:$0xff]
    %v1965 = vld [vmem:[#allocation2 + $0x200] sm:$0xff]
    %v1966 = vld [vmem:[#allocation2 + $0x228] sm:$0xff]
    %v1967 = vld [vmem:[#allocation2 + $0x250] sm:$0xff]
    %v1968 = vld [vmem:[#allocation2 + $0x278] sm:$0xff]
    %v1969 = vld [vmem:[#allocation2 + $0x2a0] sm:$0xff]
    %v1970 = vld [vmem:[#allocation2 + $0x2c8] sm:$0xff]
    %v1971 = vld [vmem:[#allocation2 + $0x2f0] sm:$0xff]
    %v1972 = vld [vmem:[#allocation2 + $0x318] sm:$0xff]
    %v1973 = vld [vmem:[#allocation2 + $0x340] sm:$0xff]
    %v1974 = vld [vmem:[#allocation2 + $0x368] sm:$0xff]
    %v1975 = vld [vmem:[#allocation2 + $0x390] sm:$0xff]
    %v1976 = vld [vmem:[#allocation2 + $0x3b8] sm:$0xff]
    %v2001 = vunpack.c.l.b16 %v1953
    %v2002 = vunpack.c.h.b16 %v1953
    %v2003 = vunpack.c.l.b16 %v1954
    %v2004 = vunpack.c.h.b16 %v1954
    %v2005 = vunpack.c.l.b16 %v1955
    %v2006 = vunpack.c.h.b16 %v1955
    %v2007 = vunpack.c.l.b16 %v1956
    %v2008 = vunpack.c.h.b16 %v1956
    %v2009 = vunpack.c.l.b16 %v1957
    %v2010 = vunpack.c.h.b16 %v1957
    %v2011 = vunpack.c.l.b16 %v1958
    %v2012 = vunpack.c.h.b16 %v1958
    %v2013 = vunpack.c.l.b16 %v1959
    %v2014 = vunpack.c.h.b16 %v1959
    %v2015 = vunpack.c.l.b16 %v1960
    %v2016 = vunpack.c.h.b16 %v1960
    %v2017 = vunpack.c.l.b16 %v1961
    %v2018 = vunpack.c.h.b16 %v1961
    %v2019 = vunpack.c.l.b16 %v1962
    %v2020 = vunpack.c.h.b16 %v1962
    %v2021 = vunpack.c.l.b16 %v1963
    %v2022 = vunpack.c.h.b16 %v1963
    %v2023 = vunpack.c.l.b16 %v1964
    %v2024 = vunpack.c.h.b16 %v1964
    %v2025 = vunpack.c.l.b16 %v1965
    %v2026 = vunpack.c.h.b16 %v1965
    %v2027 = vunpack.c.l.b16 %v1966
    %v2028 = vunpack.c.h.b16 %v1966
    %v2029 = vunpack.c.l.b16 %v1967
    %v2030 = vunpack.c.h.b16 %v1967
    %v2031 = vunpack.c.l.b16 %v1968
    %v2032 = vunpack.c.h.b16 %v1968
    %v2033 = vunpack.c.l.b16 %v1969
    %v2034 = vunpack.c.h.b16 %v1969
    %v2035 = vunpack.c.l.b16 %v1970
    %v2036 = vunpack.c.h.b16 %v1970
    %v2037 = vunpack.c.l.b16 %v1971
    %v2038 = vunpack.c.h.b16 %v1971
    %v2039 = vunpack.c.l.b16 %v1972
    %v2040 = vunpack.c.h.b16 %v1972
    %v2041 = vunpack.c.l.b16 %v1973
    %v2042 = vunpack.c.h.b16 %v1973
    %v2043 = vunpack.c.l.b16 %v1974
    %v2044 = vunpack.c.h.b16 %v1974
    %v2045 = vunpack.c.l.b16 %v1975
    %v2046 = vunpack.c.h.b16 %v1975
    %v2047 = vunpack.c.l.b16 %v1976
    %v2048 = vunpack.c.h.b16 %v1976
    %v2049 = vpack.c.b16 %v2003, %v2001
    %v2050 = vpack.c.b16 %v2004, %v2002
    %v2051 = vpack.c.b16 %v2007, %v2005
    %v2052 = vpack.c.b16 %v2008, %v2006
    %v2053 = vpack.c.b16 %v2011, %v2009
    %v2054 = vpack.c.b16 %v2012, %v2010
    %v2055 = vpack.c.b16 %v2015, %v2013
    %v2056 = vpack.c.b16 %v2016, %v2014
    %v2057 = vpack.c.b16 %v2019, %v2017
    %v2058 = vpack.c.b16 %v2020, %v2018
    %v2059 = vpack.c.b16 %v2023, %v2021
    %v2060 = vpack.c.b16 %v2024, %v2022
    %v2061 = vpack.c.b16 %v2027, %v2025
    %v2062 = vpack.c.b16 %v2028, %v2026
    %v2063 = vpack.c.b16 %v2031, %v2029
    %v2064 = vpack.c.b16 %v2032, %v2030
    %v2065 = vpack.c.b16 %v2035, %v2033
    %v2066 = vpack.c.b16 %v2036, %v2034
    %v2067 = vpack.c.b16 %v2039, %v2037
    %v2068 = vpack.c.b16 %v2040, %v2038
    %v2069 = vpack.c.b16 %v2043, %v2041
    %v2070 = vpack.c.b16 %v2044, %v2042
    %v2071 = vpack.c.b16 %v2047, %v2045
    %v2072 = vpack.c.b16 %v2048, %v2046
    %2097 = vmatprep.subr.bf16.mxu0 %v2050
    %2098 = vmatpush1.bf16.msra.mxu0 %v2049
    %2099 = vmatprep.subr.bf16.mxu0 %v2052
    %2100 = vmatpush1.bf16.msra.mxu0 %v2051
    %2101 = vmatprep.subr.bf16.mxu0 %v2054
    %2102 = vmatpush1.bf16.msra.mxu0 %v2053
    %2103 = vmatprep.subr.bf16.mxu0 %v2056
    %2104 = vmatpush1.bf16.msra.mxu0 %v2055
    %2105 = vmatprep.subr.bf16.mxu0 %v2058
    %2106 = vmatpush1.bf16.msra.mxu0 %v2057
    %2107 = vmatprep.subr.bf16.mxu0 %v2060
    %2108 = vmatpush1.bf16.msra.mxu0 %v2059
    %2109 = vmatprep.subr.bf16.mxu0 %v2062
    %2110 = vmatpush1.bf16.msra.mxu0 %v2061
    %2111 = vmatprep.subr.bf16.mxu0 %v2064
    %2112 = vmatpush1.bf16.msra.mxu0 %v2063
    %2113 = vmatprep.subr.bf16.mxu0 %v2066
    %2114 = vmatpush1.bf16.msra.mxu0 %v2065
    %2115 = vmatprep.subr.bf16.mxu0 %v2068
    %2116 = vmatpush1.bf16.msra.mxu0 %v2067
    %2117 = vmatprep.subr.bf16.mxu0 %v2070
    %2118 = vmatpush1.bf16.msra.mxu0 %v2069
    %2119 = vmatprep.subr.bf16.mxu0 %v2072
    %2120 = vmatpush1.bf16.msra.mxu0 %v2071
    %2121 = vmatprep.subr.bf16.mxu0 0
    %2122 = vmatpush1.bf16.msra.mxu0 0
    %2123 = vmatprep.subr.bf16.mxu0 0
    %2124 = vmatpush1.bf16.msra.mxu0 0
    %2125 = vmatprep.subr.bf16.mxu0 0
    %2126 = vmatpush1.bf16.msra.mxu0 0
    %2127 = vmatprep.subr.bf16.mxu0 0
    %2128 = vmatpush1.bf16.msra.mxu0 0
    %2129 = vmatprep.mubr.bf16.mxu0 %v527
    %2130 = vmatmul.mubr.bf16.gmra.mrb[0].mxu0 %v381
    %v2131 = vpop.f32.mrb[0].mxu0
    %v2132 = vadd.f32 0.0, %v2131
    %v2133 = vpop.f32.mrb[0].mxu0
    %v2134 = vadd.f32 0.0, %v2133
    %v2135 = vpop.f32.mrb[0].mxu0
    %v2136 = vadd.f32 0.0, %v2135
    %v2137 = vpop.f32.mrb[0].mxu0
    %v2138 = vadd.f32 0.0, %v2137
    %2139 = vmatprep.mubr.bf16.mxu0 %v530
    %2140 = vmatmul.mubr.bf16.gmra.mrb[0].mxu0 %v383
    %v2141 = vpop.f32.mrb[0].mxu0
    %v2142 = vadd.f32 0.0, %v2141
    %v2143 = vpop.f32.mrb[0].mxu0
    %v2144 = vadd.f32 0.0, %v2143
    %v2145 = vpop.f32.mrb[0].mxu0
    %v2146 = vadd.f32 0.0, %v2145
    %v2147 = vpop.f32.mrb[0].mxu0
    %v2148 = vadd.f32 0.0, %v2147
    %2149 = vmatprep.mubr.bf16.mxu0 %v533
    %2150 = vmatmul.mubr.bf16.gmra.mrb[0].mxu0 %v385
    %v2151 = vpop.f32.mrb[0].mxu0
    %v2152 = vadd.f32 0.0, %v2151
    %v2153 = vpop.f32.mrb[0].mxu0
    %v2154 = vadd.f32 0.0, %v2153
    %v2155 = vpop.f32.mrb[0].mxu0
    %v2156 = vadd.f32 0.0, %v2155
    %v2157 = vpop.f32.mrb[0].mxu0
    %v2158 = vadd.f32 0.0, %v2157
    %2159 = vmatprep.mubr.bf16.mxu0 %v536
    %2160 = vmatmul.mubr.bf16.gmra.mrb[0].mxu0 %v387
    %v2161 = vpop.f32.mrb[0].mxu0
    %v2162 = vadd.f32 0.0, %v2161
    %v2163 = vpop.f32.mrb[0].mxu0
    %v2164 = vadd.f32 0.0, %v2163
    %v2165 = vpop.f32.mrb[0].mxu0
    %v2166 = vadd.f32 0.0, %v2165
    %v2167 = vpop.f32.mrb[0].mxu0
    %v2168 = vadd.f32 0.0, %v2167
    %2169 = vmatprep.mubr.bf16.mxu0 %v539
    %2170 = vmatmul.mubr.bf16.gmra.mrb[0].mxu0 %v389
    %v2171 = vpop.f32.mrb[0].mxu0
    %v2172 = vadd.f32 0.0, %v2171
    %v2173 = vpop.f32.mrb[0].mxu0
    %v2174 = vadd.f32 0.0, %v2173
    %v2175 = vpop.f32.mrb[0].mxu0
    %v2176 = vadd.f32 0.0, %v2175
    %v2177 = vpop.f32.mrb[0].mxu0
    %v2178 = vadd.f32 0.0, %v2177
    %2179 = vmatprep.mubr.bf16.mxu0 %v542
    %2180 = vmatmul.mubr.bf16.gmra.mrb[0].mxu0 %v391
    %v2181 = vpop.f32.mrb[0].mxu0
    %v2182 = vadd.f32 0.0, %v2181
    %v2183 = vpop.f32.mrb[0].mxu0
    %v2184 = vadd.f32 0.0, %v2183
    %v2185 = vpop.f32.mrb[0].mxu0
    %v2186 = vadd.f32 0.0, %v2185
    %v2187 = vpop.f32.mrb[0].mxu0
    %v2188 = vadd.f32 0.0, %v2187
    %2189 = vmatprep.mubr.bf16.mxu0 %v545
    %2190 = vmatmul.mubr.bf16.gmra.mrb[0].mxu0 %v393
    %v2191 = vpop.f32.mrb[0].mxu0
    %v2192 = vadd.f32 0.0, %v2191
    %v2193 = vpop.f32.mrb[0].mxu0
    %v2194 = vadd.f32 0.0, %v2193
    %v2195 = vpop.f32.mrb[0].mxu0
    %v2196 = vadd.f32 0.0, %v2195
    %v2197 = vpop.f32.mrb[0].mxu0
    %v2198 = vadd.f32 0.0, %v2197
    %2199 = vmatprep.mubr.bf16.mxu0 %v548
    %2200 = vmatmul.mubr.bf16.gmra.mrb[0].mxu0 %v395
    %v2201 = vpop.f32.mrb[0].mxu0
    %v2202 = vadd.f32 0.0, %v2201
    %v2203 = vpop.f32.mrb[0].mxu0
    %v2204 = vadd.f32 0.0, %v2203
    %v2205 = vpop.f32.mrb[0].mxu0
    %v2206 = vadd.f32 0.0, %v2205
    %v2207 = vpop.f32.mrb[0].mxu0
    %v2208 = vadd.f32 0.0, %v2207
    %2209 = vdwg.mxu0
    %s2210 = scalar_lea.vmem [#allocation4], 256
    %v2211 = vld [vmem:[%s2210] sm:$0xff]
    %v2212 = vld [vmem:[%s2210 + $0x8] sm:$0xff]
    %v2213 = vld [vmem:[%s2210 + $0x10] sm:$0xff]
    %v2214 = vld [vmem:[%s2210 + $0x18] sm:$0xff]
    %v2215 = vld [vmem:[%s2210 + $0x20] sm:$0xff]
    %v2216 = vld [vmem:[%s2210 + $0x28] sm:$0xff]
    %v2217 = vld [vmem:[%s2210 + $0x30] sm:$0xff]
    %v2218 = vld [vmem:[%s2210 + $0x38] sm:$0xff]
    %2219 = vmatprep.subr.mxu0 %v2134
    %2220 = vmatpush1.msra.mxu0 %v2132
    %2221 = vmatprep.subr.mxu0 %v2138
    %2222 = vmatpush1.msra.mxu0 %v2136
    %2223 = vmatprep.subr.mxu0 %v2144
    %2224 = vmatpush1.msra.mxu0 %v2142
    %2225 = vmatprep.subr.mxu0 %v2148
    %2226 = vmatpush1.msra.mxu0 %v2146
    %2227 = vmatprep.subr.mxu0 %v2154
    %2228 = vmatpush1.msra.mxu0 %v2152
    %2229 = vmatprep.subr.mxu0 %v2158
    %2230 = vmatpush1.msra.mxu0 %v2156
    %2231 = vmatprep.subr.mxu0 %v2164
    %2232 = vmatpush1.msra.mxu0 %v2162
    %2233 = vmatprep.subr.mxu0 %v2168
    %2234 = vmatpush1.msra.mxu0 %v2166
    %2235 = vmatprep.subr.mxu0 %v2174
    %2236 = vmatpush1.msra.mxu0 %v2172
    %2237 = vmatprep.subr.mxu0 %v2178
    %2238 = vmatpush1.msra.mxu0 %v2176
    %2239 = vmatprep.subr.mxu0 %v2184
    %2240 = vmatpush1.msra.mxu0 %v2182
    %2241 = vmatprep.subr.mxu0 %v2188
    %2242 = vmatpush1.msra.mxu0 %v2186
    %2243 = vmatprep.subr.mxu0 %v2194
    %2244 = vmatpush1.msra.mxu0 %v2192
    %2245 = vmatprep.subr.mxu0 %v2198
    %2246 = vmatpush1.msra.mxu0 %v2196
    %2247 = vmatprep.subr.mxu0 %v2204
    %2248 = vmatpush1.msra.mxu0 %v2202
    %2249 = vmatprep.subr.mxu0 %v2208
    %2250 = vmatpush1.msra.mxu0 %v2206
    %2251 = vmatprep.subr.mxu0 0.0
    %2252 = vmatpush1.msra.mxu0 0.0
    %2253 = vmatprep.subr.mxu0 0.0
    %2254 = vmatpush1.msra.mxu0 0.0
    %2255 = vmatprep.subr.mxu0 0.0
    %2256 = vmatpush1.msra.mxu0 0.0
    %2257 = vmatprep.subr.mxu0 0.0
    %2258 = vmatpush1.msra.mxu0 0.0
    %2259 = vmatprep.subr.mxu0 0.0
    %2260 = vmatpush1.msra.mxu0 0.0
    %2261 = vmatprep.subr.mxu0 0.0
    %2262 = vmatpush1.msra.mxu0 0.0
    %2263 = vmatprep.subr.mxu0 0.0
    %2264 = vmatpush1.msra.mxu0 0.0
    %2265 = vmatprep.subr.mxu0 0.0
    %2266 = vmatpush1.msra.mxu0 0.0
    %2267 = vmatprep.subr.mxu0 0.0
    %2268 = vmatpush1.msra.mxu0 0.0
    %2269 = vmatprep.subr.mxu0 0.0
    %2270 = vmatpush1.msra.mxu0 0.0
    %2271 = vmatprep.subr.mxu0 0.0
    %2272 = vmatpush1.msra.mxu0 0.0
    %2273 = vmatprep.subr.mxu0 0.0
    %2274 = vmatpush1.msra.mxu0 0.0
    %2275 = vmatprep.subr.mxu0 0.0
    %2276 = vmatpush1.msra.mxu0 0.0
    %2277 = vmatprep.subr.mxu0 0.0
    %2278 = vmatpush1.msra.mxu0 0.0
    %2279 = vmatprep.subr.mxu0 0.0
    %2280 = vmatpush1.msra.mxu0 0.0
    %2281 = vmatprep.subr.mxu0 0.0
    %2282 = vmatpush1.msra.mxu0 0.0
    %2283 = vmatprep.mubr.f32.mxu0 0.0
    %2284 = vmatmul.mubr.f32.gmra.mrb[0].mxu0 %v2211
    %v2285 = vpop.f32.mrb[0].mxu0
    %v2286 = vadd.f32 0.0, %v2285
    %v2287 = vpop.f32.mrb[0].mxu0
    %v2288 = vadd.f32 0.0, %v2287
    %2289 = vmatprep.mubr.f32.mxu0 0.0
    %2290 = vmatmul.mubr.f32.gmra.mrb[0].mxu0 %v2212
    %v2291 = vpop.f32.mrb[0].mxu0
    %v2292 = vadd.f32 0.0, %v2291
    %v2293 = vpop.f32.mrb[0].mxu0
    %v2294 = vadd.f32 0.0, %v2293
    %2295 = vmatprep.mubr.f32.mxu0 0.0
    %2296 = vmatmul.mubr.f32.gmra.mrb[0].mxu0 %v2213
    %v2297 = vpop.f32.mrb[0].mxu0
    %v2298 = vadd.f32 0.0, %v2297
    %v2299 = vpop.f32.mrb[0].mxu0
    %v2300 = vadd.f32 0.0, %v2299
    %2301 = vmatprep.mubr.f32.mxu0 0.0
    %2302 = vmatmul.mubr.f32.gmra.mrb[0].mxu0 %v2214
    %v2303 = vpop.f32.mrb[0].mxu0
    %v2304 = vadd.f32 0.0, %v2303
    %v2305 = vpop.f32.mrb[0].mxu0
    %v2306 = vadd.f32 0.0, %v2305
    %2307 = vmatprep.mubr.f32.mxu0 0.0
    %2308 = vmatmul.mubr.f32.gmra.mrb[0].mxu0 %v2215
    %v2309 = vpop.f32.mrb[0].mxu0
    %v2310 = vadd.f32 0.0, %v2309
    %v2311 = vpop.f32.mrb[0].mxu0
    %v2312 = vadd.f32 0.0, %v2311
    %2313 = vmatprep.mubr.f32.mxu0 0.0
    %2314 = vmatmul.mubr.f32.gmra.mrb[0].mxu0 %v2216
    %v2315 = vpop.f32.mrb[0].mxu0
    %v2316 = vadd.f32 0.0, %v2315
    %v2317 = vpop.f32.mrb[0].mxu0
    %v2318 = vadd.f32 0.0, %v2317
    %2319 = vmatprep.mubr.f32.mxu0 0.0
    %2320 = vmatmul.mubr.f32.gmra.mrb[0].mxu0 %v2217
    %v2321 = vpop.f32.mrb[0].mxu0
    %v2322 = vadd.f32 0.0, %v2321
    %v2323 = vpop.f32.mrb[0].mxu0
    %v2324 = vadd.f32 0.0, %v2323
    %2325 = vmatprep.mubr.f32.mxu0 0.0
    %2326 = vmatmul.mubr.f32.gmra.mrb[0].mxu0 %v2218
    %v2327 = vpop.f32.mrb[0].mxu0
    %v2328 = vadd.f32 0.0, %v2327
    %v2329 = vpop.f32.mrb[0].mxu0
    %v2330 = vadd.f32 0.0, %v2329
    %2331 = vdwg.mxu0
    %v2332 = vadd.f32 %v1937, %v2286
    %v2333 = vadd.f32 %v1938, %v2288
    %v2334 = vadd.f32 %v1939, %v2292
    %v2335 = vadd.f32 %v1940, %v2294
    %v2336 = vadd.f32 %v1941, %v2298
    %v2337 = vadd.f32 %v1942, %v2300
    %v2338 = vadd.f32 %v1943, %v2304
    %v2339 = vadd.f32 %v1944, %v2306
    %v2340 = vadd.f32 %v1945, %v2310
    %v2341 = vadd.f32 %v1946, %v2312
    %v2342 = vadd.f32 %v1947, %v2316
    %v2343 = vadd.f32 %v1948, %v2318
    %v2344 = vadd.f32 %v1949, %v2322
    %v2345 = vadd.f32 %v1950, %v2324
    %v2346 = vadd.f32 %v1951, %v2328
    %v2347 = vadd.f32 %v1952, %v2330
    %v2348 = vadd.f32 %v2332, %v2334
    %v2349 = vadd.f32 %v2348, %v2336
    %v2350 = vadd.f32 %v2349, %v2338
    %v2351 = vadd.f32 %v2350, %v2340
    %v2352 = vadd.f32 %v2351, %v2342
    %v2353 = vadd.f32 %v2352, %v2344
    %v2354 = vadd.f32 %v2353, %v2346
    %v2355 = vrot.slane %v2354, 4
    %v2356 = vadd.f32 %v2354, %v2355
    %v2357 = vrot.slane %v2356, 2
    %v2358 = vadd.f32 %v2356, %v2357
    %v2359 = vrot.slane %v2358, 1
    %v2360 = vadd.f32 %v2358, %v2359
    %v2361 = vadd.f32 %v2333, %v2335
    %v2362 = vadd.f32 %v2361, %v2337
    %v2363 = vadd.f32 %v2362, %v2339
    %v2364 = vadd.f32 %v2363, %v2341
    %v2365 = vadd.f32 %v2364, %v2343
    %v2366 = vadd.f32 %v2365, %v2345
    %v2367 = vadd.f32 %v2366, %v2347
    %v2368 = vrot.slane %v2367, 4
    %v2369 = vadd.f32 %v2367, %v2368
    %v2370 = vrot.slane %v2369, 2
    %v2371 = vadd.f32 %v2369, %v2370
    %v2372 = vrot.slane %v2371, 1
    %v2373 = vadd.f32 %v2371, %v2372
    %v2374 = vmul.f32 %v2332, %v2332
    %v2375 = vmul.f32 %v2333, %v2333
    %v2376 = vmul.f32 %v2334, %v2334
    %v2377 = vmul.f32 %v2335, %v2335
    %v2378 = vmul.f32 %v2336, %v2336
    %v2379 = vmul.f32 %v2337, %v2337
    %v2380 = vmul.f32 %v2338, %v2338
    %v2381 = vmul.f32 %v2339, %v2339
    %v2382 = vmul.f32 %v2340, %v2340
    %v2383 = vmul.f32 %v2341, %v2341
    %v2384 = vmul.f32 %v2342, %v2342
    %v2385 = vmul.f32 %v2343, %v2343
    %v2386 = vmul.f32 %v2344, %v2344
    %v2387 = vmul.f32 %v2345, %v2345
    %v2388 = vmul.f32 %v2346, %v2346
    %v2389 = vmul.f32 %v2347, %v2347
    %v2390 = vadd.f32 %v2374, %v2376
    %v2391 = vadd.f32 %v2390, %v2378
    %v2392 = vadd.f32 %v2391, %v2380
    %v2393 = vadd.f32 %v2392, %v2382
    %v2394 = vadd.f32 %v2393, %v2384
    %v2395 = vadd.f32 %v2394, %v2386
    %v2396 = vadd.f32 %v2395, %v2388
    %v2397 = vrot.slane %v2396, 4
    %v2398 = vadd.f32 %v2396, %v2397
    %v2399 = vrot.slane %v2398, 2
    %v2400 = vadd.f32 %v2398, %v2399
    %v2401 = vrot.slane %v2400, 1
    %v2402 = vadd.f32 %v2400, %v2401
    %v2403 = vadd.f32 %v2375, %v2377
    %v2404 = vadd.f32 %v2403, %v2379
    %v2405 = vadd.f32 %v2404, %v2381
    %v2406 = vadd.f32 %v2405, %v2383
    %v2407 = vadd.f32 %v2406, %v2385
    %v2408 = vadd.f32 %v2407, %v2387
    %v2409 = vadd.f32 %v2408, %v2389
    %v2410 = vrot.slane %v2409, 4
    %v2411 = vadd.f32 %v2409, %v2410
    %v2412 = vrot.slane %v2411, 2
    %v2413 = vadd.f32 %v2411, %v2412
    %v2414 = vrot.slane %v2413, 1
    %v2415 = vadd.f32 %v2413, %v2414
    %v2416 = vld [vmem:[%s3] sm:$0xff]
    %v2417 = vld [vmem:[%s3 + $0x8] sm:$0xff]
    %v2418 = vld [vmem:[%s3 + $0x10] sm:$0xff]
    %v2419 = vld [vmem:[%s3 + $0x18] sm:$0xff]
    %v2420 = vld [vmem:[%s3 + $0x20] sm:$0xff]
    %v2421 = vld [vmem:[%s3 + $0x28] sm:$0xff]
    %v2422 = vld [vmem:[%s3 + $0x30] sm:$0xff]
    %v2423 = vld [vmem:[%s3 + $0x38] sm:$0xff]
    %v2424 = vld [vmem:[%s3 + $0x40] sm:$0xff]
    %v2425 = vld [vmem:[%s3 + $0x48] sm:$0xff]
    %v2426 = vld [vmem:[%s3 + $0x50] sm:$0xff]
    %v2427 = vld [vmem:[%s3 + $0x58] sm:$0xff]
    %v2428 = vld [vmem:[%s3 + $0x60] sm:$0xff]
    %v2429 = vld [vmem:[%s3 + $0x68] sm:$0xff]
    %v2430 = vld [vmem:[%s3 + $0x70] sm:$0xff]
    %v2431 = vld [vmem:[%s3 + $0x78] sm:$0xff]
    %v2432 = vld [vmem:[%s3 + $0x80] sm:$0xff]
    %v2433 = vld [vmem:[%s3 + $0x88] sm:$0xff]
    %v2434 = vld [vmem:[%s3 + $0x90] sm:$0xff]
    %v2435 = vld [vmem:[%s3 + $0x98] sm:$0xff]
    %v2436 = vld [vmem:[%s3 + $0xa0] sm:$0xff]
    %v2437 = vld [vmem:[%s3 + $0xa8] sm:$0xff]
    %v2438 = vld [vmem:[%s3 + $0xb0] sm:$0xff]
    %v2439 = vld [vmem:[%s3 + $0xb8] sm:$0xff]
    %v2440 = vld [vmem:[%s3 + $0xc0] sm:$0xff]
    %v2441 = vld [vmem:[%s3 + $0xc8] sm:$0xff]
    %v2442 = vld [vmem:[%s3 + $0xd0] sm:$0xff]
    %v2443 = vld [vmem:[%s3 + $0xd8] sm:$0xff]
    %v2444 = vld [vmem:[%s3 + $0xe0] sm:$0xff]
    %v2445 = vld [vmem:[%s3 + $0xe8] sm:$0xff]
    %v2446 = vld [vmem:[%s3 + $0xf0] sm:$0xff]
    %v2447 = vld [vmem:[%s3 + $0xf8] sm:$0xff]
    %2448 = vmatprep.subr.mxu0 0.0
    %2449 = vmatpush1.msra.mxu0 %v2416
    %2450 = vmatprep.subr.mxu0 0.0
    %2451 = vmatpush1.msra.mxu0 %v2417
    %2452 = vmatprep.subr.mxu0 0.0
    %2453 = vmatpush1.msra.mxu0 %v2418
    %2454 = vmatprep.subr.mxu0 0.0
    %2455 = vmatpush1.msra.mxu0 %v2419
    %2456 = vmatprep.subr.mxu0 0.0
    %2457 = vmatpush1.msra.mxu0 %v2420
    %2458 = vmatprep.subr.mxu0 0.0
    %2459 = vmatpush1.msra.mxu0 %v2421
    %2460 = vmatprep.subr.mxu0 0.0
    %2461 = vmatpush1.msra.mxu0 %v2422
    %2462 = vmatprep.subr.mxu0 0.0
    %2463 = vmatpush1.msra.mxu0 %v2423
    %2464 = vmatprep.subr.mxu0 0.0
    %2465 = vmatpush1.msra.mxu0 %v2424
    %2466 = vmatprep.subr.mxu0 0.0
    %2467 = vmatpush1.msra.mxu0 %v2425
    %2468 = vmatprep.subr.mxu0 0.0
    %2469 = vmatpush1.msra.mxu0 %v2426
    %2470 = vmatprep.subr.mxu0 0.0
    %2471 = vmatpush1.msra.mxu0 %v2427
    %2472 = vmatprep.subr.mxu0 0.0
    %2473 = vmatpush1.msra.mxu0 %v2428
    %2474 = vmatprep.subr.mxu0 0.0
    %2475 = vmatpush1.msra.mxu0 %v2429
    %2476 = vmatprep.subr.mxu0 0.0
    %2477 = vmatpush1.msra.mxu0 %v2430
    %2478 = vmatprep.subr.mxu0 0.0
    %2479 = vmatpush1.msra.mxu0 %v2431
    %2480 = vmatprep.subr.mxu0 0.0
    %2481 = vmatpush1.msra.mxu0 %v2432
    %2482 = vmatprep.subr.mxu0 0.0
    %2483 = vmatpush1.msra.mxu0 %v2433
    %2484 = vmatprep.subr.mxu0 0.0
    %2485 = vmatpush1.msra.mxu0 %v2434
    %2486 = vmatprep.subr.mxu0 0.0
    %2487 = vmatpush1.msra.mxu0 %v2435
    %2488 = vmatprep.subr.mxu0 0.0
    %2489 = vmatpush1.msra.mxu0 %v2436
    %2490 = vmatprep.subr.mxu0 0.0
    %2491 = vmatpush1.msra.mxu0 %v2437
    %2492 = vmatprep.subr.mxu0 0.0
    %2493 = vmatpush1.msra.mxu0 %v2438
    %2494 = vmatprep.subr.mxu0 0.0
    %2495 = vmatpush1.msra.mxu0 %v2439
    %2496 = vmatprep.subr.mxu0 0.0
    %2497 = vmatpush1.msra.mxu0 %v2440
    %2498 = vmatprep.subr.mxu0 0.0
    %2499 = vmatpush1.msra.mxu0 %v2441
    %2500 = vmatprep.subr.mxu0 0.0
    %2501 = vmatpush1.msra.mxu0 %v2442
    %2502 = vmatprep.subr.mxu0 0.0
    %2503 = vmatpush1.msra.mxu0 %v2443
    %2504 = vmatprep.subr.mxu0 0.0
    %2505 = vmatpush1.msra.mxu0 %v2444
    %2506 = vmatprep.subr.mxu0 0.0
    %2507 = vmatpush1.msra.mxu0 %v2445
    %2508 = vmatprep.subr.mxu0 0.0
    %2509 = vmatpush1.msra.mxu0 %v2446
    %2510 = vmatprep.subr.mxu0 0.0
    %2511 = vmatpush1.msra.mxu0 %v2447
    %2512 = vmatprep.mubr.f32.mxu0 %v2373
    %2513 = vmatmul.mubr.f32.gmra.mrb[0].mxu0 %v2360
    %v2514 = vpop.f32.mrb[0].mxu0
    %v2515 = vadd.f32 0.0, %v2514
    %v2516 = vpop.f32.mrb[0].mxu0
    %2517 = vdwg.mxu0
    %2518 = vmatprep.subr.mxu0 0.0
    %2519 = vmatpush1.msra.mxu0 %v2416
    %2520 = vmatprep.subr.mxu0 0.0
    %2521 = vmatpush1.msra.mxu0 %v2417
    %2522 = vmatprep.subr.mxu0 0.0
    %2523 = vmatpush1.msra.mxu0 %v2418
    %2524 = vmatprep.subr.mxu0 0.0
    %2525 = vmatpush1.msra.mxu0 %v2419
    %2526 = vmatprep.subr.mxu0 0.0
    %2527 = vmatpush1.msra.mxu0 %v2420
    %2528 = vmatprep.subr.mxu0 0.0
    %2529 = vmatpush1.msra.mxu0 %v2421
    %2530 = vmatprep.subr.mxu0 0.0
    %2531 = vmatpush1.msra.mxu0 %v2422
    %2532 = vmatprep.subr.mxu0 0.0
    %2533 = vmatpush1.msra.mxu0 %v2423
    %2534 = vmatprep.subr.mxu0 0.0
    %2535 = vmatpush1.msra.mxu0 %v2424
    %2536 = vmatprep.subr.mxu0 0.0
    %2537 = vmatpush1.msra.mxu0 %v2425
    %2538 = vmatprep.subr.mxu0 0.0
    %2539 = vmatpush1.msra.mxu0 %v2426
    %2540 = vmatprep.subr.mxu0 0.0
    %2541 = vmatpush1.msra.mxu0 %v2427
    %2542 = vmatprep.subr.mxu0 0.0
    %2543 = vmatpush1.msra.mxu0 %v2428
    %2544 = vmatprep.subr.mxu0 0.0
    %2545 = vmatpush1.msra.mxu0 %v2429
    %2546 = vmatprep.subr.mxu0 0.0
    %2547 = vmatpush1.msra.mxu0 %v2430
    %2548 = vmatprep.subr.mxu0 0.0
    %2549 = vmatpush1.msra.mxu0 %v2431
    %2550 = vmatprep.subr.mxu0 0.0
    %2551 = vmatpush1.msra.mxu0 %v2432
    %2552 = vmatprep.subr.mxu0 0.0
    %2553 = vmatpush1.msra.mxu0 %v2433
    %2554 = vmatprep.subr.mxu0 0.0
    %2555 = vmatpush1.msra.mxu0 %v2434
    %2556 = vmatprep.subr.mxu0 0.0
    %2557 = vmatpush1.msra.mxu0 %v2435
    %2558 = vmatprep.subr.mxu0 0.0
    %2559 = vmatpush1.msra.mxu0 %v2436
    %2560 = vmatprep.subr.mxu0 0.0
    %2561 = vmatpush1.msra.mxu0 %v2437
    %2562 = vmatprep.subr.mxu0 0.0
    %2563 = vmatpush1.msra.mxu0 %v2438
    %2564 = vmatprep.subr.mxu0 0.0
    %2565 = vmatpush1.msra.mxu0 %v2439
    %2566 = vmatprep.subr.mxu0 0.0
    %2567 = vmatpush1.msra.mxu0 %v2440
    %2568 = vmatprep.subr.mxu0 0.0
    %2569 = vmatpush1.msra.mxu0 %v2441
    %2570 = vmatprep.subr.mxu0 0.0
    %2571 = vmatpush1.msra.mxu0 %v2442
    %2572 = vmatprep.subr.mxu0 0.0
    %2573 = vmatpush1.msra.mxu0 %v2443
    %2574 = vmatprep.subr.mxu0 0.0
    %2575 = vmatpush1.msra.mxu0 %v2444
    %2576 = vmatprep.subr.mxu0 0.0
    %2577 = vmatpush1.msra.mxu0 %v2445
    %2578 = vmatprep.subr.mxu0 0.0
    %2579 = vmatpush1.msra.mxu0 %v2446
    %2580 = vmatprep.subr.mxu0 0.0
    %2581 = vmatpush1.msra.mxu0 %v2447
    %2582 = vmatprep.mubr.f32.mxu0 %v2415
    %2583 = vmatmul.mubr.f32.gmra.mrb[0].mxu0 %v2402
    %v2584 = vpop.f32.mrb[0].mxu0
    %v2585 = vadd.f32 0.0, %v2584
    %v2586 = vpop.f32.mrb[0].mxu0
    %2587 = vdwg.mxu0
    %v2588 = vmul.f32 %v2515, 0.00048828125
    %v2589 = vmul.f32 %v2585, 0.00048828125
    %v2590 = vmul.f32 %v2588, %v2588
    %v2591 = vsub.f32 %v2589, %v2590
    %v2592 = vmax.f32 %v2591, 0.0
    %v2593 = vld [vmem:[%s5] sm:$0x1]
    %v2594 = vadd.f32 %v2592, 1e-05
    %v2595 = vrsqrt.pop %v2594
    %v2596 = vmul.f32 %v2593, %v2595
    %v2597 = vld [vmem:[%s6] sm:$0x1]
    %v2598 = vmul.f32 %v2588, %v2596
    %v2599 = vsub.f32 %v2597, %v2598
    %v2600 = vld [vmem:[#allocation6] sm:$0xff]
    %v2601 = vld [vmem:[#allocation6 + $0x8] sm:$0xff]
    %v2602 = vld [vmem:[#allocation6 + $0x10] sm:$0xff]
    %v2603 = vld [vmem:[#allocation6 + $0x18] sm:$0xff]
    %v2604 = vld [vmem:[#allocation6 + $0x20] sm:$0xff]
    %v2605 = vld [vmem:[#allocation6 + $0x28] sm:$0xff]
    %v2606 = vld [vmem:[#allocation6 + $0x30] sm:$0xff]
    %v2607 = vld [vmem:[#allocation6 + $0x38] sm:$0xff]
    %v2608 = vld [vmem:[#allocation6 + $0x40] sm:$0xff]
    %v2609 = vld [vmem:[#allocation6 + $0x48] sm:$0xff]
    %v2610 = vld [vmem:[#allocation6 + $0x50] sm:$0xff]
    %v2611 = vld [vmem:[#allocation6 + $0x58] sm:$0xff]
    %v2612 = vld [vmem:[#allocation6 + $0x60] sm:$0xff]
    %v2613 = vld [vmem:[#allocation6 + $0x68] sm:$0xff]
    %v2614 = vld [vmem:[#allocation6 + $0x70] sm:$0xff]
    %v2615 = vld [vmem:[#allocation6 + $0x78] sm:$0xff]
    %v2616 = vld [vmem:[#allocation6 + $0x80] sm:$0xff]
    %v2617 = vld [vmem:[#allocation6 + $0x88] sm:$0xff]
    %v2618 = vld [vmem:[#allocation6 + $0x90] sm:$0xff]
    %v2619 = vld [vmem:[#allocation6 + $0x98] sm:$0xff]
    %v2620 = vld [vmem:[#allocation6 + $0xa0] sm:$0xff]
    %v2621 = vld [vmem:[#allocation6 + $0xa8] sm:$0xff]
    %v2622 = vld [vmem:[#allocation6 + $0xb0] sm:$0xff]
    %v2623 = vld [vmem:[#allocation6 + $0xb8] sm:$0xff]
    %v2624 = vld [vmem:[#allocation6 + $0xc0] sm:$0xff]
    %v2625 = vld [vmem:[#allocation6 + $0xc8] sm:$0xff]
    %v2626 = vld [vmem:[#allocation6 + $0xd0] sm:$0xff]
    %v2627 = vld [vmem:[#allocation6 + $0xd8] sm:$0xff]
    %v2628 = vld [vmem:[#allocation6 + $0xe0] sm:$0xff]
    %v2629 = vld [vmem:[#allocation6 + $0xe8] sm:$0xff]
    %v2630 = vld [vmem:[#allocation6 + $0xf0] sm:$0xff]
    %v2631 = vld [vmem:[#allocation6 + $0xf8] sm:$0xff]
    %2632 = vmatprep.subr.mxu0 %v2601
    %2633 = vmatpush1.msra.mxu0 %v2600
    %2634 = vmatprep.subr.mxu0 %v2603
    %2635 = vmatpush1.msra.mxu0 %v2602
    %2636 = vmatprep.subr.mxu0 %v2605
    %2637 = vmatpush1.msra.mxu0 %v2604
    %2638 = vmatprep.subr.mxu0 %v2607
    %2639 = vmatpush1.msra.mxu0 %v2606
    %2640 = vmatprep.subr.mxu0 %v2609
    %2641 = vmatpush1.msra.mxu0 %v2608
    %2642 = vmatprep.subr.mxu0 %v2611
    %2643 = vmatpush1.msra.mxu0 %v2610
    %2644 = vmatprep.subr.mxu0 %v2613
    %2645 = vmatpush1.msra.mxu0 %v2612
    %2646 = vmatprep.subr.mxu0 %v2615
    %2647 = vmatpush1.msra.mxu0 %v2614
    %2648 = vmatprep.subr.mxu0 %v2617
    %2649 = vmatpush1.msra.mxu0 %v2616
    %2650 = vmatprep.subr.mxu0 %v2619
    %2651 = vmatpush1.msra.mxu0 %v2618
    %2652 = vmatprep.subr.mxu0 %v2621
    %2653 = vmatpush1.msra.mxu0 %v2620
    %2654 = vmatprep.subr.mxu0 %v2623
    %2655 = vmatpush1.msra.mxu0 %v2622
    %2656 = vmatprep.subr.mxu0 %v2625
    %2657 = vmatpush1.msra.mxu0 %v2624
    %2658 = vmatprep.subr.mxu0 %v2627
    %2659 = vmatpush1.msra.mxu0 %v2626
    %2660 = vmatprep.subr.mxu0 %v2629
    %2661 = vmatpush1.msra.mxu0 %v2628
    %2662 = vmatprep.subr.mxu0 %v2631
    %2663 = vmatpush1.msra.mxu0 %v2630
    %2664 = vmatprep.subr.mxu0 0.0
    %2665 = vmatpush1.msra.mxu0 0.0
    %2666 = vmatprep.subr.mxu0 0.0
    %2667 = vmatpush1.msra.mxu0 0.0
    %2668 = vmatprep.subr.mxu0 0.0
    %2669 = vmatpush1.msra.mxu0 0.0
    %2670 = vmatprep.subr.mxu0 0.0
    %2671 = vmatpush1.msra.mxu0 0.0
    %2672 = vmatprep.subr.mxu0 0.0
    %2673 = vmatpush1.msra.mxu0 0.0
    %2674 = vmatprep.subr.mxu0 0.0
    %2675 = vmatpush1.msra.mxu0 0.0
    %2676 = vmatprep.subr.mxu0 0.0
    %2677 = vmatpush1.msra.mxu0 0.0
    %2678 = vmatprep.subr.mxu0 0.0
    %2679 = vmatpush1.msra.mxu0 0.0
    %2680 = vmatprep.subr.mxu0 0.0
    %2681 = vmatpush1.msra.mxu0 0.0
    %2682 = vmatprep.subr.mxu0 0.0
    %2683 = vmatpush1.msra.mxu0 0.0
    %2684 = vmatprep.subr.mxu0 0.0
    %2685 = vmatpush1.msra.mxu0 0.0
    %2686 = vmatprep.subr.mxu0 0.0
    %2687 = vmatpush1.msra.mxu0 0.0
    %2688 = vmatprep.subr.mxu0 0.0
    %2689 = vmatpush1.msra.mxu0 0.0
    %2690 = vmatprep.subr.mxu0 0.0
    %2691 = vmatpush1.msra.mxu0 0.0
    %2692 = vmatprep.subr.mxu0 0.0
    %2693 = vmatpush1.msra.mxu0 0.0
    %2694 = vmatprep.subr.mxu0 0.0
    %2695 = vmatpush1.msra.mxu0 0.0
    %2696 = vmatprep.mubr.f32.mxu0 0.0
    %2697 = vmatmul.mubr.f32.gmra.mrb[0].mxu0 %v2596
    %v2698 = vpop.f32.mrb[0].mxu0
    %v2699 = vadd.f32 0.0, %v2698
    %v2700 = vpop.f32.mrb[0].mxu0
    %v2701 = vadd.f32 0.0, %v2700
    %2702 = vdwg.mxu0
    %2703 = vmatprep.subr.mxu0 %v2601
    %2704 = vmatpush1.msra.mxu0 %v2600
    %2705 = vmatprep.subr.mxu0 %v2603
    %2706 = vmatpush1.msra.mxu0 %v2602
    %2707 = vmatprep.subr.mxu0 %v2605
    %2708 = vmatpush1.msra.mxu0 %v2604
    %2709 = vmatprep.subr.mxu0 %v2607
    %2710 = vmatpush1.msra.mxu0 %v2606
    %2711 = vmatprep.subr.mxu0 %v2609
    %2712 = vmatpush1.msra.mxu0 %v2608
    %2713 = vmatprep.subr.mxu0 %v2611
    %2714 = vmatpush1.msra.mxu0 %v2610
    %2715 = vmatprep.subr.mxu0 %v2613
    %2716 = vmatpush1.msra.mxu0 %v2612
    %2717 = vmatprep.subr.mxu0 %v2615
    %2718 = vmatpush1.msra.mxu0 %v2614
    %2719 = vmatprep.subr.mxu0 %v2617
    %2720 = vmatpush1.msra.mxu0 %v2616
    %2721 = vmatprep.subr.mxu0 %v2619
    %2722 = vmatpush1.msra.mxu0 %v2618
    %2723 = vmatprep.subr.mxu0 %v2621
    %2724 = vmatpush1.msra.mxu0 %v2620
    %2725 = vmatprep.subr.mxu0 %v2623
    %2726 = vmatpush1.msra.mxu0 %v2622
    %2727 = vmatprep.subr.mxu0 %v2625
    %2728 = vmatpush1.msra.mxu0 %v2624
    %2729 = vmatprep.subr.mxu0 %v2627
    %2730 = vmatpush1.msra.mxu0 %v2626
    %2731 = vmatprep.subr.mxu0 %v2629
    %2732 = vmatpush1.msra.mxu0 %v2628
    %2733 = vmatprep.subr.mxu0 %v2631
    %2734 = vmatpush1.msra.mxu0 %v2630
    %2735 = vmatprep.subr.mxu0 0.0
    %2736 = vmatpush1.msra.mxu0 0.0
    %2737 = vmatprep.subr.mxu0 0.0
    %2738 = vmatpush1.msra.mxu0 0.0
    %2739 = vmatprep.subr.mxu0 0.0
    %2740 = vmatpush1.msra.mxu0 0.0
    %2741 = vmatprep.subr.mxu0 0.0
    %2742 = vmatpush1.msra.mxu0 0.0
    %2743 = vmatprep.subr.mxu0 0.0
    %2744 = vmatpush1.msra.mxu0 0.0
    %2745 = vmatprep.subr.mxu0 0.0
    %2746 = vmatpush1.msra.mxu0 0.0
    %2747 = vmatprep.subr.mxu0 0.0
    %2748 = vmatpush1.msra.mxu0 0.0
    %2749 = vmatprep.subr.mxu0 0.0
    %2750 = vmatpush1.msra.mxu0 0.0
    %2751 = vmatprep.subr.mxu0 0.0
    %2752 = vmatpush1.msra.mxu0 0.0
    %2753 = vmatprep.subr.mxu0 0.0
    %2754 = vmatpush1.msra.mxu0 0.0
    %2755 = vmatprep.subr.mxu0 0.0
    %2756 = vmatpush1.msra.mxu0 0.0
    %2757 = vmatprep.subr.mxu0 0.0
    %2758 = vmatpush1.msra.mxu0 0.0
    %2759 = vmatprep.subr.mxu0 0.0
    %2760 = vmatpush1.msra.mxu0 0.0
    %2761 = vmatprep.subr.mxu0 0.0
    %2762 = vmatpush1.msra.mxu0 0.0
    %2763 = vmatprep.subr.mxu0 0.0
    %2764 = vmatpush1.msra.mxu0 0.0
    %2765 = vmatprep.subr.mxu0 0.0
    %2766 = vmatpush1.msra.mxu0 0.0
    %2767 = vmatprep.mubr.f32.mxu0 0.0
    %2768 = vmatmul.mubr.f32.gmra.mrb[0].mxu0 %v2599
    %v2769 = vpop.f32.mrb[0].mxu0
    %v2770 = vadd.f32 0.0, %v2769
    %v2771 = vpop.f32.mrb[0].mxu0
    %v2772 = vadd.f32 0.0, %v2771
    %2773 = vdwg.mxu0
    %v2774 = vlaneseq
    %v2775 = vshrl.u32 %v2774, 7
    %v2776 = vsub.s32 0, %v2775
    %v2777 = vrot.slane %v2699, %v2776
    %v2778 = vlaneseq
    %v2779 = vshrl.u32 %v2778, 7
    %v2780 = vsub.s32 0, %v2779
    %v2781 = vrot.slane %v2701, %v2780
    %v2782 = vmul.f32 %v2332, %v2777
    %v2783 = vmul.f32 %v2333, %v2781
    %v2784 = vmul.f32 %v2334, %v2777
    %v2785 = vmul.f32 %v2335, %v2781
    %v2786 = vmul.f32 %v2336, %v2777
    %v2787 = vmul.f32 %v2337, %v2781
    %v2788 = vmul.f32 %v2338, %v2777
    %v2789 = vmul.f32 %v2339, %v2781
    %v2790 = vmul.f32 %v2340, %v2777
    %v2791 = vmul.f32 %v2341, %v2781
    %v2792 = vmul.f32 %v2342, %v2777
    %v2793 = vmul.f32 %v2343, %v2781
    %v2794 = vmul.f32 %v2344, %v2777
    %v2795 = vmul.f32 %v2345, %v2781
    %v2796 = vmul.f32 %v2346, %v2777
    %v2797 = vmul.f32 %v2347, %v2781
    %v2798 = vlaneseq
    %v2799 = vshrl.u32 %v2798, 7
    %v2800 = vsub.s32 0, %v2799
    %v2801 = vrot.slane %v2770, %v2800
    %v2802 = vlaneseq
    %v2803 = vshrl.u32 %v2802, 7
    %v2804 = vsub.s32 0, %v2803
    %v2805 = vrot.slane %v2772, %v2804
    %v2806 = vadd.f32 %v2782, %v2801
    %v2807 = vadd.f32 %v2783, %v2805
    %v2808 = vadd.f32 %v2784, %v2801
    %v2809 = vadd.f32 %v2785, %v2805
    %v2810 = vadd.f32 %v2786, %v2801
    %v2811 = vadd.f32 %v2787, %v2805
    %v2812 = vadd.f32 %v2788, %v2801
    %v2813 = vadd.f32 %v2789, %v2805
    %v2814 = vadd.f32 %v2790, %v2801
    %v2815 = vadd.f32 %v2791, %v2805
    %v2816 = vadd.f32 %v2792, %v2801
    %v2817 = vadd.f32 %v2793, %v2805
    %v2818 = vadd.f32 %v2794, %v2801
    %v2819 = vadd.f32 %v2795, %v2805
    %v2820 = vadd.f32 %v2796, %v2801
    %v2821 = vadd.f32 %v2797, %v2805
    %v2822 = vmax.f32 %v2806, 0.0
    %v2823 = vmax.f32 %v2807, 0.0
    %v2824 = vmax.f32 %v2808, 0.0
    %v2825 = vmax.f32 %v2809, 0.0
    %v2826 = vmax.f32 %v2810, 0.0
    %v2827 = vmax.f32 %v2811, 0.0
    %v2828 = vmax.f32 %v2812, 0.0
    %v2829 = vmax.f32 %v2813, 0.0
    %v2830 = vmax.f32 %v2814, 0.0
    %v2831 = vmax.f32 %v2815, 0.0
    %v2832 = vmax.f32 %v2816, 0.0
    %v2833 = vmax.f32 %v2817, 0.0
    %v2834 = vmax.f32 %v2818, 0.0
    %v2835 = vmax.f32 %v2819, 0.0
    %v2836 = vmax.f32 %v2820, 0.0
    %v2837 = vmax.f32 %v2821, 0.0
    %v2838 = vpack.c.bf16 %v2824, %v2822
    %v2839 = vpack.c.bf16 %v2825, %v2823
    %v2840 = vpack.c.bf16 %v2828, %v2826
    %v2841 = vpack.c.bf16 %v2829, %v2827
    %v2842 = vpack.c.bf16 %v2832, %v2830
    %v2843 = vpack.c.bf16 %v2833, %v2831
    %v2844 = vpack.c.bf16 %v2836, %v2834
    %v2845 = vpack.c.bf16 %v2837, %v2835
    %v2846 = vld [vmem:[%s7] sm:$0xff]
    %v2847 = vld [vmem:[%s7 + $0x28] sm:$0xff]
    %v2848 = vld [vmem:[%s7 + $0x50] sm:$0xff]
    %v2849 = vld [vmem:[%s7 + $0x78] sm:$0xff]
    %v2850 = vld [vmem:[%s7 + $0xa0] sm:$0xff]
    %v2851 = vld [vmem:[%s7 + $0xc8] sm:$0xff]
    %v2852 = vld [vmem:[%s7 + $0xf0] sm:$0xff]
    %v2853 = vld [vmem:[%s7 + $0x118] sm:$0xff]
    %v2854 = vld [vmem:[%s7 + $0x140] sm:$0xff]
    %v2855 = vld [vmem:[%s7 + $0x168] sm:$0xff]
    %v2856 = vld [vmem:[%s7 + $0x190] sm:$0xff]
    %v2857 = vld [vmem:[%s7 + $0x1b8] sm:$0xff]
    %v2858 = vld [vmem:[%s7 + $0x1e0] sm:$0xff]
    %v2859 = vld [vmem:[%s7 + $0x208] sm:$0xff]
    %v2860 = vld [vmem:[%s7 + $0x230] sm:$0xff]
    %v2861 = vld [vmem:[%s7 + $0x258] sm:$0xff]
    %v2862 = vld [vmem:[%s7 + $0x280] sm:$0xff]
    %v2863 = vld [vmem:[%s7 + $0x2a8] sm:$0xff]
    %v2864 = vld [vmem:[%s7 + $0x2d0] sm:$0xff]
    %v2865 = vld [vmem:[%s7 + $0x2f8] sm:$0xff]
    %v2866 = vld [vmem:[%s7 + $0x320] sm:$0xff]
    %v2867 = vld [vmem:[%s7 + $0x348] sm:$0xff]
    %v2868 = vld [vmem:[%s7 + $0x370] sm:$0xff]
    %v2869 = vld [vmem:[%s7 + $0x398] sm:$0xff]
    %v2870 = vld [vmem:[%s7 + $0x3c0] sm:$0xff]
    %v2871 = vld [vmem:[%s7 + $0x3e8] sm:$0xff]
    %v2872 = vld [vmem:[%s7 + $0x410] sm:$0xff]
    %v2873 = vld [vmem:[%s7 + $0x438] sm:$0xff]
    %v2874 = vld [vmem:[%s7 + $0x460] sm:$0xff]
    %v2875 = vld [vmem:[%s7 + $0x488] sm:$0xff]
    %v2876 = vld [vmem:[%s7 + $0x4b0] sm:$0xff]
    %v2877 = vld [vmem:[%s7 + $0x4d8] sm:$0xff]
    %v2910 = vunpack.c.l.b16 %v2846
    %v2911 = vunpack.c.h.b16 %v2846
    %v2912 = vunpack.c.l.b16 %v2847
    %v2913 = vunpack.c.h.b16 %v2847
    %v2914 = vunpack.c.l.b16 %v2848
    %v2915 = vunpack.c.h.b16 %v2848
    %v2916 = vunpack.c.l.b16 %v2849
    %v2917 = vunpack.c.h.b16 %v2849
    %v2918 = vunpack.c.l.b16 %v2850
    %v2919 = vunpack.c.h.b16 %v2850
    %v2920 = vunpack.c.l.b16 %v2851
    %v2921 = vunpack.c.h.b16 %v2851
    %v2922 = vunpack.c.l.b16 %v2852
    %v2923 = vunpack.c.h.b16 %v2852
    %v2924 = vunpack.c.l.b16 %v2853
    %v2925 = vunpack.c.h.b16 %v2853
    %v2926 = vunpack.c.l.b16 %v2854
    %v2927 = vunpack.c.h.b16 %v2854
    %v2928 = vunpack.c.l.b16 %v2855
    %v2929 = vunpack.c.h.b16 %v2855
    %v2930 = vunpack.c.l.b16 %v2856
    %v2931 = vunpack.c.h.b16 %v2856
    %v2932 = vunpack.c.l.b16 %v2857
    %v2933 = vunpack.c.h.b16 %v2857
    %v2934 = vunpack.c.l.b16 %v2858
    %v2935 = vunpack.c.h.b16 %v2858
    %v2936 = vunpack.c.l.b16 %v2859
    %v2937 = vunpack.c.h.b16 %v2859
    %v2938 = vunpack.c.l.b16 %v2860
    %v2939 = vunpack.c.h.b16 %v2860
    %v2940 = vunpack.c.l.b16 %v2861
    %v2941 = vunpack.c.h.b16 %v2861
    %v2942 = vunpack.c.l.b16 %v2862
    %v2943 = vunpack.c.h.b16 %v2862
    %v2944 = vunpack.c.l.b16 %v2863
    %v2945 = vunpack.c.h.b16 %v2863
    %v2946 = vunpack.c.l.b16 %v2864
    %v2947 = vunpack.c.h.b16 %v2864
    %v2948 = vunpack.c.l.b16 %v2865
    %v2949 = vunpack.c.h.b16 %v2865
    %v2950 = vunpack.c.l.b16 %v2866
    %v2951 = vunpack.c.h.b16 %v2866
    %v2952 = vunpack.c.l.b16 %v2867
    %v2953 = vunpack.c.h.b16 %v2867
    %v2954 = vunpack.c.l.b16 %v2868
    %v2955 = vunpack.c.h.b16 %v2868
    %v2956 = vunpack.c.l.b16 %v2869
    %v2957 = vunpack.c.h.b16 %v2869
    %v2958 = vunpack.c.l.b16 %v2870
    %v2959 = vunpack.c.h.b16 %v2870
    %v2960 = vunpack.c.l.b16 %v2871
    %v2961 = vunpack.c.h.b16 %v2871
    %v2962 = vunpack.c.l.b16 %v2872
    %v2963 = vunpack.c.h.b16 %v2872
    %v2964 = vunpack.c.l.b16 %v2873
    %v2965 = vunpack.c.h.b16 %v2873
    %v2966 = vunpack.c.l.b16 %v2874
    %v2967 = vunpack.c.h.b16 %v2874
    %v2968 = vunpack.c.l.b16 %v2875
    %v2969 = vunpack.c.h.b16 %v2875
    %v2970 = vunpack.c.l.b16 %v2876
    %v2971 = vunpack.c.h.b16 %v2876
    %v2972 = vunpack.c.l.b16 %v2877
    %v2973 = vunpack.c.h.b16 %v2877
    %v2974 = vpack.c.b16 %v2912, %v2910
    %v2975 = vpack.c.b16 %v2913, %v2911
    %v2976 = vpack.c.b16 %v2916, %v2914
    %v2977 = vpack.c.b16 %v2917, %v2915
    %v2978 = vpack.c.b16 %v2920, %v2918
    %v2979 = vpack.c.b16 %v2921, %v2919
    %v2980 = vpack.c.b16 %v2924, %v2922
    %v2981 = vpack.c.b16 %v2925, %v2923
    %v2982 = vpack.c.b16 %v2928, %v2926
    %v2983 = vpack.c.b16 %v2929, %v2927
    %v2984 = vpack.c.b16 %v2932, %v2930
    %v2985 = vpack.c.b16 %v2933, %v2931
    %v2986 = vpack.c.b16 %v2936, %v2934
    %v2987 = vpack.c.b16 %v2937, %v2935
    %v2988 = vpack.c.b16 %v2940, %v2938
    %v2989 = vpack.c.b16 %v2941, %v2939
    %v2990 = vpack.c.b16 %v2944, %v2942
    %v2991 = vpack.c.b16 %v2945, %v2943
    %v2992 = vpack.c.b16 %v2948, %v2946
    %v2993 = vpack.c.b16 %v2949, %v2947
    %v2994 = vpack.c.b16 %v2952, %v2950
    %v2995 = vpack.c.b16 %v2953, %v2951
    %v2996 = vpack.c.b16 %v2956, %v2954
    %v2997 = vpack.c.b16 %v2957, %v2955
    %v2998 = vpack.c.b16 %v2960, %v2958
    %v2999 = vpack.c.b16 %v2961, %v2959
    %v3000 = vpack.c.b16 %v2964, %v2962
    %v3001 = vpack.c.b16 %v2965, %v2963
    %v3002 = vpack.c.b16 %v2968, %v2966
    %v3003 = vpack.c.b16 %v2969, %v2967
    %v3004 = vpack.c.b16 %v2972, %v2970
    %v3005 = vpack.c.b16 %v2973, %v2971
    %3038 = vmatprep.subr.bf16.mxu0 %v2975
    %3039 = vmatpush1.bf16.msra.mxu0 %v2974
    %3040 = vmatprep.subr.bf16.mxu0 %v2977
    %3041 = vmatpush1.bf16.msra.mxu0 %v2976
    %3042 = vmatprep.subr.bf16.mxu0 %v2979
    %3043 = vmatpush1.bf16.msra.mxu0 %v2978
    %3044 = vmatprep.subr.bf16.mxu0 %v2981
    %3045 = vmatpush1.bf16.msra.mxu0 %v2980
    %3046 = vmatprep.subr.bf16.mxu0 %v2983
    %3047 = vmatpush1.bf16.msra.mxu0 %v2982
    %3048 = vmatprep.subr.bf16.mxu0 %v2985
    %3049 = vmatpush1.bf16.msra.mxu0 %v2984
    %3050 = vmatprep.subr.bf16.mxu0 %v2987
    %3051 = vmatpush1.bf16.msra.mxu0 %v2986
    %3052 = vmatprep.subr.bf16.mxu0 %v2989
    %3053 = vmatpush1.bf16.msra.mxu0 %v2988
    %3054 = vmatprep.subr.bf16.mxu0 %v2991
    %3055 = vmatpush1.bf16.msra.mxu0 %v2990
    %3056 = vmatprep.subr.bf16.mxu0 %v2993
    %3057 = vmatpush1.bf16.msra.mxu0 %v2992
    %3058 = vmatprep.subr.bf16.mxu0 %v2995
    %3059 = vmatpush1.bf16.msra.mxu0 %v2994
    %3060 = vmatprep.subr.bf16.mxu0 %v2997
    %3061 = vmatpush1.bf16.msra.mxu0 %v2996
    %3062 = vmatprep.subr.bf16.mxu0 %v2999
    %3063 = vmatpush1.bf16.msra.mxu0 %v2998
    %3064 = vmatprep.subr.bf16.mxu0 %v3001
    %3065 = vmatpush1.bf16.msra.mxu0 %v3000
    %3066 = vmatprep.subr.bf16.mxu0 %v3003
    %3067 = vmatpush1.bf16.msra.mxu0 %v3002
    %3068 = vmatprep.subr.bf16.mxu0 %v3005
    %3069 = vmatpush1.bf16.msra.mxu0 %v3004
    %3070 = vmatprep.mubr.bf16.mxu0 %v2839
    %3071 = vmatmul.mubr.bf16.gmra.mrb[0].mxu0 %v2838
    %v3072 = vpop.f32.mrb[0].mxu0
    %v3073 = vadd.f32 0.0, %v3072
    %v3074 = vpop.f32.mrb[0].mxu0
    %v3075 = vadd.f32 0.0, %v3074
    %v3076 = vpop.f32.mrb[0].mxu0
    %v3077 = vadd.f32 0.0, %v3076
    %v3078 = vpop.f32.mrb[0].mxu0
    %v3079 = vadd.f32 0.0, %v3078
    %3080 = vmatprep.mubr.bf16.mxu0 %v2841
    %3081 = vmatmul.mubr.bf16.gmra.mrb[0].mxu0 %v2840
    %v3082 = vpop.f32.mrb[0].mxu0
    %v3083 = vadd.f32 0.0, %v3082
    %v3084 = vpop.f32.mrb[0].mxu0
    %v3085 = vadd.f32 0.0, %v3084
    %v3086 = vpop.f32.mrb[0].mxu0
    %v3087 = vadd.f32 0.0, %v3086
    %v3088 = vpop.f32.mrb[0].mxu0
    %v3089 = vadd.f32 0.0, %v3088
    %3090 = vmatprep.mubr.bf16.mxu0 %v2843
    %3091 = vmatmul.mubr.bf16.gmra.mrb[0].mxu0 %v2842
    %v3092 = vpop.f32.mrb[0].mxu0
    %v3093 = vadd.f32 0.0, %v3092
    %v3094 = vpop.f32.mrb[0].mxu0
    %v3095 = vadd.f32 0.0, %v3094
    %v3096 = vpop.f32.mrb[0].mxu0
    %v3097 = vadd.f32 0.0, %v3096
    %v3098 = vpop.f32.mrb[0].mxu0
    %v3099 = vadd.f32 0.0, %v3098
    %3100 = vmatprep.mubr.bf16.mxu0 %v2845
    %3101 = vmatmul.mubr.bf16.gmra.mrb[0].mxu0 %v2844
    %v3102 = vpop.f32.mrb[0].mxu0
    %v3103 = vadd.f32 0.0, %v3102
    %v3104 = vpop.f32.mrb[0].mxu0
    %v3105 = vadd.f32 0.0, %v3104
    %v3106 = vpop.f32.mrb[0].mxu0
    %v3107 = vadd.f32 0.0, %v3106
    %v3108 = vpop.f32.mrb[0].mxu0
    %v3109 = vadd.f32 0.0, %v3108
    %3110 = vdwg.mxu0
    %v3111 = vld [vmem:[#allocation7] sm:$0xff]
    %v3112 = vld [vmem:[#allocation7 + $0x8] sm:$0xff]
    %v3113 = vld [vmem:[#allocation7 + $0x10] sm:$0xff]
    %v3114 = vld [vmem:[#allocation7 + $0x18] sm:$0xff]
    %v3115 = vld [vmem:[%s7 + $0x8] sm:$0xff]
    %v3116 = vld [vmem:[%s7 + $0x30] sm:$0xff]
    %v3117 = vld [vmem:[%s7 + $0x58] sm:$0xff]
    %v3118 = vld [vmem:[%s7 + $0x80] sm:$0xff]
    %v3119 = vld [vmem:[%s7 + $0xa8] sm:$0xff]
    %v3120 = vld [vmem:[%s7 + $0xd0] sm:$0xff]
    %v3121 = vld [vmem:[%s7 + $0xf8] sm:$0xff]
    %v3122 = vld [vmem:[%s7 + $0x120] sm:$0xff]
    %v3123 = vld [vmem:[%s7 + $0x148] sm:$0xff]
    %v3124 = vld [vmem:[%s7 + $0x170] sm:$0xff]
    %v3125 = vld [vmem:[%s7 + $0x198] sm:$0xff]
    %v3126 = vld [vmem:[%s7 + $0x1c0] sm:$0xff]
    %v3127 = vld [vmem:[%s7 + $0x1e8] sm:$0xff]
    %v3128 = vld [vmem:[%s7 + $0x210] sm:$0xff]
    %v3129 = vld [vmem:[%s7 + $0x238] sm:$0xff]
    %v3130 = vld [vmem:[%s7 + $0x260] sm:$0xff]
    %v3131 = vld [vmem:[%s7 + $0x288] sm:$0xff]
    %v3132 = vld [vmem:[%s7 + $0x2b0] sm:$0xff]
    %v3133 = vld [vmem:[%s7 + $0x2d8] sm:$0xff]
    %v3134 = vld [vmem:[%s7 + $0x300] sm:$0xff]
    %v3135 = vld [vmem:[%s7 + $0x328] sm:$0xff]
    %v3136 = vld [vmem:[%s7 + $0x350] sm:$0xff]
    %v3137 = vld [vmem:[%s7 + $0x378] sm:$0xff]
    %v3138 = vld [vmem:[%s7 + $0x3a0] sm:$0xff]
    %v3139 = vld [vmem:[%s7 + $0x3c8] sm:$0xff]
    %v3140 = vld [vmem:[%s7 + $0x3f0] sm:$0xff]
    %v3141 = vld [vmem:[%s7 + $0x418] sm:$0xff]
    %v3142 = vld [vmem:[%s7 + $0x440] sm:$0xff]
    %v3143 = vld [vmem:[%s7 + $0x468] sm:$0xff]
    %v3144 = vld [vmem:[%s7 + $0x490] sm:$0xff]
    %v3145 = vld [vmem:[%s7 + $0x4b8] sm:$0xff]
    %v3146 = vld [vmem:[%s7 + $0x4e0] sm:$0xff]
    %v3179 = vunpack.c.l.b16 %v3115
    %v3180 = vunpack.c.h.b16 %v3115
    %v3181 = vunpack.c.l.b16 %v3116
    %v3182 = vunpack.c.h.b16 %v3116
    %v3183 = vunpack.c.l.b16 %v3117
    %v3184 = vunpack.c.h.b16 %v3117
    %v3185 = vunpack.c.l.b16 %v3118
    %v3186 = vunpack.c.h.b16 %v3118
    %v3187 = vunpack.c.l.b16 %v3119
    %v3188 = vunpack.c.h.b16 %v3119
    %v3189 = vunpack.c.l.b16 %v3120
    %v3190 = vunpack.c.h.b16 %v3120
    %v3191 = vunpack.c.l.b16 %v3121
    %v3192 = vunpack.c.h.b16 %v3121
    %v3193 = vunpack.c.l.b16 %v3122
    %v3194 = vunpack.c.h.b16 %v3122
    %v3195 = vunpack.c.l.b16 %v3123
    %v3196 = vunpack.c.h.b16 %v3123
    %v3197 = vunpack.c.l.b16 %v3124
    %v3198 = vunpack.c.h.b16 %v3124
    %v3199 = vunpack.c.l.b16 %v3125
    %v3200 = vunpack.c.h.b16 %v3125
    %v3201 = vunpack.c.l.b16 %v3126
    %v3202 = vunpack.c.h.b16 %v3126
    %v3203 = vunpack.c.l.b16 %v3127
    %v3204 = vunpack.c.h.b16 %v3127
    %v3205 = vunpack.c.l.b16 %v3128
    %v3206 = vunpack.c.h.b16 %v3128
    %v3207 = vunpack.c.l.b16 %v3129
    %v3208 = vunpack.c.h.b16 %v3129
    %v3209 = vunpack.c.l.b16 %v3130
    %v3210 = vunpack.c.h.b16 %v3130
    %v3211 = vunpack.c.l.b16 %v3131
    %v3212 = vunpack.c.h.b16 %v3131
    %v3213 = vunpack.c.l.b16 %v3132
    %v3214 = vunpack.c.h.b16 %v3132
    %v3215 = vunpack.c.l.b16 %v3133
    %v3216 = vunpack.c.h.b16 %v3133
    %v3217 = vunpack.c.l.b16 %v3134
    %v3218 = vunpack.c.h.b16 %v3134
    %v3219 = vunpack.c.l.b16 %v3135
    %v3220 = vunpack.c.h.b16 %v3135
    %v3221 = vunpack.c.l.b16 %v3136
    %v3222 = vunpack.c.h.b16 %v3136
    %v3223 = vunpack.c.l.b16 %v3137
    %v3224 = vunpack.c.h.b16 %v3137
    %v3225 = vunpack.c.l.b16 %v3138
    %v3226 = vunpack.c.h.b16 %v3138
    %v3227 = vunpack.c.l.b16 %v3139
    %v3228 = vunpack.c.h.b16 %v3139
    %v3229 = vunpack.c.l.b16 %v3140
    %v3230 = vunpack.c.h.b16 %v3140
    %v3231 = vunpack.c.l.b16 %v3141
    %v3232 = vunpack.c.h.b16 %v3141
    %v3233 = vunpack.c.l.b16 %v3142
    %v3234 = vunpack.c.h.b16 %v3142
    %v3235 = vunpack.c.l.b16 %v3143
    %v3236 = vunpack.c.h.b16 %v3143
    %v3237 = vunpack.c.l.b16 %v3144
    %v3238 = vunpack.c.h.b16 %v3144
    %v3239 = vunpack.c.l.b16 %v3145
    %v3240 = vunpack.c.h.b16 %v3145
    %v3241 = vunpack.c.l.b16 %v3146
    %v3242 = vunpack.c.h.b16 %v3146
    %v3243 = vpack.c.b16 %v3181, %v3179
    %v3244 = vpack.c.b16 %v3182, %v3180
    %v3245 = vpack.c.b16 %v3185, %v3183
    %v3246 = vpack.c.b16 %v3186, %v3184
    %v3247 = vpack.c.b16 %v3189, %v3187
    %v3248 = vpack.c.b16 %v3190, %v3188
    %v3249 = vpack.c.b16 %v3193, %v3191
    %v3250 = vpack.c.b16 %v3194, %v3192
    %v3251 = vpack.c.b16 %v3197, %v3195
    %v3252 = vpack.c.b16 %v3198, %v3196
    %v3253 = vpack.c.b16 %v3201, %v3199
    %v3254 = vpack.c.b16 %v3202, %v3200
    %v3255 = vpack.c.b16 %v3205, %v3203
    %v3256 = vpack.c.b16 %v3206, %v3204
    %v3257 = vpack.c.b16 %v3209, %v3207
    %v3258 = vpack.c.b16 %v3210, %v3208
    %v3259 = vpack.c.b16 %v3213, %v3211
    %v3260 = vpack.c.b16 %v3214, %v3212
    %v3261 = vpack.c.b16 %v3217, %v3215
    %v3262 = vpack.c.b16 %v3218, %v3216
    %v3263 = vpack.c.b16 %v3221, %v3219
    %v3264 = vpack.c.b16 %v3222, %v3220
    %v3265 = vpack.c.b16 %v3225, %v3223
    %v3266 = vpack.c.b16 %v3226, %v3224
    %v3267 = vpack.c.b16 %v3229, %v3227
    %v3268 = vpack.c.b16 %v3230, %v3228
    %v3269 = vpack.c.b16 %v3233, %v3231
    %v3270 = vpack.c.b16 %v3234, %v3232
    %v3271 = vpack.c.b16 %v3237, %v3235
    %v3272 = vpack.c.b16 %v3238, %v3236
    %v3273 = vpack.c.b16 %v3241, %v3239
    %v3274 = vpack.c.b16 %v3242, %v3240
    %3307 = vmatprep.subr.bf16.mxu0 %v3244
    %3308 = vmatpush1.bf16.msra.mxu0 %v3243
    %3309 = vmatprep.subr.bf16.mxu0 %v3246
    %3310 = vmatpush1.bf16.msra.mxu0 %v3245
    %3311 = vmatprep.subr.bf16.mxu0 %v3248
    %3312 = vmatpush1.bf16.msra.mxu0 %v3247
    %3313 = vmatprep.subr.bf16.mxu0 %v3250
    %3314 = vmatpush1.bf16.msra.mxu0 %v3249
    %3315 = vmatprep.subr.bf16.mxu0 %v3252
    %3316 = vmatpush1.bf16.msra.mxu0 %v3251
    %3317 = vmatprep.subr.bf16.mxu0 %v3254
    %3318 = vmatpush1.bf16.msra.mxu0 %v3253
    %3319 = vmatprep.subr.bf16.mxu0 %v3256
    %3320 = vmatpush1.bf16.msra.mxu0 %v3255
    %3321 = vmatprep.subr.bf16.mxu0 %v3258
    %3322 = vmatpush1.bf16.msra.mxu0 %v3257
    %3323 = vmatprep.subr.bf16.mxu0 %v3260
    %3324 = vmatpush1.bf16.msra.mxu0 %v3259
    %3325 = vmatprep.subr.bf16.mxu0 %v3262
    %3326 = vmatpush1.bf16.msra.mxu0 %v3261
    %3327 = vmatprep.subr.bf16.mxu0 %v3264
    %3328 = vmatpush1.bf16.msra.mxu0 %v3263
    %3329 = vmatprep.subr.bf16.mxu0 %v3266
    %3330 = vmatpush1.bf16.msra.mxu0 %v3265
    %3331 = vmatprep.subr.bf16.mxu0 %v3268
    %3332 = vmatpush1.bf16.msra.mxu0 %v3267
    %3333 = vmatprep.subr.bf16.mxu0 %v3270
    %3334 = vmatpush1.bf16.msra.mxu0 %v3269
    %3335 = vmatprep.subr.bf16.mxu0 %v3272
    %3336 = vmatpush1.bf16.msra.mxu0 %v3271
    %3337 = vmatprep.subr.bf16.mxu0 %v3274
    %3338 = vmatpush1.bf16.msra.mxu0 %v3273
    %3339 = vmatprep.mubr.bf16.mxu0 %v2839
    %3340 = vmatmul.mubr.bf16.gmra.mrb[0].mxu0 %v2838
    %v3341 = vpop.f32.mrb[0].mxu0
    %v3342 = vadd.f32 0.0, %v3341
    %v3343 = vpop.f32.mrb[0].mxu0
    %v3344 = vadd.f32 0.0, %v3343
    %v3345 = vpop.f32.mrb[0].mxu0
    %v3346 = vadd.f32 0.0, %v3345
    %v3347 = vpop.f32.mrb[0].mxu0
    %v3348 = vadd.f32 0.0, %v3347
    %3349 = vmatprep.mubr.bf16.mxu0 %v2841
    %3350 = vmatmul.mubr.bf16.gmra.mrb[0].mxu0 %v2840
    %v3351 = vpop.f32.mrb[0].mxu0
    %v3352 = vadd.f32 0.0, %v3351
    %v3353 = vpop.f32.mrb[0].mxu0
    %v3354 = vadd.f32 0.0, %v3353
    %v3355 = vpop.f32.mrb[0].mxu0
    %v3356 = vadd.f32 0.0, %v3355
    %v3357 = vpop.f32.mrb[0].mxu0
    %v3358 = vadd.f32 0.0, %v3357
    %3359 = vmatprep.mubr.bf16.mxu0 %v2843
    %3360 = vmatmul.mubr.bf16.gmra.mrb[0].mxu0 %v2842
    %v3361 = vpop.f32.mrb[0].mxu0
    %v3362 = vadd.f32 0.0, %v3361
    %v3363 = vpop.f32.mrb[0].mxu0
    %v3364 = vadd.f32 0.0, %v3363
    %v3365 = vpop.f32.mrb[0].mxu0
    %v3366 = vadd.f32 0.0, %v3365
    %v3367 = vpop.f32.mrb[0].mxu0
    %v3368 = vadd.f32 0.0, %v3367
    %3369 = vmatprep.mubr.bf16.mxu0 %v2845
    %3370 = vmatmul.mubr.bf16.gmra.mrb[0].mxu0 %v2844
    %v3371 = vpop.f32.mrb[0].mxu0
    %v3372 = vadd.f32 0.0, %v3371
    %v3373 = vpop.f32.mrb[0].mxu0
    %v3374 = vadd.f32 0.0, %v3373
    %v3375 = vpop.f32.mrb[0].mxu0
    %v3376 = vadd.f32 0.0, %v3375
    %v3377 = vpop.f32.mrb[0].mxu0
    %v3378 = vadd.f32 0.0, %v3377
    %3379 = vdwg.mxu0
    %s3380 = scalar_lea.vmem [#allocation7], 32
    %v3381 = vld [vmem:[%s3380] sm:$0xff]
    %v3382 = vld [vmem:[%s3380 + $0x8] sm:$0xff]
    %v3383 = vld [vmem:[%s3380 + $0x10] sm:$0xff]
    %v3384 = vld [vmem:[%s3380 + $0x18] sm:$0xff]
    %v3386 = vsel %vm525, %v3381, 0
    %v3389 = vsel %vm525, %v3382, 0
    %v3392 = vsel %vm525, %v3383, 0
    %v3395 = vsel %vm525, %v3384, 0
    %3397 = vmatprep.subr.mxu0 %v3344
    %3398 = vmatpush1.msra.mxu0 %v3342
    %3399 = vmatprep.subr.mxu0 %v3348
    %3400 = vmatpush1.msra.mxu0 %v3346
    %3401 = vmatprep.subr.mxu0 %v3354
    %3402 = vmatpush1.msra.mxu0 %v3352
    %3403 = vmatprep.subr.mxu0 %v3358
    %3404 = vmatpush1.msra.mxu0 %v3356
    %3405 = vmatprep.subr.mxu0 %v3364
    %3406 = vmatpush1.msra.mxu0 %v3362
    %3407 = vmatprep.subr.mxu0 %v3368
    %3408 = vmatpush1.msra.mxu0 %v3366
    %3409 = vmatprep.subr.mxu0 %v3374
    %3410 = vmatpush1.msra.mxu0 %v3372
    %3411 = vmatprep.subr.mxu0 %v3378
    %3412 = vmatpush1.msra.mxu0 %v3376
    %3413 = vmatprep.subr.mxu0 0.0
    %3414 = vmatpush1.msra.mxu0 0.0
    %3415 = vmatprep.subr.mxu0 0.0
    %3416 = vmatpush1.msra.mxu0 0.0
    %3417 = vmatprep.subr.mxu0 0.0
    %3418 = vmatpush1.msra.mxu0 0.0
    %3419 = vmatprep.subr.mxu0 0.0
    %3420 = vmatpush1.msra.mxu0 0.0
    %3421 = vmatprep.subr.mxu0 0.0
    %3422 = vmatpush1.msra.mxu0 0.0
    %3423 = vmatprep.subr.mxu0 0.0
    %3424 = vmatpush1.msra.mxu0 0.0
    %3425 = vmatprep.subr.mxu0 0.0
    %3426 = vmatpush1.msra.mxu0 0.0
    %3427 = vmatprep.subr.mxu0 0.0
    %3428 = vmatpush1.msra.mxu0 0.0
    %3429 = vmatprep.subr.mxu0 0.0
    %3430 = vmatpush1.msra.mxu0 0.0
    %3431 = vmatprep.subr.mxu0 0.0
    %3432 = vmatpush1.msra.mxu0 0.0
    %3433 = vmatprep.subr.mxu0 0.0
    %3434 = vmatpush1.msra.mxu0 0.0
    %3435 = vmatprep.subr.mxu0 0.0
    %3436 = vmatpush1.msra.mxu0 0.0
    %3437 = vmatprep.subr.mxu0 0.0
    %3438 = vmatpush1.msra.mxu0 0.0
    %3439 = vmatprep.subr.mxu0 0.0
    %3440 = vmatpush1.msra.mxu0 0.0
    %3441 = vmatprep.subr.mxu0 0.0
    %3442 = vmatpush1.msra.mxu0 0.0
    %3443 = vmatprep.subr.mxu0 0.0
    %3444 = vmatpush1.msra.mxu0 0.0
    %3445 = vmatprep.subr.mxu0 0.0
    %3446 = vmatpush1.msra.mxu0 0.0
    %3447 = vmatprep.subr.mxu0 0.0
    %3448 = vmatpush1.msra.mxu0 0.0
    %3449 = vmatprep.subr.mxu0 0.0
    %3450 = vmatpush1.msra.mxu0 0.0
    %3451 = vmatprep.subr.mxu0 0.0
    %3452 = vmatpush1.msra.mxu0 0.0
    %3453 = vmatprep.subr.mxu0 0.0
    %3454 = vmatpush1.msra.mxu0 0.0
    %3455 = vmatprep.subr.mxu0 0.0
    %3456 = vmatpush1.msra.mxu0 0.0
    %3457 = vmatprep.subr.mxu0 0.0
    %3458 = vmatpush1.msra.mxu0 0.0
    %3459 = vmatprep.subr.mxu0 0.0
    %3460 = vmatpush1.msra.mxu0 0.0
    %3461 = vmatprep.mubr.f32.mxu0 0.0
    %3462 = vmatmul.mubr.f32.gmra.mrb[0].mxu0 %v3386
    %v3463 = vpop.f32.mrb[0].mxu0
    %v3464 = vadd.f32 0.0, %v3463
    %v3465 = vpop.f32.mrb[0].mxu0
    %v3466 = vadd.f32 0.0, %v3465
    %3467 = vmatprep.mubr.f32.mxu0 0.0
    %3468 = vmatmul.mubr.f32.gmra.mrb[0].mxu0 %v3389
    %v3469 = vpop.f32.mrb[0].mxu0
    %v3470 = vadd.f32 0.0, %v3469
    %v3471 = vpop.f32.mrb[0].mxu0
    %v3472 = vadd.f32 0.0, %v3471
    %3473 = vmatprep.mubr.f32.mxu0 0.0
    %3474 = vmatmul.mubr.f32.gmra.mrb[0].mxu0 %v3392
    %v3475 = vpop.f32.mrb[0].mxu0
    %v3476 = vadd.f32 0.0, %v3475
    %v3477 = vpop.f32.mrb[0].mxu0
    %v3478 = vadd.f32 0.0, %v3477
    %3479 = vmatprep.mubr.f32.mxu0 0.0
    %3480 = vmatmul.mubr.f32.gmra.mrb[0].mxu0 %v3395
    %v3481 = vpop.f32.mrb[0].mxu0
    %v3482 = vadd.f32 0.0, %v3481
    %v3483 = vpop.f32.mrb[0].mxu0
    %v3484 = vadd.f32 0.0, %v3483
    %3485 = vdwg.mxu0
    %v3487 = vsel %vm525, %v3111, 0
    %v3490 = vsel %vm525, %v3112, 0
    %v3493 = vsel %vm525, %v3113, 0
    %v3496 = vsel %vm525, %v3114, 0
    %3498 = vmatprep.subr.mxu0 %v3075
    %3499 = vmatpush1.msra.mxu0 %v3073
    %3500 = vmatprep.subr.mxu0 %v3079
    %3501 = vmatpush1.msra.mxu0 %v3077
    %3502 = vmatprep.subr.mxu0 %v3085
    %3503 = vmatpush1.msra.mxu0 %v3083
    %3504 = vmatprep.subr.mxu0 %v3089
    %3505 = vmatpush1.msra.mxu0 %v3087
    %3506 = vmatprep.subr.mxu0 %v3095
    %3507 = vmatpush1.msra.mxu0 %v3093
    %3508 = vmatprep.subr.mxu0 %v3099
    %3509 = vmatpush1.msra.mxu0 %v3097
    %3510 = vmatprep.subr.mxu0 %v3105
    %3511 = vmatpush1.msra.mxu0 %v3103
    %3512 = vmatprep.subr.mxu0 %v3109
    %3513 = vmatpush1.msra.mxu0 %v3107
    %3514 = vmatprep.subr.mxu0 0.0
    %3515 = vmatpush1.msra.mxu0 0.0
    %3516 = vmatprep.subr.mxu0 0.0
    %3517 = vmatpush1.msra.mxu0 0.0
    %3518 = vmatprep.subr.mxu0 0.0
    %3519 = vmatpush1.msra.mxu0 0.0
    %3520 = vmatprep.subr.mxu0 0.0
    %3521 = vmatpush1.msra.mxu0 0.0
    %3522 = vmatprep.subr.mxu0 0.0
    %3523 = vmatpush1.msra.mxu0 0.0
    %3524 = vmatprep.subr.mxu0 0.0
    %3525 = vmatpush1.msra.mxu0 0.0
    %3526 = vmatprep.subr.mxu0 0.0
    %3527 = vmatpush1.msra.mxu0 0.0
    %3528 = vmatprep.subr.mxu0 0.0
    %3529 = vmatpush1.msra.mxu0 0.0
    %3530 = vmatprep.subr.mxu0 0.0
    %3531 = vmatpush1.msra.mxu0 0.0
    %3532 = vmatprep.subr.mxu0 0.0
    %3533 = vmatpush1.msra.mxu0 0.0
    %3534 = vmatprep.subr.mxu0 0.0
    %3535 = vmatpush1.msra.mxu0 0.0
    %3536 = vmatprep.subr.mxu0 0.0
    %3537 = vmatpush1.msra.mxu0 0.0
    %3538 = vmatprep.subr.mxu0 0.0
    %3539 = vmatpush1.msra.mxu0 0.0
    %3540 = vmatprep.subr.mxu0 0.0
    %3541 = vmatpush1.msra.mxu0 0.0
    %3542 = vmatprep.subr.mxu0 0.0
    %3543 = vmatpush1.msra.mxu0 0.0
    %3544 = vmatprep.subr.mxu0 0.0
    %3545 = vmatpush1.msra.mxu0 0.0
    %3546 = vmatprep.subr.mxu0 0.0
    %3547 = vmatpush1.msra.mxu0 0.0
    %3548 = vmatprep.subr.mxu0 0.0
    %3549 = vmatpush1.msra.mxu0 0.0
    %3550 = vmatprep.subr.mxu0 0.0
    %3551 = vmatpush1.msra.mxu0 0.0
    %3552 = vmatprep.subr.mxu0 0.0
    %3553 = vmatpush1.msra.mxu0 0.0
    %3554 = vmatprep.subr.mxu0 0.0
    %3555 = vmatpush1.msra.mxu0 0.0
    %3556 = vmatprep.subr.mxu0 0.0
    %3557 = vmatpush1.msra.mxu0 0.0
    %3558 = vmatprep.subr.mxu0 0.0
    %3559 = vmatpush1.msra.mxu0 0.0
    %3560 = vmatprep.subr.mxu0 0.0
    %3561 = vmatpush1.msra.mxu0 0.0
    %3562 = vmatprep.mubr.f32.mxu0 0.0
    %3563 = vmatmul.mubr.f32.gmra.mrb[0].mxu0 %v3487
    %v3564 = vpop.f32.mrb[0].mxu0
    %v3565 = vadd.f32 %v3464, %v3564
    %v3566 = vpop.f32.mrb[0].mxu0
    %v3567 = vadd.f32 %v3466, %v3566
    %3568 = vmatprep.mubr.f32.mxu0 0.0
    %3569 = vmatmul.mubr.f32.gmra.mrb[0].mxu0 %v3490
    %v3570 = vpop.f32.mrb[0].mxu0
    %v3571 = vadd.f32 %v3470, %v3570
    %v3572 = vpop.f32.mrb[0].mxu0
    %v3573 = vadd.f32 %v3472, %v3572
    %3574 = vmatprep.mubr.f32.mxu0 0.0
    %3575 = vmatmul.mubr.f32.gmra.mrb[0].mxu0 %v3493
    %v3576 = vpop.f32.mrb[0].mxu0
    %v3577 = vadd.f32 %v3476, %v3576
    %v3578 = vpop.f32.mrb[0].mxu0
    %v3579 = vadd.f32 %v3478, %v3578
    %3580 = vmatprep.mubr.f32.mxu0 0.0
    %3581 = vmatmul.mubr.f32.gmra.mrb[0].mxu0 %v3496
    %v3582 = vpop.f32.mrb[0].mxu0
    %v3583 = vadd.f32 %v3482, %v3582
    %v3584 = vpop.f32.mrb[0].mxu0
    %v3585 = vadd.f32 %v3484, %v3584
    %3586 = vdwg.mxu0
    %v3587 = vld [vmem:[%s7 + $0x10] sm:$0xff]
    %v3588 = vld [vmem:[%s7 + $0x38] sm:$0xff]
    %v3589 = vld [vmem:[%s7 + $0x60] sm:$0xff]
    %v3590 = vld [vmem:[%s7 + $0x88] sm:$0xff]
    %v3591 = vld [vmem:[%s7 + $0xb0] sm:$0xff]
    %v3592 = vld [vmem:[%s7 + $0xd8] sm:$0xff]
    %v3593 = vld [vmem:[%s7 + $0x100] sm:$0xff]
    %v3594 = vld [vmem:[%s7 + $0x128] sm:$0xff]
    %v3595 = vld [vmem:[%s7 + $0x150] sm:$0xff]
    %v3596 = vld [vmem:[%s7 + $0x178] sm:$0xff]
    %v3597 = vld [vmem:[%s7 + $0x1a0] sm:$0xff]
    %v3598 = vld [vmem:[%s7 + $0x1c8] sm:$0xff]
    %v3599 = vld [vmem:[%s7 + $0x1f0] sm:$0xff]
    %v3600 = vld [vmem:[%s7 + $0x218] sm:$0xff]
    %v3601 = vld [vmem:[%s7 + $0x240] sm:$0xff]
    %v3602 = vld [vmem:[%s7 + $0x268] sm:$0xff]
    %v3603 = vld [vmem:[%s7 + $0x290] sm:$0xff]
    %v3604 = vld [vmem:[%s7 + $0x2b8] sm:$0xff]
    %v3605 = vld [vmem:[%s7 + $0x2e0] sm:$0xff]
    %v3606 = vld [vmem:[%s7 + $0x308] sm:$0xff]
    %v3607 = vld [vmem:[%s7 + $0x330] sm:$0xff]
    %v3608 = vld [vmem:[%s7 + $0x358] sm:$0xff]
    %v3609 = vld [vmem:[%s7 + $0x380] sm:$0xff]
    %v3610 = vld [vmem:[%s7 + $0x3a8] sm:$0xff]
    %v3611 = vld [vmem:[%s7 + $0x3d0] sm:$0xff]
    %v3612 = vld [vmem:[%s7 + $0x3f8] sm:$0xff]
    %v3613 = vld [vmem:[%s7 + $0x420] sm:$0xff]
    %v3614 = vld [vmem:[%s7 + $0x448] sm:$0xff]
    %v3615 = vld [vmem:[%s7 + $0x470] sm:$0xff]
    %v3616 = vld [vmem:[%s7 + $0x498] sm:$0xff]
    %v3617 = vld [vmem:[%s7 + $0x4c0] sm:$0xff]
    %v3618 = vld [vmem:[%s7 + $0x4e8] sm:$0xff]
    %v3651 = vunpack.c.l.b16 %v3587
    %v3652 = vunpack.c.h.b16 %v3587
    %v3653 = vunpack.c.l.b16 %v3588
    %v3654 = vunpack.c.h.b16 %v3588
    %v3655 = vunpack.c.l.b16 %v3589
    %v3656 = vunpack.c.h.b16 %v3589
    %v3657 = vunpack.c.l.b16 %v3590
    %v3658 = vunpack.c.h.b16 %v3590
    %v3659 = vunpack.c.l.b16 %v3591
    %v3660 = vunpack.c.h.b16 %v3591
    %v3661 = vunpack.c.l.b16 %v3592
    %v3662 = vunpack.c.h.b16 %v3592
    %v3663 = vunpack.c.l.b16 %v3593
    %v3664 = vunpack.c.h.b16 %v3593
    %v3665 = vunpack.c.l.b16 %v3594
    %v3666 = vunpack.c.h.b16 %v3594
    %v3667 = vunpack.c.l.b16 %v3595
    %v3668 = vunpack.c.h.b16 %v3595
    %v3669 = vunpack.c.l.b16 %v3596
    %v3670 = vunpack.c.h.b16 %v3596
    %v3671 = vunpack.c.l.b16 %v3597
    %v3672 = vunpack.c.h.b16 %v3597
    %v3673 = vunpack.c.l.b16 %v3598
    %v3674 = vunpack.c.h.b16 %v3598
    %v3675 = vunpack.c.l.b16 %v3599
    %v3676 = vunpack.c.h.b16 %v3599
    %v3677 = vunpack.c.l.b16 %v3600
    %v3678 = vunpack.c.h.b16 %v3600
    %v3679 = vunpack.c.l.b16 %v3601
    %v3680 = vunpack.c.h.b16 %v3601
    %v3681 = vunpack.c.l.b16 %v3602
    %v3682 = vunpack.c.h.b16 %v3602
    %v3683 = vunpack.c.l.b16 %v3603
    %v3684 = vunpack.c.h.b16 %v3603
    %v3685 = vunpack.c.l.b16 %v3604
    %v3686 = vunpack.c.h.b16 %v3604
    %v3687 = vunpack.c.l.b16 %v3605
    %v3688 = vunpack.c.h.b16 %v3605
    %v3689 = vunpack.c.l.b16 %v3606
    %v3690 = vunpack.c.h.b16 %v3606
    %v3691 = vunpack.c.l.b16 %v3607
    %v3692 = vunpack.c.h.b16 %v3607
    %v3693 = vunpack.c.l.b16 %v3608
    %v3694 = vunpack.c.h.b16 %v3608
    %v3695 = vunpack.c.l.b16 %v3609
    %v3696 = vunpack.c.h.b16 %v3609
    %v3697 = vunpack.c.l.b16 %v3610
    %v3698 = vunpack.c.h.b16 %v3610
    %v3699 = vunpack.c.l.b16 %v3611
    %v3700 = vunpack.c.h.b16 %v3611
    %v3701 = vunpack.c.l.b16 %v3612
    %v3702 = vunpack.c.h.b16 %v3612
    %v3703 = vunpack.c.l.b16 %v3613
    %v3704 = vunpack.c.h.b16 %v3613
    %v3705 = vunpack.c.l.b16 %v3614
    %v3706 = vunpack.c.h.b16 %v3614
    %v3707 = vunpack.c.l.b16 %v3615
    %v3708 = vunpack.c.h.b16 %v3615
    %v3709 = vunpack.c.l.b16 %v3616
    %v3710 = vunpack.c.h.b16 %v3616
    %v3711 = vunpack.c.l.b16 %v3617
    %v3712 = vunpack.c.h.b16 %v3617
    %v3713 = vunpack.c.l.b16 %v3618
    %v3714 = vunpack.c.h.b16 %v3618
    %v3715 = vpack.c.b16 %v3653, %v3651
    %v3716 = vpack.c.b16 %v3654, %v3652
    %v3717 = vpack.c.b16 %v3657, %v3655
    %v3718 = vpack.c.b16 %v3658, %v3656
    %v3719 = vpack.c.b16 %v3661, %v3659
    %v3720 = vpack.c.b16 %v3662, %v3660
    %v3721 = vpack.c.b16 %v3665, %v3663
    %v3722 = vpack.c.b16 %v3666, %v3664
    %v3723 = vpack.c.b16 %v3669, %v3667
    %v3724 = vpack.c.b16 %v3670, %v3668
    %v3725 = vpack.c.b16 %v3673, %v3671
    %v3726 = vpack.c.b16 %v3674, %v3672
    %v3727 = vpack.c.b16 %v3677, %v3675
    %v3728 = vpack.c.b16 %v3678, %v3676
    %v3729 = vpack.c.b16 %v3681, %v3679
    %v3730 = vpack.c.b16 %v3682, %v3680
    %v3731 = vpack.c.b16 %v3685, %v3683
    %v3732 = vpack.c.b16 %v3686, %v3684
    %v3733 = vpack.c.b16 %v3689, %v3687
    %v3734 = vpack.c.b16 %v3690, %v3688
    %v3735 = vpack.c.b16 %v3693, %v3691
    %v3736 = vpack.c.b16 %v3694, %v3692
    %v3737 = vpack.c.b16 %v3697, %v3695
    %v3738 = vpack.c.b16 %v3698, %v3696
    %v3739 = vpack.c.b16 %v3701, %v3699
    %v3740 = vpack.c.b16 %v3702, %v3700
    %v3741 = vpack.c.b16 %v3705, %v3703
    %v3742 = vpack.c.b16 %v3706, %v3704
    %v3743 = vpack.c.b16 %v3709, %v3707
    %v3744 = vpack.c.b16 %v3710, %v3708
    %v3745 = vpack.c.b16 %v3713, %v3711
    %v3746 = vpack.c.b16 %v3714, %v3712
    %3779 = vmatprep.subr.bf16.mxu0 %v3716
    %3780 = vmatpush1.bf16.msra.mxu0 %v3715
    %3781 = vmatprep.subr.bf16.mxu0 %v3718
    %3782 = vmatpush1.bf16.msra.mxu0 %v3717
    %3783 = vmatprep.subr.bf16.mxu0 %v3720
    %3784 = vmatpush1.bf16.msra.mxu0 %v3719
    %3785 = vmatprep.subr.bf16.mxu0 %v3722
    %3786 = vmatpush1.bf16.msra.mxu0 %v3721
    %3787 = vmatprep.subr.bf16.mxu0 %v3724
    %3788 = vmatpush1.bf16.msra.mxu0 %v3723
    %3789 = vmatprep.subr.bf16.mxu0 %v3726
    %3790 = vmatpush1.bf16.msra.mxu0 %v3725
    %3791 = vmatprep.subr.bf16.mxu0 %v3728
    %3792 = vmatpush1.bf16.msra.mxu0 %v3727
    %3793 = vmatprep.subr.bf16.mxu0 %v3730
    %3794 = vmatpush1.bf16.msra.mxu0 %v3729
    %3795 = vmatprep.subr.bf16.mxu0 %v3732
    %3796 = vmatpush1.bf16.msra.mxu0 %v3731
    %3797 = vmatprep.subr.bf16.mxu0 %v3734
    %3798 = vmatpush1.bf16.msra.mxu0 %v3733
    %3799 = vmatprep.subr.bf16.mxu0 %v3736
    %3800 = vmatpush1.bf16.msra.mxu0 %v3735
    %3801 = vmatprep.subr.bf16.mxu0 %v3738
    %3802 = vmatpush1.bf16.msra.mxu0 %v3737
    %3803 = vmatprep.subr.bf16.mxu0 %v3740
    %3804 = vmatpush1.bf16.msra.mxu0 %v3739
    %3805 = vmatprep.subr.bf16.mxu0 %v3742
    %3806 = vmatpush1.bf16.msra.mxu0 %v3741
    %3807 = vmatprep.subr.bf16.mxu0 %v3744
    %3808 = vmatpush1.bf16.msra.mxu0 %v3743
    %3809 = vmatprep.subr.bf16.mxu0 %v3746
    %3810 = vmatpush1.bf16.msra.mxu0 %v3745
    %3811 = vmatprep.mubr.bf16.mxu0 %v2839
    %3812 = vmatmul.mubr.bf16.gmra.mrb[0].mxu0 %v2838
    %v3813 = vpop.f32.mrb[0].mxu0
    %v3814 = vadd.f32 0.0, %v3813
    %v3815 = vpop.f32.mrb[0].mxu0
    %v3816 = vadd.f32 0.0, %v3815
    %v3817 = vpop.f32.mrb[0].mxu0
    %v3818 = vadd.f32 0.0, %v3817
    %v3819 = vpop.f32.mrb[0].mxu0
    %v3820 = vadd.f32 0.0, %v3819
    %3821 = vmatprep.mubr.bf16.mxu0 %v2841
    %3822 = vmatmul.mubr.bf16.gmra.mrb[0].mxu0 %v2840
    %v3823 = vpop.f32.mrb[0].mxu0
    %v3824 = vadd.f32 0.0, %v3823
    %v3825 = vpop.f32.mrb[0].mxu0
    %v3826 = vadd.f32 0.0, %v3825
    %v3827 = vpop.f32.mrb[0].mxu0
    %v3828 = vadd.f32 0.0, %v3827
    %v3829 = vpop.f32.mrb[0].mxu0
    %v3830 = vadd.f32 0.0, %v3829
    %3831 = vmatprep.mubr.bf16.mxu0 %v2843
    %3832 = vmatmul.mubr.bf16.gmra.mrb[0].mxu0 %v2842
    %v3833 = vpop.f32.mrb[0].mxu0
    %v3834 = vadd.f32 0.0, %v3833
    %v3835 = vpop.f32.mrb[0].mxu0
    %v3836 = vadd.f32 0.0, %v3835
    %v3837 = vpop.f32.mrb[0].mxu0
    %v3838 = vadd.f32 0.0, %v3837
    %v3839 = vpop.f32.mrb[0].mxu0
    %v3840 = vadd.f32 0.0, %v3839
    %3841 = vmatprep.mubr.bf16.mxu0 %v2845
    %3842 = vmatmul.mubr.bf16.gmra.mrb[0].mxu0 %v2844
    %v3843 = vpop.f32.mrb[0].mxu0
    %v3844 = vadd.f32 0.0, %v3843
    %v3845 = vpop.f32.mrb[0].mxu0
    %v3846 = vadd.f32 0.0, %v3845
    %v3847 = vpop.f32.mrb[0].mxu0
    %v3848 = vadd.f32 0.0, %v3847
    %v3849 = vpop.f32.mrb[0].mxu0
    %v3850 = vadd.f32 0.0, %v3849
    %3851 = vdwg.mxu0
    %s3852 = scalar_lea.vmem [#allocation7], 64
    %v3853 = vld [vmem:[%s3852] sm:$0xff]
    %v3854 = vld [vmem:[%s3852 + $0x8] sm:$0xff]
    %v3855 = vld [vmem:[%s3852 + $0x10] sm:$0xff]
    %v3856 = vld [vmem:[%s3852 + $0x18] sm:$0xff]
    %v3858 = vsel %vm525, %v3853, 0
    %v3861 = vsel %vm525, %v3854, 0
    %v3864 = vsel %vm525, %v3855, 0
    %v3867 = vsel %vm525, %v3856, 0
    %3869 = vmatprep.subr.mxu0 %v3816
    %3870 = vmatpush1.msra.mxu0 %v3814
    %3871 = vmatprep.subr.mxu0 %v3820
    %3872 = vmatpush1.msra.mxu0 %v3818
    %3873 = vmatprep.subr.mxu0 %v3826
    %3874 = vmatpush1.msra.mxu0 %v3824
    %3875 = vmatprep.subr.mxu0 %v3830
    %3876 = vmatpush1.msra.mxu0 %v3828
    %3877 = vmatprep.subr.mxu0 %v3836
    %3878 = vmatpush1.msra.mxu0 %v3834
    %3879 = vmatprep.subr.mxu0 %v3840
    %3880 = vmatpush1.msra.mxu0 %v3838
    %3881 = vmatprep.subr.mxu0 %v3846
    %3882 = vmatpush1.msra.mxu0 %v3844
    %3883 = vmatprep.subr.mxu0 %v3850
    %3884 = vmatpush1.msra.mxu0 %v3848
    %3885 = vmatprep.subr.mxu0 0.0
    %3886 = vmatpush1.msra.mxu0 0.0
    %3887 = vmatprep.subr.mxu0 0.0
    %3888 = vmatpush1.msra.mxu0 0.0
    %3889 = vmatprep.subr.mxu0 0.0
    %3890 = vmatpush1.msra.mxu0 0.0
    %3891 = vmatprep.subr.mxu0 0.0
    %3892 = vmatpush1.msra.mxu0 0.0
    %3893 = vmatprep.subr.mxu0 0.0
    %3894 = vmatpush1.msra.mxu0 0.0
    %3895 = vmatprep.subr.mxu0 0.0
    %3896 = vmatpush1.msra.mxu0 0.0
    %3897 = vmatprep.subr.mxu0 0.0
    %3898 = vmatpush1.msra.mxu0 0.0
    %3899 = vmatprep.subr.mxu0 0.0
    %3900 = vmatpush1.msra.mxu0 0.0
    %3901 = vmatprep.subr.mxu0 0.0
    %3902 = vmatpush1.msra.mxu0 0.0
    %3903 = vmatprep.subr.mxu0 0.0
    %3904 = vmatpush1.msra.mxu0 0.0
    %3905 = vmatprep.subr.mxu0 0.0
    %3906 = vmatpush1.msra.mxu0 0.0
    %3907 = vmatprep.subr.mxu0 0.0
    %3908 = vmatpush1.msra.mxu0 0.0
    %3909 = vmatprep.subr.mxu0 0.0
    %3910 = vmatpush1.msra.mxu0 0.0
    %3911 = vmatprep.subr.mxu0 0.0
    %3912 = vmatpush1.msra.mxu0 0.0
    %3913 = vmatprep.subr.mxu0 0.0
    %3914 = vmatpush1.msra.mxu0 0.0
    %3915 = vmatprep.subr.mxu0 0.0
    %3916 = vmatpush1.msra.mxu0 0.0
    %3917 = vmatprep.subr.mxu0 0.0
    %3918 = vmatpush1.msra.mxu0 0.0
    %3919 = vmatprep.subr.mxu0 0.0
    %3920 = vmatpush1.msra.mxu0 0.0
    %3921 = vmatprep.subr.mxu0 0.0
    %3922 = vmatpush1.msra.mxu0 0.0
    %3923 = vmatprep.subr.mxu0 0.0
    %3924 = vmatpush1.msra.mxu0 0.0
    %3925 = vmatprep.subr.mxu0 0.0
    %3926 = vmatpush1.msra.mxu0 0.0
    %3927 = vmatprep.subr.mxu0 0.0
    %3928 = vmatpush1.msra.mxu0 0.0
    %3929 = vmatprep.subr.mxu0 0.0
    %3930 = vmatpush1.msra.mxu0 0.0
    %3931 = vmatprep.subr.mxu0 0.0
    %3932 = vmatpush1.msra.mxu0 0.0
    %3933 = vmatprep.mubr.f32.mxu0 0.0
    %3934 = vmatmul.mubr.f32.gmra.mrb[0].mxu0 %v3858
    %v3935 = vpop.f32.mrb[0].mxu0
    %v3936 = vadd.f32 0.0, %v3935
    %v3937 = vpop.f32.mrb[0].mxu0
    %v3938 = vadd.f32 0.0, %v3937
    %3939 = vmatprep.mubr.f32.mxu0 0.0
    %3940 = vmatmul.mubr.f32.gmra.mrb[0].mxu0 %v3861
    %v3941 = vpop.f32.mrb[0].mxu0
    %v3942 = vadd.f32 0.0, %v3941
    %v3943 = vpop.f32.mrb[0].mxu0
    %v3944 = vadd.f32 0.0, %v3943
    %3945 = vmatprep.mubr.f32.mxu0 0.0
    %3946 = vmatmul.mubr.f32.gmra.mrb[0].mxu0 %v3864
    %v3947 = vpop.f32.mrb[0].mxu0
    %v3948 = vadd.f32 0.0, %v3947
    %v3949 = vpop.f32.mrb[0].mxu0
    %v3950 = vadd.f32 0.0, %v3949
    %3951 = vmatprep.mubr.f32.mxu0 0.0
    %3952 = vmatmul.mubr.f32.gmra.mrb[0].mxu0 %v3867
    %v3953 = vpop.f32.mrb[0].mxu0
    %v3954 = vadd.f32 0.0, %v3953
    %v3955 = vpop.f32.mrb[0].mxu0
    %v3956 = vadd.f32 0.0, %v3955
    %3957 = vdwg.mxu0
    %v3958 = vadd.f32 %v3565, %v3936
    %v3959 = vadd.f32 %v3567, %v3938
    %v3960 = vadd.f32 %v3571, %v3942
    %v3961 = vadd.f32 %v3573, %v3944
    %v3962 = vadd.f32 %v3577, %v3948
    %v3963 = vadd.f32 %v3579, %v3950
    %v3964 = vadd.f32 %v3583, %v3954
    %v3965 = vadd.f32 %v3585, %v3956
    %v3966 = vld [vmem:[%s7 + $0x18] sm:$0xff]
    %v3967 = vld [vmem:[%s7 + $0x40] sm:$0xff]
    %v3968 = vld [vmem:[%s7 + $0x68] sm:$0xff]
    %v3969 = vld [vmem:[%s7 + $0x90] sm:$0xff]
    %v3970 = vld [vmem:[%s7 + $0xb8] sm:$0xff]
    %v3971 = vld [vmem:[%s7 + $0xe0] sm:$0xff]
    %v3972 = vld [vmem:[%s7 + $0x108] sm:$0xff]
    %v3973 = vld [vmem:[%s7 + $0x130] sm:$0xff]
    %v3974 = vld [vmem:[%s7 + $0x158] sm:$0xff]
    %v3975 = vld [vmem:[%s7 + $0x180] sm:$0xff]
    %v3976 = vld [vmem:[%s7 + $0x1a8] sm:$0xff]
    %v3977 = vld [vmem:[%s7 + $0x1d0] sm:$0xff]
    %v3978 = vld [vmem:[%s7 + $0x1f8] sm:$0xff]
    %v3979 = vld [vmem:[%s7 + $0x220] sm:$0xff]
    %v3980 = vld [vmem:[%s7 + $0x248] sm:$0xff]
    %v3981 = vld [vmem:[%s7 + $0x270] sm:$0xff]
    %v3982 = vld [vmem:[%s7 + $0x298] sm:$0xff]
    %v3983 = vld [vmem:[%s7 + $0x2c0] sm:$0xff]
    %v3984 = vld [vmem:[%s7 + $0x2e8] sm:$0xff]
    %v3985 = vld [vmem:[%s7 + $0x310] sm:$0xff]
    %v3986 = vld [vmem:[%s7 + $0x338] sm:$0xff]
    %v3987 = vld [vmem:[%s7 + $0x360] sm:$0xff]
    %v3988 = vld [vmem:[%s7 + $0x388] sm:$0xff]
    %v3989 = vld [vmem:[%s7 + $0x3b0] sm:$0xff]
    %v3990 = vld [vmem:[%s7 + $0x3d8] sm:$0xff]
    %v3991 = vld [vmem:[%s7 + $0x400] sm:$0xff]
    %v3992 = vld [vmem:[%s7 + $0x428] sm:$0xff]
    %v3993 = vld [vmem:[%s7 + $0x450] sm:$0xff]
    %v3994 = vld [vmem:[%s7 + $0x478] sm:$0xff]
    %v3995 = vld [vmem:[%s7 + $0x4a0] sm:$0xff]
    %v3996 = vld [vmem:[%s7 + $0x4c8] sm:$0xff]
    %v3997 = vld [vmem:[%s7 + $0x4f0] sm:$0xff]
    %v4030 = vunpack.c.l.b16 %v3966
    %v4031 = vunpack.c.h.b16 %v3966
    %v4032 = vunpack.c.l.b16 %v3967
    %v4033 = vunpack.c.h.b16 %v3967
    %v4034 = vunpack.c.l.b16 %v3968
    %v4035 = vunpack.c.h.b16 %v3968
    %v4036 = vunpack.c.l.b16 %v3969
    %v4037 = vunpack.c.h.b16 %v3969
    %v4038 = vunpack.c.l.b16 %v3970
    %v4039 = vunpack.c.h.b16 %v3970
    %v4040 = vunpack.c.l.b16 %v3971
    %v4041 = vunpack.c.h.b16 %v3971
    %v4042 = vunpack.c.l.b16 %v3972
    %v4043 = vunpack.c.h.b16 %v3972
    %v4044 = vunpack.c.l.b16 %v3973
    %v4045 = vunpack.c.h.b16 %v3973
    %v4046 = vunpack.c.l.b16 %v3974
    %v4047 = vunpack.c.h.b16 %v3974
    %v4048 = vunpack.c.l.b16 %v3975
    %v4049 = vunpack.c.h.b16 %v3975
    %v4050 = vunpack.c.l.b16 %v3976
    %v4051 = vunpack.c.h.b16 %v3976
    %v4052 = vunpack.c.l.b16 %v3977
    %v4053 = vunpack.c.h.b16 %v3977
    %v4054 = vunpack.c.l.b16 %v3978
    %v4055 = vunpack.c.h.b16 %v3978
    %v4056 = vunpack.c.l.b16 %v3979
    %v4057 = vunpack.c.h.b16 %v3979
    %v4058 = vunpack.c.l.b16 %v3980
    %v4059 = vunpack.c.h.b16 %v3980
    %v4060 = vunpack.c.l.b16 %v3981
    %v4061 = vunpack.c.h.b16 %v3981
    %v4062 = vunpack.c.l.b16 %v3982
    %v4063 = vunpack.c.h.b16 %v3982
    %v4064 = vunpack.c.l.b16 %v3983
    %v4065 = vunpack.c.h.b16 %v3983
    %v4066 = vunpack.c.l.b16 %v3984
    %v4067 = vunpack.c.h.b16 %v3984
    %v4068 = vunpack.c.l.b16 %v3985
    %v4069 = vunpack.c.h.b16 %v3985
    %v4070 = vunpack.c.l.b16 %v3986
    %v4071 = vunpack.c.h.b16 %v3986
    %v4072 = vunpack.c.l.b16 %v3987
    %v4073 = vunpack.c.h.b16 %v3987
    %v4074 = vunpack.c.l.b16 %v3988
    %v4075 = vunpack.c.h.b16 %v3988
    %v4076 = vunpack.c.l.b16 %v3989
    %v4077 = vunpack.c.h.b16 %v3989
    %v4078 = vunpack.c.l.b16 %v3990
    %v4079 = vunpack.c.h.b16 %v3990
    %v4080 = vunpack.c.l.b16 %v3991
    %v4081 = vunpack.c.h.b16 %v3991
    %v4082 = vunpack.c.l.b16 %v3992
    %v4083 = vunpack.c.h.b16 %v3992
    %v4084 = vunpack.c.l.b16 %v3993
    %v4085 = vunpack.c.h.b16 %v3993
    %v4086 = vunpack.c.l.b16 %v3994
    %v4087 = vunpack.c.h.b16 %v3994
    %v4088 = vunpack.c.l.b16 %v3995
    %v4089 = vunpack.c.h.b16 %v3995
    %v4090 = vunpack.c.l.b16 %v3996
    %v4091 = vunpack.c.h.b16 %v3996
    %v4092 = vunpack.c.l.b16 %v3997
    %v4093 = vunpack.c.h.b16 %v3997
    %v4094 = vpack.c.b16 %v4032, %v4030
    %v4095 = vpack.c.b16 %v4033, %v4031
    %v4096 = vpack.c.b16 %v4036, %v4034
    %v4097 = vpack.c.b16 %v4037, %v4035
    %v4098 = vpack.c.b16 %v4040, %v4038
    %v4099 = vpack.c.b16 %v4041, %v4039
    %v4100 = vpack.c.b16 %v4044, %v4042
    %v4101 = vpack.c.b16 %v4045, %v4043
    %v4102 = vpack.c.b16 %v4048, %v4046
    %v4103 = vpack.c.b16 %v4049, %v4047
    %v4104 = vpack.c.b16 %v4052, %v4050
    %v4105 = vpack.c.b16 %v4053, %v4051
    %v4106 = vpack.c.b16 %v4056, %v4054
    %v4107 = vpack.c.b16 %v4057, %v4055
    %v4108 = vpack.c.b16 %v4060, %v4058
    %v4109 = vpack.c.b16 %v4061, %v4059
    %v4110 = vpack.c.b16 %v4064, %v4062
    %v4111 = vpack.c.b16 %v4065, %v4063
    %v4112 = vpack.c.b16 %v4068, %v4066
    %v4113 = vpack.c.b16 %v4069, %v4067
    %v4114 = vpack.c.b16 %v4072, %v4070
    %v4115 = vpack.c.b16 %v4073, %v4071
    %v4116 = vpack.c.b16 %v4076, %v4074
    %v4117 = vpack.c.b16 %v4077, %v4075
    %v4118 = vpack.c.b16 %v4080, %v4078
    %v4119 = vpack.c.b16 %v4081, %v4079
    %v4120 = vpack.c.b16 %v4084, %v4082
    %v4121 = vpack.c.b16 %v4085, %v4083
    %v4122 = vpack.c.b16 %v4088, %v4086
    %v4123 = vpack.c.b16 %v4089, %v4087
    %v4124 = vpack.c.b16 %v4092, %v4090
    %v4125 = vpack.c.b16 %v4093, %v4091
    %4158 = vmatprep.subr.bf16.mxu0 %v4095
    %4159 = vmatpush1.bf16.msra.mxu0 %v4094
    %4160 = vmatprep.subr.bf16.mxu0 %v4097
    %4161 = vmatpush1.bf16.msra.mxu0 %v4096
    %4162 = vmatprep.subr.bf16.mxu0 %v4099
    %4163 = vmatpush1.bf16.msra.mxu0 %v4098
    %4164 = vmatprep.subr.bf16.mxu0 %v4101
    %4165 = vmatpush1.bf16.msra.mxu0 %v4100
    %4166 = vmatprep.subr.bf16.mxu0 %v4103
    %4167 = vmatpush1.bf16.msra.mxu0 %v4102
    %4168 = vmatprep.subr.bf16.mxu0 %v4105
    %4169 = vmatpush1.bf16.msra.mxu0 %v4104
    %4170 = vmatprep.subr.bf16.mxu0 %v4107
    %4171 = vmatpush1.bf16.msra.mxu0 %v4106
    %4172 = vmatprep.subr.bf16.mxu0 %v4109
    %4173 = vmatpush1.bf16.msra.mxu0 %v4108
    %4174 = vmatprep.subr.bf16.mxu0 %v4111
    %4175 = vmatpush1.bf16.msra.mxu0 %v4110
    %4176 = vmatprep.subr.bf16.mxu0 %v4113
    %4177 = vmatpush1.bf16.msra.mxu0 %v4112
    %4178 = vmatprep.subr.bf16.mxu0 %v4115
    %4179 = vmatpush1.bf16.msra.mxu0 %v4114
    %4180 = vmatprep.subr.bf16.mxu0 %v4117
    %4181 = vmatpush1.bf16.msra.mxu0 %v4116
    %4182 = vmatprep.subr.bf16.mxu0 %v4119
    %4183 = vmatpush1.bf16.msra.mxu0 %v4118
    %4184 = vmatprep.subr.bf16.mxu0 %v4121
    %4185 = vmatpush1.bf16.msra.mxu0 %v4120
    %4186 = vmatprep.subr.bf16.mxu0 %v4123
    %4187 = vmatpush1.bf16.msra.mxu0 %v4122
    %4188 = vmatprep.subr.bf16.mxu0 %v4125
    %4189 = vmatpush1.bf16.msra.mxu0 %v4124
    %4190 = vmatprep.mubr.bf16.mxu0 %v2839
    %4191 = vmatmul.mubr.bf16.gmra.mrb[0].mxu0 %v2838
    %v4192 = vpop.f32.mrb[0].mxu0
    %v4193 = vadd.f32 0.0, %v4192
    %v4194 = vpop.f32.mrb[0].mxu0
    %v4195 = vadd.f32 0.0, %v4194
    %v4196 = vpop.f32.mrb[0].mxu0
    %v4197 = vadd.f32 0.0, %v4196
    %v4198 = vpop.f32.mrb[0].mxu0
    %v4199 = vadd.f32 0.0, %v4198
    %4200 = vmatprep.mubr.bf16.mxu0 %v2841
    %4201 = vmatmul.mubr.bf16.gmra.mrb[0].mxu0 %v2840
    %v4202 = vpop.f32.mrb[0].mxu0
    %v4203 = vadd.f32 0.0, %v4202
    %v4204 = vpop.f32.mrb[0].mxu0
    %v4205 = vadd.f32 0.0, %v4204
    %v4206 = vpop.f32.mrb[0].mxu0
    %v4207 = vadd.f32 0.0, %v4206
    %v4208 = vpop.f32.mrb[0].mxu0
    %v4209 = vadd.f32 0.0, %v4208
    %4210 = vmatprep.mubr.bf16.mxu0 %v2843
    %4211 = vmatmul.mubr.bf16.gmra.mrb[0].mxu0 %v2842
    %v4212 = vpop.f32.mrb[0].mxu0
    %v4213 = vadd.f32 0.0, %v4212
    %v4214 = vpop.f32.mrb[0].mxu0
    %v4215 = vadd.f32 0.0, %v4214
    %v4216 = vpop.f32.mrb[0].mxu0
    %v4217 = vadd.f32 0.0, %v4216
    %v4218 = vpop.f32.mrb[0].mxu0
    %v4219 = vadd.f32 0.0, %v4218
    %4220 = vmatprep.mubr.bf16.mxu0 %v2845
    %4221 = vmatmul.mubr.bf16.gmra.mrb[0].mxu0 %v2844
    %v4222 = vpop.f32.mrb[0].mxu0
    %v4223 = vadd.f32 0.0, %v4222
    %v4224 = vpop.f32.mrb[0].mxu0
    %v4225 = vadd.f32 0.0, %v4224
    %v4226 = vpop.f32.mrb[0].mxu0
    %v4227 = vadd.f32 0.0, %v4226
    %v4228 = vpop.f32.mrb[0].mxu0
    %v4229 = vadd.f32 0.0, %v4228
    %4230 = vdwg.mxu0
    %s4231 = scalar_lea.vmem [#allocation7], 96
    %v4232 = vld [vmem:[%s4231] sm:$0xff]
    %v4233 = vld [vmem:[%s4231 + $0x8] sm:$0xff]
    %v4234 = vld [vmem:[%s4231 + $0x10] sm:$0xff]
    %v4235 = vld [vmem:[%s4231 + $0x18] sm:$0xff]
    %v4237 = vsel %vm525, %v4232, 0
    %v4240 = vsel %vm525, %v4233, 0
    %v4243 = vsel %vm525, %v4234, 0
    %v4246 = vsel %vm525, %v4235, 0
    %4248 = vmatprep.subr.mxu0 %v4195
    %4249 = vmatpush1.msra.mxu0 %v4193
    %4250 = vmatprep.subr.mxu0 %v4199
    %4251 = vmatpush1.msra.mxu0 %v4197
    %4252 = vmatprep.subr.mxu0 %v4205
    %4253 = vmatpush1.msra.mxu0 %v4203
    %4254 = vmatprep.subr.mxu0 %v4209
    %4255 = vmatpush1.msra.mxu0 %v4207
    %4256 = vmatprep.subr.mxu0 %v4215
    %4257 = vmatpush1.msra.mxu0 %v4213
    %4258 = vmatprep.subr.mxu0 %v4219
    %4259 = vmatpush1.msra.mxu0 %v4217
    %4260 = vmatprep.subr.mxu0 %v4225
    %4261 = vmatpush1.msra.mxu0 %v4223
    %4262 = vmatprep.subr.mxu0 %v4229
    %4263 = vmatpush1.msra.mxu0 %v4227
    %4264 = vmatprep.subr.mxu0 0.0
    %4265 = vmatpush1.msra.mxu0 0.0
    %4266 = vmatprep.subr.mxu0 0.0
    %4267 = vmatpush1.msra.mxu0 0.0
    %4268 = vmatprep.subr.mxu0 0.0
    %4269 = vmatpush1.msra.mxu0 0.0
    %4270 = vmatprep.subr.mxu0 0.0
    %4271 = vmatpush1.msra.mxu0 0.0
    %4272 = vmatprep.subr.mxu0 0.0
    %4273 = vmatpush1.msra.mxu0 0.0
    %4274 = vmatprep.subr.mxu0 0.0
    %4275 = vmatpush1.msra.mxu0 0.0
    %4276 = vmatprep.subr.mxu0 0.0
    %4277 = vmatpush1.msra.mxu0 0.0
    %4278 = vmatprep.subr.mxu0 0.0
    %4279 = vmatpush1.msra.mxu0 0.0
    %4280 = vmatprep.subr.mxu0 0.0
    %4281 = vmatpush1.msra.mxu0 0.0
    %4282 = vmatprep.subr.mxu0 0.0
    %4283 = vmatpush1.msra.mxu0 0.0
    %4284 = vmatprep.subr.mxu0 0.0
    %4285 = vmatpush1.msra.mxu0 0.0
    %4286 = vmatprep.subr.mxu0 0.0
    %4287 = vmatpush1.msra.mxu0 0.0
    %4288 = vmatprep.subr.mxu0 0.0
    %4289 = vmatpush1.msra.mxu0 0.0
    %4290 = vmatprep.subr.mxu0 0.0
    %4291 = vmatpush1.msra.mxu0 0.0
    %4292 = vmatprep.subr.mxu0 0.0
    %4293 = vmatpush1.msra.mxu0 0.0
    %4294 = vmatprep.subr.mxu0 0.0
    %4295 = vmatpush1.msra.mxu0 0.0
    %4296 = vmatprep.subr.mxu0 0.0
    %4297 = vmatpush1.msra.mxu0 0.0
    %4298 = vmatprep.subr.mxu0 0.0
    %4299 = vmatpush1.msra.mxu0 0.0
    %4300 = vmatprep.subr.mxu0 0.0
    %4301 = vmatpush1.msra.mxu0 0.0
    %4302 = vmatprep.subr.mxu0 0.0
    %4303 = vmatpush1.msra.mxu0 0.0
    %4304 = vmatprep.subr.mxu0 0.0
    %4305 = vmatpush1.msra.mxu0 0.0
    %4306 = vmatprep.subr.mxu0 0.0
    %4307 = vmatpush1.msra.mxu0 0.0
    %4308 = vmatprep.subr.mxu0 0.0
    %4309 = vmatpush1.msra.mxu0 0.0
    %4310 = vmatprep.subr.mxu0 0.0
    %4311 = vmatpush1.msra.mxu0 0.0
    %4312 = vmatprep.mubr.f32.mxu0 0.0
    %4313 = vmatmul.mubr.f32.gmra.mrb[0].mxu0 %v4237
    %v4314 = vpop.f32.mrb[0].mxu0
    %v4315 = vadd.f32 0.0, %v4314
    %v4316 = vpop.f32.mrb[0].mxu0
    %v4317 = vadd.f32 0.0, %v4316
    %4318 = vmatprep.mubr.f32.mxu0 0.0
    %4319 = vmatmul.mubr.f32.gmra.mrb[0].mxu0 %v4240
    %v4320 = vpop.f32.mrb[0].mxu0
    %v4321 = vadd.f32 0.0, %v4320
    %v4322 = vpop.f32.mrb[0].mxu0
    %v4323 = vadd.f32 0.0, %v4322
    %4324 = vmatprep.mubr.f32.mxu0 0.0
    %4325 = vmatmul.mubr.f32.gmra.mrb[0].mxu0 %v4243
    %v4326 = vpop.f32.mrb[0].mxu0
    %v4327 = vadd.f32 0.0, %v4326
    %v4328 = vpop.f32.mrb[0].mxu0
    %v4329 = vadd.f32 0.0, %v4328
    %4330 = vmatprep.mubr.f32.mxu0 0.0
    %4331 = vmatmul.mubr.f32.gmra.mrb[0].mxu0 %v4246
    %v4332 = vpop.f32.mrb[0].mxu0
    %v4333 = vadd.f32 0.0, %v4332
    %v4334 = vpop.f32.mrb[0].mxu0
    %v4335 = vadd.f32 0.0, %v4334
    %4336 = vdwg.mxu0
    %v4337 = vadd.f32 %v3958, %v4315
    %v4338 = vadd.f32 %v3959, %v4317
    %v4339 = vadd.f32 %v3960, %v4321
    %v4340 = vadd.f32 %v3961, %v4323
    %v4341 = vadd.f32 %v3962, %v4327
    %v4342 = vadd.f32 %v3963, %v4329
    %v4343 = vadd.f32 %v3964, %v4333
    %v4344 = vadd.f32 %v3965, %v4335
    %v4345 = vld [vmem:[%s7 + $0x20] sm:$0xff]
    %v4346 = vld [vmem:[%s7 + $0x48] sm:$0xff]
    %v4347 = vld [vmem:[%s7 + $0x70] sm:$0xff]
    %v4348 = vld [vmem:[%s7 + $0x98] sm:$0xff]
    %v4349 = vld [vmem:[%s7 + $0xc0] sm:$0xff]
    %v4350 = vld [vmem:[%s7 + $0xe8] sm:$0xff]
    %v4351 = vld [vmem:[%s7 + $0x110] sm:$0xff]
    %v4352 = vld [vmem:[%s7 + $0x138] sm:$0xff]
    %v4353 = vld [vmem:[%s7 + $0x160] sm:$0xff]
    %v4354 = vld [vmem:[%s7 + $0x188] sm:$0xff]
    %v4355 = vld [vmem:[%s7 + $0x1b0] sm:$0xff]
    %v4356 = vld [vmem:[%s7 + $0x1d8] sm:$0xff]
    %v4357 = vld [vmem:[%s7 + $0x200] sm:$0xff]
    %v4358 = vld [vmem:[%s7 + $0x228] sm:$0xff]
    %v4359 = vld [vmem:[%s7 + $0x250] sm:$0xff]
    %v4360 = vld [vmem:[%s7 + $0x278] sm:$0xff]
    %v4361 = vld [vmem:[%s7 + $0x2a0] sm:$0xff]
    %v4362 = vld [vmem:[%s7 + $0x2c8] sm:$0xff]
    %v4363 = vld [vmem:[%s7 + $0x2f0] sm:$0xff]
    %v4364 = vld [vmem:[%s7 + $0x318] sm:$0xff]
    %v4365 = vld [vmem:[%s7 + $0x340] sm:$0xff]
    %v4366 = vld [vmem:[%s7 + $0x368] sm:$0xff]
    %v4367 = vld [vmem:[%s7 + $0x390] sm:$0xff]
    %v4368 = vld [vmem:[%s7 + $0x3b8] sm:$0xff]
    %v4369 = vld [vmem:[%s7 + $0x3e0] sm:$0xff]
    %v4370 = vld [vmem:[%s7 + $0x408] sm:$0xff]
    %v4371 = vld [vmem:[%s7 + $0x430] sm:$0xff]
    %v4372 = vld [vmem:[%s7 + $0x458] sm:$0xff]
    %v4373 = vld [vmem:[%s7 + $0x480] sm:$0xff]
    %v4374 = vld [vmem:[%s7 + $0x4a8] sm:$0xff]
    %v4375 = vld [vmem:[%s7 + $0x4d0] sm:$0xff]
    %v4376 = vld [vmem:[%s7 + $0x4f8] sm:$0xff]
    %v4409 = vunpack.c.l.b16 %v4345
    %v4410 = vunpack.c.h.b16 %v4345
    %v4411 = vunpack.c.l.b16 %v4346
    %v4412 = vunpack.c.h.b16 %v4346
    %v4413 = vunpack.c.l.b16 %v4347
    %v4414 = vunpack.c.h.b16 %v4347
    %v4415 = vunpack.c.l.b16 %v4348
    %v4416 = vunpack.c.h.b16 %v4348
    %v4417 = vunpack.c.l.b16 %v4349
    %v4418 = vunpack.c.h.b16 %v4349
    %v4419 = vunpack.c.l.b16 %v4350
    %v4420 = vunpack.c.h.b16 %v4350
    %v4421 = vunpack.c.l.b16 %v4351
    %v4422 = vunpack.c.h.b16 %v4351
    %v4423 = vunpack.c.l.b16 %v4352
    %v4424 = vunpack.c.h.b16 %v4352
    %v4425 = vunpack.c.l.b16 %v4353
    %v4426 = vunpack.c.h.b16 %v4353
    %v4427 = vunpack.c.l.b16 %v4354
    %v4428 = vunpack.c.h.b16 %v4354
    %v4429 = vunpack.c.l.b16 %v4355
    %v4430 = vunpack.c.h.b16 %v4355
    %v4431 = vunpack.c.l.b16 %v4356
    %v4432 = vunpack.c.h.b16 %v4356
    %v4433 = vunpack.c.l.b16 %v4357
    %v4434 = vunpack.c.h.b16 %v4357
    %v4435 = vunpack.c.l.b16 %v4358
    %v4436 = vunpack.c.h.b16 %v4358
    %v4437 = vunpack.c.l.b16 %v4359
    %v4438 = vunpack.c.h.b16 %v4359
    %v4439 = vunpack.c.l.b16 %v4360
    %v4440 = vunpack.c.h.b16 %v4360
    %v4441 = vunpack.c.l.b16 %v4361
    %v4442 = vunpack.c.h.b16 %v4361
    %v4443 = vunpack.c.l.b16 %v4362
    %v4444 = vunpack.c.h.b16 %v4362
    %v4445 = vunpack.c.l.b16 %v4363
    %v4446 = vunpack.c.h.b16 %v4363
    %v4447 = vunpack.c.l.b16 %v4364
    %v4448 = vunpack.c.h.b16 %v4364
    %v4449 = vunpack.c.l.b16 %v4365
    %v4450 = vunpack.c.h.b16 %v4365
    %v4451 = vunpack.c.l.b16 %v4366
    %v4452 = vunpack.c.h.b16 %v4366
    %v4453 = vunpack.c.l.b16 %v4367
    %v4454 = vunpack.c.h.b16 %v4367
    %v4455 = vunpack.c.l.b16 %v4368
    %v4456 = vunpack.c.h.b16 %v4368
    %v4457 = vunpack.c.l.b16 %v4369
    %v4458 = vunpack.c.h.b16 %v4369
    %v4459 = vunpack.c.l.b16 %v4370
    %v4460 = vunpack.c.h.b16 %v4370
    %v4461 = vunpack.c.l.b16 %v4371
    %v4462 = vunpack.c.h.b16 %v4371
    %v4463 = vunpack.c.l.b16 %v4372
    %v4464 = vunpack.c.h.b16 %v4372
    %v4465 = vunpack.c.l.b16 %v4373
    %v4466 = vunpack.c.h.b16 %v4373
    %v4467 = vunpack.c.l.b16 %v4374
    %v4468 = vunpack.c.h.b16 %v4374
    %v4469 = vunpack.c.l.b16 %v4375
    %v4470 = vunpack.c.h.b16 %v4375
    %v4471 = vunpack.c.l.b16 %v4376
    %v4472 = vunpack.c.h.b16 %v4376
    %v4473 = vpack.c.b16 %v4411, %v4409
    %v4474 = vpack.c.b16 %v4412, %v4410
    %v4475 = vpack.c.b16 %v4415, %v4413
    %v4476 = vpack.c.b16 %v4416, %v4414
    %v4477 = vpack.c.b16 %v4419, %v4417
    %v4478 = vpack.c.b16 %v4420, %v4418
    %v4479 = vpack.c.b16 %v4423, %v4421
    %v4480 = vpack.c.b16 %v4424, %v4422
    %v4481 = vpack.c.b16 %v4427, %v4425
    %v4482 = vpack.c.b16 %v4428, %v4426
    %v4483 = vpack.c.b16 %v4431, %v4429
    %v4484 = vpack.c.b16 %v4432, %v4430
    %v4485 = vpack.c.b16 %v4435, %v4433
    %v4486 = vpack.c.b16 %v4436, %v4434
    %v4487 = vpack.c.b16 %v4439, %v4437
    %v4488 = vpack.c.b16 %v4440, %v4438
    %v4489 = vpack.c.b16 %v4443, %v4441
    %v4490 = vpack.c.b16 %v4444, %v4442
    %v4491 = vpack.c.b16 %v4447, %v4445
    %v4492 = vpack.c.b16 %v4448, %v4446
    %v4493 = vpack.c.b16 %v4451, %v4449
    %v4494 = vpack.c.b16 %v4452, %v4450
    %v4495 = vpack.c.b16 %v4455, %v4453
    %v4496 = vpack.c.b16 %v4456, %v4454
    %v4497 = vpack.c.b16 %v4459, %v4457
    %v4498 = vpack.c.b16 %v4460, %v4458
    %v4499 = vpack.c.b16 %v4463, %v4461
    %v4500 = vpack.c.b16 %v4464, %v4462
    %v4501 = vpack.c.b16 %v4467, %v4465
    %v4502 = vpack.c.b16 %v4468, %v4466
    %v4503 = vpack.c.b16 %v4471, %v4469
    %v4504 = vpack.c.b16 %v4472, %v4470
    %4537 = vmatprep.subr.bf16.mxu0 %v4474
    %4538 = vmatpush1.bf16.msra.mxu0 %v4473
    %4539 = vmatprep.subr.bf16.mxu0 %v4476
    %4540 = vmatpush1.bf16.msra.mxu0 %v4475
    %4541 = vmatprep.subr.bf16.mxu0 %v4478
    %4542 = vmatpush1.bf16.msra.mxu0 %v4477
    %4543 = vmatprep.subr.bf16.mxu0 %v4480
    %4544 = vmatpush1.bf16.msra.mxu0 %v4479
    %4545 = vmatprep.subr.bf16.mxu0 %v4482
    %4546 = vmatpush1.bf16.msra.mxu0 %v4481
    %4547 = vmatprep.subr.bf16.mxu0 %v4484
    %4548 = vmatpush1.bf16.msra.mxu0 %v4483
    %4549 = vmatprep.subr.bf16.mxu0 %v4486
    %4550 = vmatpush1.bf16.msra.mxu0 %v4485
    %4551 = vmatprep.subr.bf16.mxu0 %v4488
    %4552 = vmatpush1.bf16.msra.mxu0 %v4487
    %4553 = vmatprep.subr.bf16.mxu0 %v4490
    %4554 = vmatpush1.bf16.msra.mxu0 %v4489
    %4555 = vmatprep.subr.bf16.mxu0 %v4492
    %4556 = vmatpush1.bf16.msra.mxu0 %v4491
    %4557 = vmatprep.subr.bf16.mxu0 %v4494
    %4558 = vmatpush1.bf16.msra.mxu0 %v4493
    %4559 = vmatprep.subr.bf16.mxu0 %v4496
    %4560 = vmatpush1.bf16.msra.mxu0 %v4495
    %4561 = vmatprep.subr.bf16.mxu0 %v4498
    %4562 = vmatpush1.bf16.msra.mxu0 %v4497
    %4563 = vmatprep.subr.bf16.mxu0 %v4500
    %4564 = vmatpush1.bf16.msra.mxu0 %v4499
    %4565 = vmatprep.subr.bf16.mxu0 %v4502
    %4566 = vmatpush1.bf16.msra.mxu0 %v4501
    %4567 = vmatprep.subr.bf16.mxu0 %v4504
    %4568 = vmatpush1.bf16.msra.mxu0 %v4503
    %4569 = vmatprep.mubr.bf16.mxu0 %v2839
    %4570 = vmatmul.mubr.bf16.gmra.mrb[0].mxu0 %v2838
    %v4571 = vpop.f32.mrb[0].mxu0
    %v4572 = vadd.f32 0.0, %v4571
    %v4573 = vpop.f32.mrb[0].mxu0
    %v4574 = vadd.f32 0.0, %v4573
    %v4575 = vpop.f32.mrb[0].mxu0
    %v4576 = vadd.f32 0.0, %v4575
    %v4577 = vpop.f32.mrb[0].mxu0
    %v4578 = vadd.f32 0.0, %v4577
    %4579 = vmatprep.mubr.bf16.mxu0 %v2841
    %4580 = vmatmul.mubr.bf16.gmra.mrb[0].mxu0 %v2840
    %v4581 = vpop.f32.mrb[0].mxu0
    %v4582 = vadd.f32 0.0, %v4581
    %v4583 = vpop.f32.mrb[0].mxu0
    %v4584 = vadd.f32 0.0, %v4583
    %v4585 = vpop.f32.mrb[0].mxu0
    %v4586 = vadd.f32 0.0, %v4585
    %v4587 = vpop.f32.mrb[0].mxu0
    %v4588 = vadd.f32 0.0, %v4587
    %4589 = vmatprep.mubr.bf16.mxu0 %v2843
    %4590 = vmatmul.mubr.bf16.gmra.mrb[0].mxu0 %v2842
    %v4591 = vpop.f32.mrb[0].mxu0
    %v4592 = vadd.f32 0.0, %v4591
    %v4593 = vpop.f32.mrb[0].mxu0
    %v4594 = vadd.f32 0.0, %v4593
    %v4595 = vpop.f32.mrb[0].mxu0
    %v4596 = vadd.f32 0.0, %v4595
    %v4597 = vpop.f32.mrb[0].mxu0
    %v4598 = vadd.f32 0.0, %v4597
    %4599 = vmatprep.mubr.bf16.mxu0 %v2845
    %4600 = vmatmul.mubr.bf16.gmra.mrb[0].mxu0 %v2844
    %v4601 = vpop.f32.mrb[0].mxu0
    %v4602 = vadd.f32 0.0, %v4601
    %v4603 = vpop.f32.mrb[0].mxu0
    %v4604 = vadd.f32 0.0, %v4603
    %v4605 = vpop.f32.mrb[0].mxu0
    %v4606 = vadd.f32 0.0, %v4605
    %v4607 = vpop.f32.mrb[0].mxu0
    %v4608 = vadd.f32 0.0, %v4607
    %4609 = vdwg.mxu0
    %s4610 = scalar_lea.vmem [#allocation7], 128
    %v4611 = vld [vmem:[%s4610] sm:$0xff]
    %v4612 = vld [vmem:[%s4610 + $0x8] sm:$0xff]
    %v4613 = vld [vmem:[%s4610 + $0x10] sm:$0xff]
    %v4614 = vld [vmem:[%s4610 + $0x18] sm:$0xff]
    %v4616 = vsel %vm525, %v4611, 0
    %v4619 = vsel %vm525, %v4612, 0
    %v4622 = vsel %vm525, %v4613, 0
    %v4625 = vsel %vm525, %v4614, 0
    %4627 = vmatprep.subr.mxu0 %v4574
    %4628 = vmatpush1.msra.mxu0 %v4572
    %4629 = vmatprep.subr.mxu0 %v4578
    %4630 = vmatpush1.msra.mxu0 %v4576
    %4631 = vmatprep.subr.mxu0 %v4584
    %4632 = vmatpush1.msra.mxu0 %v4582
    %4633 = vmatprep.subr.mxu0 %v4588
    %4634 = vmatpush1.msra.mxu0 %v4586
    %4635 = vmatprep.subr.mxu0 %v4594
    %4636 = vmatpush1.msra.mxu0 %v4592
    %4637 = vmatprep.subr.mxu0 %v4598
    %4638 = vmatpush1.msra.mxu0 %v4596
    %4639 = vmatprep.subr.mxu0 %v4604
    %4640 = vmatpush1.msra.mxu0 %v4602
    %4641 = vmatprep.subr.mxu0 %v4608
    %4642 = vmatpush1.msra.mxu0 %v4606
    %4643 = vmatprep.subr.mxu0 0.0
    %4644 = vmatpush1.msra.mxu0 0.0
    %4645 = vmatprep.subr.mxu0 0.0
    %4646 = vmatpush1.msra.mxu0 0.0
    %4647 = vmatprep.subr.mxu0 0.0
    %4648 = vmatpush1.msra.mxu0 0.0
    %4649 = vmatprep.subr.mxu0 0.0
    %4650 = vmatpush1.msra.mxu0 0.0
    %4651 = vmatprep.subr.mxu0 0.0
    %4652 = vmatpush1.msra.mxu0 0.0
    %4653 = vmatprep.subr.mxu0 0.0
    %4654 = vmatpush1.msra.mxu0 0.0
    %4655 = vmatprep.subr.mxu0 0.0
    %4656 = vmatpush1.msra.mxu0 0.0
    %4657 = vmatprep.subr.mxu0 0.0
    %4658 = vmatpush1.msra.mxu0 0.0
    %4659 = vmatprep.subr.mxu0 0.0
    %4660 = vmatpush1.msra.mxu0 0.0
    %4661 = vmatprep.subr.mxu0 0.0
    %4662 = vmatpush1.msra.mxu0 0.0
    %4663 = vmatprep.subr.mxu0 0.0
    %4664 = vmatpush1.msra.mxu0 0.0
    %4665 = vmatprep.subr.mxu0 0.0
    %4666 = vmatpush1.msra.mxu0 0.0
    %4667 = vmatprep.subr.mxu0 0.0
    %4668 = vmatpush1.msra.mxu0 0.0
    %4669 = vmatprep.subr.mxu0 0.0
    %4670 = vmatpush1.msra.mxu0 0.0
    %4671 = vmatprep.subr.mxu0 0.0
    %4672 = vmatpush1.msra.mxu0 0.0
    %4673 = vmatprep.subr.mxu0 0.0
    %4674 = vmatpush1.msra.mxu0 0.0
    %4675 = vmatprep.subr.mxu0 0.0
    %4676 = vmatpush1.msra.mxu0 0.0
    %4677 = vmatprep.subr.mxu0 0.0
    %4678 = vmatpush1.msra.mxu0 0.0
    %4679 = vmatprep.subr.mxu0 0.0
    %4680 = vmatpush1.msra.mxu0 0.0
    %4681 = vmatprep.subr.mxu0 0.0
    %4682 = vmatpush1.msra.mxu0 0.0
    %4683 = vmatprep.subr.mxu0 0.0
    %4684 = vmatpush1.msra.mxu0 0.0
    %4685 = vmatprep.subr.mxu0 0.0
    %4686 = vmatpush1.msra.mxu0 0.0
    %4687 = vmatprep.subr.mxu0 0.0
    %4688 = vmatpush1.msra.mxu0 0.0
    %4689 = vmatprep.subr.mxu0 0.0
    %4690 = vmatpush1.msra.mxu0 0.0
    %4691 = vmatprep.mubr.f32.mxu0 0.0
    %4692 = vmatmul.mubr.f32.gmra.mrb[0].mxu0 %v4616
    %v4693 = vpop.f32.mrb[0].mxu0
    %v4694 = vadd.f32 0.0, %v4693
    %v4695 = vpop.f32.mrb[0].mxu0
    %v4696 = vadd.f32 0.0, %v4695
    %4697 = vmatprep.mubr.f32.mxu0 0.0
    %4698 = vmatmul.mubr.f32.gmra.mrb[0].mxu0 %v4619
    %v4699 = vpop.f32.mrb[0].mxu0
    %v4700 = vadd.f32 0.0, %v4699
    %v4701 = vpop.f32.mrb[0].mxu0
    %v4702 = vadd.f32 0.0, %v4701
    %4703 = vmatprep.mubr.f32.mxu0 0.0
    %4704 = vmatmul.mubr.f32.gmra.mrb[0].mxu0 %v4622
    %v4705 = vpop.f32.mrb[0].mxu0
    %v4706 = vadd.f32 0.0, %v4705
    %v4707 = vpop.f32.mrb[0].mxu0
    %v4708 = vadd.f32 0.0, %v4707
    %4709 = vmatprep.mubr.f32.mxu0 0.0
    %4710 = vmatmul.mubr.f32.gmra.mrb[0].mxu0 %v4625
    %v4711 = vpop.f32.mrb[0].mxu0
    %v4712 = vadd.f32 0.0, %v4711
    %v4713 = vpop.f32.mrb[0].mxu0
    %v4714 = vadd.f32 0.0, %v4713
    %4715 = vdwg.mxu0
    %v4716 = vadd.f32 %v4337, %v4694
    %v4717 = vadd.f32 %v4338, %v4696
    %v4718 = vadd.f32 %v4339, %v4700
    %v4719 = vadd.f32 %v4340, %v4702
    %v4720 = vadd.f32 %v4341, %v4706
    %v4721 = vadd.f32 %v4342, %v4708
    %v4722 = vadd.f32 %v4343, %v4712
    %v4723 = vadd.f32 %v4344, %v4714
    %v4724 = vadd.f32 %v4716, %v4718
    %v4725 = vadd.f32 %v4724, %v4720
    %v4726 = vadd.f32 %v4725, %v4722
    %v4727 = vrot.slane %v4726, 4
    %v4728 = vadd.f32 %v4726, %v4727
    %v4729 = vrot.slane %v4728, 2
    %v4730 = vadd.f32 %v4728, %v4729
    %v4731 = vrot.slane %v4730, 1
    %v4732 = vadd.f32 %v4730, %v4731
    %v4733 = vadd.f32 %v4717, %v4719
    %v4734 = vadd.f32 %v4733, %v4721
    %v4735 = vadd.f32 %v4734, %v4723
    %v4736 = vrot.slane %v4735, 4
    %v4737 = vadd.f32 %v4735, %v4736
    %v4738 = vrot.slane %v4737, 2
    %v4739 = vadd.f32 %v4737, %v4738
    %v4740 = vrot.slane %v4739, 1
    %v4741 = vadd.f32 %v4739, %v4740
    %v4742 = vmul.f32 %v4716, %v4716
    %v4743 = vmul.f32 %v4717, %v4717
    %v4744 = vmul.f32 %v4718, %v4718
    %v4745 = vmul.f32 %v4719, %v4719
    %v4746 = vmul.f32 %v4720, %v4720
    %v4747 = vmul.f32 %v4721, %v4721
    %v4748 = vmul.f32 %v4722, %v4722
    %v4749 = vmul.f32 %v4723, %v4723
    %v4750 = vadd.f32 %v4742, %v4744
    %v4751 = vadd.f32 %v4750, %v4746
    %v4752 = vadd.f32 %v4751, %v4748
    %v4753 = vrot.slane %v4752, 4
    %v4754 = vadd.f32 %v4752, %v4753
    %v4755 = vrot.slane %v4754, 2
    %v4756 = vadd.f32 %v4754, %v4755
    %v4757 = vrot.slane %v4756, 1
    %v4758 = vadd.f32 %v4756, %v4757
    %v4759 = vadd.f32 %v4743, %v4745
    %v4760 = vadd.f32 %v4759, %v4747
    %v4761 = vadd.f32 %v4760, %v4749
    %v4762 = vrot.slane %v4761, 4
    %v4763 = vadd.f32 %v4761, %v4762
    %v4764 = vrot.slane %v4763, 2
    %v4765 = vadd.f32 %v4763, %v4764
    %v4766 = vrot.slane %v4765, 1
    %v4767 = vadd.f32 %v4765, %v4766
    %v4768 = vld [vmem:[#allocation9] sm:$0xff]
    %v4769 = vld [vmem:[#allocation9 + $0x8] sm:$0xff]
    %v4770 = vld [vmem:[#allocation9 + $0x10] sm:$0xff]
    %v4771 = vld [vmem:[#allocation9 + $0x18] sm:$0xff]
    %v4772 = vld [vmem:[#allocation9 + $0x20] sm:$0xff]
    %v4773 = vld [vmem:[#allocation9 + $0x28] sm:$0xff]
    %v4774 = vld [vmem:[#allocation9 + $0x30] sm:$0xff]
    %v4775 = vld [vmem:[#allocation9 + $0x38] sm:$0xff]
    %v4776 = vld [vmem:[#allocation9 + $0x40] sm:$0xff]
    %v4777 = vld [vmem:[#allocation9 + $0x48] sm:$0xff]
    %v4778 = vld [vmem:[#allocation9 + $0x50] sm:$0xff]
    %v4779 = vld [vmem:[#allocation9 + $0x58] sm:$0xff]
    %v4780 = vld [vmem:[#allocation9 + $0x60] sm:$0xff]
    %v4781 = vld [vmem:[#allocation9 + $0x68] sm:$0xff]
    %v4782 = vld [vmem:[#allocation9 + $0x70] sm:$0xff]
    %v4783 = vld [vmem:[#allocation9 + $0x78] sm:$0xff]
    %v4784 = vld [vmem:[#allocation9 + $0x80] sm:$0xff]
    %v4785 = vld [vmem:[#allocation9 + $0x88] sm:$0xff]
    %v4786 = vld [vmem:[#allocation9 + $0x90] sm:$0xff]
    %v4787 = vld [vmem:[#allocation9 + $0x98] sm:$0xff]
    %v4788 = vld [vmem:[#allocation9 + $0xa0] sm:$0xff]
    %v4789 = vld [vmem:[#allocation9 + $0xa8] sm:$0xff]
    %v4790 = vld [vmem:[#allocation9 + $0xb0] sm:$0xff]
    %v4791 = vld [vmem:[#allocation9 + $0xb8] sm:$0xff]
    %v4792 = vld [vmem:[#allocation9 + $0xc0] sm:$0xff]
    %v4793 = vld [vmem:[#allocation9 + $0xc8] sm:$0xff]
    %v4794 = vld [vmem:[#allocation9 + $0xd0] sm:$0xff]
    %v4795 = vld [vmem:[#allocation9 + $0xd8] sm:$0xff]
    %v4796 = vld [vmem:[#allocation9 + $0xe0] sm:$0xff]
    %v4797 = vld [vmem:[#allocation9 + $0xe8] sm:$0xff]
    %v4798 = vld [vmem:[#allocation9 + $0xf0] sm:$0xff]
    %v4799 = vld [vmem:[#allocation9 + $0xf8] sm:$0xff]
    %4800 = vmatprep.subr.mxu0 0.0
    %4801 = vmatpush1.msra.mxu0 %v4768
    %4802 = vmatprep.subr.mxu0 0.0
    %4803 = vmatpush1.msra.mxu0 %v4769
    %4804 = vmatprep.subr.mxu0 0.0
    %4805 = vmatpush1.msra.mxu0 %v4770
    %4806 = vmatprep.subr.mxu0 0.0
    %4807 = vmatpush1.msra.mxu0 %v4771
    %4808 = vmatprep.subr.mxu0 0.0
    %4809 = vmatpush1.msra.mxu0 %v4772
    %4810 = vmatprep.subr.mxu0 0.0
    %4811 = vmatpush1.msra.mxu0 %v4773
    %4812 = vmatprep.subr.mxu0 0.0
    %4813 = vmatpush1.msra.mxu0 %v4774
    %4814 = vmatprep.subr.mxu0 0.0
    %4815 = vmatpush1.msra.mxu0 %v4775
    %4816 = vmatprep.subr.mxu0 0.0
    %4817 = vmatpush1.msra.mxu0 %v4776
    %4818 = vmatprep.subr.mxu0 0.0
    %4819 = vmatpush1.msra.mxu0 %v4777
    %4820 = vmatprep.subr.mxu0 0.0
    %4821 = vmatpush1.msra.mxu0 %v4778
    %4822 = vmatprep.subr.mxu0 0.0
    %4823 = vmatpush1.msra.mxu0 %v4779
    %4824 = vmatprep.subr.mxu0 0.0
    %4825 = vmatpush1.msra.mxu0 %v4780
    %4826 = vmatprep.subr.mxu0 0.0
    %4827 = vmatpush1.msra.mxu0 %v4781
    %4828 = vmatprep.subr.mxu0 0.0
    %4829 = vmatpush1.msra.mxu0 %v4782
    %4830 = vmatprep.subr.mxu0 0.0
    %4831 = vmatpush1.msra.mxu0 %v4783
    %4832 = vmatprep.subr.mxu0 0.0
    %4833 = vmatpush1.msra.mxu0 %v4784
    %4834 = vmatprep.subr.mxu0 0.0
    %4835 = vmatpush1.msra.mxu0 %v4785
    %4836 = vmatprep.subr.mxu0 0.0
    %4837 = vmatpush1.msra.mxu0 %v4786
    %4838 = vmatprep.subr.mxu0 0.0
    %4839 = vmatpush1.msra.mxu0 %v4787
    %4840 = vmatprep.subr.mxu0 0.0
    %4841 = vmatpush1.msra.mxu0 %v4788
    %4842 = vmatprep.subr.mxu0 0.0
    %4843 = vmatpush1.msra.mxu0 %v4789
    %4844 = vmatprep.subr.mxu0 0.0
    %4845 = vmatpush1.msra.mxu0 %v4790
    %4846 = vmatprep.subr.mxu0 0.0
    %4847 = vmatpush1.msra.mxu0 %v4791
    %4848 = vmatprep.subr.mxu0 0.0
    %4849 = vmatpush1.msra.mxu0 %v4792
    %4850 = vmatprep.subr.mxu0 0.0
    %4851 = vmatpush1.msra.mxu0 %v4793
    %4852 = vmatprep.subr.mxu0 0.0
    %4853 = vmatpush1.msra.mxu0 %v4794
    %4854 = vmatprep.subr.mxu0 0.0
    %4855 = vmatpush1.msra.mxu0 %v4795
    %4856 = vmatprep.subr.mxu0 0.0
    %4857 = vmatpush1.msra.mxu0 %v4796
    %4858 = vmatprep.subr.mxu0 0.0
    %4859 = vmatpush1.msra.mxu0 %v4797
    %4860 = vmatprep.subr.mxu0 0.0
    %4861 = vmatpush1.msra.mxu0 %v4798
    %4862 = vmatprep.subr.mxu0 0.0
    %4863 = vmatpush1.msra.mxu0 %v4799
    %4864 = vmatprep.mubr.f32.mxu0 %v4741
    %4865 = vmatmul.mubr.f32.gmra.mrb[0].mxu0 %v4732
    %v4866 = vpop.f32.mrb[0].mxu0
    %v4867 = vadd.f32 0.0, %v4866
    %v4868 = vpop.f32.mrb[0].mxu0
    %4869 = vdwg.mxu0
    %4870 = vmatprep.subr.mxu0 0.0
    %4871 = vmatpush1.msra.mxu0 %v4768
    %4872 = vmatprep.subr.mxu0 0.0
    %4873 = vmatpush1.msra.mxu0 %v4769
    %4874 = vmatprep.subr.mxu0 0.0
    %4875 = vmatpush1.msra.mxu0 %v4770
    %4876 = vmatprep.subr.mxu0 0.0
    %4877 = vmatpush1.msra.mxu0 %v4771
    %4878 = vmatprep.subr.mxu0 0.0
    %4879 = vmatpush1.msra.mxu0 %v4772
    %4880 = vmatprep.subr.mxu0 0.0
    %4881 = vmatpush1.msra.mxu0 %v4773
    %4882 = vmatprep.subr.mxu0 0.0
    %4883 = vmatpush1.msra.mxu0 %v4774
    %4884 = vmatprep.subr.mxu0 0.0
    %4885 = vmatpush1.msra.mxu0 %v4775
    %4886 = vmatprep.subr.mxu0 0.0
    %4887 = vmatpush1.msra.mxu0 %v4776
    %4888 = vmatprep.subr.mxu0 0.0
    %4889 = vmatpush1.msra.mxu0 %v4777
    %4890 = vmatprep.subr.mxu0 0.0
    %4891 = vmatpush1.msra.mxu0 %v4778
    %4892 = vmatprep.subr.mxu0 0.0
    %4893 = vmatpush1.msra.mxu0 %v4779
    %4894 = vmatprep.subr.mxu0 0.0
    %4895 = vmatpush1.msra.mxu0 %v4780
    %4896 = vmatprep.subr.mxu0 0.0
    %4897 = vmatpush1.msra.mxu0 %v4781
    %4898 = vmatprep.subr.mxu0 0.0
    %4899 = vmatpush1.msra.mxu0 %v4782
    %4900 = vmatprep.subr.mxu0 0.0
    %4901 = vmatpush1.msra.mxu0 %v4783
    %4902 = vmatprep.subr.mxu0 0.0
    %4903 = vmatpush1.msra.mxu0 %v4784
    %4904 = vmatprep.subr.mxu0 0.0
    %4905 = vmatpush1.msra.mxu0 %v4785
    %4906 = vmatprep.subr.mxu0 0.0
    %4907 = vmatpush1.msra.mxu0 %v4786
    %4908 = vmatprep.subr.mxu0 0.0
    %4909 = vmatpush1.msra.mxu0 %v4787
    %4910 = vmatprep.subr.mxu0 0.0
    %4911 = vmatpush1.msra.mxu0 %v4788
    %4912 = vmatprep.subr.mxu0 0.0
    %4913 = vmatpush1.msra.mxu0 %v4789
    %4914 = vmatprep.subr.mxu0 0.0
    %4915 = vmatpush1.msra.mxu0 %v4790
    %4916 = vmatprep.subr.mxu0 0.0
    %4917 = vmatpush1.msra.mxu0 %v4791
    %4918 = vmatprep.subr.mxu0 0.0
    %4919 = vmatpush1.msra.mxu0 %v4792
    %4920 = vmatprep.subr.mxu0 0.0
    %4921 = vmatpush1.msra.mxu0 %v4793
    %4922 = vmatprep.subr.mxu0 0.0
    %4923 = vmatpush1.msra.mxu0 %v4794
    %4924 = vmatprep.subr.mxu0 0.0
    %4925 = vmatpush1.msra.mxu0 %v4795
    %4926 = vmatprep.subr.mxu0 0.0
    %4927 = vmatpush1.msra.mxu0 %v4796
    %4928 = vmatprep.subr.mxu0 0.0
    %4929 = vmatpush1.msra.mxu0 %v4797
    %4930 = vmatprep.subr.mxu0 0.0
    %4931 = vmatpush1.msra.mxu0 %v4798
    %4932 = vmatprep.subr.mxu0 0.0
    %4933 = vmatpush1.msra.mxu0 %v4799
    %4934 = vmatprep.mubr.f32.mxu0 %v4767
    %4935 = vmatmul.mubr.f32.gmra.mrb[0].mxu0 %v4758
    %v4936 = vpop.f32.mrb[0].mxu0
    %v4937 = vadd.f32 0.0, %v4936
    %v4938 = vpop.f32.mrb[0].mxu0
    %4939 = vdwg.mxu0
    %v4940 = vmul.f32 %v4867, 0.001953125
    %v4941 = vmul.f32 %v4937, 0.001953125
    %v4942 = vmul.f32 %v4940, %v4940
    %v4943 = vsub.f32 %v4941, %v4942
    %v4944 = vmax.f32 %v4943, 0.0
    %v4945 = vld [vmem:[%s11] sm:$0x1]
    %v4946 = vadd.f32 %v4944, 1e-05
    %v4947 = vrsqrt.pop %v4946
    %v4948 = vmul.f32 %v4945, %v4947
    %v4949 = vld [vmem:[%s12] sm:$0x1]
    %v4950 = vmul.f32 %v4940, %v4948
    %v4951 = vsub.f32 %v4949, %v4950
    %v4952 = vld [vmem:[#allocation10] sm:$0xff]
    %v4953 = vld [vmem:[#allocation10 + $0x8] sm:$0xff]
    %v4954 = vld [vmem:[#allocation10 + $0x10] sm:$0xff]
    %v4955 = vld [vmem:[#allocation10 + $0x18] sm:$0xff]
    %v4956 = vld [vmem:[#allocation10 + $0x20] sm:$0xff]
    %v4957 = vld [vmem:[#allocation10 + $0x28] sm:$0xff]
    %v4958 = vld [vmem:[#allocation10 + $0x30] sm:$0xff]
    %v4959 = vld [vmem:[#allocation10 + $0x38] sm:$0xff]
    %v4960 = vld [vmem:[#allocation10 + $0x40] sm:$0xff]
    %v4961 = vld [vmem:[#allocation10 + $0x48] sm:$0xff]
    %v4962 = vld [vmem:[#allocation10 + $0x50] sm:$0xff]
    %v4963 = vld [vmem:[#allocation10 + $0x58] sm:$0xff]
    %v4964 = vld [vmem:[#allocation10 + $0x60] sm:$0xff]
    %v4965 = vld [vmem:[#allocation10 + $0x68] sm:$0xff]
    %v4966 = vld [vmem:[#allocation10 + $0x70] sm:$0xff]
    %v4967 = vld [vmem:[#allocation10 + $0x78] sm:$0xff]
    %v4968 = vld [vmem:[#allocation10 + $0x80] sm:$0xff]
    %v4969 = vld [vmem:[#allocation10 + $0x88] sm:$0xff]
    %v4970 = vld [vmem:[#allocation10 + $0x90] sm:$0xff]
    %v4971 = vld [vmem:[#allocation10 + $0x98] sm:$0xff]
    %v4972 = vld [vmem:[#allocation10 + $0xa0] sm:$0xff]
    %v4973 = vld [vmem:[#allocation10 + $0xa8] sm:$0xff]
    %v4974 = vld [vmem:[#allocation10 + $0xb0] sm:$0xff]
    %v4975 = vld [vmem:[#allocation10 + $0xb8] sm:$0xff]
    %v4976 = vld [vmem:[#allocation10 + $0xc0] sm:$0xff]
    %v4977 = vld [vmem:[#allocation10 + $0xc8] sm:$0xff]
    %v4978 = vld [vmem:[#allocation10 + $0xd0] sm:$0xff]
    %v4979 = vld [vmem:[#allocation10 + $0xd8] sm:$0xff]
    %v4980 = vld [vmem:[#allocation10 + $0xe0] sm:$0xff]
    %v4981 = vld [vmem:[#allocation10 + $0xe8] sm:$0xff]
    %v4982 = vld [vmem:[#allocation10 + $0xf0] sm:$0xff]
    %v4983 = vld [vmem:[#allocation10 + $0xf8] sm:$0xff]
    %4984 = vmatprep.subr.mxu0 %v4953
    %4985 = vmatpush1.msra.mxu0 %v4952
    %4986 = vmatprep.subr.mxu0 %v4955
    %4987 = vmatpush1.msra.mxu0 %v4954
    %4988 = vmatprep.subr.mxu0 %v4957
    %4989 = vmatpush1.msra.mxu0 %v4956
    %4990 = vmatprep.subr.mxu0 %v4959
    %4991 = vmatpush1.msra.mxu0 %v4958
    %4992 = vmatprep.subr.mxu0 %v4961
    %4993 = vmatpush1.msra.mxu0 %v4960
    %4994 = vmatprep.subr.mxu0 %v4963
    %4995 = vmatpush1.msra.mxu0 %v4962
    %4996 = vmatprep.subr.mxu0 %v4965
    %4997 = vmatpush1.msra.mxu0 %v4964
    %4998 = vmatprep.subr.mxu0 %v4967
    %4999 = vmatpush1.msra.mxu0 %v4966
    %5000 = vmatprep.subr.mxu0 %v4969
    %5001 = vmatpush1.msra.mxu0 %v4968
    %5002 = vmatprep.subr.mxu0 %v4971
    %5003 = vmatpush1.msra.mxu0 %v4970
    %5004 = vmatprep.subr.mxu0 %v4973
    %5005 = vmatpush1.msra.mxu0 %v4972
    %5006 = vmatprep.subr.mxu0 %v4975
    %5007 = vmatpush1.msra.mxu0 %v4974
    %5008 = vmatprep.subr.mxu0 %v4977
    %5009 = vmatpush1.msra.mxu0 %v4976
    %5010 = vmatprep.subr.mxu0 %v4979
    %5011 = vmatpush1.msra.mxu0 %v4978
    %5012 = vmatprep.subr.mxu0 %v4981
    %5013 = vmatpush1.msra.mxu0 %v4980
    %5014 = vmatprep.subr.mxu0 %v4983
    %5015 = vmatpush1.msra.mxu0 %v4982
    %5016 = vmatprep.subr.mxu0 0.0
    %5017 = vmatpush1.msra.mxu0 0.0
    %5018 = vmatprep.subr.mxu0 0.0
    %5019 = vmatpush1.msra.mxu0 0.0
    %5020 = vmatprep.subr.mxu0 0.0
    %5021 = vmatpush1.msra.mxu0 0.0
    %5022 = vmatprep.subr.mxu0 0.0
    %5023 = vmatpush1.msra.mxu0 0.0
    %5024 = vmatprep.subr.mxu0 0.0
    %5025 = vmatpush1.msra.mxu0 0.0
    %5026 = vmatprep.subr.mxu0 0.0
    %5027 = vmatpush1.msra.mxu0 0.0
    %5028 = vmatprep.subr.mxu0 0.0
    %5029 = vmatpush1.msra.mxu0 0.0
    %5030 = vmatprep.subr.mxu0 0.0
    %5031 = vmatpush1.msra.mxu0 0.0
    %5032 = vmatprep.subr.mxu0 0.0
    %5033 = vmatpush1.msra.mxu0 0.0
    %5034 = vmatprep.subr.mxu0 0.0
    %5035 = vmatpush1.msra.mxu0 0.0
    %5036 = vmatprep.subr.mxu0 0.0
    %5037 = vmatpush1.msra.mxu0 0.0
    %5038 = vmatprep.subr.mxu0 0.0
    %5039 = vmatpush1.msra.mxu0 0.0
    %5040 = vmatprep.subr.mxu0 0.0
    %5041 = vmatpush1.msra.mxu0 0.0
    %5042 = vmatprep.subr.mxu0 0.0
    %5043 = vmatpush1.msra.mxu0 0.0
    %5044 = vmatprep.subr.mxu0 0.0
    %5045 = vmatpush1.msra.mxu0 0.0
    %5046 = vmatprep.subr.mxu0 0.0
    %5047 = vmatpush1.msra.mxu0 0.0
    %5048 = vmatprep.mubr.f32.mxu0 0.0
    %5049 = vmatmul.mubr.f32.gmra.mrb[0].mxu0 %v4948
    %v5050 = vpop.f32.mrb[0].mxu0
    %v5051 = vadd.f32 0.0, %v5050
    %v5052 = vpop.f32.mrb[0].mxu0
    %v5053 = vadd.f32 0.0, %v5052
    %5054 = vdwg.mxu0
    %5055 = vmatprep.subr.mxu0 %v4953
    %5056 = vmatpush1.msra.mxu0 %v4952
    %5057 = vmatprep.subr.mxu0 %v4955
    %5058 = vmatpush1.msra.mxu0 %v4954
    %5059 = vmatprep.subr.mxu0 %v4957
    %5060 = vmatpush1.msra.mxu0 %v4956
    %5061 = vmatprep.subr.mxu0 %v4959
    %5062 = vmatpush1.msra.mxu0 %v4958
    %5063 = vmatprep.subr.mxu0 %v4961
    %5064 = vmatpush1.msra.mxu0 %v4960
    %5065 = vmatprep.subr.mxu0 %v4963
    %5066 = vmatpush1.msra.mxu0 %v4962
    %5067 = vmatprep.subr.mxu0 %v4965
    %5068 = vmatpush1.msra.mxu0 %v4964
    %5069 = vmatprep.subr.mxu0 %v4967
    %5070 = vmatpush1.msra.mxu0 %v4966
    %5071 = vmatprep.subr.mxu0 %v4969
    %5072 = vmatpush1.msra.mxu0 %v4968
    %5073 = vmatprep.subr.mxu0 %v4971
    %5074 = vmatpush1.msra.mxu0 %v4970
    %5075 = vmatprep.subr.mxu0 %v4973
    %5076 = vmatpush1.msra.mxu0 %v4972
    %5077 = vmatprep.subr.mxu0 %v4975
    %5078 = vmatpush1.msra.mxu0 %v4974
    %5079 = vmatprep.subr.mxu0 %v4977
    %5080 = vmatpush1.msra.mxu0 %v4976
    %5081 = vmatprep.subr.mxu0 %v4979
    %5082 = vmatpush1.msra.mxu0 %v4978
    %5083 = vmatprep.subr.mxu0 %v4981
    %5084 = vmatpush1.msra.mxu0 %v4980
    %5085 = vmatprep.subr.mxu0 %v4983
    %5086 = vmatpush1.msra.mxu0 %v4982
    %5087 = vmatprep.subr.mxu0 0.0
    %5088 = vmatpush1.msra.mxu0 0.0
    %5089 = vmatprep.subr.mxu0 0.0
    %5090 = vmatpush1.msra.mxu0 0.0
    %5091 = vmatprep.subr.mxu0 0.0
    %5092 = vmatpush1.msra.mxu0 0.0
    %5093 = vmatprep.subr.mxu0 0.0
    %5094 = vmatpush1.msra.mxu0 0.0
    %5095 = vmatprep.subr.mxu0 0.0
    %5096 = vmatpush1.msra.mxu0 0.0
    %5097 = vmatprep.subr.mxu0 0.0
    %5098 = vmatpush1.msra.mxu0 0.0
    %5099 = vmatprep.subr.mxu0 0.0
    %5100 = vmatpush1.msra.mxu0 0.0
    %5101 = vmatprep.subr.mxu0 0.0
    %5102 = vmatpush1.msra.mxu0 0.0
    %5103 = vmatprep.subr.mxu0 0.0
    %5104 = vmatpush1.msra.mxu0 0.0
    %5105 = vmatprep.subr.mxu0 0.0
    %5106 = vmatpush1.msra.mxu0 0.0
    %5107 = vmatprep.subr.mxu0 0.0
    %5108 = vmatpush1.msra.mxu0 0.0
    %5109 = vmatprep.subr.mxu0 0.0
    %5110 = vmatpush1.msra.mxu0 0.0
    %5111 = vmatprep.subr.mxu0 0.0
    %5112 = vmatpush1.msra.mxu0 0.0
    %5113 = vmatprep.subr.mxu0 0.0
    %5114 = vmatpush1.msra.mxu0 0.0
    %5115 = vmatprep.subr.mxu0 0.0
    %5116 = vmatpush1.msra.mxu0 0.0
    %5117 = vmatprep.subr.mxu0 0.0
    %5118 = vmatpush1.msra.mxu0 0.0
    %5119 = vmatprep.mubr.f32.mxu0 0.0
    %5120 = vmatmul.mubr.f32.gmra.mrb[0].mxu0 %v4951
    %v5121 = vpop.f32.mrb[0].mxu0
    %v5122 = vadd.f32 0.0, %v5121
    %v5123 = vpop.f32.mrb[0].mxu0
    %v5124 = vadd.f32 0.0, %v5123
    %5125 = vdwg.mxu0
    %v5126 = vlaneseq
    %v5127 = vshrl.u32 %v5126, 7
    %v5128 = vsub.s32 0, %v5127
    %v5129 = vrot.slane %v5051, %v5128
    %v5130 = vlaneseq
    %v5131 = vshrl.u32 %v5130, 7
    %v5132 = vsub.s32 0, %v5131
    %v5133 = vrot.slane %v5053, %v5132
    %v5134 = vmul.f32 %v4716, %v5129
    %v5135 = vmul.f32 %v4717, %v5133
    %v5136 = vmul.f32 %v4718, %v5129
    %v5137 = vmul.f32 %v4719, %v5133
    %v5138 = vmul.f32 %v4720, %v5129
    %v5139 = vmul.f32 %v4721, %v5133
    %v5140 = vmul.f32 %v4722, %v5129
    %v5141 = vmul.f32 %v4723, %v5133
    %v5142 = vlaneseq
    %v5143 = vshrl.u32 %v5142, 7
    %v5144 = vsub.s32 0, %v5143
    %v5145 = vrot.slane %v5122, %v5144
    %v5146 = vlaneseq
    %v5147 = vshrl.u32 %v5146, 7
    %v5148 = vsub.s32 0, %v5147
    %v5149 = vrot.slane %v5124, %v5148
    %v5150 = vadd.f32 %v5134, %v5145
    %v5151 = vadd.f32 %v5135, %v5149
    %v5152 = vadd.f32 %v5136, %v5145
    %v5153 = vadd.f32 %v5137, %v5149
    %v5154 = vadd.f32 %v5138, %v5145
    %v5155 = vadd.f32 %v5139, %v5149
    %v5156 = vadd.f32 %v5140, %v5145
    %v5157 = vadd.f32 %v5141, %v5149
    %v5158 = vmax.f32 %v5150, 0.0
    %v5159 = vmax.f32 %v5151, 0.0
    %v5160 = vmax.f32 %v5152, 0.0
    %v5161 = vmax.f32 %v5153, 0.0
    %v5162 = vmax.f32 %v5154, 0.0
    %v5163 = vmax.f32 %v5155, 0.0
    %v5164 = vmax.f32 %v5156, 0.0
    %v5165 = vmax.f32 %v5157, 0.0
    %v5166 = vpack.c.bf16 %v5160, %v5158
    %v5167 = vpack.c.bf16 %v5161, %v5159
    %v5168 = vpack.c.bf16 %v5164, %v5162
    %v5169 = vpack.c.bf16 %v5165, %v5163
    %v5170 = vld [vmem:[#allocation12] sm:$0xff]
    %v5171 = vld [vmem:[#allocation12 + $0x28] sm:$0xff]
    %v5172 = vld [vmem:[#allocation12 + $0x50] sm:$0xff]
    %v5173 = vld [vmem:[#allocation12 + $0x78] sm:$0xff]
    %v5174 = vld [vmem:[#allocation12 + $0xa0] sm:$0xff]
    %v5175 = vld [vmem:[#allocation12 + $0xc8] sm:$0xff]
    %v5176 = vld [vmem:[#allocation12 + $0xf0] sm:$0xff]
    %v5177 = vld [vmem:[#allocation12 + $0x118] sm:$0xff]
    %v5178 = vld [vmem:[#allocation12 + $0x140] sm:$0xff]
    %v5179 = vld [vmem:[#allocation12 + $0x168] sm:$0xff]
    %v5180 = vld [vmem:[#allocation12 + $0x190] sm:$0xff]
    %v5181 = vld [vmem:[#allocation12 + $0x1b8] sm:$0xff]
    %v5182 = vld [vmem:[#allocation12 + $0x1e0] sm:$0xff]
    %v5183 = vld [vmem:[#allocation12 + $0x208] sm:$0xff]
    %v5184 = vld [vmem:[#allocation12 + $0x230] sm:$0xff]
    %v5185 = vld [vmem:[#allocation12 + $0x258] sm:$0xff]
    %v5186 = vld [vmem:[#allocation12 + $0x280] sm:$0xff]
    %v5187 = vld [vmem:[#allocation12 + $0x2a8] sm:$0xff]
    %v5188 = vld [vmem:[#allocation12 + $0x2d0] sm:$0xff]
    %v5189 = vld [vmem:[#allocation12 + $0x2f8] sm:$0xff]
    %v5190 = vld [vmem:[#allocation12 + $0x320] sm:$0xff]
    %v5191 = vld [vmem:[#allocation12 + $0x348] sm:$0xff]
    %v5192 = vld [vmem:[#allocation12 + $0x370] sm:$0xff]
    %v5193 = vld [vmem:[#allocation12 + $0x398] sm:$0xff]
    %v5194 = vld [vmem:[#allocation12 + $0x3c0] sm:$0xff]
    %v5195 = vld [vmem:[#allocation12 + $0x3e8] sm:$0xff]
    %v5196 = vld [vmem:[#allocation12 + $0x410] sm:$0xff]
    %v5197 = vld [vmem:[#allocation12 + $0x438] sm:$0xff]
    %v5198 = vld [vmem:[#allocation12 + $0x460] sm:$0xff]
    %v5199 = vld [vmem:[#allocation12 + $0x488] sm:$0xff]
    %v5200 = vld [vmem:[#allocation12 + $0x4b0] sm:$0xff]
    %v5201 = vld [vmem:[#allocation12 + $0x4d8] sm:$0xff]
    %v5234 = vunpack.c.l.b16 %v5170
    %v5235 = vunpack.c.h.b16 %v5170
    %v5236 = vunpack.c.l.b16 %v5171
    %v5237 = vunpack.c.h.b16 %v5171
    %v5238 = vunpack.c.l.b16 %v5172
    %v5239 = vunpack.c.h.b16 %v5172
    %v5240 = vunpack.c.l.b16 %v5173
    %v5241 = vunpack.c.h.b16 %v5173
    %v5242 = vunpack.c.l.b16 %v5174
    %v5243 = vunpack.c.h.b16 %v5174
    %v5244 = vunpack.c.l.b16 %v5175
    %v5245 = vunpack.c.h.b16 %v5175
    %v5246 = vunpack.c.l.b16 %v5176
    %v5247 = vunpack.c.h.b16 %v5176
    %v5248 = vunpack.c.l.b16 %v5177
    %v5249 = vunpack.c.h.b16 %v5177
    %v5250 = vunpack.c.l.b16 %v5178
    %v5251 = vunpack.c.h.b16 %v5178
    %v5252 = vunpack.c.l.b16 %v5179
    %v5253 = vunpack.c.h.b16 %v5179
    %v5254 = vunpack.c.l.b16 %v5180
    %v5255 = vunpack.c.h.b16 %v5180
    %v5256 = vunpack.c.l.b16 %v5181
    %v5257 = vunpack.c.h.b16 %v5181
    %v5258 = vunpack.c.l.b16 %v5182
    %v5259 = vunpack.c.h.b16 %v5182
    %v5260 = vunpack.c.l.b16 %v5183
    %v5261 = vunpack.c.h.b16 %v5183
    %v5262 = vunpack.c.l.b16 %v5184
    %v5263 = vunpack.c.h.b16 %v5184
    %v5264 = vunpack.c.l.b16 %v5185
    %v5265 = vunpack.c.h.b16 %v5185
    %v5266 = vunpack.c.l.b16 %v5186
    %v5267 = vunpack.c.h.b16 %v5186
    %v5268 = vunpack.c.l.b16 %v5187
    %v5269 = vunpack.c.h.b16 %v5187
    %v5270 = vunpack.c.l.b16 %v5188
    %v5271 = vunpack.c.h.b16 %v5188
    %v5272 = vunpack.c.l.b16 %v5189
    %v5273 = vunpack.c.h.b16 %v5189
    %v5274 = vunpack.c.l.b16 %v5190
    %v5275 = vunpack.c.h.b16 %v5190
    %v5276 = vunpack.c.l.b16 %v5191
    %v5277 = vunpack.c.h.b16 %v5191
    %v5278 = vunpack.c.l.b16 %v5192
    %v5279 = vunpack.c.h.b16 %v5192
    %v5280 = vunpack.c.l.b16 %v5193
    %v5281 = vunpack.c.h.b16 %v5193
    %v5282 = vunpack.c.l.b16 %v5194
    %v5283 = vunpack.c.h.b16 %v5194
    %v5284 = vunpack.c.l.b16 %v5195
    %v5285 = vunpack.c.h.b16 %v5195
    %v5286 = vunpack.c.l.b16 %v5196
    %v5287 = vunpack.c.h.b16 %v5196
    %v5288 = vunpack.c.l.b16 %v5197
    %v5289 = vunpack.c.h.b16 %v5197
    %v5290 = vunpack.c.l.b16 %v5198
    %v5291 = vunpack.c.h.b16 %v5198
    %v5292 = vunpack.c.l.b16 %v5199
    %v5293 = vunpack.c.h.b16 %v5199
    %v5294 = vunpack.c.l.b16 %v5200
    %v5295 = vunpack.c.h.b16 %v5200
    %v5296 = vunpack.c.l.b16 %v5201
    %v5297 = vunpack.c.h.b16 %v5201
    %v5298 = vpack.c.b16 %v5236, %v5234
    %v5299 = vpack.c.b16 %v5237, %v5235
    %v5300 = vpack.c.b16 %v5240, %v5238
    %v5301 = vpack.c.b16 %v5241, %v5239
    %v5302 = vpack.c.b16 %v5244, %v5242
    %v5303 = vpack.c.b16 %v5245, %v5243
    %v5304 = vpack.c.b16 %v5248, %v5246
    %v5305 = vpack.c.b16 %v5249, %v5247
    %v5306 = vpack.c.b16 %v5252, %v5250
    %v5307 = vpack.c.b16 %v5253, %v5251
    %v5308 = vpack.c.b16 %v5256, %v5254
    %v5309 = vpack.c.b16 %v5257, %v5255
    %v5310 = vpack.c.b16 %v5260, %v5258
    %v5311 = vpack.c.b16 %v5261, %v5259
    %v5312 = vpack.c.b16 %v5264, %v5262
    %v5313 = vpack.c.b16 %v5265, %v5263
    %v5314 = vpack.c.b16 %v5268, %v5266
    %v5315 = vpack.c.b16 %v5269, %v5267
    %v5316 = vpack.c.b16 %v5272, %v5270
    %v5317 = vpack.c.b16 %v5273, %v5271
    %v5318 = vpack.c.b16 %v5276, %v5274
    %v5319 = vpack.c.b16 %v5277, %v5275
    %v5320 = vpack.c.b16 %v5280, %v5278
    %v5321 = vpack.c.b16 %v5281, %v5279
    %v5322 = vpack.c.b16 %v5284, %v5282
    %v5323 = vpack.c.b16 %v5285, %v5283
    %v5324 = vpack.c.b16 %v5288, %v5286
    %v5325 = vpack.c.b16 %v5289, %v5287
    %v5326 = vpack.c.b16 %v5292, %v5290
    %v5327 = vpack.c.b16 %v5293, %v5291
    %v5328 = vpack.c.b16 %v5296, %v5294
    %v5329 = vpack.c.b16 %v5297, %v5295
    %5362 = vmatprep.subr.bf16.mxu0 %v5299
    %5363 = vmatpush1.bf16.msra.mxu0 %v5298
    %5364 = vmatprep.subr.bf16.mxu0 %v5301
    %5365 = vmatpush1.bf16.msra.mxu0 %v5300
    %5366 = vmatprep.subr.bf16.mxu0 %v5303
    %5367 = vmatpush1.bf16.msra.mxu0 %v5302
    %5368 = vmatprep.subr.bf16.mxu0 %v5305
    %5369 = vmatpush1.bf16.msra.mxu0 %v5304
    %5370 = vmatprep.subr.bf16.mxu0 %v5307
    %5371 = vmatpush1.bf16.msra.mxu0 %v5306
    %5372 = vmatprep.subr.bf16.mxu0 %v5309
    %5373 = vmatpush1.bf16.msra.mxu0 %v5308
    %5374 = vmatprep.subr.bf16.mxu0 %v5311
    %5375 = vmatpush1.bf16.msra.mxu0 %v5310
    %5376 = vmatprep.subr.bf16.mxu0 %v5313
    %5377 = vmatpush1.bf16.msra.mxu0 %v5312
    %5378 = vmatprep.subr.bf16.mxu0 %v5315
    %5379 = vmatpush1.bf16.msra.mxu0 %v5314
    %5380 = vmatprep.subr.bf16.mxu0 %v5317
    %5381 = vmatpush1.bf16.msra.mxu0 %v5316
    %5382 = vmatprep.subr.bf16.mxu0 %v5319
    %5383 = vmatpush1.bf16.msra.mxu0 %v5318
    %5384 = vmatprep.subr.bf16.mxu0 %v5321
    %5385 = vmatpush1.bf16.msra.mxu0 %v5320
    %5386 = vmatprep.subr.bf16.mxu0 %v5323
    %5387 = vmatpush1.bf16.msra.mxu0 %v5322
    %5388 = vmatprep.subr.bf16.mxu0 %v5325
    %5389 = vmatpush1.bf16.msra.mxu0 %v5324
    %5390 = vmatprep.subr.bf16.mxu0 %v5327
    %5391 = vmatpush1.bf16.msra.mxu0 %v5326
    %5392 = vmatprep.subr.bf16.mxu0 %v5329
    %5393 = vmatpush1.bf16.msra.mxu0 %v5328
    %5394 = vmatprep.mubr.bf16.mxu0 %v5167
    %5395 = vmatmul.mubr.bf16.gmra.mrb[0].mxu0 %v5166
    %v5396 = vpop.f32.mrb[0].mxu0
    %v5397 = vadd.f32 0.0, %v5396
    %v5398 = vpop.f32.mrb[0].mxu0
    %v5399 = vadd.f32 0.0, %v5398
    %v5400 = vpop.f32.mrb[0].mxu0
    %v5401 = vadd.f32 0.0, %v5400
    %v5402 = vpop.f32.mrb[0].mxu0
    %v5403 = vadd.f32 0.0, %v5402
    %5404 = vmatprep.mubr.bf16.mxu0 %v5169
    %5405 = vmatmul.mubr.bf16.gmra.mrb[0].mxu0 %v5168
    %v5406 = vpop.f32.mrb[0].mxu0
    %v5407 = vadd.f32 0.0, %v5406
    %v5408 = vpop.f32.mrb[0].mxu0
    %v5409 = vadd.f32 0.0, %v5408
    %v5410 = vpop.f32.mrb[0].mxu0
    %v5411 = vadd.f32 0.0, %v5410
    %v5412 = vpop.f32.mrb[0].mxu0
    %v5413 = vadd.f32 0.0, %v5412
    %5414 = vdwg.mxu0
    %v5415 = vld [vmem:[#allocation13] sm:$0xff]
    %v5416 = vld [vmem:[#allocation13 + $0x8] sm:$0xff]
    %v5417 = vld [vmem:[#allocation12 + $0x8] sm:$0xff]
    %v5418 = vld [vmem:[#allocation12 + $0x30] sm:$0xff]
    %v5419 = vld [vmem:[#allocation12 + $0x58] sm:$0xff]
    %v5420 = vld [vmem:[#allocation12 + $0x80] sm:$0xff]
    %v5421 = vld [vmem:[#allocation12 + $0xa8] sm:$0xff]
    %v5422 = vld [vmem:[#allocation12 + $0xd0] sm:$0xff]
    %v5423 = vld [vmem:[#allocation12 + $0xf8] sm:$0xff]
    %v5424 = vld [vmem:[#allocation12 + $0x120] sm:$0xff]
    %v5425 = vld [vmem:[#allocation12 + $0x148] sm:$0xff]
    %v5426 = vld [vmem:[#allocation12 + $0x170] sm:$0xff]
    %v5427 = vld [vmem:[#allocation12 + $0x198] sm:$0xff]
    %v5428 = vld [vmem:[#allocation12 + $0x1c0] sm:$0xff]
    %v5429 = vld [vmem:[#allocation12 + $0x1e8] sm:$0xff]
    %v5430 = vld [vmem:[#allocation12 + $0x210] sm:$0xff]
    %v5431 = vld [vmem:[#allocation12 + $0x238] sm:$0xff]
    %v5432 = vld [vmem:[#allocation12 + $0x260] sm:$0xff]
    %v5433 = vld [vmem:[#allocation12 + $0x288] sm:$0xff]
    %v5434 = vld [vmem:[#allocation12 + $0x2b0] sm:$0xff]
    %v5435 = vld [vmem:[#allocation12 + $0x2d8] sm:$0xff]
    %v5436 = vld [vmem:[#allocation12 + $0x300] sm:$0xff]
    %v5437 = vld [vmem:[#allocation12 + $0x328] sm:$0xff]
    %v5438 = vld [vmem:[#allocation12 + $0x350] sm:$0xff]
    %v5439 = vld [vmem:[#allocation12 + $0x378] sm:$0xff]
    %v5440 = vld [vmem:[#allocation12 + $0x3a0] sm:$0xff]
    %v5441 = vld [vmem:[#allocation12 + $0x3c8] sm:$0xff]
    %v5442 = vld [vmem:[#allocation12 + $0x3f0] sm:$0xff]
    %v5443 = vld [vmem:[#allocation12 + $0x418] sm:$0xff]
    %v5444 = vld [vmem:[#allocation12 + $0x440] sm:$0xff]
    %v5445 = vld [vmem:[#allocation12 + $0x468] sm:$0xff]
    %v5446 = vld [vmem:[#allocation12 + $0x490] sm:$0xff]
    %v5447 = vld [vmem:[#allocation12 + $0x4b8] sm:$0xff]
    %v5448 = vld [vmem:[#allocation12 + $0x4e0] sm:$0xff]
    %v5481 = vunpack.c.l.b16 %v5417
    %v5482 = vunpack.c.h.b16 %v5417
    %v5483 = vunpack.c.l.b16 %v5418
    %v5484 = vunpack.c.h.b16 %v5418
    %v5485 = vunpack.c.l.b16 %v5419
    %v5486 = vunpack.c.h.b16 %v5419
    %v5487 = vunpack.c.l.b16 %v5420
    %v5488 = vunpack.c.h.b16 %v5420
    %v5489 = vunpack.c.l.b16 %v5421
    %v5490 = vunpack.c.h.b16 %v5421
    %v5491 = vunpack.c.l.b16 %v5422
    %v5492 = vunpack.c.h.b16 %v5422
    %v5493 = vunpack.c.l.b16 %v5423
    %v5494 = vunpack.c.h.b16 %v5423
    %v5495 = vunpack.c.l.b16 %v5424
    %v5496 = vunpack.c.h.b16 %v5424
    %v5497 = vunpack.c.l.b16 %v5425
    %v5498 = vunpack.c.h.b16 %v5425
    %v5499 = vunpack.c.l.b16 %v5426
    %v5500 = vunpack.c.h.b16 %v5426
    %v5501 = vunpack.c.l.b16 %v5427
    %v5502 = vunpack.c.h.b16 %v5427
    %v5503 = vunpack.c.l.b16 %v5428
    %v5504 = vunpack.c.h.b16 %v5428
    %v5505 = vunpack.c.l.b16 %v5429
    %v5506 = vunpack.c.h.b16 %v5429
    %v5507 = vunpack.c.l.b16 %v5430
    %v5508 = vunpack.c.h.b16 %v5430
    %v5509 = vunpack.c.l.b16 %v5431
    %v5510 = vunpack.c.h.b16 %v5431
    %v5511 = vunpack.c.l.b16 %v5432
    %v5512 = vunpack.c.h.b16 %v5432
    %v5513 = vunpack.c.l.b16 %v5433
    %v5514 = vunpack.c.h.b16 %v5433
    %v5515 = vunpack.c.l.b16 %v5434
    %v5516 = vunpack.c.h.b16 %v5434
    %v5517 = vunpack.c.l.b16 %v5435
    %v5518 = vunpack.c.h.b16 %v5435
    %v5519 = vunpack.c.l.b16 %v5436
    %v5520 = vunpack.c.h.b16 %v5436
    %v5521 = vunpack.c.l.b16 %v5437
    %v5522 = vunpack.c.h.b16 %v5437
    %v5523 = vunpack.c.l.b16 %v5438
    %v5524 = vunpack.c.h.b16 %v5438
    %v5525 = vunpack.c.l.b16 %v5439
    %v5526 = vunpack.c.h.b16 %v5439
    %v5527 = vunpack.c.l.b16 %v5440
    %v5528 = vunpack.c.h.b16 %v5440
    %v5529 = vunpack.c.l.b16 %v5441
    %v5530 = vunpack.c.h.b16 %v5441
    %v5531 = vunpack.c.l.b16 %v5442
    %v5532 = vunpack.c.h.b16 %v5442
    %v5533 = vunpack.c.l.b16 %v5443
    %v5534 = vunpack.c.h.b16 %v5443
    %v5535 = vunpack.c.l.b16 %v5444
    %v5536 = vunpack.c.h.b16 %v5444
    %v5537 = vunpack.c.l.b16 %v5445
    %v5538 = vunpack.c.h.b16 %v5445
    %v5539 = vunpack.c.l.b16 %v5446
    %v5540 = vunpack.c.h.b16 %v5446
    %v5541 = vunpack.c.l.b16 %v5447
    %v5542 = vunpack.c.h.b16 %v5447
    %v5543 = vunpack.c.l.b16 %v5448
    %v5544 = vunpack.c.h.b16 %v5448
    %v5545 = vpack.c.b16 %v5483, %v5481
    %v5546 = vpack.c.b16 %v5484, %v5482
    %v5547 = vpack.c.b16 %v5487, %v5485
    %v5548 = vpack.c.b16 %v5488, %v5486
    %v5549 = vpack.c.b16 %v5491, %v5489
    %v5550 = vpack.c.b16 %v5492, %v5490
    %v5551 = vpack.c.b16 %v5495, %v5493
    %v5552 = vpack.c.b16 %v5496, %v5494
    %v5553 = vpack.c.b16 %v5499, %v5497
    %v5554 = vpack.c.b16 %v5500, %v5498
    %v5555 = vpack.c.b16 %v5503, %v5501
    %v5556 = vpack.c.b16 %v5504, %v5502
    %v5557 = vpack.c.b16 %v5507, %v5505
    %v5558 = vpack.c.b16 %v5508, %v5506
    %v5559 = vpack.c.b16 %v5511, %v5509
    %v5560 = vpack.c.b16 %v5512, %v5510
    %v5561 = vpack.c.b16 %v5515, %v5513
    %v5562 = vpack.c.b16 %v5516, %v5514
    %v5563 = vpack.c.b16 %v5519, %v5517
    %v5564 = vpack.c.b16 %v5520, %v5518
    %v5565 = vpack.c.b16 %v5523, %v5521
    %v5566 = vpack.c.b16 %v5524, %v5522
    %v5567 = vpack.c.b16 %v5527, %v5525
    %v5568 = vpack.c.b16 %v5528, %v5526
    %v5569 = vpack.c.b16 %v5531, %v5529
    %v5570 = vpack.c.b16 %v5532, %v5530
    %v5571 = vpack.c.b16 %v5535, %v5533
    %v5572 = vpack.c.b16 %v5536, %v5534
    %v5573 = vpack.c.b16 %v5539, %v5537
    %v5574 = vpack.c.b16 %v5540, %v5538
    %v5575 = vpack.c.b16 %v5543, %v5541
    %v5576 = vpack.c.b16 %v5544, %v5542
    %5609 = vmatprep.subr.bf16.mxu0 %v5546
    %5610 = vmatpush1.bf16.msra.mxu0 %v5545
    %5611 = vmatprep.subr.bf16.mxu0 %v5548
    %5612 = vmatpush1.bf16.msra.mxu0 %v5547
    %5613 = vmatprep.subr.bf16.mxu0 %v5550
    %5614 = vmatpush1.bf16.msra.mxu0 %v5549
    %5615 = vmatprep.subr.bf16.mxu0 %v5552
    %5616 = vmatpush1.bf16.msra.mxu0 %v5551
    %5617 = vmatprep.subr.bf16.mxu0 %v5554
    %5618 = vmatpush1.bf16.msra.mxu0 %v5553
    %5619 = vmatprep.subr.bf16.mxu0 %v5556
    %5620 = vmatpush1.bf16.msra.mxu0 %v5555
    %5621 = vmatprep.subr.bf16.mxu0 %v5558
    %5622 = vmatpush1.bf16.msra.mxu0 %v5557
    %5623 = vmatprep.subr.bf16.mxu0 %v5560
    %5624 = vmatpush1.bf16.msra.mxu0 %v5559
    %5625 = vmatprep.subr.bf16.mxu0 %v5562
    %5626 = vmatpush1.bf16.msra.mxu0 %v5561
    %5627 = vmatprep.subr.bf16.mxu0 %v5564
    %5628 = vmatpush1.bf16.msra.mxu0 %v5563
    %5629 = vmatprep.subr.bf16.mxu0 %v5566
    %5630 = vmatpush1.bf16.msra.mxu0 %v5565
    %5631 = vmatprep.subr.bf16.mxu0 %v5568
    %5632 = vmatpush1.bf16.msra.mxu0 %v5567
    %5633 = vmatprep.subr.bf16.mxu0 %v5570
    %5634 = vmatpush1.bf16.msra.mxu0 %v5569
    %5635 = vmatprep.subr.bf16.mxu0 %v5572
    %5636 = vmatpush1.bf16.msra.mxu0 %v5571
    %5637 = vmatprep.subr.bf16.mxu0 %v5574
    %5638 = vmatpush1.bf16.msra.mxu0 %v5573
    %5639 = vmatprep.subr.bf16.mxu0 %v5576
    %5640 = vmatpush1.bf16.msra.mxu0 %v5575
    %5641 = vmatprep.mubr.bf16.mxu0 %v5167
    %5642 = vmatmul.mubr.bf16.gmra.mrb[0].mxu0 %v5166
    %v5643 = vpop.f32.mrb[0].mxu0
    %v5644 = vadd.f32 0.0, %v5643
    %v5645 = vpop.f32.mrb[0].mxu0
    %v5646 = vadd.f32 0.0, %v5645
    %v5647 = vpop.f32.mrb[0].mxu0
    %v5648 = vadd.f32 0.0, %v5647
    %v5649 = vpop.f32.mrb[0].mxu0
    %v5650 = vadd.f32 0.0, %v5649
    %5651 = vmatprep.mubr.bf16.mxu0 %v5169
    %5652 = vmatmul.mubr.bf16.gmra.mrb[0].mxu0 %v5168
    %v5653 = vpop.f32.mrb[0].mxu0
    %v5654 = vadd.f32 0.0, %v5653
    %v5655 = vpop.f32.mrb[0].mxu0
    %v5656 = vadd.f32 0.0, %v5655
    %v5657 = vpop.f32.mrb[0].mxu0
    %v5658 = vadd.f32 0.0, %v5657
    %v5659 = vpop.f32.mrb[0].mxu0
    %v5660 = vadd.f32 0.0, %v5659
    %5661 = vdwg.mxu0
    %s5662 = scalar_lea.vmem [#allocation13], 16
    %v5663 = vld [vmem:[%s5662] sm:$0xff]
    %v5664 = vld [vmem:[%s5662 + $0x8] sm:$0xff]
    %vm5665 = vcmask 261120
    %v5667 = vsel %vm5665, %v5663, 0
    %v5670 = vsel %vm5665, %v5664, 0
    %5672 = vmatprep.subr.mxu0 %v5646
    %5673 = vmatpush1.msra.mxu0 %v5644
    %5674 = vmatprep.subr.mxu0 %v5650
    %5675 = vmatpush1.msra.mxu0 %v5648
    %5676 = vmatprep.subr.mxu0 %v5656
    %5677 = vmatpush1.msra.mxu0 %v5654
    %5678 = vmatprep.subr.mxu0 %v5660
    %5679 = vmatpush1.msra.mxu0 %v5658
    %5680 = vmatprep.subr.mxu0 0.0
    %5681 = vmatpush1.msra.mxu0 0.0
    %5682 = vmatprep.subr.mxu0 0.0
    %5683 = vmatpush1.msra.mxu0 0.0
    %5684 = vmatprep.subr.mxu0 0.0
    %5685 = vmatpush1.msra.mxu0 0.0
    %5686 = vmatprep.subr.mxu0 0.0
    %5687 = vmatpush1.msra.mxu0 0.0
    %5688 = vmatprep.subr.mxu0 0.0
    %5689 = vmatpush1.msra.mxu0 0.0
    %5690 = vmatprep.subr.mxu0 0.0
    %5691 = vmatpush1.msra.mxu0 0.0
    %5692 = vmatprep.subr.mxu0 0.0
    %5693 = vmatpush1.msra.mxu0 0.0
    %5694 = vmatprep.subr.mxu0 0.0
    %5695 = vmatpush1.msra.mxu0 0.0
    %5696 = vmatprep.subr.mxu0 0.0
    %5697 = vmatpush1.msra.mxu0 0.0
    %5698 = vmatprep.subr.mxu0 0.0
    %5699 = vmatpush1.msra.mxu0 0.0
    %5700 = vmatprep.subr.mxu0 0.0
    %5701 = vmatpush1.msra.mxu0 0.0
    %5702 = vmatprep.subr.mxu0 0.0
    %5703 = vmatpush1.msra.mxu0 0.0
    %5704 = vmatprep.subr.mxu0 0.0
    %5705 = vmatpush1.msra.mxu0 0.0
    %5706 = vmatprep.subr.mxu0 0.0
    %5707 = vmatpush1.msra.mxu0 0.0
    %5708 = vmatprep.subr.mxu0 0.0
    %5709 = vmatpush1.msra.mxu0 0.0
    %5710 = vmatprep.subr.mxu0 0.0
    %5711 = vmatpush1.msra.mxu0 0.0
    %5712 = vmatprep.subr.mxu0 0.0
    %5713 = vmatpush1.msra.mxu0 0.0
    %5714 = vmatprep.subr.mxu0 0.0
    %5715 = vmatpush1.msra.mxu0 0.0
    %5716 = vmatprep.subr.mxu0 0.0
    %5717 = vmatpush1.msra.mxu0 0.0
    %5718 = vmatprep.subr.mxu0 0.0
    %5719 = vmatpush1.msra.mxu0 0.0
    %5720 = vmatprep.subr.mxu0 0.0
    %5721 = vmatpush1.msra.mxu0 0.0
    %5722 = vmatprep.subr.mxu0 0.0
    %5723 = vmatpush1.msra.mxu0 0.0
    %5724 = vmatprep.subr.mxu0 0.0
    %5725 = vmatpush1.msra.mxu0 0.0
    %5726 = vmatprep.subr.mxu0 0.0
    %5727 = vmatpush1.msra.mxu0 0.0
    %5728 = vmatprep.subr.mxu0 0.0
    %5729 = vmatpush1.msra.mxu0 0.0
    %5730 = vmatprep.subr.mxu0 0.0
    %5731 = vmatpush1.msra.mxu0 0.0
    %5732 = vmatprep.subr.mxu0 0.0
    %5733 = vmatpush1.msra.mxu0 0.0
    %5734 = vmatprep.subr.mxu0 0.0
    %5735 = vmatpush1.msra.mxu0 0.0
    %5736 = vmatprep.mubr.f32.mxu0 0.0
    %5737 = vmatmul.mubr.f32.gmra.mrb[0].mxu0 %v5667
    %v5738 = vpop.f32.mrb[0].mxu0
    %v5739 = vadd.f32 0.0, %v5738
    %v5740 = vpop.f32.mrb[0].mxu0
    %v5741 = vadd.f32 0.0, %v5740
    %5742 = vmatprep.mubr.f32.mxu0 0.0
    %5743 = vmatmul.mubr.f32.gmra.mrb[0].mxu0 %v5670
    %v5744 = vpop.f32.mrb[0].mxu0
    %v5745 = vadd.f32 0.0, %v5744
    %v5746 = vpop.f32.mrb[0].mxu0
    %v5747 = vadd.f32 0.0, %v5746
    %5748 = vdwg.mxu0
    %v5750 = vsel %vm5665, %v5415, 0
    %v5753 = vsel %vm5665, %v5416, 0
    %5755 = vmatprep.subr.mxu0 %v5399
    %5756 = vmatpush1.msra.mxu0 %v5397
    %5757 = vmatprep.subr.mxu0 %v5403
    %5758 = vmatpush1.msra.mxu0 %v5401
    %5759 = vmatprep.subr.mxu0 %v5409
    %5760 = vmatpush1.msra.mxu0 %v5407
    %5761 = vmatprep.subr.mxu0 %v5413
    %5762 = vmatpush1.msra.mxu0 %v5411
    %5763 = vmatprep.subr.mxu0 0.0
    %5764 = vmatpush1.msra.mxu0 0.0
    %5765 = vmatprep.subr.mxu0 0.0
    %5766 = vmatpush1.msra.mxu0 0.0
    %5767 = vmatprep.subr.mxu0 0.0
    %5768 = vmatpush1.msra.mxu0 0.0
    %5769 = vmatprep.subr.mxu0 0.0
    %5770 = vmatpush1.msra.mxu0 0.0
    %5771 = vmatprep.subr.mxu0 0.0
    %5772 = vmatpush1.msra.mxu0 0.0
    %5773 = vmatprep.subr.mxu0 0.0
    %5774 = vmatpush1.msra.mxu0 0.0
    %5775 = vmatprep.subr.mxu0 0.0
    %5776 = vmatpush1.msra.mxu0 0.0
    %5777 = vmatprep.subr.mxu0 0.0
    %5778 = vmatpush1.msra.mxu0 0.0
    %5779 = vmatprep.subr.mxu0 0.0
    %5780 = vmatpush1.msra.mxu0 0.0
    %5781 = vmatprep.subr.mxu0 0.0
    %5782 = vmatpush1.msra.mxu0 0.0
    %5783 = vmatprep.subr.mxu0 0.0
    %5784 = vmatpush1.msra.mxu0 0.0
    %5785 = vmatprep.subr.mxu0 0.0
    %5786 = vmatpush1.msra.mxu0 0.0
    %5787 = vmatprep.subr.mxu0 0.0
    %5788 = vmatpush1.msra.mxu0 0.0
    %5789 = vmatprep.subr.mxu0 0.0
    %5790 = vmatpush1.msra.mxu0 0.0
    %5791 = vmatprep.subr.mxu0 0.0
    %5792 = vmatpush1.msra.mxu0 0.0
    %5793 = vmatprep.subr.mxu0 0.0
    %5794 = vmatpush1.msra.mxu0 0.0
    %5795 = vmatprep.subr.mxu0 0.0
    %5796 = vmatpush1.msra.mxu0 0.0
    %5797 = vmatprep.subr.mxu0 0.0
    %5798 = vmatpush1.msra.mxu0 0.0
    %5799 = vmatprep.subr.mxu0 0.0
    %5800 = vmatpush1.msra.mxu0 0.0
    %5801 = vmatprep.subr.mxu0 0.0
    %5802 = vmatpush1.msra.mxu0 0.0
    %5803 = vmatprep.subr.mxu0 0.0
    %5804 = vmatpush1.msra.mxu0 0.0
    %5805 = vmatprep.subr.mxu0 0.0
    %5806 = vmatpush1.msra.mxu0 0.0
    %5807 = vmatprep.subr.mxu0 0.0
    %5808 = vmatpush1.msra.mxu0 0.0
    %5809 = vmatprep.subr.mxu0 0.0
    %5810 = vmatpush1.msra.mxu0 0.0
    %5811 = vmatprep.subr.mxu0 0.0
    %5812 = vmatpush1.msra.mxu0 0.0
    %5813 = vmatprep.subr.mxu0 0.0
    %5814 = vmatpush1.msra.mxu0 0.0
    %5815 = vmatprep.subr.mxu0 0.0
    %5816 = vmatpush1.msra.mxu0 0.0
    %5817 = vmatprep.subr.mxu0 0.0
    %5818 = vmatpush1.msra.mxu0 0.0
    %5819 = vmatprep.mubr.f32.mxu0 0.0
    %5820 = vmatmul.mubr.f32.gmra.mrb[0].mxu0 %v5750
    %v5821 = vpop.f32.mrb[0].mxu0
    %v5822 = vadd.f32 %v5739, %v5821
    %v5823 = vpop.f32.mrb[0].mxu0
    %v5824 = vadd.f32 %v5741, %v5823
    %5825 = vmatprep.mubr.f32.mxu0 0.0
    %5826 = vmatmul.mubr.f32.gmra.mrb[0].mxu0 %v5753
    %v5827 = vpop.f32.mrb[0].mxu0
    %v5828 = vadd.f32 %v5745, %v5827
    %v5829 = vpop.f32.mrb[0].mxu0
    %v5830 = vadd.f32 %v5747, %v5829
    %5831 = vdwg.mxu0
    %v5832 = vld [vmem:[#allocation12 + $0x10] sm:$0xff]
    %v5833 = vld [vmem:[#allocation12 + $0x38] sm:$0xff]
    %v5834 = vld [vmem:[#allocation12 + $0x60] sm:$0xff]
    %v5835 = vld [vmem:[#allocation12 + $0x88] sm:$0xff]
    %v5836 = vld [vmem:[#allocation12 + $0xb0] sm:$0xff]
    %v5837 = vld [vmem:[#allocation12 + $0xd8] sm:$0xff]
    %v5838 = vld [vmem:[#allocation12 + $0x100] sm:$0xff]
    %v5839 = vld [vmem:[#allocation12 + $0x128] sm:$0xff]
    %v5840 = vld [vmem:[#allocation12 + $0x150] sm:$0xff]
    %v5841 = vld [vmem:[#allocation12 + $0x178] sm:$0xff]
    %v5842 = vld [vmem:[#allocation12 + $0x1a0] sm:$0xff]
    %v5843 = vld [vmem:[#allocation12 + $0x1c8] sm:$0xff]
    %v5844 = vld [vmem:[#allocation12 + $0x1f0] sm:$0xff]
    %v5845 = vld [vmem:[#allocation12 + $0x218] sm:$0xff]
    %v5846 = vld [vmem:[#allocation12 + $0x240] sm:$0xff]
    %v5847 = vld [vmem:[#allocation12 + $0x268] sm:$0xff]
    %v5848 = vld [vmem:[#allocation12 + $0x290] sm:$0xff]
    %v5849 = vld [vmem:[#allocation12 + $0x2b8] sm:$0xff]
    %v5850 = vld [vmem:[#allocation12 + $0x2e0] sm:$0xff]
    %v5851 = vld [vmem:[#allocation12 + $0x308] sm:$0xff]
    %v5852 = vld [vmem:[#allocation12 + $0x330] sm:$0xff]
    %v5853 = vld [vmem:[#allocation12 + $0x358] sm:$0xff]
    %v5854 = vld [vmem:[#allocation12 + $0x380] sm:$0xff]
    %v5855 = vld [vmem:[#allocation12 + $0x3a8] sm:$0xff]
    %v5856 = vld [vmem:[#allocation12 + $0x3d0] sm:$0xff]
    %v5857 = vld [vmem:[#allocation12 + $0x3f8] sm:$0xff]
    %v5858 = vld [vmem:[#allocation12 + $0x420] sm:$0xff]
    %v5859 = vld [vmem:[#allocation12 + $0x448] sm:$0xff]
    %v5860 = vld [vmem:[#allocation12 + $0x470] sm:$0xff]
    %v5861 = vld [vmem:[#allocation12 + $0x498] sm:$0xff]
    %v5862 = vld [vmem:[#allocation12 + $0x4c0] sm:$0xff]
    %v5863 = vld [vmem:[#allocation12 + $0x4e8] sm:$0xff]
    %v5896 = vunpack.c.l.b16 %v5832
    %v5897 = vunpack.c.h.b16 %v5832
    %v5898 = vunpack.c.l.b16 %v5833
    %v5899 = vunpack.c.h.b16 %v5833
    %v5900 = vunpack.c.l.b16 %v5834
    %v5901 = vunpack.c.h.b16 %v5834
    %v5902 = vunpack.c.l.b16 %v5835
    %v5903 = vunpack.c.h.b16 %v5835
    %v5904 = vunpack.c.l.b16 %v5836
    %v5905 = vunpack.c.h.b16 %v5836
    %v5906 = vunpack.c.l.b16 %v5837
    %v5907 = vunpack.c.h.b16 %v5837
    %v5908 = vunpack.c.l.b16 %v5838
    %v5909 = vunpack.c.h.b16 %v5838
    %v5910 = vunpack.c.l.b16 %v5839
    %v5911 = vunpack.c.h.b16 %v5839
    %v5912 = vunpack.c.l.b16 %v5840
    %v5913 = vunpack.c.h.b16 %v5840
    %v5914 = vunpack.c.l.b16 %v5841
    %v5915 = vunpack.c.h.b16 %v5841
    %v5916 = vunpack.c.l.b16 %v5842
    %v5917 = vunpack.c.h.b16 %v5842
    %v5918 = vunpack.c.l.b16 %v5843
    %v5919 = vunpack.c.h.b16 %v5843
    %v5920 = vunpack.c.l.b16 %v5844
    %v5921 = vunpack.c.h.b16 %v5844
    %v5922 = vunpack.c.l.b16 %v5845
    %v5923 = vunpack.c.h.b16 %v5845
    %v5924 = vunpack.c.l.b16 %v5846
    %v5925 = vunpack.c.h.b16 %v5846
    %v5926 = vunpack.c.l.b16 %v5847
    %v5927 = vunpack.c.h.b16 %v5847
    %v5928 = vunpack.c.l.b16 %v5848
    %v5929 = vunpack.c.h.b16 %v5848
    %v5930 = vunpack.c.l.b16 %v5849
    %v5931 = vunpack.c.h.b16 %v5849
    %v5932 = vunpack.c.l.b16 %v5850
    %v5933 = vunpack.c.h.b16 %v5850
    %v5934 = vunpack.c.l.b16 %v5851
    %v5935 = vunpack.c.h.b16 %v5851
    %v5936 = vunpack.c.l.b16 %v5852
    %v5937 = vunpack.c.h.b16 %v5852
    %v5938 = vunpack.c.l.b16 %v5853
    %v5939 = vunpack.c.h.b16 %v5853
    %v5940 = vunpack.c.l.b16 %v5854
    %v5941 = vunpack.c.h.b16 %v5854
    %v5942 = vunpack.c.l.b16 %v5855
    %v5943 = vunpack.c.h.b16 %v5855
    %v5944 = vunpack.c.l.b16 %v5856
    %v5945 = vunpack.c.h.b16 %v5856
    %v5946 = vunpack.c.l.b16 %v5857
    %v5947 = vunpack.c.h.b16 %v5857
    %v5948 = vunpack.c.l.b16 %v5858
    %v5949 = vunpack.c.h.b16 %v5858
    %v5950 = vunpack.c.l.b16 %v5859
    %v5951 = vunpack.c.h.b16 %v5859
    %v5952 = vunpack.c.l.b16 %v5860
    %v5953 = vunpack.c.h.b16 %v5860
    %v5954 = vunpack.c.l.b16 %v5861
    %v5955 = vunpack.c.h.b16 %v5861
    %v5956 = vunpack.c.l.b16 %v5862
    %v5957 = vunpack.c.h.b16 %v5862
    %v5958 = vunpack.c.l.b16 %v5863
    %v5959 = vunpack.c.h.b16 %v5863
    %v5960 = vpack.c.b16 %v5898, %v5896
    %v5961 = vpack.c.b16 %v5899, %v5897
    %v5962 = vpack.c.b16 %v5902, %v5900
    %v5963 = vpack.c.b16 %v5903, %v5901
    %v5964 = vpack.c.b16 %v5906, %v5904
    %v5965 = vpack.c.b16 %v5907, %v5905
    %v5966 = vpack.c.b16 %v5910, %v5908
    %v5967 = vpack.c.b16 %v5911, %v5909
    %v5968 = vpack.c.b16 %v5914, %v5912
    %v5969 = vpack.c.b16 %v5915, %v5913
    %v5970 = vpack.c.b16 %v5918, %v5916
    %v5971 = vpack.c.b16 %v5919, %v5917
    %v5972 = vpack.c.b16 %v5922, %v5920
    %v5973 = vpack.c.b16 %v5923, %v5921
    %v5974 = vpack.c.b16 %v5926, %v5924
    %v5975 = vpack.c.b16 %v5927, %v5925
    %v5976 = vpack.c.b16 %v5930, %v5928
    %v5977 = vpack.c.b16 %v5931, %v5929
    %v5978 = vpack.c.b16 %v5934, %v5932
    %v5979 = vpack.c.b16 %v5935, %v5933
    %v5980 = vpack.c.b16 %v5938, %v5936
    %v5981 = vpack.c.b16 %v5939, %v5937
    %v5982 = vpack.c.b16 %v5942, %v5940
    %v5983 = vpack.c.b16 %v5943, %v5941
    %v5984 = vpack.c.b16 %v5946, %v5944
    %v5985 = vpack.c.b16 %v5947, %v5945
    %v5986 = vpack.c.b16 %v5950, %v5948
    %v5987 = vpack.c.b16 %v5951, %v5949
    %v5988 = vpack.c.b16 %v5954, %v5952
    %v5989 = vpack.c.b16 %v5955, %v5953
    %v5990 = vpack.c.b16 %v5958, %v5956
    %v5991 = vpack.c.b16 %v5959, %v5957
    %6024 = vmatprep.subr.bf16.mxu0 %v5961
    %6025 = vmatpush1.bf16.msra.mxu0 %v5960
    %6026 = vmatprep.subr.bf16.mxu0 %v5963
    %6027 = vmatpush1.bf16.msra.mxu0 %v5962
    %6028 = vmatprep.subr.bf16.mxu0 %v5965
    %6029 = vmatpush1.bf16.msra.mxu0 %v5964
    %6030 = vmatprep.subr.bf16.mxu0 %v5967
    %6031 = vmatpush1.bf16.msra.mxu0 %v5966
    %6032 = vmatprep.subr.bf16.mxu0 %v5969
    %6033 = vmatpush1.bf16.msra.mxu0 %v5968
    %6034 = vmatprep.subr.bf16.mxu0 %v5971
    %6035 = vmatpush1.bf16.msra.mxu0 %v5970
    %6036 = vmatprep.subr.bf16.mxu0 %v5973
    %6037 = vmatpush1.bf16.msra.mxu0 %v5972
    %6038 = vmatprep.subr.bf16.mxu0 %v5975
    %6039 = vmatpush1.bf16.msra.mxu0 %v5974
    %6040 = vmatprep.subr.bf16.mxu0 %v5977
    %6041 = vmatpush1.bf16.msra.mxu0 %v5976
    %6042 = vmatprep.subr.bf16.mxu0 %v5979
    %6043 = vmatpush1.bf16.msra.mxu0 %v5978
    %6044 = vmatprep.subr.bf16.mxu0 %v5981
    %6045 = vmatpush1.bf16.msra.mxu0 %v5980
    %6046 = vmatprep.subr.bf16.mxu0 %v5983
    %6047 = vmatpush1.bf16.msra.mxu0 %v5982
    %6048 = vmatprep.subr.bf16.mxu0 %v5985
    %6049 = vmatpush1.bf16.msra.mxu0 %v5984
    %6050 = vmatprep.subr.bf16.mxu0 %v5987
    %6051 = vmatpush1.bf16.msra.mxu0 %v5986
    %6052 = vmatprep.subr.bf16.mxu0 %v5989
    %6053 = vmatpush1.bf16.msra.mxu0 %v5988
    %6054 = vmatprep.subr.bf16.mxu0 %v5991
    %6055 = vmatpush1.bf16.msra.mxu0 %v5990
    %6056 = vmatprep.mubr.bf16.mxu0 %v5167
    %6057 = vmatmul.mubr.bf16.gmra.mrb[0].mxu0 %v5166
    %v6058 = vpop.f32.mrb[0].mxu0
    %v6059 = vadd.f32 0.0, %v6058
    %v6060 = vpop.f32.mrb[0].mxu0
    %v6061 = vadd.f32 0.0, %v6060
    %v6062 = vpop.f32.mrb[0].mxu0
    %v6063 = vadd.f32 0.0, %v6062
    %v6064 = vpop.f32.mrb[0].mxu0
    %v6065 = vadd.f32 0.0, %v6064
    %6066 = vmatprep.mubr.bf16.mxu0 %v5169
    %6067 = vmatmul.mubr.bf16.gmra.mrb[0].mxu0 %v5168
    %v6068 = vpop.f32.mrb[0].mxu0
    %v6069 = vadd.f32 0.0, %v6068
    %v6070 = vpop.f32.mrb[0].mxu0
    %v6071 = vadd.f32 0.0, %v6070
    %v6072 = vpop.f32.mrb[0].mxu0
    %v6073 = vadd.f32 0.0, %v6072
    %v6074 = vpop.f32.mrb[0].mxu0
    %v6075 = vadd.f32 0.0, %v6074
    %6076 = vdwg.mxu0
    %s6077 = scalar_lea.vmem [#allocation13], 32
    %v6078 = vld [vmem:[%s6077] sm:$0xff]
    %v6079 = vld [vmem:[%s6077 + $0x8] sm:$0xff]
    %v6081 = vsel %vm5665, %v6078, 0
    %v6084 = vsel %vm5665, %v6079, 0
    %6086 = vmatprep.subr.mxu0 %v6061
    %6087 = vmatpush1.msra.mxu0 %v6059
    %6088 = vmatprep.subr.mxu0 %v6065
    %6089 = vmatpush1.msra.mxu0 %v6063
    %6090 = vmatprep.subr.mxu0 %v6071
    %6091 = vmatpush1.msra.mxu0 %v6069
    %6092 = vmatprep.subr.mxu0 %v6075
    %6093 = vmatpush1.msra.mxu0 %v6073
    %6094 = vmatprep.subr.mxu0 0.0
    %6095 = vmatpush1.msra.mxu0 0.0
    %6096 = vmatprep.subr.mxu0 0.0
    %6097 = vmatpush1.msra.mxu0 0.0
    %6098 = vmatprep.subr.mxu0 0.0
    %6099 = vmatpush1.msra.mxu0 0.0
    %6100 = vmatprep.subr.mxu0 0.0
    %6101 = vmatpush1.msra.mxu0 0.0
    %6102 = vmatprep.subr.mxu0 0.0
    %6103 = vmatpush1.msra.mxu0 0.0
    %6104 = vmatprep.subr.mxu0 0.0
    %6105 = vmatpush1.msra.mxu0 0.0
    %6106 = vmatprep.subr.mxu0 0.0
    %6107 = vmatpush1.msra.mxu0 0.0
    %6108 = vmatprep.subr.mxu0 0.0
    %6109 = vmatpush1.msra.mxu0 0.0
    %6110 = vmatprep.subr.mxu0 0.0
    %6111 = vmatpush1.msra.mxu0 0.0
    %6112 = vmatprep.subr.mxu0 0.0
    %6113 = vmatpush1.msra.mxu0 0.0
    %6114 = vmatprep.subr.mxu0 0.0
    %6115 = vmatpush1.msra.mxu0 0.0
    %6116 = vmatprep.subr.mxu0 0.0
    %6117 = vmatpush1.msra.mxu0 0.0
    %6118 = vmatprep.subr.mxu0 0.0
    %6119 = vmatpush1.msra.mxu0 0.0
    %6120 = vmatprep.subr.mxu0 0.0
    %6121 = vmatpush1.msra.mxu0 0.0
    %6122 = vmatprep.subr.mxu0 0.0
    %6123 = vmatpush1.msra.mxu0 0.0
    %6124 = vmatprep.subr.mxu0 0.0
    %6125 = vmatpush1.msra.mxu0 0.0
    %6126 = vmatprep.subr.mxu0 0.0
    %6127 = vmatpush1.msra.mxu0 0.0
    %6128 = vmatprep.subr.mxu0 0.0
    %6129 = vmatpush1.msra.mxu0 0.0
    %6130 = vmatprep.subr.mxu0 0.0
    %6131 = vmatpush1.msra.mxu0 0.0
    %6132 = vmatprep.subr.mxu0 0.0
    %6133 = vmatpush1.msra.mxu0 0.0
    %6134 = vmatprep.subr.mxu0 0.0
    %6135 = vmatpush1.msra.mxu0 0.0
    %6136 = vmatprep.subr.mxu0 0.0
    %6137 = vmatpush1.msra.mxu0 0.0
    %6138 = vmatprep.subr.mxu0 0.0
    %6139 = vmatpush1.msra.mxu0 0.0
    %6140 = vmatprep.subr.mxu0 0.0
    %6141 = vmatpush1.msra.mxu0 0.0
    %6142 = vmatprep.subr.mxu0 0.0
    %6143 = vmatpush1.msra.mxu0 0.0
    %6144 = vmatprep.subr.mxu0 0.0
    %6145 = vmatpush1.msra.mxu0 0.0
    %6146 = vmatprep.subr.mxu0 0.0
    %6147 = vmatpush1.msra.mxu0 0.0
    %6148 = vmatprep.subr.mxu0 0.0
    %6149 = vmatpush1.msra.mxu0 0.0
    %6150 = vmatprep.mubr.f32.mxu0 0.0
    %6151 = vmatmul.mubr.f32.gmra.mrb[0].mxu0 %v6081
    %v6152 = vpop.f32.mrb[0].mxu0
    %v6153 = vadd.f32 0.0, %v6152
    %v6154 = vpop.f32.mrb[0].mxu0
    %v6155 = vadd.f32 0.0, %v6154
    %6156 = vmatprep.mubr.f32.mxu0 0.0
    %6157 = vmatmul.mubr.f32.gmra.mrb[0].mxu0 %v6084
    %v6158 = vpop.f32.mrb[0].mxu0
    %v6159 = vadd.f32 0.0, %v6158
    %v6160 = vpop.f32.mrb[0].mxu0
    %v6161 = vadd.f32 0.0, %v6160
    %6162 = vdwg.mxu0
    %v6163 = vadd.f32 %v5822, %v6153
    %v6164 = vadd.f32 %v5824, %v6155
    %v6165 = vadd.f32 %v5828, %v6159
    %v6166 = vadd.f32 %v5830, %v6161
    %v6167 = vld [vmem:[#allocation12 + $0x18] sm:$0xff]
    %v6168 = vld [vmem:[#allocation12 + $0x40] sm:$0xff]
    %v6169 = vld [vmem:[#allocation12 + $0x68] sm:$0xff]
    %v6170 = vld [vmem:[#allocation12 + $0x90] sm:$0xff]
    %v6171 = vld [vmem:[#allocation12 + $0xb8] sm:$0xff]
    %v6172 = vld [vmem:[#allocation12 + $0xe0] sm:$0xff]
    %v6173 = vld [vmem:[#allocation12 + $0x108] sm:$0xff]
    %v6174 = vld [vmem:[#allocation12 + $0x130] sm:$0xff]
    %v6175 = vld [vmem:[#allocation12 + $0x158] sm:$0xff]
    %v6176 = vld [vmem:[#allocation12 + $0x180] sm:$0xff]
    %v6177 = vld [vmem:[#allocation12 + $0x1a8] sm:$0xff]
    %v6178 = vld [vmem:[#allocation12 + $0x1d0] sm:$0xff]
    %v6179 = vld [vmem:[#allocation12 + $0x1f8] sm:$0xff]
    %v6180 = vld [vmem:[#allocation12 + $0x220] sm:$0xff]
    %v6181 = vld [vmem:[#allocation12 + $0x248] sm:$0xff]
    %v6182 = vld [vmem:[#allocation12 + $0x270] sm:$0xff]
    %v6183 = vld [vmem:[#allocation12 + $0x298] sm:$0xff]
    %v6184 = vld [vmem:[#allocation12 + $0x2c0] sm:$0xff]
    %v6185 = vld [vmem:[#allocation12 + $0x2e8] sm:$0xff]
    %v6186 = vld [vmem:[#allocation12 + $0x310] sm:$0xff]
    %v6187 = vld [vmem:[#allocation12 + $0x338] sm:$0xff]
    %v6188 = vld [vmem:[#allocation12 + $0x360] sm:$0xff]
    %v6189 = vld [vmem:[#allocation12 + $0x388] sm:$0xff]
    %v6190 = vld [vmem:[#allocation12 + $0x3b0] sm:$0xff]
    %v6191 = vld [vmem:[#allocation12 + $0x3d8] sm:$0xff]
    %v6192 = vld [vmem:[#allocation12 + $0x400] sm:$0xff]
    %v6193 = vld [vmem:[#allocation12 + $0x428] sm:$0xff]
    %v6194 = vld [vmem:[#allocation12 + $0x450] sm:$0xff]
    %v6195 = vld [vmem:[#allocation12 + $0x478] sm:$0xff]
    %v6196 = vld [vmem:[#allocation12 + $0x4a0] sm:$0xff]
    %v6197 = vld [vmem:[#allocation12 + $0x4c8] sm:$0xff]
    %v6198 = vld [vmem:[#allocation12 + $0x4f0] sm:$0xff]
    %v6231 = vunpack.c.l.b16 %v6167
    %v6232 = vunpack.c.h.b16 %v6167
    %v6233 = vunpack.c.l.b16 %v6168
    %v6234 = vunpack.c.h.b16 %v6168
    %v6235 = vunpack.c.l.b16 %v6169
    %v6236 = vunpack.c.h.b16 %v6169
    %v6237 = vunpack.c.l.b16 %v6170
    %v6238 = vunpack.c.h.b16 %v6170
    %v6239 = vunpack.c.l.b16 %v6171
    %v6240 = vunpack.c.h.b16 %v6171
    %v6241 = vunpack.c.l.b16 %v6172
    %v6242 = vunpack.c.h.b16 %v6172
    %v6243 = vunpack.c.l.b16 %v6173
    %v6244 = vunpack.c.h.b16 %v6173
    %v6245 = vunpack.c.l.b16 %v6174
    %v6246 = vunpack.c.h.b16 %v6174
    %v6247 = vunpack.c.l.b16 %v6175
    %v6248 = vunpack.c.h.b16 %v6175
    %v6249 = vunpack.c.l.b16 %v6176
    %v6250 = vunpack.c.h.b16 %v6176
    %v6251 = vunpack.c.l.b16 %v6177
    %v6252 = vunpack.c.h.b16 %v6177
    %v6253 = vunpack.c.l.b16 %v6178
    %v6254 = vunpack.c.h.b16 %v6178
    %v6255 = vunpack.c.l.b16 %v6179
    %v6256 = vunpack.c.h.b16 %v6179
    %v6257 = vunpack.c.l.b16 %v6180
    %v6258 = vunpack.c.h.b16 %v6180
    %v6259 = vunpack.c.l.b16 %v6181
    %v6260 = vunpack.c.h.b16 %v6181
    %v6261 = vunpack.c.l.b16 %v6182
    %v6262 = vunpack.c.h.b16 %v6182
    %v6263 = vunpack.c.l.b16 %v6183
    %v6264 = vunpack.c.h.b16 %v6183
    %v6265 = vunpack.c.l.b16 %v6184
    %v6266 = vunpack.c.h.b16 %v6184
    %v6267 = vunpack.c.l.b16 %v6185
    %v6268 = vunpack.c.h.b16 %v6185
    %v6269 = vunpack.c.l.b16 %v6186
    %v6270 = vunpack.c.h.b16 %v6186
    %v6271 = vunpack.c.l.b16 %v6187
    %v6272 = vunpack.c.h.b16 %v6187
    %v6273 = vunpack.c.l.b16 %v6188
    %v6274 = vunpack.c.h.b16 %v6188
    %v6275 = vunpack.c.l.b16 %v6189
    %v6276 = vunpack.c.h.b16 %v6189
    %v6277 = vunpack.c.l.b16 %v6190
    %v6278 = vunpack.c.h.b16 %v6190
    %v6279 = vunpack.c.l.b16 %v6191
    %v6280 = vunpack.c.h.b16 %v6191
    %v6281 = vunpack.c.l.b16 %v6192
    %v6282 = vunpack.c.h.b16 %v6192
    %v6283 = vunpack.c.l.b16 %v6193
    %v6284 = vunpack.c.h.b16 %v6193
    %v6285 = vunpack.c.l.b16 %v6194
    %v6286 = vunpack.c.h.b16 %v6194
    %v6287 = vunpack.c.l.b16 %v6195
    %v6288 = vunpack.c.h.b16 %v6195
    %v6289 = vunpack.c.l.b16 %v6196
    %v6290 = vunpack.c.h.b16 %v6196
    %v6291 = vunpack.c.l.b16 %v6197
    %v6292 = vunpack.c.h.b16 %v6197
    %v6293 = vunpack.c.l.b16 %v6198
    %v6294 = vunpack.c.h.b16 %v6198
    %v6295 = vpack.c.b16 %v6233, %v6231
    %v6296 = vpack.c.b16 %v6234, %v6232
    %v6297 = vpack.c.b16 %v6237, %v6235
    %v6298 = vpack.c.b16 %v6238, %v6236
    %v6299 = vpack.c.b16 %v6241, %v6239
    %v6300 = vpack.c.b16 %v6242, %v6240
    %v6301 = vpack.c.b16 %v6245, %v6243
    %v6302 = vpack.c.b16 %v6246, %v6244
    %v6303 = vpack.c.b16 %v6249, %v6247
    %v6304 = vpack.c.b16 %v6250, %v6248
    %v6305 = vpack.c.b16 %v6253, %v6251
    %v6306 = vpack.c.b16 %v6254, %v6252
    %v6307 = vpack.c.b16 %v6257, %v6255
    %v6308 = vpack.c.b16 %v6258, %v6256
    %v6309 = vpack.c.b16 %v6261, %v6259
    %v6310 = vpack.c.b16 %v6262, %v6260
    %v6311 = vpack.c.b16 %v6265, %v6263
    %v6312 = vpack.c.b16 %v6266, %v6264
    %v6313 = vpack.c.b16 %v6269, %v6267
    %v6314 = vpack.c.b16 %v6270, %v6268
    %v6315 = vpack.c.b16 %v6273, %v6271
    %v6316 = vpack.c.b16 %v6274, %v6272
    %v6317 = vpack.c.b16 %v6277, %v6275
    %v6318 = vpack.c.b16 %v6278, %v6276
    %v6319 = vpack.c.b16 %v6281, %v6279
    %v6320 = vpack.c.b16 %v6282, %v6280
    %v6321 = vpack.c.b16 %v6285, %v6283
    %v6322 = vpack.c.b16 %v6286, %v6284
    %v6323 = vpack.c.b16 %v6289, %v6287
    %v6324 = vpack.c.b16 %v6290, %v6288
    %v6325 = vpack.c.b16 %v6293, %v6291
    %v6326 = vpack.c.b16 %v6294, %v6292
    %6359 = vmatprep.subr.bf16.mxu0 %v6296
    %6360 = vmatpush1.bf16.msra.mxu0 %v6295
    %6361 = vmatprep.subr.bf16.mxu0 %v6298
    %6362 = vmatpush1.bf16.msra.mxu0 %v6297
    %6363 = vmatprep.subr.bf16.mxu0 %v6300
    %6364 = vmatpush1.bf16.msra.mxu0 %v6299
    %6365 = vmatprep.subr.bf16.mxu0 %v6302
    %6366 = vmatpush1.bf16.msra.mxu0 %v6301
    %6367 = vmatprep.subr.bf16.mxu0 %v6304
    %6368 = vmatpush1.bf16.msra.mxu0 %v6303
    %6369 = vmatprep.subr.bf16.mxu0 %v6306
    %6370 = vmatpush1.bf16.msra.mxu0 %v6305
    %6371 = vmatprep.subr.bf16.mxu0 %v6308
    %6372 = vmatpush1.bf16.msra.mxu0 %v6307
    %6373 = vmatprep.subr.bf16.mxu0 %v6310
    %6374 = vmatpush1.bf16.msra.mxu0 %v6309
    %6375 = vmatprep.subr.bf16.mxu0 %v6312
    %6376 = vmatpush1.bf16.msra.mxu0 %v6311
    %6377 = vmatprep.subr.bf16.mxu0 %v6314
    %6378 = vmatpush1.bf16.msra.mxu0 %v6313
    %6379 = vmatprep.subr.bf16.mxu0 %v6316
    %6380 = vmatpush1.bf16.msra.mxu0 %v6315
    %6381 = vmatprep.subr.bf16.mxu0 %v6318
    %6382 = vmatpush1.bf16.msra.mxu0 %v6317
    %6383 = vmatprep.subr.bf16.mxu0 %v6320
    %6384 = vmatpush1.bf16.msra.mxu0 %v6319
    %6385 = vmatprep.subr.bf16.mxu0 %v6322
    %6386 = vmatpush1.bf16.msra.mxu0 %v6321
    %6387 = vmatprep.subr.bf16.mxu0 %v6324
    %6388 = vmatpush1.bf16.msra.mxu0 %v6323
    %6389 = vmatprep.subr.bf16.mxu0 %v6326
    %6390 = vmatpush1.bf16.msra.mxu0 %v6325
    %6391 = vmatprep.mubr.bf16.mxu0 %v5167
    %6392 = vmatmul.mubr.bf16.gmra.mrb[0].mxu0 %v5166
    %v6393 = vpop.f32.mrb[0].mxu0
    %v6394 = vadd.f32 0.0, %v6393
    %v6395 = vpop.f32.mrb[0].mxu0
    %v6396 = vadd.f32 0.0, %v6395
    %v6397 = vpop.f32.mrb[0].mxu0
    %v6398 = vadd.f32 0.0, %v6397
    %v6399 = vpop.f32.mrb[0].mxu0
    %v6400 = vadd.f32 0.0, %v6399
    %6401 = vmatprep.mubr.bf16.mxu0 %v5169
    %6402 = vmatmul.mubr.bf16.gmra.mrb[0].mxu0 %v5168
    %v6403 = vpop.f32.mrb[0].mxu0
    %v6404 = vadd.f32 0.0, %v6403
    %v6405 = vpop.f32.mrb[0].mxu0
    %v6406 = vadd.f32 0.0, %v6405
    %v6407 = vpop.f32.mrb[0].mxu0
    %v6408 = vadd.f32 0.0, %v6407
    %v6409 = vpop.f32.mrb[0].mxu0
    %v6410 = vadd.f32 0.0, %v6409
    %6411 = vdwg.mxu0
    %s6412 = scalar_lea.vmem [#allocation13], 48
    %v6413 = vld [vmem:[%s6412] sm:$0xff]
    %v6414 = vld [vmem:[%s6412 + $0x8] sm:$0xff]
    %v6416 = vsel %vm5665, %v6413, 0
    %v6419 = vsel %vm5665, %v6414, 0
    %6421 = vmatprep.subr.mxu0 %v6396
    %6422 = vmatpush1.msra.mxu0 %v6394
    %6423 = vmatprep.subr.mxu0 %v6400
    %6424 = vmatpush1.msra.mxu0 %v6398
    %6425 = vmatprep.subr.mxu0 %v6406
    %6426 = vmatpush1.msra.mxu0 %v6404
    %6427 = vmatprep.subr.mxu0 %v6410
    %6428 = vmatpush1.msra.mxu0 %v6408
    %6429 = vmatprep.subr.mxu0 0.0
    %6430 = vmatpush1.msra.mxu0 0.0
    %6431 = vmatprep.subr.mxu0 0.0
    %6432 = vmatpush1.msra.mxu0 0.0
    %6433 = vmatprep.subr.mxu0 0.0
    %6434 = vmatpush1.msra.mxu0 0.0
    %6435 = vmatprep.subr.mxu0 0.0
    %6436 = vmatpush1.msra.mxu0 0.0
    %6437 = vmatprep.subr.mxu0 0.0
    %6438 = vmatpush1.msra.mxu0 0.0
    %6439 = vmatprep.subr.mxu0 0.0
    %6440 = vmatpush1.msra.mxu0 0.0
    %6441 = vmatprep.subr.mxu0 0.0
    %6442 = vmatpush1.msra.mxu0 0.0
    %6443 = vmatprep.subr.mxu0 0.0
    %6444 = vmatpush1.msra.mxu0 0.0
    %6445 = vmatprep.subr.mxu0 0.0
    %6446 = vmatpush1.msra.mxu0 0.0
    %6447 = vmatprep.subr.mxu0 0.0
    %6448 = vmatpush1.msra.mxu0 0.0
    %6449 = vmatprep.subr.mxu0 0.0
    %6450 = vmatpush1.msra.mxu0 0.0
    %6451 = vmatprep.subr.mxu0 0.0
    %6452 = vmatpush1.msra.mxu0 0.0
    %6453 = vmatprep.subr.mxu0 0.0
    %6454 = vmatpush1.msra.mxu0 0.0
    %6455 = vmatprep.subr.mxu0 0.0
    %6456 = vmatpush1.msra.mxu0 0.0
    %6457 = vmatprep.subr.mxu0 0.0
    %6458 = vmatpush1.msra.mxu0 0.0
    %6459 = vmatprep.subr.mxu0 0.0
    %6460 = vmatpush1.msra.mxu0 0.0
    %6461 = vmatprep.subr.mxu0 0.0
    %6462 = vmatpush1.msra.mxu0 0.0
    %6463 = vmatprep.subr.mxu0 0.0
    %6464 = vmatpush1.msra.mxu0 0.0
    %6465 = vmatprep.subr.mxu0 0.0
    %6466 = vmatpush1.msra.mxu0 0.0
    %6467 = vmatprep.subr.mxu0 0.0
    %6468 = vmatpush1.msra.mxu0 0.0
    %6469 = vmatprep.subr.mxu0 0.0
    %6470 = vmatpush1.msra.mxu0 0.0
    %6471 = vmatprep.subr.mxu0 0.0
    %6472 = vmatpush1.msra.mxu0 0.0
    %6473 = vmatprep.subr.mxu0 0.0
    %6474 = vmatpush1.msra.mxu0 0.0
    %6475 = vmatprep.subr.mxu0 0.0
    %6476 = vmatpush1.msra.mxu0 0.0
    %6477 = vmatprep.subr.mxu0 0.0
    %6478 = vmatpush1.msra.mxu0 0.0
    %6479 = vmatprep.subr.mxu0 0.0
    %6480 = vmatpush1.msra.mxu0 0.0
    %6481 = vmatprep.subr.mxu0 0.0
    %6482 = vmatpush1.msra.mxu0 0.0
    %6483 = vmatprep.subr.mxu0 0.0
    %6484 = vmatpush1.msra.mxu0 0.0
    %6485 = vmatprep.mubr.f32.mxu0 0.0
    %6486 = vmatmul.mubr.f32.gmra.mrb[0].mxu0 %v6416
    %v6487 = vpop.f32.mrb[0].mxu0
    %v6488 = vadd.f32 0.0, %v6487
    %v6489 = vpop.f32.mrb[0].mxu0
    %v6490 = vadd.f32 0.0, %v6489
    %6491 = vmatprep.mubr.f32.mxu0 0.0
    %6492 = vmatmul.mubr.f32.gmra.mrb[0].mxu0 %v6419
    %v6493 = vpop.f32.mrb[0].mxu0
    %v6494 = vadd.f32 0.0, %v6493
    %v6495 = vpop.f32.mrb[0].mxu0
    %v6496 = vadd.f32 0.0, %v6495
    %6497 = vdwg.mxu0
    %v6498 = vadd.f32 %v6163, %v6488
    %v6499 = vadd.f32 %v6164, %v6490
    %v6500 = vadd.f32 %v6165, %v6494
    %v6501 = vadd.f32 %v6166, %v6496
    %v6502 = vld [vmem:[#allocation12 + $0x20] sm:$0xff]
    %v6503 = vld [vmem:[#allocation12 + $0x48] sm:$0xff]
    %v6504 = vld [vmem:[#allocation12 + $0x70] sm:$0xff]
    %v6505 = vld [vmem:[#allocation12 + $0x98] sm:$0xff]
    %v6506 = vld [vmem:[#allocation12 + $0xc0] sm:$0xff]
    %v6507 = vld [vmem:[#allocation12 + $0xe8] sm:$0xff]
    %v6508 = vld [vmem:[#allocation12 + $0x110] sm:$0xff]
    %v6509 = vld [vmem:[#allocation12 + $0x138] sm:$0xff]
    %v6510 = vld [vmem:[#allocation12 + $0x160] sm:$0xff]
    %v6511 = vld [vmem:[#allocation12 + $0x188] sm:$0xff]
    %v6512 = vld [vmem:[#allocation12 + $0x1b0] sm:$0xff]
    %v6513 = vld [vmem:[#allocation12 + $0x1d8] sm:$0xff]
    %v6514 = vld [vmem:[#allocation12 + $0x200] sm:$0xff]
    %v6515 = vld [vmem:[#allocation12 + $0x228] sm:$0xff]
    %v6516 = vld [vmem:[#allocation12 + $0x250] sm:$0xff]
    %v6517 = vld [vmem:[#allocation12 + $0x278] sm:$0xff]
    %v6518 = vld [vmem:[#allocation12 + $0x2a0] sm:$0xff]
    %v6519 = vld [vmem:[#allocation12 + $0x2c8] sm:$0xff]
    %v6520 = vld [vmem:[#allocation12 + $0x2f0] sm:$0xff]
    %v6521 = vld [vmem:[#allocation12 + $0x318] sm:$0xff]
    %v6522 = vld [vmem:[#allocation12 + $0x340] sm:$0xff]
    %v6523 = vld [vmem:[#allocation12 + $0x368] sm:$0xff]
    %v6524 = vld [vmem:[#allocation12 + $0x390] sm:$0xff]
    %v6525 = vld [vmem:[#allocation12 + $0x3b8] sm:$0xff]
    %v6526 = vld [vmem:[#allocation12 + $0x3e0] sm:$0xff]
    %v6527 = vld [vmem:[#allocation12 + $0x408] sm:$0xff]
    %v6528 = vld [vmem:[#allocation12 + $0x430] sm:$0xff]
    %v6529 = vld [vmem:[#allocation12 + $0x458] sm:$0xff]
    %v6530 = vld [vmem:[#allocation12 + $0x480] sm:$0xff]
    %v6531 = vld [vmem:[#allocation12 + $0x4a8] sm:$0xff]
    %v6532 = vld [vmem:[#allocation12 + $0x4d0] sm:$0xff]
    %v6533 = vld [vmem:[#allocation12 + $0x4f8] sm:$0xff]
    %v6566 = vunpack.c.l.b16 %v6502
    %v6567 = vunpack.c.h.b16 %v6502
    %v6568 = vunpack.c.l.b16 %v6503
    %v6569 = vunpack.c.h.b16 %v6503
    %v6570 = vunpack.c.l.b16 %v6504
    %v6571 = vunpack.c.h.b16 %v6504
    %v6572 = vunpack.c.l.b16 %v6505
    %v6573 = vunpack.c.h.b16 %v6505
    %v6574 = vunpack.c.l.b16 %v6506
    %v6575 = vunpack.c.h.b16 %v6506
    %v6576 = vunpack.c.l.b16 %v6507
    %v6577 = vunpack.c.h.b16 %v6507
    %v6578 = vunpack.c.l.b16 %v6508
    %v6579 = vunpack.c.h.b16 %v6508
    %v6580 = vunpack.c.l.b16 %v6509
    %v6581 = vunpack.c.h.b16 %v6509
    %v6582 = vunpack.c.l.b16 %v6510
    %v6583 = vunpack.c.h.b16 %v6510
    %v6584 = vunpack.c.l.b16 %v6511
    %v6585 = vunpack.c.h.b16 %v6511
    %v6586 = vunpack.c.l.b16 %v6512
    %v6587 = vunpack.c.h.b16 %v6512
    %v6588 = vunpack.c.l.b16 %v6513
    %v6589 = vunpack.c.h.b16 %v6513
    %v6590 = vunpack.c.l.b16 %v6514
    %v6591 = vunpack.c.h.b16 %v6514
    %v6592 = vunpack.c.l.b16 %v6515
    %v6593 = vunpack.c.h.b16 %v6515
    %v6594 = vunpack.c.l.b16 %v6516
    %v6595 = vunpack.c.h.b16 %v6516
    %v6596 = vunpack.c.l.b16 %v6517
    %v6597 = vunpack.c.h.b16 %v6517
    %v6598 = vunpack.c.l.b16 %v6518
    %v6599 = vunpack.c.h.b16 %v6518
    %v6600 = vunpack.c.l.b16 %v6519
    %v6601 = vunpack.c.h.b16 %v6519
    %v6602 = vunpack.c.l.b16 %v6520
    %v6603 = vunpack.c.h.b16 %v6520
    %v6604 = vunpack.c.l.b16 %v6521
    %v6605 = vunpack.c.h.b16 %v6521
    %v6606 = vunpack.c.l.b16 %v6522
    %v6607 = vunpack.c.h.b16 %v6522
    %v6608 = vunpack.c.l.b16 %v6523
    %v6609 = vunpack.c.h.b16 %v6523
    %v6610 = vunpack.c.l.b16 %v6524
    %v6611 = vunpack.c.h.b16 %v6524
    %v6612 = vunpack.c.l.b16 %v6525
    %v6613 = vunpack.c.h.b16 %v6525
    %v6614 = vunpack.c.l.b16 %v6526
    %v6615 = vunpack.c.h.b16 %v6526
    %v6616 = vunpack.c.l.b16 %v6527
    %v6617 = vunpack.c.h.b16 %v6527
    %v6618 = vunpack.c.l.b16 %v6528
    %v6619 = vunpack.c.h.b16 %v6528
    %v6620 = vunpack.c.l.b16 %v6529
    %v6621 = vunpack.c.h.b16 %v6529
    %v6622 = vunpack.c.l.b16 %v6530
    %v6623 = vunpack.c.h.b16 %v6530
    %v6624 = vunpack.c.l.b16 %v6531
    %v6625 = vunpack.c.h.b16 %v6531
    %v6626 = vunpack.c.l.b16 %v6532
    %v6627 = vunpack.c.h.b16 %v6532
    %v6628 = vunpack.c.l.b16 %v6533
    %v6629 = vunpack.c.h.b16 %v6533
    %v6630 = vpack.c.b16 %v6568, %v6566
    %v6631 = vpack.c.b16 %v6569, %v6567
    %v6632 = vpack.c.b16 %v6572, %v6570
    %v6633 = vpack.c.b16 %v6573, %v6571
    %v6634 = vpack.c.b16 %v6576, %v6574
    %v6635 = vpack.c.b16 %v6577, %v6575
    %v6636 = vpack.c.b16 %v6580, %v6578
    %v6637 = vpack.c.b16 %v6581, %v6579
    %v6638 = vpack.c.b16 %v6584, %v6582
    %v6639 = vpack.c.b16 %v6585, %v6583
    %v6640 = vpack.c.b16 %v6588, %v6586
    %v6641 = vpack.c.b16 %v6589, %v6587
    %v6642 = vpack.c.b16 %v6592, %v6590
    %v6643 = vpack.c.b16 %v6593, %v6591
    %v6644 = vpack.c.b16 %v6596, %v6594
    %v6645 = vpack.c.b16 %v6597, %v6595
    %v6646 = vpack.c.b16 %v6600, %v6598
    %v6647 = vpack.c.b16 %v6601, %v6599
    %v6648 = vpack.c.b16 %v6604, %v6602
    %v6649 = vpack.c.b16 %v6605, %v6603
    %v6650 = vpack.c.b16 %v6608, %v6606
    %v6651 = vpack.c.b16 %v6609, %v6607
    %v6652 = vpack.c.b16 %v6612, %v6610
    %v6653 = vpack.c.b16 %v6613, %v6611
    %v6654 = vpack.c.b16 %v6616, %v6614
    %v6655 = vpack.c.b16 %v6617, %v6615
    %v6656 = vpack.c.b16 %v6620, %v6618
    %v6657 = vpack.c.b16 %v6621, %v6619
    %v6658 = vpack.c.b16 %v6624, %v6622
    %v6659 = vpack.c.b16 %v6625, %v6623
    %v6660 = vpack.c.b16 %v6628, %v6626
    %v6661 = vpack.c.b16 %v6629, %v6627
    %6694 = vmatprep.subr.bf16.mxu0 %v6631
    %6695 = vmatpush1.bf16.msra.mxu0 %v6630
    %6696 = vmatprep.subr.bf16.mxu0 %v6633
    %6697 = vmatpush1.bf16.msra.mxu0 %v6632
    %6698 = vmatprep.subr.bf16.mxu0 %v6635
    %6699 = vmatpush1.bf16.msra.mxu0 %v6634
    %6700 = vmatprep.subr.bf16.mxu0 %v6637
    %6701 = vmatpush1.bf16.msra.mxu0 %v6636
    %6702 = vmatprep.subr.bf16.mxu0 %v6639
    %6703 = vmatpush1.bf16.msra.mxu0 %v6638
    %6704 = vmatprep.subr.bf16.mxu0 %v6641
    %6705 = vmatpush1.bf16.msra.mxu0 %v6640
    %6706 = vmatprep.subr.bf16.mxu0 %v6643
    %6707 = vmatpush1.bf16.msra.mxu0 %v6642
    %6708 = vmatprep.subr.bf16.mxu0 %v6645
    %6709 = vmatpush1.bf16.msra.mxu0 %v6644
    %6710 = vmatprep.subr.bf16.mxu0 %v6647
    %6711 = vmatpush1.bf16.msra.mxu0 %v6646
    %6712 = vmatprep.subr.bf16.mxu0 %v6649
    %6713 = vmatpush1.bf16.msra.mxu0 %v6648
    %6714 = vmatprep.subr.bf16.mxu0 %v6651
    %6715 = vmatpush1.bf16.msra.mxu0 %v6650
    %6716 = vmatprep.subr.bf16.mxu0 %v6653
    %6717 = vmatpush1.bf16.msra.mxu0 %v6652
    %6718 = vmatprep.subr.bf16.mxu0 %v6655
    %6719 = vmatpush1.bf16.msra.mxu0 %v6654
    %6720 = vmatprep.subr.bf16.mxu0 %v6657
    %6721 = vmatpush1.bf16.msra.mxu0 %v6656
    %6722 = vmatprep.subr.bf16.mxu0 %v6659
    %6723 = vmatpush1.bf16.msra.mxu0 %v6658
    %6724 = vmatprep.subr.bf16.mxu0 %v6661
    %6725 = vmatpush1.bf16.msra.mxu0 %v6660
    %6726 = vmatprep.mubr.bf16.mxu0 %v5167
    %6727 = vmatmul.mubr.bf16.gmra.mrb[0].mxu0 %v5166
    %v6728 = vpop.f32.mrb[0].mxu0
    %v6729 = vadd.f32 0.0, %v6728
    %v6730 = vpop.f32.mrb[0].mxu0
    %v6731 = vadd.f32 0.0, %v6730
    %v6732 = vpop.f32.mrb[0].mxu0
    %v6733 = vadd.f32 0.0, %v6732
    %v6734 = vpop.f32.mrb[0].mxu0
    %v6735 = vadd.f32 0.0, %v6734
    %6736 = vmatprep.mubr.bf16.mxu0 %v5169
    %6737 = vmatmul.mubr.bf16.gmra.mrb[0].mxu0 %v5168
    %v6738 = vpop.f32.mrb[0].mxu0
    %v6739 = vadd.f32 0.0, %v6738
    %v6740 = vpop.f32.mrb[0].mxu0
    %v6741 = vadd.f32 0.0, %v6740
    %v6742 = vpop.f32.mrb[0].mxu0
    %v6743 = vadd.f32 0.0, %v6742
    %v6744 = vpop.f32.mrb[0].mxu0
    %v6745 = vadd.f32 0.0, %v6744
    %6746 = vdwg.mxu0
    %s6747 = scalar_lea.vmem [#allocation13], 64
    %v6748 = vld [vmem:[%s6747] sm:$0xff]
    %v6749 = vld [vmem:[%s6747 + $0x8] sm:$0xff]
    %v6751 = vsel %vm5665, %v6748, 0
    %v6754 = vsel %vm5665, %v6749, 0
    %6756 = vmatprep.subr.mxu0 %v6731
    %6757 = vmatpush1.msra.mxu0 %v6729
    %6758 = vmatprep.subr.mxu0 %v6735
    %6759 = vmatpush1.msra.mxu0 %v6733
    %6760 = vmatprep.subr.mxu0 %v6741
    %6761 = vmatpush1.msra.mxu0 %v6739
    %6762 = vmatprep.subr.mxu0 %v6745
    %6763 = vmatpush1.msra.mxu0 %v6743
    %6764 = vmatprep.subr.mxu0 0.0
    %6765 = vmatpush1.msra.mxu0 0.0
    %6766 = vmatprep.subr.mxu0 0.0
    %6767 = vmatpush1.msra.mxu0 0.0
    %6768 = vmatprep.subr.mxu0 0.0
    %6769 = vmatpush1.msra.mxu0 0.0
    %6770 = vmatprep.subr.mxu0 0.0
    %6771 = vmatpush1.msra.mxu0 0.0
    %6772 = vmatprep.subr.mxu0 0.0
    %6773 = vmatpush1.msra.mxu0 0.0
    %6774 = vmatprep.subr.mxu0 0.0
    %6775 = vmatpush1.msra.mxu0 0.0
    %6776 = vmatprep.subr.mxu0 0.0
    %6777 = vmatpush1.msra.mxu0 0.0
    %6778 = vmatprep.subr.mxu0 0.0
    %6779 = vmatpush1.msra.mxu0 0.0
    %6780 = vmatprep.subr.mxu0 0.0
    %6781 = vmatpush1.msra.mxu0 0.0
    %6782 = vmatprep.subr.mxu0 0.0
    %6783 = vmatpush1.msra.mxu0 0.0
    %6784 = vmatprep.subr.mxu0 0.0
    %6785 = vmatpush1.msra.mxu0 0.0
    %6786 = vmatprep.subr.mxu0 0.0
    %6787 = vmatpush1.msra.mxu0 0.0
    %6788 = vmatprep.subr.mxu0 0.0
    %6789 = vmatpush1.msra.mxu0 0.0
    %6790 = vmatprep.subr.mxu0 0.0
    %6791 = vmatpush1.msra.mxu0 0.0
    %6792 = vmatprep.subr.mxu0 0.0
    %6793 = vmatpush1.msra.mxu0 0.0
    %6794 = vmatprep.subr.mxu0 0.0
    %6795 = vmatpush1.msra.mxu0 0.0
    %6796 = vmatprep.subr.mxu0 0.0
    %6797 = vmatpush1.msra.mxu0 0.0
    %6798 = vmatprep.subr.mxu0 0.0
    %6799 = vmatpush1.msra.mxu0 0.0
    %6800 = vmatprep.subr.mxu0 0.0
    %6801 = vmatpush1.msra.mxu0 0.0
    %6802 = vmatprep.subr.mxu0 0.0
    %6803 = vmatpush1.msra.mxu0 0.0
    %6804 = vmatprep.subr.mxu0 0.0
    %6805 = vmatpush1.msra.mxu0 0.0
    %6806 = vmatprep.subr.mxu0 0.0
    %6807 = vmatpush1.msra.mxu0 0.0
    %6808 = vmatprep.subr.mxu0 0.0
    %6809 = vmatpush1.msra.mxu0 0.0
    %6810 = vmatprep.subr.mxu0 0.0
    %6811 = vmatpush1.msra.mxu0 0.0
    %6812 = vmatprep.subr.mxu0 0.0
    %6813 = vmatpush1.msra.mxu0 0.0
    %6814 = vmatprep.subr.mxu0 0.0
    %6815 = vmatpush1.msra.mxu0 0.0
    %6816 = vmatprep.subr.mxu0 0.0
    %6817 = vmatpush1.msra.mxu0 0.0
    %6818 = vmatprep.subr.mxu0 0.0
    %6819 = vmatpush1.msra.mxu0 0.0
    %6820 = vmatprep.mubr.f32.mxu0 0.0
    %6821 = vmatmul.mubr.f32.gmra.mrb[0].mxu0 %v6751
    %v6822 = vpop.f32.mrb[0].mxu0
    %v6823 = vadd.f32 0.0, %v6822
    %v6824 = vpop.f32.mrb[0].mxu0
    %v6825 = vadd.f32 0.0, %v6824
    %6826 = vmatprep.mubr.f32.mxu0 0.0
    %6827 = vmatmul.mubr.f32.gmra.mrb[0].mxu0 %v6754
    %v6828 = vpop.f32.mrb[0].mxu0
    %v6829 = vadd.f32 0.0, %v6828
    %v6830 = vpop.f32.mrb[0].mxu0
    %v6831 = vadd.f32 0.0, %v6830
    %6832 = vdwg.mxu0
    %v6833 = vadd.f32 %v6498, %v6823
    %v6834 = vadd.f32 %v6499, %v6825
    %v6835 = vadd.f32 %v6500, %v6829
    %v6836 = vadd.f32 %v6501, %v6831
    %v6837 = vadd.f32 %v6833, %v6835
    %v6838 = vrot.slane %v6837, 4
    %v6839 = vadd.f32 %v6837, %v6838
    %v6840 = vrot.slane %v6839, 2
    %v6841 = vadd.f32 %v6839, %v6840
    %v6842 = vrot.slane %v6841, 1
    %v6843 = vadd.f32 %v6841, %v6842
    %v6844 = vadd.f32 %v6834, %v6836
    %v6845 = vrot.slane %v6844, 4
    %v6846 = vadd.f32 %v6844, %v6845
    %v6847 = vrot.slane %v6846, 2
    %v6848 = vadd.f32 %v6846, %v6847
    %v6849 = vrot.slane %v6848, 1
    %v6850 = vadd.f32 %v6848, %v6849
    %v6851 = vmul.f32 %v6833, %v6833
    %v6852 = vmul.f32 %v6834, %v6834
    %v6853 = vmul.f32 %v6835, %v6835
    %v6854 = vmul.f32 %v6836, %v6836
    %v6855 = vadd.f32 %v6851, %v6853
    %v6856 = vrot.slane %v6855, 4
    %v6857 = vadd.f32 %v6855, %v6856
    %v6858 = vrot.slane %v6857, 2
    %v6859 = vadd.f32 %v6857, %v6858
    %v6860 = vrot.slane %v6859, 1
    %v6861 = vadd.f32 %v6859, %v6860
    %v6862 = vadd.f32 %v6852, %v6854
    %v6863 = vrot.slane %v6862, 4
    %v6864 = vadd.f32 %v6862, %v6863
    %v6865 = vrot.slane %v6864, 2
    %v6866 = vadd.f32 %v6864, %v6865
    %v6867 = vrot.slane %v6866, 1
    %v6868 = vadd.f32 %v6866, %v6867
    %v6869 = vld [vmem:[#allocation15] sm:$0xff]
    %v6870 = vld [vmem:[#allocation15 + $0x8] sm:$0xff]
    %v6871 = vld [vmem:[#allocation15 + $0x10] sm:$0xff]
    %v6872 = vld [vmem:[#allocation15 + $0x18] sm:$0xff]
    %v6873 = vld [vmem:[#allocation15 + $0x20] sm:$0xff]
    %v6874 = vld [vmem:[#allocation15 + $0x28] sm:$0xff]
    %v6875 = vld [vmem:[#allocation15 + $0x30] sm:$0xff]
    %v6876 = vld [vmem:[#allocation15 + $0x38] sm:$0xff]
    %v6877 = vld [vmem:[#allocation15 + $0x40] sm:$0xff]
    %v6878 = vld [vmem:[#allocation15 + $0x48] sm:$0xff]
    %v6879 = vld [vmem:[#allocation15 + $0x50] sm:$0xff]
    %v6880 = vld [vmem:[#allocation15 + $0x58] sm:$0xff]
    %v6881 = vld [vmem:[#allocation15 + $0x60] sm:$0xff]
    %v6882 = vld [vmem:[#allocation15 + $0x68] sm:$0xff]
    %v6883 = vld [vmem:[#allocation15 + $0x70] sm:$0xff]
    %v6884 = vld [vmem:[#allocation15 + $0x78] sm:$0xff]
    %v6885 = vld [vmem:[#allocation15 + $0x80] sm:$0xff]
    %v6886 = vld [vmem:[#allocation15 + $0x88] sm:$0xff]
    %v6887 = vld [vmem:[#allocation15 + $0x90] sm:$0xff]
    %v6888 = vld [vmem:[#allocation15 + $0x98] sm:$0xff]
    %v6889 = vld [vmem:[#allocation15 + $0xa0] sm:$0xff]
    %v6890 = vld [vmem:[#allocation15 + $0xa8] sm:$0xff]
    %v6891 = vld [vmem:[#allocation15 + $0xb0] sm:$0xff]
    %v6892 = vld [vmem:[#allocation15 + $0xb8] sm:$0xff]
    %v6893 = vld [vmem:[#allocation15 + $0xc0] sm:$0xff]
    %v6894 = vld [vmem:[#allocation15 + $0xc8] sm:$0xff]
    %v6895 = vld [vmem:[#allocation15 + $0xd0] sm:$0xff]
    %v6896 = vld [vmem:[#allocation15 + $0xd8] sm:$0xff]
    %v6897 = vld [vmem:[#allocation15 + $0xe0] sm:$0xff]
    %v6898 = vld [vmem:[#allocation15 + $0xe8] sm:$0xff]
    %v6899 = vld [vmem:[#allocation15 + $0xf0] sm:$0xff]
    %v6900 = vld [vmem:[#allocation15 + $0xf8] sm:$0xff]
    %6901 = vmatprep.subr.mxu0 0.0
    %6902 = vmatpush1.msra.mxu0 %v6869
    %6903 = vmatprep.subr.mxu0 0.0
    %6904 = vmatpush1.msra.mxu0 %v6870
    %6905 = vmatprep.subr.mxu0 0.0
    %6906 = vmatpush1.msra.mxu0 %v6871
    %6907 = vmatprep.subr.mxu0 0.0
    %6908 = vmatpush1.msra.mxu0 %v6872
    %6909 = vmatprep.subr.mxu0 0.0
    %6910 = vmatpush1.msra.mxu0 %v6873
    %6911 = vmatprep.subr.mxu0 0.0
    %6912 = vmatpush1.msra.mxu0 %v6874
    %6913 = vmatprep.subr.mxu0 0.0
    %6914 = vmatpush1.msra.mxu0 %v6875
    %6915 = vmatprep.subr.mxu0 0.0
    %6916 = vmatpush1.msra.mxu0 %v6876
    %6917 = vmatprep.subr.mxu0 0.0
    %6918 = vmatpush1.msra.mxu0 %v6877
    %6919 = vmatprep.subr.mxu0 0.0
    %6920 = vmatpush1.msra.mxu0 %v6878
    %6921 = vmatprep.subr.mxu0 0.0
    %6922 = vmatpush1.msra.mxu0 %v6879
    %6923 = vmatprep.subr.mxu0 0.0
    %6924 = vmatpush1.msra.mxu0 %v6880
    %6925 = vmatprep.subr.mxu0 0.0
    %6926 = vmatpush1.msra.mxu0 %v6881
    %6927 = vmatprep.subr.mxu0 0.0
    %6928 = vmatpush1.msra.mxu0 %v6882
    %6929 = vmatprep.subr.mxu0 0.0
    %6930 = vmatpush1.msra.mxu0 %v6883
    %6931 = vmatprep.subr.mxu0 0.0
    %6932 = vmatpush1.msra.mxu0 %v6884
    %6933 = vmatprep.subr.mxu0 0.0
    %6934 = vmatpush1.msra.mxu0 %v6885
    %6935 = vmatprep.subr.mxu0 0.0
    %6936 = vmatpush1.msra.mxu0 %v6886
    %6937 = vmatprep.subr.mxu0 0.0
    %6938 = vmatpush1.msra.mxu0 %v6887
    %6939 = vmatprep.subr.mxu0 0.0
    %6940 = vmatpush1.msra.mxu0 %v6888
    %6941 = vmatprep.subr.mxu0 0.0
    %6942 = vmatpush1.msra.mxu0 %v6889
    %6943 = vmatprep.subr.mxu0 0.0
    %6944 = vmatpush1.msra.mxu0 %v6890
    %6945 = vmatprep.subr.mxu0 0.0
    %6946 = vmatpush1.msra.mxu0 %v6891
    %6947 = vmatprep.subr.mxu0 0.0
    %6948 = vmatpush1.msra.mxu0 %v6892
    %6949 = vmatprep.subr.mxu0 0.0
    %6950 = vmatpush1.msra.mxu0 %v6893
    %6951 = vmatprep.subr.mxu0 0.0
    %6952 = vmatpush1.msra.mxu0 %v6894
    %6953 = vmatprep.subr.mxu0 0.0
    %6954 = vmatpush1.msra.mxu0 %v6895
    %6955 = vmatprep.subr.mxu0 0.0
    %6956 = vmatpush1.msra.mxu0 %v6896
    %6957 = vmatprep.subr.mxu0 0.0
    %6958 = vmatpush1.msra.mxu0 %v6897
    %6959 = vmatprep.subr.mxu0 0.0
    %6960 = vmatpush1.msra.mxu0 %v6898
    %6961 = vmatprep.subr.mxu0 0.0
    %6962 = vmatpush1.msra.mxu0 %v6899
    %6963 = vmatprep.subr.mxu0 0.0
    %6964 = vmatpush1.msra.mxu0 %v6900
    %6965 = vmatprep.mubr.f32.mxu0 %v6850
    %6966 = vmatmul.mubr.f32.gmra.mrb[0].mxu0 %v6843
    %v6967 = vpop.f32.mrb[0].mxu0
    %v6968 = vadd.f32 0.0, %v6967
    %v6969 = vpop.f32.mrb[0].mxu0
    %6970 = vdwg.mxu0
    %6971 = vmatprep.subr.mxu0 0.0
    %6972 = vmatpush1.msra.mxu0 %v6869
    %6973 = vmatprep.subr.mxu0 0.0
    %6974 = vmatpush1.msra.mxu0 %v6870
    %6975 = vmatprep.subr.mxu0 0.0
    %6976 = vmatpush1.msra.mxu0 %v6871
    %6977 = vmatprep.subr.mxu0 0.0
    %6978 = vmatpush1.msra.mxu0 %v6872
    %6979 = vmatprep.subr.mxu0 0.0
    %6980 = vmatpush1.msra.mxu0 %v6873
    %6981 = vmatprep.subr.mxu0 0.0
    %6982 = vmatpush1.msra.mxu0 %v6874
    %6983 = vmatprep.subr.mxu0 0.0
    %6984 = vmatpush1.msra.mxu0 %v6875
    %6985 = vmatprep.subr.mxu0 0.0
    %6986 = vmatpush1.msra.mxu0 %v6876
    %6987 = vmatprep.subr.mxu0 0.0
    %6988 = vmatpush1.msra.mxu0 %v6877
    %6989 = vmatprep.subr.mxu0 0.0
    %6990 = vmatpush1.msra.mxu0 %v6878
    %6991 = vmatprep.subr.mxu0 0.0
    %6992 = vmatpush1.msra.mxu0 %v6879
    %6993 = vmatprep.subr.mxu0 0.0
    %6994 = vmatpush1.msra.mxu0 %v6880
    %6995 = vmatprep.subr.mxu0 0.0
    %6996 = vmatpush1.msra.mxu0 %v6881
    %6997 = vmatprep.subr.mxu0 0.0
    %6998 = vmatpush1.msra.mxu0 %v6882
    %6999 = vmatprep.subr.mxu0 0.0
    %7000 = vmatpush1.msra.mxu0 %v6883
    %7001 = vmatprep.subr.mxu0 0.0
    %7002 = vmatpush1.msra.mxu0 %v6884
    %7003 = vmatprep.subr.mxu0 0.0
    %7004 = vmatpush1.msra.mxu0 %v6885
    %7005 = vmatprep.subr.mxu0 0.0
    %7006 = vmatpush1.msra.mxu0 %v6886
    %7007 = vmatprep.subr.mxu0 0.0
    %7008 = vmatpush1.msra.mxu0 %v6887
    %7009 = vmatprep.subr.mxu0 0.0
    %7010 = vmatpush1.msra.mxu0 %v6888
    %7011 = vmatprep.subr.mxu0 0.0
    %7012 = vmatpush1.msra.mxu0 %v6889
    %7013 = vmatprep.subr.mxu0 0.0
    %7014 = vmatpush1.msra.mxu0 %v6890
    %7015 = vmatprep.subr.mxu0 0.0
    %7016 = vmatpush1.msra.mxu0 %v6891
    %7017 = vmatprep.subr.mxu0 0.0
    %7018 = vmatpush1.msra.mxu0 %v6892
    %7019 = vmatprep.subr.mxu0 0.0
    %7020 = vmatpush1.msra.mxu0 %v6893
    %7021 = vmatprep.subr.mxu0 0.0
    %7022 = vmatpush1.msra.mxu0 %v6894
    %7023 = vmatprep.subr.mxu0 0.0
    %7024 = vmatpush1.msra.mxu0 %v6895
    %7025 = vmatprep.subr.mxu0 0.0
    %7026 = vmatpush1.msra.mxu0 %v6896
    %7027 = vmatprep.subr.mxu0 0.0
    %7028 = vmatpush1.msra.mxu0 %v6897
    %7029 = vmatprep.subr.mxu0 0.0
    %7030 = vmatpush1.msra.mxu0 %v6898
    %7031 = vmatprep.subr.mxu0 0.0
    %7032 = vmatpush1.msra.mxu0 %v6899
    %7033 = vmatprep.subr.mxu0 0.0
    %7034 = vmatpush1.msra.mxu0 %v6900
    %7035 = vmatprep.mubr.f32.mxu0 %v6868
    %7036 = vmatmul.mubr.f32.gmra.mrb[0].mxu0 %v6861
    %v7037 = vpop.f32.mrb[0].mxu0
    %v7038 = vadd.f32 0.0, %v7037
    %v7039 = vpop.f32.mrb[0].mxu0
    %7040 = vdwg.mxu0
    %v7041 = vmul.f32 %v6968, 0.0078125
    %v7042 = vmul.f32 %v7038, 0.0078125
    %v7043 = vmul.f32 %v7041, %v7041
    %v7044 = vsub.f32 %v7042, %v7043
    %v7045 = vmax.f32 %v7044, 0.0
    %v7046 = vld [vmem:[%s17] sm:$0x1]
    %v7047 = vadd.f32 %v7045, 1e-05
    %v7048 = vrsqrt.pop %v7047
    %v7049 = vmul.f32 %v7046, %v7048
    %v7050 = vld [vmem:[%s18] sm:$0x1]
    %v7051 = vmul.f32 %v7041, %v7049
    %v7052 = vsub.f32 %v7050, %v7051
    %v7053 = vld [vmem:[#allocation16] sm:$0xff]
    %v7054 = vld [vmem:[#allocation16 + $0x8] sm:$0xff]
    %v7055 = vld [vmem:[#allocation16 + $0x10] sm:$0xff]
    %v7056 = vld [vmem:[#allocation16 + $0x18] sm:$0xff]
    %v7057 = vld [vmem:[#allocation16 + $0x20] sm:$0xff]
    %v7058 = vld [vmem:[#allocation16 + $0x28] sm:$0xff]
    %v7059 = vld [vmem:[#allocation16 + $0x30] sm:$0xff]
    %v7060 = vld [vmem:[#allocation16 + $0x38] sm:$0xff]
    %v7061 = vld [vmem:[#allocation16 + $0x40] sm:$0xff]
    %v7062 = vld [vmem:[#allocation16 + $0x48] sm:$0xff]
    %v7063 = vld [vmem:[#allocation16 + $0x50] sm:$0xff]
    %v7064 = vld [vmem:[#allocation16 + $0x58] sm:$0xff]
    %v7065 = vld [vmem:[#allocation16 + $0x60] sm:$0xff]
    %v7066 = vld [vmem:[#allocation16 + $0x68] sm:$0xff]
    %v7067 = vld [vmem:[#allocation16 + $0x70] sm:$0xff]
    %v7068 = vld [vmem:[#allocation16 + $0x78] sm:$0xff]
    %v7069 = vld [vmem:[#allocation16 + $0x80] sm:$0xff]
    %v7070 = vld [vmem:[#allocation16 + $0x88] sm:$0xff]
    %v7071 = vld [vmem:[#allocation16 + $0x90] sm:$0xff]
    %v7072 = vld [vmem:[#allocation16 + $0x98] sm:$0xff]
    %v7073 = vld [vmem:[#allocation16 + $0xa0] sm:$0xff]
    %v7074 = vld [vmem:[#allocation16 + $0xa8] sm:$0xff]
    %v7075 = vld [vmem:[#allocation16 + $0xb0] sm:$0xff]
    %v7076 = vld [vmem:[#allocation16 + $0xb8] sm:$0xff]
    %v7077 = vld [vmem:[#allocation16 + $0xc0] sm:$0xff]
    %v7078 = vld [vmem:[#allocation16 + $0xc8] sm:$0xff]
    %v7079 = vld [vmem:[#allocation16 + $0xd0] sm:$0xff]
    %v7080 = vld [vmem:[#allocation16 + $0xd8] sm:$0xff]
    %v7081 = vld [vmem:[#allocation16 + $0xe0] sm:$0xff]
    %v7082 = vld [vmem:[#allocation16 + $0xe8] sm:$0xff]
    %v7083 = vld [vmem:[#allocation16 + $0xf0] sm:$0xff]
    %v7084 = vld [vmem:[#allocation16 + $0xf8] sm:$0xff]
    %7085 = vmatprep.subr.mxu0 %v7054
    %7086 = vmatpush1.msra.mxu0 %v7053
    %7087 = vmatprep.subr.mxu0 %v7056
    %7088 = vmatpush1.msra.mxu0 %v7055
    %7089 = vmatprep.subr.mxu0 %v7058
    %7090 = vmatpush1.msra.mxu0 %v7057
    %7091 = vmatprep.subr.mxu0 %v7060
    %7092 = vmatpush1.msra.mxu0 %v7059
    %7093 = vmatprep.subr.mxu0 %v7062
    %7094 = vmatpush1.msra.mxu0 %v7061
    %7095 = vmatprep.subr.mxu0 %v7064
    %7096 = vmatpush1.msra.mxu0 %v7063
    %7097 = vmatprep.subr.mxu0 %v7066
    %7098 = vmatpush1.msra.mxu0 %v7065
    %7099 = vmatprep.subr.mxu0 %v7068
    %7100 = vmatpush1.msra.mxu0 %v7067
    %7101 = vmatprep.subr.mxu0 %v7070
    %7102 = vmatpush1.msra.mxu0 %v7069
    %7103 = vmatprep.subr.mxu0 %v7072
    %7104 = vmatpush1.msra.mxu0 %v7071
    %7105 = vmatprep.subr.mxu0 %v7074
    %7106 = vmatpush1.msra.mxu0 %v7073
    %7107 = vmatprep.subr.mxu0 %v7076
    %7108 = vmatpush1.msra.mxu0 %v7075
    %7109 = vmatprep.subr.mxu0 %v7078
    %7110 = vmatpush1.msra.mxu0 %v7077
    %7111 = vmatprep.subr.mxu0 %v7080
    %7112 = vmatpush1.msra.mxu0 %v7079
    %7113 = vmatprep.subr.mxu0 %v7082
    %7114 = vmatpush1.msra.mxu0 %v7081
    %7115 = vmatprep.subr.mxu0 %v7084
    %7116 = vmatpush1.msra.mxu0 %v7083
    %7117 = vmatprep.subr.mxu0 0.0
    %7118 = vmatpush1.msra.mxu0 0.0
    %7119 = vmatprep.subr.mxu0 0.0
    %7120 = vmatpush1.msra.mxu0 0.0
    %7121 = vmatprep.subr.mxu0 0.0
    %7122 = vmatpush1.msra.mxu0 0.0
    %7123 = vmatprep.subr.mxu0 0.0
    %7124 = vmatpush1.msra.mxu0 0.0
    %7125 = vmatprep.subr.mxu0 0.0
    %7126 = vmatpush1.msra.mxu0 0.0
    %7127 = vmatprep.subr.mxu0 0.0
    %7128 = vmatpush1.msra.mxu0 0.0
    %7129 = vmatprep.subr.mxu0 0.0
    %7130 = vmatpush1.msra.mxu0 0.0
    %7131 = vmatprep.subr.mxu0 0.0
    %7132 = vmatpush1.msra.mxu0 0.0
    %7133 = vmatprep.subr.mxu0 0.0
    %7134 = vmatpush1.msra.mxu0 0.0
    %7135 = vmatprep.subr.mxu0 0.0
    %7136 = vmatpush1.msra.mxu0 0.0
    %7137 = vmatprep.subr.mxu0 0.0
    %7138 = vmatpush1.msra.mxu0 0.0
    %7139 = vmatprep.subr.mxu0 0.0
    %7140 = vmatpush1.msra.mxu0 0.0
    %7141 = vmatprep.subr.mxu0 0.0
    %7142 = vmatpush1.msra.mxu0 0.0
    %7143 = vmatprep.subr.mxu0 0.0
    %7144 = vmatpush1.msra.mxu0 0.0
    %7145 = vmatprep.subr.mxu0 0.0
    %7146 = vmatpush1.msra.mxu0 0.0
    %7147 = vmatprep.subr.mxu0 0.0
    %7148 = vmatpush1.msra.mxu0 0.0
    %7149 = vmatprep.mubr.f32.mxu0 0.0
    %7150 = vmatmul.mubr.f32.gmra.mrb[0].mxu0 %v7049
    %v7151 = vpop.f32.mrb[0].mxu0
    %v7152 = vadd.f32 0.0, %v7151
    %v7153 = vpop.f32.mrb[0].mxu0
    %v7154 = vadd.f32 0.0, %v7153
    %7155 = vdwg.mxu0
    %7156 = vmatprep.subr.mxu0 %v7054
    %7157 = vmatpush1.msra.mxu0 %v7053
    %7158 = vmatprep.subr.mxu0 %v7056
    %7159 = vmatpush1.msra.mxu0 %v7055
    %7160 = vmatprep.subr.mxu0 %v7058
    %7161 = vmatpush1.msra.mxu0 %v7057
    %7162 = vmatprep.subr.mxu0 %v7060
    %7163 = vmatpush1.msra.mxu0 %v7059
    %7164 = vmatprep.subr.mxu0 %v7062
    %7165 = vmatpush1.msra.mxu0 %v7061
    %7166 = vmatprep.subr.mxu0 %v7064
    %7167 = vmatpush1.msra.mxu0 %v7063
    %7168 = vmatprep.subr.mxu0 %v7066
    %7169 = vmatpush1.msra.mxu0 %v7065
    %7170 = vmatprep.subr.mxu0 %v7068
    %7171 = vmatpush1.msra.mxu0 %v7067
    %7172 = vmatprep.subr.mxu0 %v7070
    %7173 = vmatpush1.msra.mxu0 %v7069
    %7174 = vmatprep.subr.mxu0 %v7072
    %7175 = vmatpush1.msra.mxu0 %v7071
    %7176 = vmatprep.subr.mxu0 %v7074
    %7177 = vmatpush1.msra.mxu0 %v7073
    %7178 = vmatprep.subr.mxu0 %v7076
    %7179 = vmatpush1.msra.mxu0 %v7075
    %7180 = vmatprep.subr.mxu0 %v7078
    %7181 = vmatpush1.msra.mxu0 %v7077
    %7182 = vmatprep.subr.mxu0 %v7080
    %7183 = vmatpush1.msra.mxu0 %v7079
    %7184 = vmatprep.subr.mxu0 %v7082
    %7185 = vmatpush1.msra.mxu0 %v7081
    %7186 = vmatprep.subr.mxu0 %v7084
    %7187 = vmatpush1.msra.mxu0 %v7083
    %7188 = vmatprep.subr.mxu0 0.0
    %7189 = vmatpush1.msra.mxu0 0.0
    %7190 = vmatprep.subr.mxu0 0.0
    %7191 = vmatpush1.msra.mxu0 0.0
    %7192 = vmatprep.subr.mxu0 0.0
    %7193 = vmatpush1.msra.mxu0 0.0
    %7194 = vmatprep.subr.mxu0 0.0
    %7195 = vmatpush1.msra.mxu0 0.0
    %7196 = vmatprep.subr.mxu0 0.0
    %7197 = vmatpush1.msra.mxu0 0.0
    %7198 = vmatprep.subr.mxu0 0.0
    %7199 = vmatpush1.msra.mxu0 0.0
    %7200 = vmatprep.subr.mxu0 0.0
    %7201 = vmatpush1.msra.mxu0 0.0
    %7202 = vmatprep.subr.mxu0 0.0
    %7203 = vmatpush1.msra.mxu0 0.0
    %7204 = vmatprep.subr.mxu0 0.0
    %7205 = vmatpush1.msra.mxu0 0.0
    %7206 = vmatprep.subr.mxu0 0.0
    %7207 = vmatpush1.msra.mxu0 0.0
    %7208 = vmatprep.subr.mxu0 0.0
    %7209 = vmatpush1.msra.mxu0 0.0
    %7210 = vmatprep.subr.mxu0 0.0
    %7211 = vmatpush1.msra.mxu0 0.0
    %7212 = vmatprep.subr.mxu0 0.0
    %7213 = vmatpush1.msra.mxu0 0.0
    %7214 = vmatprep.subr.mxu0 0.0
    %7215 = vmatpush1.msra.mxu0 0.0
    %7216 = vmatprep.subr.mxu0 0.0
    %7217 = vmatpush1.msra.mxu0 0.0
    %7218 = vmatprep.subr.mxu0 0.0
    %7219 = vmatpush1.msra.mxu0 0.0
    %7220 = vmatprep.mubr.f32.mxu0 0.0
    %7221 = vmatmul.mubr.f32.gmra.mrb[0].mxu0 %v7052
    %v7222 = vpop.f32.mrb[0].mxu0
    %v7223 = vadd.f32 0.0, %v7222
    %v7224 = vpop.f32.mrb[0].mxu0
    %v7225 = vadd.f32 0.0, %v7224
    %7226 = vdwg.mxu0
    %v7227 = vlaneseq
    %v7228 = vshrl.u32 %v7227, 7
    %v7229 = vsub.s32 0, %v7228
    %v7230 = vrot.slane %v7152, %v7229
    %v7231 = vlaneseq
    %v7232 = vshrl.u32 %v7231, 7
    %v7233 = vsub.s32 0, %v7232
    %v7234 = vrot.slane %v7154, %v7233
    %v7235 = vmul.f32 %v6833, %v7230
    %v7236 = vmul.f32 %v6834, %v7234
    %v7237 = vmul.f32 %v6835, %v7230
    %v7238 = vmul.f32 %v6836, %v7234
    %v7239 = vlaneseq
    %v7240 = vshrl.u32 %v7239, 7
    %v7241 = vsub.s32 0, %v7240
    %v7242 = vrot.slane %v7223, %v7241
    %v7243 = vlaneseq
    %v7244 = vshrl.u32 %v7243, 7
    %v7245 = vsub.s32 0, %v7244
    %v7246 = vrot.slane %v7225, %v7245
    %v7247 = vadd.f32 %v7235, %v7242
    %v7248 = vadd.f32 %v7236, %v7246
    %v7249 = vadd.f32 %v7237, %v7242
    %v7250 = vadd.f32 %v7238, %v7246
    %v7251 = vmax.f32 %v7247, 0.0
    %v7252 = vmax.f32 %v7248, 0.0
    %v7253 = vmax.f32 %v7249, 0.0
    %v7254 = vmax.f32 %v7250, 0.0
    %v7255 = vpack.c.bf16 %v7253, %v7251
    %v7256 = vpack.c.bf16 %v7254, %v7252
    %v7257 = vld [vmem:[#allocation18] sm:$0xff]
    %v7258 = vld [vmem:[#allocation18 + $0x28] sm:$0xff]
    %v7259 = vld [vmem:[#allocation18 + $0x50] sm:$0xff]
    %v7260 = vld [vmem:[#allocation18 + $0x78] sm:$0xff]
    %v7261 = vld [vmem:[#allocation18 + $0xa0] sm:$0xff]
    %v7262 = vld [vmem:[#allocation18 + $0xc8] sm:$0xff]
    %v7263 = vld [vmem:[#allocation18 + $0xf0] sm:$0xff]
    %v7264 = vld [vmem:[#allocation18 + $0x118] sm:$0xff]
    %v7265 = vld [vmem:[#allocation18 + $0x140] sm:$0xff]
    %v7266 = vld [vmem:[#allocation18 + $0x168] sm:$0xff]
    %v7267 = vld [vmem:[#allocation18 + $0x190] sm:$0xff]
    %v7268 = vld [vmem:[#allocation18 + $0x1b8] sm:$0xff]
    %v7269 = vld [vmem:[#allocation18 + $0x1e0] sm:$0xff]
    %v7270 = vld [vmem:[#allocation18 + $0x208] sm:$0xff]
    %v7271 = vld [vmem:[#allocation18 + $0x230] sm:$0xff]
    %v7272 = vld [vmem:[#allocation18 + $0x258] sm:$0xff]
    %v7273 = vld [vmem:[#allocation18 + $0x280] sm:$0xff]
    %v7274 = vld [vmem:[#allocation18 + $0x2a8] sm:$0xff]
    %v7275 = vld [vmem:[#allocation18 + $0x2d0] sm:$0xff]
    %v7276 = vld [vmem:[#allocation18 + $0x2f8] sm:$0xff]
    %v7277 = vld [vmem:[#allocation18 + $0x320] sm:$0xff]
    %v7278 = vld [vmem:[#allocation18 + $0x348] sm:$0xff]
    %v7279 = vld [vmem:[#allocation18 + $0x370] sm:$0xff]
    %v7280 = vld [vmem:[#allocation18 + $0x398] sm:$0xff]
    %v7281 = vld [vmem:[#allocation18 + $0x3c0] sm:$0xff]
    %v7282 = vld [vmem:[#allocation18 + $0x3e8] sm:$0xff]
    %v7283 = vld [vmem:[#allocation18 + $0x410] sm:$0xff]
    %v7284 = vld [vmem:[#allocation18 + $0x438] sm:$0xff]
    %v7285 = vld [vmem:[#allocation18 + $0x460] sm:$0xff]
    %v7286 = vld [vmem:[#allocation18 + $0x488] sm:$0xff]
    %v7287 = vld [vmem:[#allocation18 + $0x4b0] sm:$0xff]
    %v7288 = vld [vmem:[#allocation18 + $0x4d8] sm:$0xff]
    %v7321 = vunpack.c.l.b16 %v7257
    %v7322 = vunpack.c.h.b16 %v7257
    %v7323 = vunpack.c.l.b16 %v7258
    %v7324 = vunpack.c.h.b16 %v7258
    %v7325 = vunpack.c.l.b16 %v7259
    %v7326 = vunpack.c.h.b16 %v7259
    %v7327 = vunpack.c.l.b16 %v7260
    %v7328 = vunpack.c.h.b16 %v7260
    %v7329 = vunpack.c.l.b16 %v7261
    %v7330 = vunpack.c.h.b16 %v7261
    %v7331 = vunpack.c.l.b16 %v7262
    %v7332 = vunpack.c.h.b16 %v7262
    %v7333 = vunpack.c.l.b16 %v7263
    %v7334 = vunpack.c.h.b16 %v7263
    %v7335 = vunpack.c.l.b16 %v7264
    %v7336 = vunpack.c.h.b16 %v7264
    %v7337 = vunpack.c.l.b16 %v7265
    %v7338 = vunpack.c.h.b16 %v7265
    %v7339 = vunpack.c.l.b16 %v7266
    %v7340 = vunpack.c.h.b16 %v7266
    %v7341 = vunpack.c.l.b16 %v7267
    %v7342 = vunpack.c.h.b16 %v7267
    %v7343 = vunpack.c.l.b16 %v7268
    %v7344 = vunpack.c.h.b16 %v7268
    %v7345 = vunpack.c.l.b16 %v7269
    %v7346 = vunpack.c.h.b16 %v7269
    %v7347 = vunpack.c.l.b16 %v7270
    %v7348 = vunpack.c.h.b16 %v7270
    %v7349 = vunpack.c.l.b16 %v7271
    %v7350 = vunpack.c.h.b16 %v7271
    %v7351 = vunpack.c.l.b16 %v7272
    %v7352 = vunpack.c.h.b16 %v7272
    %v7353 = vunpack.c.l.b16 %v7273
    %v7354 = vunpack.c.h.b16 %v7273
    %v7355 = vunpack.c.l.b16 %v7274
    %v7356 = vunpack.c.h.b16 %v7274
    %v7357 = vunpack.c.l.b16 %v7275
    %v7358 = vunpack.c.h.b16 %v7275
    %v7359 = vunpack.c.l.b16 %v7276
    %v7360 = vunpack.c.h.b16 %v7276
    %v7361 = vunpack.c.l.b16 %v7277
    %v7362 = vunpack.c.h.b16 %v7277
    %v7363 = vunpack.c.l.b16 %v7278
    %v7364 = vunpack.c.h.b16 %v7278
    %v7365 = vunpack.c.l.b16 %v7279
    %v7366 = vunpack.c.h.b16 %v7279
    %v7367 = vunpack.c.l.b16 %v7280
    %v7368 = vunpack.c.h.b16 %v7280
    %v7369 = vunpack.c.l.b16 %v7281
    %v7370 = vunpack.c.h.b16 %v7281
    %v7371 = vunpack.c.l.b16 %v7282
    %v7372 = vunpack.c.h.b16 %v7282
    %v7373 = vunpack.c.l.b16 %v7283
    %v7374 = vunpack.c.h.b16 %v7283
    %v7375 = vunpack.c.l.b16 %v7284
    %v7376 = vunpack.c.h.b16 %v7284
    %v7377 = vunpack.c.l.b16 %v7285
    %v7378 = vunpack.c.h.b16 %v7285
    %v7379 = vunpack.c.l.b16 %v7286
    %v7380 = vunpack.c.h.b16 %v7286
    %v7381 = vunpack.c.l.b16 %v7287
    %v7382 = vunpack.c.h.b16 %v7287
    %v7383 = vunpack.c.l.b16 %v7288
    %v7384 = vunpack.c.h.b16 %v7288
    %v7385 = vpack.c.b16 %v7323, %v7321
    %v7386 = vpack.c.b16 %v7324, %v7322
    %v7387 = vpack.c.b16 %v7327, %v7325
    %v7388 = vpack.c.b16 %v7328, %v7326
    %v7389 = vpack.c.b16 %v7331, %v7329
    %v7390 = vpack.c.b16 %v7332, %v7330
    %v7391 = vpack.c.b16 %v7335, %v7333
    %v7392 = vpack.c.b16 %v7336, %v7334
    %v7393 = vpack.c.b16 %v7339, %v7337
    %v7394 = vpack.c.b16 %v7340, %v7338
    %v7395 = vpack.c.b16 %v7343, %v7341
    %v7396 = vpack.c.b16 %v7344, %v7342
    %v7397 = vpack.c.b16 %v7347, %v7345
    %v7398 = vpack.c.b16 %v7348, %v7346
    %v7399 = vpack.c.b16 %v7351, %v7349
    %v7400 = vpack.c.b16 %v7352, %v7350
    %v7401 = vpack.c.b16 %v7355, %v7353
    %v7402 = vpack.c.b16 %v7356, %v7354
    %v7403 = vpack.c.b16 %v7359, %v7357
    %v7404 = vpack.c.b16 %v7360, %v7358
    %v7405 = vpack.c.b16 %v7363, %v7361
    %v7406 = vpack.c.b16 %v7364, %v7362
    %v7407 = vpack.c.b16 %v7367, %v7365
    %v7408 = vpack.c.b16 %v7368, %v7366
    %v7409 = vpack.c.b16 %v7371, %v7369
    %v7410 = vpack.c.b16 %v7372, %v7370
    %v7411 = vpack.c.b16 %v7375, %v7373
    %v7412 = vpack.c.b16 %v7376, %v7374
    %v7413 = vpack.c.b16 %v7379, %v7377
    %v7414 = vpack.c.b16 %v7380, %v7378
    %v7415 = vpack.c.b16 %v7383, %v7381
    %v7416 = vpack.c.b16 %v7384, %v7382
    %7449 = vmatprep.subr.bf16.mxu0 %v7386
    %7450 = vmatpush1.bf16.msra.mxu0 %v7385
    %7451 = vmatprep.subr.bf16.mxu0 %v7388
    %7452 = vmatpush1.bf16.msra.mxu0 %v7387
    %7453 = vmatprep.subr.bf16.mxu0 %v7390
    %7454 = vmatpush1.bf16.msra.mxu0 %v7389
    %7455 = vmatprep.subr.bf16.mxu0 %v7392
    %7456 = vmatpush1.bf16.msra.mxu0 %v7391
    %7457 = vmatprep.subr.bf16.mxu0 %v7394
    %7458 = vmatpush1.bf16.msra.mxu0 %v7393
    %7459 = vmatprep.subr.bf16.mxu0 %v7396
    %7460 = vmatpush1.bf16.msra.mxu0 %v7395
    %7461 = vmatprep.subr.bf16.mxu0 %v7398
    %7462 = vmatpush1.bf16.msra.mxu0 %v7397
    %7463 = vmatprep.subr.bf16.mxu0 %v7400
    %7464 = vmatpush1.bf16.msra.mxu0 %v7399
    %7465 = vmatprep.subr.bf16.mxu0 %v7402
    %7466 = vmatpush1.bf16.msra.mxu0 %v7401
    %7467 = vmatprep.subr.bf16.mxu0 %v7404
    %7468 = vmatpush1.bf16.msra.mxu0 %v7403
    %7469 = vmatprep.subr.bf16.mxu0 %v7406
    %7470 = vmatpush1.bf16.msra.mxu0 %v7405
    %7471 = vmatprep.subr.bf16.mxu0 %v7408
    %7472 = vmatpush1.bf16.msra.mxu0 %v7407
    %7473 = vmatprep.subr.bf16.mxu0 %v7410
    %7474 = vmatpush1.bf16.msra.mxu0 %v7409
    %7475 = vmatprep.subr.bf16.mxu0 %v7412
    %7476 = vmatpush1.bf16.msra.mxu0 %v7411
    %7477 = vmatprep.subr.bf16.mxu0 %v7414
    %7478 = vmatpush1.bf16.msra.mxu0 %v7413
    %7479 = vmatprep.subr.bf16.mxu0 %v7416
    %7480 = vmatpush1.bf16.msra.mxu0 %v7415
    %7481 = vmatprep.mubr.bf16.mxu0 %v7256
    %7482 = vmatmul.mubr.bf16.gmra.mrb[0].mxu0 %v7255
    %v7483 = vpop.f32.mrb[0].mxu0
    %v7484 = vadd.f32 0.0, %v7483
    %v7485 = vpop.f32.mrb[0].mxu0
    %v7486 = vadd.f32 0.0, %v7485
    %v7487 = vpop.f32.mrb[0].mxu0
    %v7488 = vadd.f32 0.0, %v7487
    %v7489 = vpop.f32.mrb[0].mxu0
    %v7490 = vadd.f32 0.0, %v7489
    %7491 = vdwg.mxu0
    %v7492 = vld [vmem:[#allocation19] sm:$0xff]
    %v7493 = vld [vmem:[#allocation18 + $0x8] sm:$0xff]
    %v7494 = vld [vmem:[#allocation18 + $0x30] sm:$0xff]
    %v7495 = vld [vmem:[#allocation18 + $0x58] sm:$0xff]
    %v7496 = vld [vmem:[#allocation18 + $0x80] sm:$0xff]
    %v7497 = vld [vmem:[#allocation18 + $0xa8] sm:$0xff]
    %v7498 = vld [vmem:[#allocation18 + $0xd0] sm:$0xff]
    %v7499 = vld [vmem:[#allocation18 + $0xf8] sm:$0xff]
    %v7500 = vld [vmem:[#allocation18 + $0x120] sm:$0xff]
    %v7501 = vld [vmem:[#allocation18 + $0x148] sm:$0xff]
    %v7502 = vld [vmem:[#allocation18 + $0x170] sm:$0xff]
    %v7503 = vld [vmem:[#allocation18 + $0x198] sm:$0xff]
    %v7504 = vld [vmem:[#allocation18 + $0x1c0] sm:$0xff]
    %v7505 = vld [vmem:[#allocation18 + $0x1e8] sm:$0xff]
    %v7506 = vld [vmem:[#allocation18 + $0x210] sm:$0xff]
    %v7507 = vld [vmem:[#allocation18 + $0x238] sm:$0xff]
    %v7508 = vld [vmem:[#allocation18 + $0x260] sm:$0xff]
    %v7509 = vld [vmem:[#allocation18 + $0x288] sm:$0xff]
    %v7510 = vld [vmem:[#allocation18 + $0x2b0] sm:$0xff]
    %v7511 = vld [vmem:[#allocation18 + $0x2d8] sm:$0xff]
    %v7512 = vld [vmem:[#allocation18 + $0x300] sm:$0xff]
    %v7513 = vld [vmem:[#allocation18 + $0x328] sm:$0xff]
    %v7514 = vld [vmem:[#allocation18 + $0x350] sm:$0xff]
    %v7515 = vld [vmem:[#allocation18 + $0x378] sm:$0xff]
    %v7516 = vld [vmem:[#allocation18 + $0x3a0] sm:$0xff]
    %v7517 = vld [vmem:[#allocation18 + $0x3c8] sm:$0xff]
    %v7518 = vld [vmem:[#allocation18 + $0x3f0] sm:$0xff]
    %v7519 = vld [vmem:[#allocation18 + $0x418] sm:$0xff]
    %v7520 = vld [vmem:[#allocation18 + $0x440] sm:$0xff]
    %v7521 = vld [vmem:[#allocation18 + $0x468] sm:$0xff]
    %v7522 = vld [vmem:[#allocation18 + $0x490] sm:$0xff]
    %v7523 = vld [vmem:[#allocation18 + $0x4b8] sm:$0xff]
    %v7524 = vld [vmem:[#allocation18 + $0x4e0] sm:$0xff]
    %v7557 = vunpack.c.l.b16 %v7493
    %v7558 = vunpack.c.h.b16 %v7493
    %v7559 = vunpack.c.l.b16 %v7494
    %v7560 = vunpack.c.h.b16 %v7494
    %v7561 = vunpack.c.l.b16 %v7495
    %v7562 = vunpack.c.h.b16 %v7495
    %v7563 = vunpack.c.l.b16 %v7496
    %v7564 = vunpack.c.h.b16 %v7496
    %v7565 = vunpack.c.l.b16 %v7497
    %v7566 = vunpack.c.h.b16 %v7497
    %v7567 = vunpack.c.l.b16 %v7498
    %v7568 = vunpack.c.h.b16 %v7498
    %v7569 = vunpack.c.l.b16 %v7499
    %v7570 = vunpack.c.h.b16 %v7499
    %v7571 = vunpack.c.l.b16 %v7500
    %v7572 = vunpack.c.h.b16 %v7500
    %v7573 = vunpack.c.l.b16 %v7501
    %v7574 = vunpack.c.h.b16 %v7501
    %v7575 = vunpack.c.l.b16 %v7502
    %v7576 = vunpack.c.h.b16 %v7502
    %v7577 = vunpack.c.l.b16 %v7503
    %v7578 = vunpack.c.h.b16 %v7503
    %v7579 = vunpack.c.l.b16 %v7504
    %v7580 = vunpack.c.h.b16 %v7504
    %v7581 = vunpack.c.l.b16 %v7505
    %v7582 = vunpack.c.h.b16 %v7505
    %v7583 = vunpack.c.l.b16 %v7506
    %v7584 = vunpack.c.h.b16 %v7506
    %v7585 = vunpack.c.l.b16 %v7507
    %v7586 = vunpack.c.h.b16 %v7507
    %v7587 = vunpack.c.l.b16 %v7508
    %v7588 = vunpack.c.h.b16 %v7508
    %v7589 = vunpack.c.l.b16 %v7509
    %v7590 = vunpack.c.h.b16 %v7509
    %v7591 = vunpack.c.l.b16 %v7510
    %v7592 = vunpack.c.h.b16 %v7510
    %v7593 = vunpack.c.l.b16 %v7511
    %v7594 = vunpack.c.h.b16 %v7511
    %v7595 = vunpack.c.l.b16 %v7512
    %v7596 = vunpack.c.h.b16 %v7512
    %v7597 = vunpack.c.l.b16 %v7513
    %v7598 = vunpack.c.h.b16 %v7513
    %v7599 = vunpack.c.l.b16 %v7514
    %v7600 = vunpack.c.h.b16 %v7514
    %v7601 = vunpack.c.l.b16 %v7515
    %v7602 = vunpack.c.h.b16 %v7515
    %v7603 = vunpack.c.l.b16 %v7516
    %v7604 = vunpack.c.h.b16 %v7516
    %v7605 = vunpack.c.l.b16 %v7517
    %v7606 = vunpack.c.h.b16 %v7517
    %v7607 = vunpack.c.l.b16 %v7518
    %v7608 = vunpack.c.h.b16 %v7518
    %v7609 = vunpack.c.l.b16 %v7519
    %v7610 = vunpack.c.h.b16 %v7519
    %v7611 = vunpack.c.l.b16 %v7520
    %v7612 = vunpack.c.h.b16 %v7520
    %v7613 = vunpack.c.l.b16 %v7521
    %v7614 = vunpack.c.h.b16 %v7521
    %v7615 = vunpack.c.l.b16 %v7522
    %v7616 = vunpack.c.h.b16 %v7522
    %v7617 = vunpack.c.l.b16 %v7523
    %v7618 = vunpack.c.h.b16 %v7523
    %v7619 = vunpack.c.l.b16 %v7524
    %v7620 = vunpack.c.h.b16 %v7524
    %v7621 = vpack.c.b16 %v7559, %v7557
    %v7622 = vpack.c.b16 %v7560, %v7558
    %v7623 = vpack.c.b16 %v7563, %v7561
    %v7624 = vpack.c.b16 %v7564, %v7562
    %v7625 = vpack.c.b16 %v7567, %v7565
    %v7626 = vpack.c.b16 %v7568, %v7566
    %v7627 = vpack.c.b16 %v7571, %v7569
    %v7628 = vpack.c.b16 %v7572, %v7570
    %v7629 = vpack.c.b16 %v7575, %v7573
    %v7630 = vpack.c.b16 %v7576, %v7574
    %v7631 = vpack.c.b16 %v7579, %v7577
    %v7632 = vpack.c.b16 %v7580, %v7578
    %v7633 = vpack.c.b16 %v7583, %v7581
    %v7634 = vpack.c.b16 %v7584, %v7582
    %v7635 = vpack.c.b16 %v7587, %v7585
    %v7636 = vpack.c.b16 %v7588, %v7586
    %v7637 = vpack.c.b16 %v7591, %v7589
    %v7638 = vpack.c.b16 %v7592, %v7590
    %v7639 = vpack.c.b16 %v7595, %v7593
    %v7640 = vpack.c.b16 %v7596, %v7594
    %v7641 = vpack.c.b16 %v7599, %v7597
    %v7642 = vpack.c.b16 %v7600, %v7598
    %v7643 = vpack.c.b16 %v7603, %v7601
    %v7644 = vpack.c.b16 %v7604, %v7602
    %v7645 = vpack.c.b16 %v7607, %v7605
    %v7646 = vpack.c.b16 %v7608, %v7606
    %v7647 = vpack.c.b16 %v7611, %v7609
    %v7648 = vpack.c.b16 %v7612, %v7610
    %v7649 = vpack.c.b16 %v7615, %v7613
    %v7650 = vpack.c.b16 %v7616, %v7614
    %v7651 = vpack.c.b16 %v7619, %v7617
    %v7652 = vpack.c.b16 %v7620, %v7618
    %7685 = vmatprep.subr.bf16.mxu0 %v7622
    %7686 = vmatpush1.bf16.msra.mxu0 %v7621
    %7687 = vmatprep.subr.bf16.mxu0 %v7624
    %7688 = vmatpush1.bf16.msra.mxu0 %v7623
    %7689 = vmatprep.subr.bf16.mxu0 %v7626
    %7690 = vmatpush1.bf16.msra.mxu0 %v7625
    %7691 = vmatprep.subr.bf16.mxu0 %v7628
    %7692 = vmatpush1.bf16.msra.mxu0 %v7627
    %7693 = vmatprep.subr.bf16.mxu0 %v7630
    %7694 = vmatpush1.bf16.msra.mxu0 %v7629
    %7695 = vmatprep.subr.bf16.mxu0 %v7632
    %7696 = vmatpush1.bf16.msra.mxu0 %v7631
    %7697 = vmatprep.subr.bf16.mxu0 %v7634
    %7698 = vmatpush1.bf16.msra.mxu0 %v7633
    %7699 = vmatprep.subr.bf16.mxu0 %v7636
    %7700 = vmatpush1.bf16.msra.mxu0 %v7635
    %7701 = vmatprep.subr.bf16.mxu0 %v7638
    %7702 = vmatpush1.bf16.msra.mxu0 %v7637
    %7703 = vmatprep.subr.bf16.mxu0 %v7640
    %7704 = vmatpush1.bf16.msra.mxu0 %v7639
    %7705 = vmatprep.subr.bf16.mxu0 %v7642
    %7706 = vmatpush1.bf16.msra.mxu0 %v7641
    %7707 = vmatprep.subr.bf16.mxu0 %v7644
    %7708 = vmatpush1.bf16.msra.mxu0 %v7643
    %7709 = vmatprep.subr.bf16.mxu0 %v7646
    %7710 = vmatpush1.bf16.msra.mxu0 %v7645
    %7711 = vmatprep.subr.bf16.mxu0 %v7648
    %7712 = vmatpush1.bf16.msra.mxu0 %v7647
    %7713 = vmatprep.subr.bf16.mxu0 %v7650
    %7714 = vmatpush1.bf16.msra.mxu0 %v7649
    %7715 = vmatprep.subr.bf16.mxu0 %v7652
    %7716 = vmatpush1.bf16.msra.mxu0 %v7651
    %7717 = vmatprep.mubr.bf16.mxu0 %v7256
    %7718 = vmatmul.mubr.bf16.gmra.mrb[0].mxu0 %v7255
    %v7719 = vpop.f32.mrb[0].mxu0
    %v7720 = vadd.f32 0.0, %v7719
    %v7721 = vpop.f32.mrb[0].mxu0
    %v7722 = vadd.f32 0.0, %v7721
    %v7723 = vpop.f32.mrb[0].mxu0
    %v7724 = vadd.f32 0.0, %v7723
    %v7725 = vpop.f32.mrb[0].mxu0
    %v7726 = vadd.f32 0.0, %v7725
    %7727 = vdwg.mxu0
    %s7728 = scalar_lea.vmem [#allocation19], 8
    %v7729 = vld [vmem:[%s7728] sm:$0xff]
    %vm7730 = vcmask 130048
    %v7732 = vsel %vm7730, %v7729, 0
    %7734 = vmatprep.subr.mxu0 %v7722
    %7735 = vmatpush1.msra.mxu0 %v7720
    %7736 = vmatprep.subr.mxu0 %v7726
    %7737 = vmatpush1.msra.mxu0 %v7724
    %7738 = vmatprep.subr.mxu0 0.0
    %7739 = vmatpush1.msra.mxu0 0.0
    %7740 = vmatprep.subr.mxu0 0.0
    %7741 = vmatpush1.msra.mxu0 0.0
    %7742 = vmatprep.subr.mxu0 0.0
    %7743 = vmatpush1.msra.mxu0 0.0
    %7744 = vmatprep.subr.mxu0 0.0
    %7745 = vmatpush1.msra.mxu0 0.0
    %7746 = vmatprep.subr.mxu0 0.0
    %7747 = vmatpush1.msra.mxu0 0.0
    %7748 = vmatprep.subr.mxu0 0.0
    %7749 = vmatpush1.msra.mxu0 0.0
    %7750 = vmatprep.subr.mxu0 0.0
    %7751 = vmatpush1.msra.mxu0 0.0
    %7752 = vmatprep.subr.mxu0 0.0
    %7753 = vmatpush1.msra.mxu0 0.0
    %7754 = vmatprep.subr.mxu0 0.0
    %7755 = vmatpush1.msra.mxu0 0.0
    %7756 = vmatprep.subr.mxu0 0.0
    %7757 = vmatpush1.msra.mxu0 0.0
    %7758 = vmatprep.subr.mxu0 0.0
    %7759 = vmatpush1.msra.mxu0 0.0
    %7760 = vmatprep.subr.mxu0 0.0
    %7761 = vmatpush1.msra.mxu0 0.0
    %7762 = vmatprep.subr.mxu0 0.0
    %7763 = vmatpush1.msra.mxu0 0.0
    %7764 = vmatprep.subr.mxu0 0.0
    %7765 = vmatpush1.msra.mxu0 0.0
    %7766 = vmatprep.subr.mxu0 0.0
    %7767 = vmatpush1.msra.mxu0 0.0
    %7768 = vmatprep.subr.mxu0 0.0
    %7769 = vmatpush1.msra.mxu0 0.0
    %7770 = vmatprep.subr.mxu0 0.0
    %7771 = vmatpush1.msra.mxu0 0.0
    %7772 = vmatprep.subr.mxu0 0.0
    %7773 = vmatpush1.msra.mxu0 0.0
    %7774 = vmatprep.subr.mxu0 0.0
    %7775 = vmatpush1.msra.mxu0 0.0
    %7776 = vmatprep.subr.mxu0 0.0
    %7777 = vmatpush1.msra.mxu0 0.0
    %7778 = vmatprep.subr.mxu0 0.0
    %7779 = vmatpush1.msra.mxu0 0.0
    %7780 = vmatprep.subr.mxu0 0.0
    %7781 = vmatpush1.msra.mxu0 0.0
    %7782 = vmatprep.subr.mxu0 0.0
    %7783 = vmatpush1.msra.mxu0 0.0
    %7784 = vmatprep.subr.mxu0 0.0
    %7785 = vmatpush1.msra.mxu0 0.0
    %7786 = vmatprep.subr.mxu0 0.0
    %7787 = vmatpush1.msra.mxu0 0.0
    %7788 = vmatprep.subr.mxu0 0.0
    %7789 = vmatpush1.msra.mxu0 0.0
    %7790 = vmatprep.subr.mxu0 0.0
    %7791 = vmatpush1.msra.mxu0 0.0
    %7792 = vmatprep.subr.mxu0 0.0
    %7793 = vmatpush1.msra.mxu0 0.0
    %7794 = vmatprep.subr.mxu0 0.0
    %7795 = vmatpush1.msra.mxu0 0.0
    %7796 = vmatprep.subr.mxu0 0.0
    %7797 = vmatpush1.msra.mxu0 0.0
    %7798 = vmatprep.mubr.f32.mxu0 0.0
    %7799 = vmatmul.mubr.f32.gmra.mrb[0].mxu0 %v7732
    %v7800 = vpop.f32.mrb[0].mxu0
    %v7801 = vadd.f32 0.0, %v7800
    %v7802 = vpop.f32.mrb[0].mxu0
    %v7803 = vadd.f32 0.0, %v7802
    %7804 = vdwg.mxu0
    %v7806 = vsel %vm7730, %v7492, 0
    %7808 = vmatprep.subr.mxu0 %v7486
    %7809 = vmatpush1.msra.mxu0 %v7484
    %7810 = vmatprep.subr.mxu0 %v7490
    %7811 = vmatpush1.msra.mxu0 %v7488
    %7812 = vmatprep.subr.mxu0 0.0
    %7813 = vmatpush1.msra.mxu0 0.0
    %7814 = vmatprep.subr.mxu0 0.0
    %7815 = vmatpush1.msra.mxu0 0.0
    %7816 = vmatprep.subr.mxu0 0.0
    %7817 = vmatpush1.msra.mxu0 0.0
    %7818 = vmatprep.subr.mxu0 0.0
    %7819 = vmatpush1.msra.mxu0 0.0
    %7820 = vmatprep.subr.mxu0 0.0
    %7821 = vmatpush1.msra.mxu0 0.0
    %7822 = vmatprep.subr.mxu0 0.0
    %7823 = vmatpush1.msra.mxu0 0.0
    %7824 = vmatprep.subr.mxu0 0.0
    %7825 = vmatpush1.msra.mxu0 0.0
    %7826 = vmatprep.subr.mxu0 0.0
    %7827 = vmatpush1.msra.mxu0 0.0
    %7828 = vmatprep.subr.mxu0 0.0
    %7829 = vmatpush1.msra.mxu0 0.0
    %7830 = vmatprep.subr.mxu0 0.0
    %7831 = vmatpush1.msra.mxu0 0.0
    %7832 = vmatprep.subr.mxu0 0.0
    %7833 = vmatpush1.msra.mxu0 0.0
    %7834 = vmatprep.subr.mxu0 0.0
    %7835 = vmatpush1.msra.mxu0 0.0
    %7836 = vmatprep.subr.mxu0 0.0
    %7837 = vmatpush1.msra.mxu0 0.0
    %7838 = vmatprep.subr.mxu0 0.0
    %7839 = vmatpush1.msra.mxu0 0.0
    %7840 = vmatprep.subr.mxu0 0.0
    %7841 = vmatpush1.msra.mxu0 0.0
    %7842 = vmatprep.subr.mxu0 0.0
    %7843 = vmatpush1.msra.mxu0 0.0
    %7844 = vmatprep.subr.mxu0 0.0
    %7845 = vmatpush1.msra.mxu0 0.0
    %7846 = vmatprep.subr.mxu0 0.0
    %7847 = vmatpush1.msra.mxu0 0.0
    %7848 = vmatprep.subr.mxu0 0.0
    %7849 = vmatpush1.msra.mxu0 0.0
    %7850 = vmatprep.subr.mxu0 0.0
    %7851 = vmatpush1.msra.mxu0 0.0
    %7852 = vmatprep.subr.mxu0 0.0
    %7853 = vmatpush1.msra.mxu0 0.0
    %7854 = vmatprep.subr.mxu0 0.0
    %7855 = vmatpush1.msra.mxu0 0.0
    %7856 = vmatprep.subr.mxu0 0.0
    %7857 = vmatpush1.msra.mxu0 0.0
    %7858 = vmatprep.subr.mxu0 0.0
    %7859 = vmatpush1.msra.mxu0 0.0
    %7860 = vmatprep.subr.mxu0 0.0
    %7861 = vmatpush1.msra.mxu0 0.0
    %7862 = vmatprep.subr.mxu0 0.0
    %7863 = vmatpush1.msra.mxu0 0.0
    %7864 = vmatprep.subr.mxu0 0.0
    %7865 = vmatpush1.msra.mxu0 0.0
    %7866 = vmatprep.subr.mxu0 0.0
    %7867 = vmatpush1.msra.mxu0 0.0
    %7868 = vmatprep.subr.mxu0 0.0
    %7869 = vmatpush1.msra.mxu0 0.0
    %7870 = vmatprep.subr.mxu0 0.0
    %7871 = vmatpush1.msra.mxu0 0.0
    %7872 = vmatprep.mubr.f32.mxu0 0.0
    %7873 = vmatmul.mubr.f32.gmra.mrb[0].mxu0 %v7806
    %v7874 = vpop.f32.mrb[0].mxu0
    %v7875 = vadd.f32 %v7801, %v7874
    %v7876 = vpop.f32.mrb[0].mxu0
    %v7877 = vadd.f32 %v7803, %v7876
    %7878 = vdwg.mxu0
    %v7879 = vld [vmem:[#allocation18 + $0x10] sm:$0xff]
    %v7880 = vld [vmem:[#allocation18 + $0x38] sm:$0xff]
    %v7881 = vld [vmem:[#allocation18 + $0x60] sm:$0xff]
    %v7882 = vld [vmem:[#allocation18 + $0x88] sm:$0xff]
    %v7883 = vld [vmem:[#allocation18 + $0xb0] sm:$0xff]
    %v7884 = vld [vmem:[#allocation18 + $0xd8] sm:$0xff]
    %v7885 = vld [vmem:[#allocation18 + $0x100] sm:$0xff]
    %v7886 = vld [vmem:[#allocation18 + $0x128] sm:$0xff]
    %v7887 = vld [vmem:[#allocation18 + $0x150] sm:$0xff]
    %v7888 = vld [vmem:[#allocation18 + $0x178] sm:$0xff]
    %v7889 = vld [vmem:[#allocation18 + $0x1a0] sm:$0xff]
    %v7890 = vld [vmem:[#allocation18 + $0x1c8] sm:$0xff]
    %v7891 = vld [vmem:[#allocation18 + $0x1f0] sm:$0xff]
    %v7892 = vld [vmem:[#allocation18 + $0x218] sm:$0xff]
    %v7893 = vld [vmem:[#allocation18 + $0x240] sm:$0xff]
    %v7894 = vld [vmem:[#allocation18 + $0x268] sm:$0xff]
    %v7895 = vld [vmem:[#allocation18 + $0x290] sm:$0xff]
    %v7896 = vld [vmem:[#allocation18 + $0x2b8] sm:$0xff]
    %v7897 = vld [vmem:[#allocation18 + $0x2e0] sm:$0xff]
    %v7898 = vld [vmem:[#allocation18 + $0x308] sm:$0xff]
    %v7899 = vld [vmem:[#allocation18 + $0x330] sm:$0xff]
    %v7900 = vld [vmem:[#allocation18 + $0x358] sm:$0xff]
    %v7901 = vld [vmem:[#allocation18 + $0x380] sm:$0xff]
    %v7902 = vld [vmem:[#allocation18 + $0x3a8] sm:$0xff]
    %v7903 = vld [vmem:[#allocation18 + $0x3d0] sm:$0xff]
    %v7904 = vld [vmem:[#allocation18 + $0x3f8] sm:$0xff]
    %v7905 = vld [vmem:[#allocation18 + $0x420] sm:$0xff]
    %v7906 = vld [vmem:[#allocation18 + $0x448] sm:$0xff]
    %v7907 = vld [vmem:[#allocation18 + $0x470] sm:$0xff]
    %v7908 = vld [vmem:[#allocation18 + $0x498] sm:$0xff]
    %v7909 = vld [vmem:[#allocation18 + $0x4c0] sm:$0xff]
    %v7910 = vld [vmem:[#allocation18 + $0x4e8] sm:$0xff]
    %v7943 = vunpack.c.l.b16 %v7879
    %v7944 = vunpack.c.h.b16 %v7879
    %v7945 = vunpack.c.l.b16 %v7880
    %v7946 = vunpack.c.h.b16 %v7880
    %v7947 = vunpack.c.l.b16 %v7881
    %v7948 = vunpack.c.h.b16 %v7881
    %v7949 = vunpack.c.l.b16 %v7882
    %v7950 = vunpack.c.h.b16 %v7882
    %v7951 = vunpack.c.l.b16 %v7883
    %v7952 = vunpack.c.h.b16 %v7883
    %v7953 = vunpack.c.l.b16 %v7884
    %v7954 = vunpack.c.h.b16 %v7884
    %v7955 = vunpack.c.l.b16 %v7885
    %v7956 = vunpack.c.h.b16 %v7885
    %v7957 = vunpack.c.l.b16 %v7886
    %v7958 = vunpack.c.h.b16 %v7886
    %v7959 = vunpack.c.l.b16 %v7887
    %v7960 = vunpack.c.h.b16 %v7887
    %v7961 = vunpack.c.l.b16 %v7888
    %v7962 = vunpack.c.h.b16 %v7888
    %v7963 = vunpack.c.l.b16 %v7889
    %v7964 = vunpack.c.h.b16 %v7889
    %v7965 = vunpack.c.l.b16 %v7890
    %v7966 = vunpack.c.h.b16 %v7890
    %v7967 = vunpack.c.l.b16 %v7891
    %v7968 = vunpack.c.h.b16 %v7891
    %v7969 = vunpack.c.l.b16 %v7892
    %v7970 = vunpack.c.h.b16 %v7892
    %v7971 = vunpack.c.l.b16 %v7893
    %v7972 = vunpack.c.h.b16 %v7893
    %v7973 = vunpack.c.l.b16 %v7894
    %v7974 = vunpack.c.h.b16 %v7894
    %v7975 = vunpack.c.l.b16 %v7895
    %v7976 = vunpack.c.h.b16 %v7895
    %v7977 = vunpack.c.l.b16 %v7896
    %v7978 = vunpack.c.h.b16 %v7896
    %v7979 = vunpack.c.l.b16 %v7897
    %v7980 = vunpack.c.h.b16 %v7897
    %v7981 = vunpack.c.l.b16 %v7898
    %v7982 = vunpack.c.h.b16 %v7898
    %v7983 = vunpack.c.l.b16 %v7899
    %v7984 = vunpack.c.h.b16 %v7899
    %v7985 = vunpack.c.l.b16 %v7900
    %v7986 = vunpack.c.h.b16 %v7900
    %v7987 = vunpack.c.l.b16 %v7901
    %v7988 = vunpack.c.h.b16 %v7901
    %v7989 = vunpack.c.l.b16 %v7902
    %v7990 = vunpack.c.h.b16 %v7902
    %v7991 = vunpack.c.l.b16 %v7903
    %v7992 = vunpack.c.h.b16 %v7903
    %v7993 = vunpack.c.l.b16 %v7904
    %v7994 = vunpack.c.h.b16 %v7904
    %v7995 = vunpack.c.l.b16 %v7905
    %v7996 = vunpack.c.h.b16 %v7905
    %v7997 = vunpack.c.l.b16 %v7906
    %v7998 = vunpack.c.h.b16 %v7906
    %v7999 = vunpack.c.l.b16 %v7907
    %v8000 = vunpack.c.h.b16 %v7907
    %v8001 = vunpack.c.l.b16 %v7908
    %v8002 = vunpack.c.h.b16 %v7908
    %v8003 = vunpack.c.l.b16 %v7909
    %v8004 = vunpack.c.h.b16 %v7909
    %v8005 = vunpack.c.l.b16 %v7910
    %v8006 = vunpack.c.h.b16 %v7910
    %v8007 = vpack.c.b16 %v7945, %v7943
    %v8008 = vpack.c.b16 %v7946, %v7944
    %v8009 = vpack.c.b16 %v7949, %v7947
    %v8010 = vpack.c.b16 %v7950, %v7948
    %v8011 = vpack.c.b16 %v7953, %v7951
    %v8012 = vpack.c.b16 %v7954, %v7952
    %v8013 = vpack.c.b16 %v7957, %v7955
    %v8014 = vpack.c.b16 %v7958, %v7956
    %v8015 = vpack.c.b16 %v7961, %v7959
    %v8016 = vpack.c.b16 %v7962, %v7960
    %v8017 = vpack.c.b16 %v7965, %v7963
    %v8018 = vpack.c.b16 %v7966, %v7964
    %v8019 = vpack.c.b16 %v7969, %v7967
    %v8020 = vpack.c.b16 %v7970, %v7968
    %v8021 = vpack.c.b16 %v7973, %v7971
    %v8022 = vpack.c.b16 %v7974, %v7972
    %v8023 = vpack.c.b16 %v7977, %v7975
    %v8024 = vpack.c.b16 %v7978, %v7976
    %v8025 = vpack.c.b16 %v7981, %v7979
    %v8026 = vpack.c.b16 %v7982, %v7980
    %v8027 = vpack.c.b16 %v7985, %v7983
    %v8028 = vpack.c.b16 %v7986, %v7984
    %v8029 = vpack.c.b16 %v7989, %v7987
    %v8030 = vpack.c.b16 %v7990, %v7988
    %v8031 = vpack.c.b16 %v7993, %v7991
    %v8032 = vpack.c.b16 %v7994, %v7992
    %v8033 = vpack.c.b16 %v7997, %v7995
    %v8034 = vpack.c.b16 %v7998, %v7996
    %v8035 = vpack.c.b16 %v8001, %v7999
    %v8036 = vpack.c.b16 %v8002, %v8000
    %v8037 = vpack.c.b16 %v8005, %v8003
    %v8038 = vpack.c.b16 %v8006, %v8004
    %8071 = vmatprep.subr.bf16.mxu0 %v8008
    %8072 = vmatpush1.bf16.msra.mxu0 %v8007
    %8073 = vmatprep.subr.bf16.mxu0 %v8010
    %8074 = vmatpush1.bf16.msra.mxu0 %v8009
    %8075 = vmatprep.subr.bf16.mxu0 %v8012
    %8076 = vmatpush1.bf16.msra.mxu0 %v8011
    %8077 = vmatprep.subr.bf16.mxu0 %v8014
    %8078 = vmatpush1.bf16.msra.mxu0 %v8013
    %8079 = vmatprep.subr.bf16.mxu0 %v8016
    %8080 = vmatpush1.bf16.msra.mxu0 %v8015
    %8081 = vmatprep.subr.bf16.mxu0 %v8018
    %8082 = vmatpush1.bf16.msra.mxu0 %v8017
    %8083 = vmatprep.subr.bf16.mxu0 %v8020
    %8084 = vmatpush1.bf16.msra.mxu0 %v8019
    %8085 = vmatprep.subr.bf16.mxu0 %v8022
    %8086 = vmatpush1.bf16.msra.mxu0 %v8021
    %8087 = vmatprep.subr.bf16.mxu0 %v8024
    %8088 = vmatpush1.bf16.msra.mxu0 %v8023
    %8089 = vmatprep.subr.bf16.mxu0 %v8026
    %8090 = vmatpush1.bf16.msra.mxu0 %v8025
    %8091 = vmatprep.subr.bf16.mxu0 %v8028
    %8092 = vmatpush1.bf16.msra.mxu0 %v8027
    %8093 = vmatprep.subr.bf16.mxu0 %v8030
    %8094 = vmatpush1.bf16.msra.mxu0 %v8029
    %8095 = vmatprep.subr.bf16.mxu0 %v8032
    %8096 = vmatpush1.bf16.msra.mxu0 %v8031
    %8097 = vmatprep.subr.bf16.mxu0 %v8034
    %8098 = vmatpush1.bf16.msra.mxu0 %v8033
    %8099 = vmatprep.subr.bf16.mxu0 %v8036
    %8100 = vmatpush1.bf16.msra.mxu0 %v8035
    %8101 = vmatprep.subr.bf16.mxu0 %v8038
    %8102 = vmatpush1.bf16.msra.mxu0 %v8037
    %8103 = vmatprep.mubr.bf16.mxu0 %v7256
    %8104 = vmatmul.mubr.bf16.gmra.mrb[0].mxu0 %v7255
    %v8105 = vpop.f32.mrb[0].mxu0
    %v8106 = vadd.f32 0.0, %v8105
    %v8107 = vpop.f32.mrb[0].mxu0
    %v8108 = vadd.f32 0.0, %v8107
    %v8109 = vpop.f32.mrb[0].mxu0
    %v8110 = vadd.f32 0.0, %v8109
    %v8111 = vpop.f32.mrb[0].mxu0
    %v8112 = vadd.f32 0.0, %v8111
    %8113 = vdwg.mxu0
    %s8114 = scalar_lea.vmem [#allocation19], 16
    %v8115 = vld [vmem:[%s8114] sm:$0xff]
    %v8117 = vsel %vm7730, %v8115, 0
    %8119 = vmatprep.subr.mxu0 %v8108
    %8120 = vmatpush1.msra.mxu0 %v8106
    %8121 = vmatprep.subr.mxu0 %v8112
    %8122 = vmatpush1.msra.mxu0 %v8110
    %8123 = vmatprep.subr.mxu0 0.0
    %8124 = vmatpush1.msra.mxu0 0.0
    %8125 = vmatprep.subr.mxu0 0.0
    %8126 = vmatpush1.msra.mxu0 0.0
    %8127 = vmatprep.subr.mxu0 0.0
    %8128 = vmatpush1.msra.mxu0 0.0
    %8129 = vmatprep.subr.mxu0 0.0
    %8130 = vmatpush1.msra.mxu0 0.0
    %8131 = vmatprep.subr.mxu0 0.0
    %8132 = vmatpush1.msra.mxu0 0.0
    %8133 = vmatprep.subr.mxu0 0.0
    %8134 = vmatpush1.msra.mxu0 0.0
    %8135 = vmatprep.subr.mxu0 0.0
    %8136 = vmatpush1.msra.mxu0 0.0
    %8137 = vmatprep.subr.mxu0 0.0
    %8138 = vmatpush1.msra.mxu0 0.0
    %8139 = vmatprep.subr.mxu0 0.0
    %8140 = vmatpush1.msra.mxu0 0.0
    %8141 = vmatprep.subr.mxu0 0.0
    %8142 = vmatpush1.msra.mxu0 0.0
    %8143 = vmatprep.subr.mxu0 0.0
    %8144 = vmatpush1.msra.mxu0 0.0
    %8145 = vmatprep.subr.mxu0 0.0
    %8146 = vmatpush1.msra.mxu0 0.0
    %8147 = vmatprep.subr.mxu0 0.0
    %8148 = vmatpush1.msra.mxu0 0.0
    %8149 = vmatprep.subr.mxu0 0.0
    %8150 = vmatpush1.msra.mxu0 0.0
    %8151 = vmatprep.subr.mxu0 0.0
    %8152 = vmatpush1.msra.mxu0 0.0
    %8153 = vmatprep.subr.mxu0 0.0
    %8154 = vmatpush1.msra.mxu0 0.0
    %8155 = vmatprep.subr.mxu0 0.0
    %8156 = vmatpush1.msra.mxu0 0.0
    %8157 = vmatprep.subr.mxu0 0.0
    %8158 = vmatpush1.msra.mxu0 0.0
    %8159 = vmatprep.subr.mxu0 0.0
    %8160 = vmatpush1.msra.mxu0 0.0
    %8161 = vmatprep.subr.mxu0 0.0
    %8162 = vmatpush1.msra.mxu0 0.0
    %8163 = vmatprep.subr.mxu0 0.0
    %8164 = vmatpush1.msra.mxu0 0.0
    %8165 = vmatprep.subr.mxu0 0.0
    %8166 = vmatpush1.msra.mxu0 0.0
    %8167 = vmatprep.subr.mxu0 0.0
    %8168 = vmatpush1.msra.mxu0 0.0
    %8169 = vmatprep.subr.mxu0 0.0
    %8170 = vmatpush1.msra.mxu0 0.0
    %8171 = vmatprep.subr.mxu0 0.0
    %8172 = vmatpush1.msra.mxu0 0.0
    %8173 = vmatprep.subr.mxu0 0.0
    %8174 = vmatpush1.msra.mxu0 0.0
    %8175 = vmatprep.subr.mxu0 0.0
    %8176 = vmatpush1.msra.mxu0 0.0
    %8177 = vmatprep.subr.mxu0 0.0
    %8178 = vmatpush1.msra.mxu0 0.0
    %8179 = vmatprep.subr.mxu0 0.0
    %8180 = vmatpush1.msra.mxu0 0.0
    %8181 = vmatprep.subr.mxu0 0.0
    %8182 = vmatpush1.msra.mxu0 0.0
    %8183 = vmatprep.mubr.f32.mxu0 0.0
    %8184 = vmatmul.mubr.f32.gmra.mrb[0].mxu0 %v8117
    %v8185 = vpop.f32.mrb[0].mxu0
    %v8186 = vadd.f32 0.0, %v8185
    %v8187 = vpop.f32.mrb[0].mxu0
    %v8188 = vadd.f32 0.0, %v8187
    %8189 = vdwg.mxu0
    %v8190 = vadd.f32 %v7875, %v8186
    %v8191 = vadd.f32 %v7877, %v8188
    %v8192 = vld [vmem:[#allocation18 + $0x18] sm:$0xff]
    %v8193 = vld [vmem:[#allocation18 + $0x40] sm:$0xff]
    %v8194 = vld [vmem:[#allocation18 + $0x68] sm:$0xff]
    %v8195 = vld [vmem:[#allocation18 + $0x90] sm:$0xff]
    %v8196 = vld [vmem:[#allocation18 + $0xb8] sm:$0xff]
    %v8197 = vld [vmem:[#allocation18 + $0xe0] sm:$0xff]
    %v8198 = vld [vmem:[#allocation18 + $0x108] sm:$0xff]
    %v8199 = vld [vmem:[#allocation18 + $0x130] sm:$0xff]
    %v8200 = vld [vmem:[#allocation18 + $0x158] sm:$0xff]
    %v8201 = vld [vmem:[#allocation18 + $0x180] sm:$0xff]
    %v8202 = vld [vmem:[#allocation18 + $0x1a8] sm:$0xff]
    %v8203 = vld [vmem:[#allocation18 + $0x1d0] sm:$0xff]
    %v8204 = vld [vmem:[#allocation18 + $0x1f8] sm:$0xff]
    %v8205 = vld [vmem:[#allocation18 + $0x220] sm:$0xff]
    %v8206 = vld [vmem:[#allocation18 + $0x248] sm:$0xff]
    %v8207 = vld [vmem:[#allocation18 + $0x270] sm:$0xff]
    %v8208 = vld [vmem:[#allocation18 + $0x298] sm:$0xff]
    %v8209 = vld [vmem:[#allocation18 + $0x2c0] sm:$0xff]
    %v8210 = vld [vmem:[#allocation18 + $0x2e8] sm:$0xff]
    %v8211 = vld [vmem:[#allocation18 + $0x310] sm:$0xff]
    %v8212 = vld [vmem:[#allocation18 + $0x338] sm:$0xff]
    %v8213 = vld [vmem:[#allocation18 + $0x360] sm:$0xff]
    %v8214 = vld [vmem:[#allocation18 + $0x388] sm:$0xff]
    %v8215 = vld [vmem:[#allocation18 + $0x3b0] sm:$0xff]
    %v8216 = vld [vmem:[#allocation18 + $0x3d8] sm:$0xff]
    %v8217 = vld [vmem:[#allocation18 + $0x400] sm:$0xff]
    %v8218 = vld [vmem:[#allocation18 + $0x428] sm:$0xff]
    %v8219 = vld [vmem:[#allocation18 + $0x450] sm:$0xff]
    %v8220 = vld [vmem:[#allocation18 + $0x478] sm:$0xff]
    %v8221 = vld [vmem:[#allocation18 + $0x4a0] sm:$0xff]
    %v8222 = vld [vmem:[#allocation18 + $0x4c8] sm:$0xff]
    %v8223 = vld [vmem:[#allocation18 + $0x4f0] sm:$0xff]
    %v8256 = vunpack.c.l.b16 %v8192
    %v8257 = vunpack.c.h.b16 %v8192
    %v8258 = vunpack.c.l.b16 %v8193
    %v8259 = vunpack.c.h.b16 %v8193
    %v8260 = vunpack.c.l.b16 %v8194
    %v8261 = vunpack.c.h.b16 %v8194
    %v8262 = vunpack.c.l.b16 %v8195
    %v8263 = vunpack.c.h.b16 %v8195
    %v8264 = vunpack.c.l.b16 %v8196
    %v8265 = vunpack.c.h.b16 %v8196
    %v8266 = vunpack.c.l.b16 %v8197
    %v8267 = vunpack.c.h.b16 %v8197
    %v8268 = vunpack.c.l.b16 %v8198
    %v8269 = vunpack.c.h.b16 %v8198
    %v8270 = vunpack.c.l.b16 %v8199
    %v8271 = vunpack.c.h.b16 %v8199
    %v8272 = vunpack.c.l.b16 %v8200
    %v8273 = vunpack.c.h.b16 %v8200
    %v8274 = vunpack.c.l.b16 %v8201
    %v8275 = vunpack.c.h.b16 %v8201
    %v8276 = vunpack.c.l.b16 %v8202
    %v8277 = vunpack.c.h.b16 %v8202
    %v8278 = vunpack.c.l.b16 %v8203
    %v8279 = vunpack.c.h.b16 %v8203
    %v8280 = vunpack.c.l.b16 %v8204
    %v8281 = vunpack.c.h.b16 %v8204
    %v8282 = vunpack.c.l.b16 %v8205
    %v8283 = vunpack.c.h.b16 %v8205
    %v8284 = vunpack.c.l.b16 %v8206
    %v8285 = vunpack.c.h.b16 %v8206
    %v8286 = vunpack.c.l.b16 %v8207
    %v8287 = vunpack.c.h.b16 %v8207
    %v8288 = vunpack.c.l.b16 %v8208
    %v8289 = vunpack.c.h.b16 %v8208
    %v8290 = vunpack.c.l.b16 %v8209
    %v8291 = vunpack.c.h.b16 %v8209
    %v8292 = vunpack.c.l.b16 %v8210
    %v8293 = vunpack.c.h.b16 %v8210
    %v8294 = vunpack.c.l.b16 %v8211
    %v8295 = vunpack.c.h.b16 %v8211
    %v8296 = vunpack.c.l.b16 %v8212
    %v8297 = vunpack.c.h.b16 %v8212
    %v8298 = vunpack.c.l.b16 %v8213
    %v8299 = vunpack.c.h.b16 %v8213
    %v8300 = vunpack.c.l.b16 %v8214
    %v8301 = vunpack.c.h.b16 %v8214
    %v8302 = vunpack.c.l.b16 %v8215
    %v8303 = vunpack.c.h.b16 %v8215
    %v8304 = vunpack.c.l.b16 %v8216
    %v8305 = vunpack.c.h.b16 %v8216
    %v8306 = vunpack.c.l.b16 %v8217
    %v8307 = vunpack.c.h.b16 %v8217
    %v8308 = vunpack.c.l.b16 %v8218
    %v8309 = vunpack.c.h.b16 %v8218
    %v8310 = vunpack.c.l.b16 %v8219
    %v8311 = vunpack.c.h.b16 %v8219
    %v8312 = vunpack.c.l.b16 %v8220
    %v8313 = vunpack.c.h.b16 %v8220
    %v8314 = vunpack.c.l.b16 %v8221
    %v8315 = vunpack.c.h.b16 %v8221
    %v8316 = vunpack.c.l.b16 %v8222
    %v8317 = vunpack.c.h.b16 %v8222
    %v8318 = vunpack.c.l.b16 %v8223
    %v8319 = vunpack.c.h.b16 %v8223
    %v8320 = vpack.c.b16 %v8258, %v8256
    %v8321 = vpack.c.b16 %v8259, %v8257
    %v8322 = vpack.c.b16 %v8262, %v8260
    %v8323 = vpack.c.b16 %v8263, %v8261
    %v8324 = vpack.c.b16 %v8266, %v8264
    %v8325 = vpack.c.b16 %v8267, %v8265
    %v8326 = vpack.c.b16 %v8270, %v8268
    %v8327 = vpack.c.b16 %v8271, %v8269
    %v8328 = vpack.c.b16 %v8274, %v8272
    %v8329 = vpack.c.b16 %v8275, %v8273
    %v8330 = vpack.c.b16 %v8278, %v8276
    %v8331 = vpack.c.b16 %v8279, %v8277
    %v8332 = vpack.c.b16 %v8282, %v8280
    %v8333 = vpack.c.b16 %v8283, %v8281
    %v8334 = vpack.c.b16 %v8286, %v8284
    %v8335 = vpack.c.b16 %v8287, %v8285
    %v8336 = vpack.c.b16 %v8290, %v8288
    %v8337 = vpack.c.b16 %v8291, %v8289
    %v8338 = vpack.c.b16 %v8294, %v8292
    %v8339 = vpack.c.b16 %v8295, %v8293
    %v8340 = vpack.c.b16 %v8298, %v8296
    %v8341 = vpack.c.b16 %v8299, %v8297
    %v8342 = vpack.c.b16 %v8302, %v8300
    %v8343 = vpack.c.b16 %v8303, %v8301
    %v8344 = vpack.c.b16 %v8306, %v8304
    %v8345 = vpack.c.b16 %v8307, %v8305
    %v8346 = vpack.c.b16 %v8310, %v8308
    %v8347 = vpack.c.b16 %v8311, %v8309
    %v8348 = vpack.c.b16 %v8314, %v8312
    %v8349 = vpack.c.b16 %v8315, %v8313
    %v8350 = vpack.c.b16 %v8318, %v8316
    %v8351 = vpack.c.b16 %v8319, %v8317
    %8384 = vmatprep.subr.bf16.mxu0 %v8321
    %8385 = vmatpush1.bf16.msra.mxu0 %v8320
    %8386 = vmatprep.subr.bf16.mxu0 %v8323
    %8387 = vmatpush1.bf16.msra.mxu0 %v8322
    %8388 = vmatprep.subr.bf16.mxu0 %v8325
    %8389 = vmatpush1.bf16.msra.mxu0 %v8324
    %8390 = vmatprep.subr.bf16.mxu0 %v8327
    %8391 = vmatpush1.bf16.msra.mxu0 %v8326
    %8392 = vmatprep.subr.bf16.mxu0 %v8329
    %8393 = vmatpush1.bf16.msra.mxu0 %v8328
    %8394 = vmatprep.subr.bf16.mxu0 %v8331
    %8395 = vmatpush1.bf16.msra.mxu0 %v8330
    %8396 = vmatprep.subr.bf16.mxu0 %v8333
    %8397 = vmatpush1.bf16.msra.mxu0 %v8332
    %8398 = vmatprep.subr.bf16.mxu0 %v8335
    %8399 = vmatpush1.bf16.msra.mxu0 %v8334
    %8400 = vmatprep.subr.bf16.mxu0 %v8337
    %8401 = vmatpush1.bf16.msra.mxu0 %v8336
    %8402 = vmatprep.subr.bf16.mxu0 %v8339
    %8403 = vmatpush1.bf16.msra.mxu0 %v8338
    %8404 = vmatprep.subr.bf16.mxu0 %v8341
    %8405 = vmatpush1.bf16.msra.mxu0 %v8340
    %8406 = vmatprep.subr.bf16.mxu0 %v8343
    %8407 = vmatpush1.bf16.msra.mxu0 %v8342
    %8408 = vmatprep.subr.bf16.mxu0 %v8345
    %8409 = vmatpush1.bf16.msra.mxu0 %v8344
    %8410 = vmatprep.subr.bf16.mxu0 %v8347
    %8411 = vmatpush1.bf16.msra.mxu0 %v8346
    %8412 = vmatprep.subr.bf16.mxu0 %v8349
    %8413 = vmatpush1.bf16.msra.mxu0 %v8348
    %8414 = vmatprep.subr.bf16.mxu0 %v8351
    %8415 = vmatpush1.bf16.msra.mxu0 %v8350
    %8416 = vmatprep.mubr.bf16.mxu0 %v7256
    %8417 = vmatmul.mubr.bf16.gmra.mrb[0].mxu0 %v7255
    %v8418 = vpop.f32.mrb[0].mxu0
    %v8419 = vadd.f32 0.0, %v8418
    %v8420 = vpop.f32.mrb[0].mxu0
    %v8421 = vadd.f32 0.0, %v8420
    %v8422 = vpop.f32.mrb[0].mxu0
    %v8423 = vadd.f32 0.0, %v8422
    %v8424 = vpop.f32.mrb[0].mxu0
    %v8425 = vadd.f32 0.0, %v8424
    %8426 = vdwg.mxu0
    %s8427 = scalar_lea.vmem [#allocation19], 24
    %v8428 = vld [vmem:[%s8427] sm:$0xff]
    %v8430 = vsel %vm7730, %v8428, 0
    %8432 = vmatprep.subr.mxu0 %v8421
    %8433 = vmatpush1.msra.mxu0 %v8419
    %8434 = vmatprep.subr.mxu0 %v8425
    %8435 = vmatpush1.msra.mxu0 %v8423
    %8436 = vmatprep.subr.mxu0 0.0
    %8437 = vmatpush1.msra.mxu0 0.0
    %8438 = vmatprep.subr.mxu0 0.0
    %8439 = vmatpush1.msra.mxu0 0.0
    %8440 = vmatprep.subr.mxu0 0.0
    %8441 = vmatpush1.msra.mxu0 0.0
    %8442 = vmatprep.subr.mxu0 0.0
    %8443 = vmatpush1.msra.mxu0 0.0
    %8444 = vmatprep.subr.mxu0 0.0
    %8445 = vmatpush1.msra.mxu0 0.0
    %8446 = vmatprep.subr.mxu0 0.0
    %8447 = vmatpush1.msra.mxu0 0.0
    %8448 = vmatprep.subr.mxu0 0.0
    %8449 = vmatpush1.msra.mxu0 0.0
    %8450 = vmatprep.subr.mxu0 0.0
    %8451 = vmatpush1.msra.mxu0 0.0
    %8452 = vmatprep.subr.mxu0 0.0
    %8453 = vmatpush1.msra.mxu0 0.0
    %8454 = vmatprep.subr.mxu0 0.0
    %8455 = vmatpush1.msra.mxu0 0.0
    %8456 = vmatprep.subr.mxu0 0.0
    %8457 = vmatpush1.msra.mxu0 0.0
    %8458 = vmatprep.subr.mxu0 0.0
    %8459 = vmatpush1.msra.mxu0 0.0
    %8460 = vmatprep.subr.mxu0 0.0
    %8461 = vmatpush1.msra.mxu0 0.0
    %8462 = vmatprep.subr.mxu0 0.0
    %8463 = vmatpush1.msra.mxu0 0.0
    %8464 = vmatprep.subr.mxu0 0.0
    %8465 = vmatpush1.msra.mxu0 0.0
    %8466 = vmatprep.subr.mxu0 0.0
    %8467 = vmatpush1.msra.mxu0 0.0
    %8468 = vmatprep.subr.mxu0 0.0
    %8469 = vmatpush1.msra.mxu0 0.0
    %8470 = vmatprep.subr.mxu0 0.0
    %8471 = vmatpush1.msra.mxu0 0.0
    %8472 = vmatprep.subr.mxu0 0.0
    %8473 = vmatpush1.msra.mxu0 0.0
    %8474 = vmatprep.subr.mxu0 0.0
    %8475 = vmatpush1.msra.mxu0 0.0
    %8476 = vmatprep.subr.mxu0 0.0
    %8477 = vmatpush1.msra.mxu0 0.0
    %8478 = vmatprep.subr.mxu0 0.0
    %8479 = vmatpush1.msra.mxu0 0.0
    %8480 = vmatprep.subr.mxu0 0.0
    %8481 = vmatpush1.msra.mxu0 0.0
    %8482 = vmatprep.subr.mxu0 0.0
    %8483 = vmatpush1.msra.mxu0 0.0
    %8484 = vmatprep.subr.mxu0 0.0
    %8485 = vmatpush1.msra.mxu0 0.0
    %8486 = vmatprep.subr.mxu0 0.0
    %8487 = vmatpush1.msra.mxu0 0.0
    %8488 = vmatprep.subr.mxu0 0.0
    %8489 = vmatpush1.msra.mxu0 0.0
    %8490 = vmatprep.subr.mxu0 0.0
    %8491 = vmatpush1.msra.mxu0 0.0
    %8492 = vmatprep.subr.mxu0 0.0
    %8493 = vmatpush1.msra.mxu0 0.0
    %8494 = vmatprep.subr.mxu0 0.0
    %8495 = vmatpush1.msra.mxu0 0.0
    %8496 = vmatprep.mubr.f32.mxu0 0.0
    %8497 = vmatmul.mubr.f32.gmra.mrb[0].mxu0 %v8430
    %v8498 = vpop.f32.mrb[0].mxu0
    %v8499 = vadd.f32 0.0, %v8498
    %v8500 = vpop.f32.mrb[0].mxu0
    %v8501 = vadd.f32 0.0, %v8500
    %8502 = vdwg.mxu0
    %v8503 = vadd.f32 %v8190, %v8499
    %v8504 = vadd.f32 %v8191, %v8501
    %v8505 = vld [vmem:[#allocation18 + $0x20] sm:$0xff]
    %v8506 = vld [vmem:[#allocation18 + $0x48] sm:$0xff]
    %v8507 = vld [vmem:[#allocation18 + $0x70] sm:$0xff]
    %v8508 = vld [vmem:[#allocation18 + $0x98] sm:$0xff]
    %v8509 = vld [vmem:[#allocation18 + $0xc0] sm:$0xff]
    %v8510 = vld [vmem:[#allocation18 + $0xe8] sm:$0xff]
    %v8511 = vld [vmem:[#allocation18 + $0x110] sm:$0xff]
    %v8512 = vld [vmem:[#allocation18 + $0x138] sm:$0xff]
    %v8513 = vld [vmem:[#allocation18 + $0x160] sm:$0xff]
    %v8514 = vld [vmem:[#allocation18 + $0x188] sm:$0xff]
    %v8515 = vld [vmem:[#allocation18 + $0x1b0] sm:$0xff]
    %v8516 = vld [vmem:[#allocation18 + $0x1d8] sm:$0xff]
    %v8517 = vld [vmem:[#allocation18 + $0x200] sm:$0xff]
    %v8518 = vld [vmem:[#allocation18 + $0x228] sm:$0xff]
    %v8519 = vld [vmem:[#allocation18 + $0x250] sm:$0xff]
    %v8520 = vld [vmem:[#allocation18 + $0x278] sm:$0xff]
    %v8521 = vld [vmem:[#allocation18 + $0x2a0] sm:$0xff]
    %v8522 = vld [vmem:[#allocation18 + $0x2c8] sm:$0xff]
    %v8523 = vld [vmem:[#allocation18 + $0x2f0] sm:$0xff]
    %v8524 = vld [vmem:[#allocation18 + $0x318] sm:$0xff]
    %v8525 = vld [vmem:[#allocation18 + $0x340] sm:$0xff]
    %v8526 = vld [vmem:[#allocation18 + $0x368] sm:$0xff]
    %v8527 = vld [vmem:[#allocation18 + $0x390] sm:$0xff]
    %v8528 = vld [vmem:[#allocation18 + $0x3b8] sm:$0xff]
    %v8529 = vld [vmem:[#allocation18 + $0x3e0] sm:$0xff]
    %v8530 = vld [vmem:[#allocation18 + $0x408] sm:$0xff]
    %v8531 = vld [vmem:[#allocation18 + $0x430] sm:$0xff]
    %v8532 = vld [vmem:[#allocation18 + $0x458] sm:$0xff]
    %v8533 = vld [vmem:[#allocation18 + $0x480] sm:$0xff]
    %v8534 = vld [vmem:[#allocation18 + $0x4a8] sm:$0xff]
    %v8535 = vld [vmem:[#allocation18 + $0x4d0] sm:$0xff]
    %v8536 = vld [vmem:[#allocation18 + $0x4f8] sm:$0xff]
    %v8569 = vunpack.c.l.b16 %v8505
    %v8570 = vunpack.c.h.b16 %v8505
    %v8571 = vunpack.c.l.b16 %v8506
    %v8572 = vunpack.c.h.b16 %v8506
    %v8573 = vunpack.c.l.b16 %v8507
    %v8574 = vunpack.c.h.b16 %v8507
    %v8575 = vunpack.c.l.b16 %v8508
    %v8576 = vunpack.c.h.b16 %v8508
    %v8577 = vunpack.c.l.b16 %v8509
    %v8578 = vunpack.c.h.b16 %v8509
    %v8579 = vunpack.c.l.b16 %v8510
    %v8580 = vunpack.c.h.b16 %v8510
    %v8581 = vunpack.c.l.b16 %v8511
    %v8582 = vunpack.c.h.b16 %v8511
    %v8583 = vunpack.c.l.b16 %v8512
    %v8584 = vunpack.c.h.b16 %v8512
    %v8585 = vunpack.c.l.b16 %v8513
    %v8586 = vunpack.c.h.b16 %v8513
    %v8587 = vunpack.c.l.b16 %v8514
    %v8588 = vunpack.c.h.b16 %v8514
    %v8589 = vunpack.c.l.b16 %v8515
    %v8590 = vunpack.c.h.b16 %v8515
    %v8591 = vunpack.c.l.b16 %v8516
    %v8592 = vunpack.c.h.b16 %v8516
    %v8593 = vunpack.c.l.b16 %v8517
    %v8594 = vunpack.c.h.b16 %v8517
    %v8595 = vunpack.c.l.b16 %v8518
    %v8596 = vunpack.c.h.b16 %v8518
    %v8597 = vunpack.c.l.b16 %v8519
    %v8598 = vunpack.c.h.b16 %v8519
    %v8599 = vunpack.c.l.b16 %v8520
    %v8600 = vunpack.c.h.b16 %v8520
    %v8601 = vunpack.c.l.b16 %v8521
    %v8602 = vunpack.c.h.b16 %v8521
    %v8603 = vunpack.c.l.b16 %v8522
    %v8604 = vunpack.c.h.b16 %v8522
    %v8605 = vunpack.c.l.b16 %v8523
    %v8606 = vunpack.c.h.b16 %v8523
    %v8607 = vunpack.c.l.b16 %v8524
    %v8608 = vunpack.c.h.b16 %v8524
    %v8609 = vunpack.c.l.b16 %v8525
    %v8610 = vunpack.c.h.b16 %v8525
    %v8611 = vunpack.c.l.b16 %v8526
    %v8612 = vunpack.c.h.b16 %v8526
    %v8613 = vunpack.c.l.b16 %v8527
    %v8614 = vunpack.c.h.b16 %v8527
    %v8615 = vunpack.c.l.b16 %v8528
    %v8616 = vunpack.c.h.b16 %v8528
    %v8617 = vunpack.c.l.b16 %v8529
    %v8618 = vunpack.c.h.b16 %v8529
    %v8619 = vunpack.c.l.b16 %v8530
    %v8620 = vunpack.c.h.b16 %v8530
    %v8621 = vunpack.c.l.b16 %v8531
    %v8622 = vunpack.c.h.b16 %v8531
    %v8623 = vunpack.c.l.b16 %v8532
    %v8624 = vunpack.c.h.b16 %v8532
    %v8625 = vunpack.c.l.b16 %v8533
    %v8626 = vunpack.c.h.b16 %v8533
    %v8627 = vunpack.c.l.b16 %v8534
    %v8628 = vunpack.c.h.b16 %v8534
    %v8629 = vunpack.c.l.b16 %v8535
    %v8630 = vunpack.c.h.b16 %v8535
    %v8631 = vunpack.c.l.b16 %v8536
    %v8632 = vunpack.c.h.b16 %v8536
    %v8633 = vpack.c.b16 %v8571, %v8569
    %v8634 = vpack.c.b16 %v8572, %v8570
    %v8635 = vpack.c.b16 %v8575, %v8573
    %v8636 = vpack.c.b16 %v8576, %v8574
    %v8637 = vpack.c.b16 %v8579, %v8577
    %v8638 = vpack.c.b16 %v8580, %v8578
    %v8639 = vpack.c.b16 %v8583, %v8581
    %v8640 = vpack.c.b16 %v8584, %v8582
    %v8641 = vpack.c.b16 %v8587, %v8585
    %v8642 = vpack.c.b16 %v8588, %v8586
    %v8643 = vpack.c.b16 %v8591, %v8589
    %v8644 = vpack.c.b16 %v8592, %v8590
    %v8645 = vpack.c.b16 %v8595, %v8593
    %v8646 = vpack.c.b16 %v8596, %v8594
    %v8647 = vpack.c.b16 %v8599, %v8597
    %v8648 = vpack.c.b16 %v8600, %v8598
    %v8649 = vpack.c.b16 %v8603, %v8601
    %v8650 = vpack.c.b16 %v8604, %v8602
    %v8651 = vpack.c.b16 %v8607, %v8605
    %v8652 = vpack.c.b16 %v8608, %v8606
    %v8653 = vpack.c.b16 %v8611, %v8609
    %v8654 = vpack.c.b16 %v8612, %v8610
    %v8655 = vpack.c.b16 %v8615, %v8613
    %v8656 = vpack.c.b16 %v8616, %v8614
    %v8657 = vpack.c.b16 %v8619, %v8617
    %v8658 = vpack.c.b16 %v8620, %v8618
    %v8659 = vpack.c.b16 %v8623, %v8621
    %v8660 = vpack.c.b16 %v8624, %v8622
    %v8661 = vpack.c.b16 %v8627, %v8625
    %v8662 = vpack.c.b16 %v8628, %v8626
    %v8663 = vpack.c.b16 %v8631, %v8629
    %v8664 = vpack.c.b16 %v8632, %v8630
    %8697 = vmatprep.subr.bf16.mxu0 %v8634
    %8698 = vmatpush1.bf16.msra.mxu0 %v8633
    %8699 = vmatprep.subr.bf16.mxu0 %v8636
    %8700 = vmatpush1.bf16.msra.mxu0 %v8635
    %8701 = vmatprep.subr.bf16.mxu0 %v8638
    %8702 = vmatpush1.bf16.msra.mxu0 %v8637
    %8703 = vmatprep.subr.bf16.mxu0 %v8640
    %8704 = vmatpush1.bf16.msra.mxu0 %v8639
    %8705 = vmatprep.subr.bf16.mxu0 %v8642
    %8706 = vmatpush1.bf16.msra.mxu0 %v8641
    %8707 = vmatprep.subr.bf16.mxu0 %v8644
    %8708 = vmatpush1.bf16.msra.mxu0 %v8643
    %8709 = vmatprep.subr.bf16.mxu0 %v8646
    %8710 = vmatpush1.bf16.msra.mxu0 %v8645
    %8711 = vmatprep.subr.bf16.mxu0 %v8648
    %8712 = vmatpush1.bf16.msra.mxu0 %v8647
    %8713 = vmatprep.subr.bf16.mxu0 %v8650
    %8714 = vmatpush1.bf16.msra.mxu0 %v8649
    %8715 = vmatprep.subr.bf16.mxu0 %v8652
    %8716 = vmatpush1.bf16.msra.mxu0 %v8651
    %8717 = vmatprep.subr.bf16.mxu0 %v8654
    %8718 = vmatpush1.bf16.msra.mxu0 %v8653
    %8719 = vmatprep.subr.bf16.mxu0 %v8656
    %8720 = vmatpush1.bf16.msra.mxu0 %v8655
    %8721 = vmatprep.subr.bf16.mxu0 %v8658
    %8722 = vmatpush1.bf16.msra.mxu0 %v8657
    %8723 = vmatprep.subr.bf16.mxu0 %v8660
    %8724 = vmatpush1.bf16.msra.mxu0 %v8659
    %8725 = vmatprep.subr.bf16.mxu0 %v8662
    %8726 = vmatpush1.bf16.msra.mxu0 %v8661
    %8727 = vmatprep.subr.bf16.mxu0 %v8664
    %8728 = vmatpush1.bf16.msra.mxu0 %v8663
    %8729 = vmatprep.mubr.bf16.mxu0 %v7256
    %8730 = vmatmul.mubr.bf16.gmra.mrb[0].mxu0 %v7255
    %v8731 = vpop.f32.mrb[0].mxu0
    %v8732 = vadd.f32 0.0, %v8731
    %v8733 = vpop.f32.mrb[0].mxu0
    %v8734 = vadd.f32 0.0, %v8733
    %v8735 = vpop.f32.mrb[0].mxu0
    %v8736 = vadd.f32 0.0, %v8735
    %v8737 = vpop.f32.mrb[0].mxu0
    %v8738 = vadd.f32 0.0, %v8737
    %8739 = vdwg.mxu0
    %s8740 = scalar_lea.vmem [#allocation19], 32
    %v8741 = vld [vmem:[%s8740] sm:$0xff]
    %v8743 = vsel %vm7730, %v8741, 0
    %8745 = vmatprep.subr.mxu0 %v8734
    %8746 = vmatpush1.msra.mxu0 %v8732
    %8747 = vmatprep.subr.mxu0 %v8738
    %8748 = vmatpush1.msra.mxu0 %v8736
    %8749 = vmatprep.subr.mxu0 0.0
    %8750 = vmatpush1.msra.mxu0 0.0
    %8751 = vmatprep.subr.mxu0 0.0
    %8752 = vmatpush1.msra.mxu0 0.0
    %8753 = vmatprep.subr.mxu0 0.0
    %8754 = vmatpush1.msra.mxu0 0.0
    %8755 = vmatprep.subr.mxu0 0.0
    %8756 = vmatpush1.msra.mxu0 0.0
    %8757 = vmatprep.subr.mxu0 0.0
    %8758 = vmatpush1.msra.mxu0 0.0
    %8759 = vmatprep.subr.mxu0 0.0
    %8760 = vmatpush1.msra.mxu0 0.0
    %8761 = vmatprep.subr.mxu0 0.0
    %8762 = vmatpush1.msra.mxu0 0.0
    %8763 = vmatprep.subr.mxu0 0.0
    %8764 = vmatpush1.msra.mxu0 0.0
    %8765 = vmatprep.subr.mxu0 0.0
    %8766 = vmatpush1.msra.mxu0 0.0
    %8767 = vmatprep.subr.mxu0 0.0
    %8768 = vmatpush1.msra.mxu0 0.0
    %8769 = vmatprep.subr.mxu0 0.0
    %8770 = vmatpush1.msra.mxu0 0.0
    %8771 = vmatprep.subr.mxu0 0.0
    %8772 = vmatpush1.msra.mxu0 0.0
    %8773 = vmatprep.subr.mxu0 0.0
    %8774 = vmatpush1.msra.mxu0 0.0
    %8775 = vmatprep.subr.mxu0 0.0
    %8776 = vmatpush1.msra.mxu0 0.0
    %8777 = vmatprep.subr.mxu0 0.0
    %8778 = vmatpush1.msra.mxu0 0.0
    %8779 = vmatprep.subr.mxu0 0.0
    %8780 = vmatpush1.msra.mxu0 0.0
    %8781 = vmatprep.subr.mxu0 0.0
    %8782 = vmatpush1.msra.mxu0 0.0
    %8783 = vmatprep.subr.mxu0 0.0
    %8784 = vmatpush1.msra.mxu0 0.0
    %8785 = vmatprep.subr.mxu0 0.0
    %8786 = vmatpush1.msra.mxu0 0.0
    %8787 = vmatprep.subr.mxu0 0.0
    %8788 = vmatpush1.msra.mxu0 0.0
    %8789 = vmatprep.subr.mxu0 0.0
    %8790 = vmatpush1.msra.mxu0 0.0
    %8791 = vmatprep.subr.mxu0 0.0
    %8792 = vmatpush1.msra.mxu0 0.0
    %8793 = vmatprep.subr.mxu0 0.0
    %8794 = vmatpush1.msra.mxu0 0.0
    %8795 = vmatprep.subr.mxu0 0.0
    %8796 = vmatpush1.msra.mxu0 0.0
    %8797 = vmatprep.subr.mxu0 0.0
    %8798 = vmatpush1.msra.mxu0 0.0
    %8799 = vmatprep.subr.mxu0 0.0
    %8800 = vmatpush1.msra.mxu0 0.0
    %8801 = vmatprep.subr.mxu0 0.0
    %8802 = vmatpush1.msra.mxu0 0.0
    %8803 = vmatprep.subr.mxu0 0.0
    %8804 = vmatpush1.msra.mxu0 0.0
    %8805 = vmatprep.subr.mxu0 0.0
    %8806 = vmatpush1.msra.mxu0 0.0
    %8807 = vmatprep.subr.mxu0 0.0
    %8808 = vmatpush1.msra.mxu0 0.0
    %8809 = vmatprep.mubr.f32.mxu0 0.0
    %8810 = vmatmul.mubr.f32.gmra.mrb[0].mxu0 %v8743
    %v8811 = vpop.f32.mrb[0].mxu0
    %v8812 = vadd.f32 0.0, %v8811
    %v8813 = vpop.f32.mrb[0].mxu0
    %v8814 = vadd.f32 0.0, %v8813
    %8815 = vdwg.mxu0
    %v8816 = vadd.f32 %v8503, %v8812
    %v8817 = vadd.f32 %v8504, %v8814
    %v8818 = vrot.slane %v8816, 4
    %v8819 = vadd.f32 %v8816, %v8818
    %v8820 = vrot.slane %v8819, 2
    %v8821 = vadd.f32 %v8819, %v8820
    %v8822 = vrot.slane %v8821, 1
    %v8823 = vadd.f32 %v8821, %v8822
    %v8824 = vrot.slane %v8817, 4
    %v8825 = vadd.f32 %v8817, %v8824
    %v8826 = vrot.slane %v8825, 2
    %v8827 = vadd.f32 %v8825, %v8826
    %v8828 = vrot.slane %v8827, 1
    %v8829 = vadd.f32 %v8827, %v8828
    %v8830 = vmul.f32 %v8816, %v8816
    %v8831 = vmul.f32 %v8817, %v8817
    %v8832 = vrot.slane %v8830, 4
    %v8833 = vadd.f32 %v8830, %v8832
    %v8834 = vrot.slane %v8833, 2
    %v8835 = vadd.f32 %v8833, %v8834
    %v8836 = vrot.slane %v8835, 1
    %v8837 = vadd.f32 %v8835, %v8836
    %v8838 = vrot.slane %v8831, 4
    %v8839 = vadd.f32 %v8831, %v8838
    %v8840 = vrot.slane %v8839, 2
    %v8841 = vadd.f32 %v8839, %v8840
    %v8842 = vrot.slane %v8841, 1
    %v8843 = vadd.f32 %v8841, %v8842
    %v8844 = vld [vmem:[#allocation21] sm:$0xff]
    %v8845 = vld [vmem:[#allocation21 + $0x8] sm:$0xff]
    %v8846 = vld [vmem:[#allocation21 + $0x10] sm:$0xff]
    %v8847 = vld [vmem:[#allocation21 + $0x18] sm:$0xff]
    %v8848 = vld [vmem:[#allocation21 + $0x20] sm:$0xff]
    %v8849 = vld [vmem:[#allocation21 + $0x28] sm:$0xff]
    %v8850 = vld [vmem:[#allocation21 + $0x30] sm:$0xff]
    %v8851 = vld [vmem:[#allocation21 + $0x38] sm:$0xff]
    %v8852 = vld [vmem:[#allocation21 + $0x40] sm:$0xff]
    %v8853 = vld [vmem:[#allocation21 + $0x48] sm:$0xff]
    %v8854 = vld [vmem:[#allocation21 + $0x50] sm:$0xff]
    %v8855 = vld [vmem:[#allocation21 + $0x58] sm:$0xff]
    %v8856 = vld [vmem:[#allocation21 + $0x60] sm:$0xff]
    %v8857 = vld [vmem:[#allocation21 + $0x68] sm:$0xff]
    %v8858 = vld [vmem:[#allocation21 + $0x70] sm:$0xff]
    %v8859 = vld [vmem:[#allocation21 + $0x78] sm:$0xff]
    %v8860 = vld [vmem:[#allocation21 + $0x80] sm:$0xff]
    %v8861 = vld [vmem:[#allocation21 + $0x88] sm:$0xff]
    %v8862 = vld [vmem:[#allocation21 + $0x90] sm:$0xff]
    %v8863 = vld [vmem:[#allocation21 + $0x98] sm:$0xff]
    %v8864 = vld [vmem:[#allocation21 + $0xa0] sm:$0xff]
    %v8865 = vld [vmem:[#allocation21 + $0xa8] sm:$0xff]
    %v8866 = vld [vmem:[#allocation21 + $0xb0] sm:$0xff]
    %v8867 = vld [vmem:[#allocation21 + $0xb8] sm:$0xff]
    %v8868 = vld [vmem:[#allocation21 + $0xc0] sm:$0xff]
    %v8869 = vld [vmem:[#allocation21 + $0xc8] sm:$0xff]
    %v8870 = vld [vmem:[#allocation21 + $0xd0] sm:$0xff]
    %v8871 = vld [vmem:[#allocation21 + $0xd8] sm:$0xff]
    %v8872 = vld [vmem:[#allocation21 + $0xe0] sm:$0xff]
    %v8873 = vld [vmem:[#allocation21 + $0xe8] sm:$0xff]
    %v8874 = vld [vmem:[#allocation21 + $0xf0] sm:$0xff]
    %v8875 = vld [vmem:[#allocation21 + $0xf8] sm:$0xff]
    %8876 = vmatprep.subr.mxu0 0.0
    %8877 = vmatpush1.msra.mxu0 %v8844
    %8878 = vmatprep.subr.mxu0 0.0
    %8879 = vmatpush1.msra.mxu0 %v8845
    %8880 = vmatprep.subr.mxu0 0.0
    %8881 = vmatpush1.msra.mxu0 %v8846
    %8882 = vmatprep.subr.mxu0 0.0
    %8883 = vmatpush1.msra.mxu0 %v8847
    %8884 = vmatprep.subr.mxu0 0.0
    %8885 = vmatpush1.msra.mxu0 %v8848
    %8886 = vmatprep.subr.mxu0 0.0
    %8887 = vmatpush1.msra.mxu0 %v8849
    %8888 = vmatprep.subr.mxu0 0.0
    %8889 = vmatpush1.msra.mxu0 %v8850
    %8890 = vmatprep.subr.mxu0 0.0
    %8891 = vmatpush1.msra.mxu0 %v8851
    %8892 = vmatprep.subr.mxu0 0.0
    %8893 = vmatpush1.msra.mxu0 %v8852
    %8894 = vmatprep.subr.mxu0 0.0
    %8895 = vmatpush1.msra.mxu0 %v8853
    %8896 = vmatprep.subr.mxu0 0.0
    %8897 = vmatpush1.msra.mxu0 %v8854
    %8898 = vmatprep.subr.mxu0 0.0
    %8899 = vmatpush1.msra.mxu0 %v8855
    %8900 = vmatprep.subr.mxu0 0.0
    %8901 = vmatpush1.msra.mxu0 %v8856
    %8902 = vmatprep.subr.mxu0 0.0
    %8903 = vmatpush1.msra.mxu0 %v8857
    %8904 = vmatprep.subr.mxu0 0.0
    %8905 = vmatpush1.msra.mxu0 %v8858
    %8906 = vmatprep.subr.mxu0 0.0
    %8907 = vmatpush1.msra.mxu0 %v8859
    %8908 = vmatprep.subr.mxu0 0.0
    %8909 = vmatpush1.msra.mxu0 %v8860
    %8910 = vmatprep.subr.mxu0 0.0
    %8911 = vmatpush1.msra.mxu0 %v8861
    %8912 = vmatprep.subr.mxu0 0.0
    %8913 = vmatpush1.msra.mxu0 %v8862
    %8914 = vmatprep.subr.mxu0 0.0
    %8915 = vmatpush1.msra.mxu0 %v8863
    %8916 = vmatprep.subr.mxu0 0.0
    %8917 = vmatpush1.msra.mxu0 %v8864
    %8918 = vmatprep.subr.mxu0 0.0
    %8919 = vmatpush1.msra.mxu0 %v8865
    %8920 = vmatprep.subr.mxu0 0.0
    %8921 = vmatpush1.msra.mxu0 %v8866
    %8922 = vmatprep.subr.mxu0 0.0
    %8923 = vmatpush1.msra.mxu0 %v8867
    %8924 = vmatprep.subr.mxu0 0.0
    %8925 = vmatpush1.msra.mxu0 %v8868
    %8926 = vmatprep.subr.mxu0 0.0
    %8927 = vmatpush1.msra.mxu0 %v8869
    %8928 = vmatprep.subr.mxu0 0.0
    %8929 = vmatpush1.msra.mxu0 %v8870
    %8930 = vmatprep.subr.mxu0 0.0
    %8931 = vmatpush1.msra.mxu0 %v8871
    %8932 = vmatprep.subr.mxu0 0.0
    %8933 = vmatpush1.msra.mxu0 %v8872
    %8934 = vmatprep.subr.mxu0 0.0
    %8935 = vmatpush1.msra.mxu0 %v8873
    %8936 = vmatprep.subr.mxu0 0.0
    %8937 = vmatpush1.msra.mxu0 %v8874
    %8938 = vmatprep.subr.mxu0 0.0
    %8939 = vmatpush1.msra.mxu0 %v8875
    %8940 = vmatprep.mubr.f32.mxu0 %v8829
    %8941 = vmatmul.mubr.f32.gmra.mrb[0].mxu0 %v8823
    %v8942 = vpop.f32.mrb[0].mxu0
    %v8943 = vadd.f32 0.0, %v8942
    %v8944 = vpop.f32.mrb[0].mxu0
    %8945 = vdwg.mxu0
    %8946 = vmatprep.subr.mxu0 0.0
    %8947 = vmatpush1.msra.mxu0 %v8844
    %8948 = vmatprep.subr.mxu0 0.0
    %8949 = vmatpush1.msra.mxu0 %v8845
    %8950 = vmatprep.subr.mxu0 0.0
    %8951 = vmatpush1.msra.mxu0 %v8846
    %8952 = vmatprep.subr.mxu0 0.0
    %8953 = vmatpush1.msra.mxu0 %v8847
    %8954 = vmatprep.subr.mxu0 0.0
    %8955 = vmatpush1.msra.mxu0 %v8848
    %8956 = vmatprep.subr.mxu0 0.0
    %8957 = vmatpush1.msra.mxu0 %v8849
    %8958 = vmatprep.subr.mxu0 0.0
    %8959 = vmatpush1.msra.mxu0 %v8850
    %8960 = vmatprep.subr.mxu0 0.0
    %8961 = vmatpush1.msra.mxu0 %v8851
    %8962 = vmatprep.subr.mxu0 0.0
    %8963 = vmatpush1.msra.mxu0 %v8852
    %8964 = vmatprep.subr.mxu0 0.0
    %8965 = vmatpush1.msra.mxu0 %v8853
    %8966 = vmatprep.subr.mxu0 0.0
    %8967 = vmatpush1.msra.mxu0 %v8854
    %8968 = vmatprep.subr.mxu0 0.0
    %8969 = vmatpush1.msra.mxu0 %v8855
    %8970 = vmatprep.subr.mxu0 0.0
    %8971 = vmatpush1.msra.mxu0 %v8856
    %8972 = vmatprep.subr.mxu0 0.0
    %8973 = vmatpush1.msra.mxu0 %v8857
    %8974 = vmatprep.subr.mxu0 0.0
    %8975 = vmatpush1.msra.mxu0 %v8858
    %8976 = vmatprep.subr.mxu0 0.0
    %8977 = vmatpush1.msra.mxu0 %v8859
    %8978 = vmatprep.subr.mxu0 0.0
    %8979 = vmatpush1.msra.mxu0 %v8860
    %8980 = vmatprep.subr.mxu0 0.0
    %8981 = vmatpush1.msra.mxu0 %v8861
    %8982 = vmatprep.subr.mxu0 0.0
    %8983 = vmatpush1.msra.mxu0 %v8862
    %8984 = vmatprep.subr.mxu0 0.0
    %8985 = vmatpush1.msra.mxu0 %v8863
    %8986 = vmatprep.subr.mxu0 0.0
    %8987 = vmatpush1.msra.mxu0 %v8864
    %8988 = vmatprep.subr.mxu0 0.0
    %8989 = vmatpush1.msra.mxu0 %v8865
    %8990 = vmatprep.subr.mxu0 0.0
    %8991 = vmatpush1.msra.mxu0 %v8866
    %8992 = vmatprep.subr.mxu0 0.0
    %8993 = vmatpush1.msra.mxu0 %v8867
    %8994 = vmatprep.subr.mxu0 0.0
    %8995 = vmatpush1.msra.mxu0 %v8868
    %8996 = vmatprep.subr.mxu0 0.0
    %8997 = vmatpush1.msra.mxu0 %v8869
    %8998 = vmatprep.subr.mxu0 0.0
    %8999 = vmatpush1.msra.mxu0 %v8870
    %9000 = vmatprep.subr.mxu0 0.0
    %9001 = vmatpush1.msra.mxu0 %v8871
    %9002 = vmatprep.subr.mxu0 0.0
    %9003 = vmatpush1.msra.mxu0 %v8872
    %9004 = vmatprep.subr.mxu0 0.0
    %9005 = vmatpush1.msra.mxu0 %v8873
    %9006 = vmatprep.subr.mxu0 0.0
    %9007 = vmatpush1.msra.mxu0 %v8874
    %9008 = vmatprep.subr.mxu0 0.0
    %9009 = vmatpush1.msra.mxu0 %v8875
    %9010 = vmatprep.mubr.f32.mxu0 %v8843
    %9011 = vmatmul.mubr.f32.gmra.mrb[0].mxu0 %v8837
    %v9012 = vpop.f32.mrb[0].mxu0
    %v9013 = vadd.f32 0.0, %v9012
    %v9014 = vpop.f32.mrb[0].mxu0
    %9015 = vdwg.mxu0
    %v9016 = vmul.f32 %v8943, 0.03125
    %v9017 = vmul.f32 %v9013, 0.03125
    %v9018 = vmul.f32 %v9016, %v9016
    %v9019 = vsub.f32 %v9017, %v9018
    %v9020 = vmax.f32 %v9019, 0.0
    %v9021 = vld [vmem:[%s23] sm:$0x1]
    %v9022 = vadd.f32 %v9020, 1e-05
    %v9023 = vrsqrt.pop %v9022
    %v9024 = vmul.f32 %v9021, %v9023
    %v9025 = vld [vmem:[%s24] sm:$0x1]
    %v9026 = vmul.f32 %v9016, %v9024
    %v9027 = vsub.f32 %v9025, %v9026
    %v9028 = vld [vmem:[#allocation22] sm:$0xff]
    %v9029 = vld [vmem:[#allocation22 + $0x8] sm:$0xff]
    %v9030 = vld [vmem:[#allocation22 + $0x10] sm:$0xff]
    %v9031 = vld [vmem:[#allocation22 + $0x18] sm:$0xff]
    %v9032 = vld [vmem:[#allocation22 + $0x20] sm:$0xff]
    %v9033 = vld [vmem:[#allocation22 + $0x28] sm:$0xff]
    %v9034 = vld [vmem:[#allocation22 + $0x30] sm:$0xff]
    %v9035 = vld [vmem:[#allocation22 + $0x38] sm:$0xff]
    %v9036 = vld [vmem:[#allocation22 + $0x40] sm:$0xff]
    %v9037 = vld [vmem:[#allocation22 + $0x48] sm:$0xff]
    %v9038 = vld [vmem:[#allocation22 + $0x50] sm:$0xff]
    %v9039 = vld [vmem:[#allocation22 + $0x58] sm:$0xff]
    %v9040 = vld [vmem:[#allocation22 + $0x60] sm:$0xff]
    %v9041 = vld [vmem:[#allocation22 + $0x68] sm:$0xff]
    %v9042 = vld [vmem:[#allocation22 + $0x70] sm:$0xff]
    %v9043 = vld [vmem:[#allocation22 + $0x78] sm:$0xff]
    %v9044 = vld [vmem:[#allocation22 + $0x80] sm:$0xff]
    %v9045 = vld [vmem:[#allocation22 + $0x88] sm:$0xff]
    %v9046 = vld [vmem:[#allocation22 + $0x90] sm:$0xff]
    %v9047 = vld [vmem:[#allocation22 + $0x98] sm:$0xff]
    %v9048 = vld [vmem:[#allocation22 + $0xa0] sm:$0xff]
    %v9049 = vld [vmem:[#allocation22 + $0xa8] sm:$0xff]
    %v9050 = vld [vmem:[#allocation22 + $0xb0] sm:$0xff]
    %v9051 = vld [vmem:[#allocation22 + $0xb8] sm:$0xff]
    %v9052 = vld [vmem:[#allocation22 + $0xc0] sm:$0xff]
    %v9053 = vld [vmem:[#allocation22 + $0xc8] sm:$0xff]
    %v9054 = vld [vmem:[#allocation22 + $0xd0] sm:$0xff]
    %v9055 = vld [vmem:[#allocation22 + $0xd8] sm:$0xff]
    %v9056 = vld [vmem:[#allocation22 + $0xe0] sm:$0xff]
    %v9057 = vld [vmem:[#allocation22 + $0xe8] sm:$0xff]
    %v9058 = vld [vmem:[#allocation22 + $0xf0] sm:$0xff]
    %v9059 = vld [vmem:[#allocation22 + $0xf8] sm:$0xff]
    %9060 = vmatprep.subr.mxu0 %v9029
    %9061 = vmatpush1.msra.mxu0 %v9028
    %9062 = vmatprep.subr.mxu0 %v9031
    %9063 = vmatpush1.msra.mxu0 %v9030
    %9064 = vmatprep.subr.mxu0 %v9033
    %9065 = vmatpush1.msra.mxu0 %v9032
    %9066 = vmatprep.subr.mxu0 %v9035
    %9067 = vmatpush1.msra.mxu0 %v9034
    %9068 = vmatprep.subr.mxu0 %v9037
    %9069 = vmatpush1.msra.mxu0 %v9036
    %9070 = vmatprep.subr.mxu0 %v9039
    %9071 = vmatpush1.msra.mxu0 %v9038
    %9072 = vmatprep.subr.mxu0 %v9041
    %9073 = vmatpush1.msra.mxu0 %v9040
    %9074 = vmatprep.subr.mxu0 %v9043
    %9075 = vmatpush1.msra.mxu0 %v9042
    %9076 = vmatprep.subr.mxu0 %v9045
    %9077 = vmatpush1.msra.mxu0 %v9044
    %9078 = vmatprep.subr.mxu0 %v9047
    %9079 = vmatpush1.msra.mxu0 %v9046
    %9080 = vmatprep.subr.mxu0 %v9049
    %9081 = vmatpush1.msra.mxu0 %v9048
    %9082 = vmatprep.subr.mxu0 %v9051
    %9083 = vmatpush1.msra.mxu0 %v9050
    %9084 = vmatprep.subr.mxu0 %v9053
    %9085 = vmatpush1.msra.mxu0 %v9052
    %9086 = vmatprep.subr.mxu0 %v9055
    %9087 = vmatpush1.msra.mxu0 %v9054
    %9088 = vmatprep.subr.mxu0 %v9057
    %9089 = vmatpush1.msra.mxu0 %v9056
    %9090 = vmatprep.subr.mxu0 %v9059
    %9091 = vmatpush1.msra.mxu0 %v9058
    %9092 = vmatprep.subr.mxu0 0.0
    %9093 = vmatpush1.msra.mxu0 0.0
    %9094 = vmatprep.subr.mxu0 0.0
    %9095 = vmatpush1.msra.mxu0 0.0
    %9096 = vmatprep.subr.mxu0 0.0
    %9097 = vmatpush1.msra.mxu0 0.0
    %9098 = vmatprep.subr.mxu0 0.0
    %9099 = vmatpush1.msra.mxu0 0.0
    %9100 = vmatprep.subr.mxu0 0.0
    %9101 = vmatpush1.msra.mxu0 0.0
    %9102 = vmatprep.subr.mxu0 0.0
    %9103 = vmatpush1.msra.mxu0 0.0
    %9104 = vmatprep.subr.mxu0 0.0
    %9105 = vmatpush1.msra.mxu0 0.0
    %9106 = vmatprep.subr.mxu0 0.0
    %9107 = vmatpush1.msra.mxu0 0.0
    %9108 = vmatprep.subr.mxu0 0.0
    %9109 = vmatpush1.msra.mxu0 0.0
    %9110 = vmatprep.subr.mxu0 0.0
    %9111 = vmatpush1.msra.mxu0 0.0
    %9112 = vmatprep.subr.mxu0 0.0
    %9113 = vmatpush1.msra.mxu0 0.0
    %9114 = vmatprep.subr.mxu0 0.0
    %9115 = vmatpush1.msra.mxu0 0.0
    %9116 = vmatprep.subr.mxu0 0.0
    %9117 = vmatpush1.msra.mxu0 0.0
    %9118 = vmatprep.subr.mxu0 0.0
    %9119 = vmatpush1.msra.mxu0 0.0
    %9120 = vmatprep.subr.mxu0 0.0
    %9121 = vmatpush1.msra.mxu0 0.0
    %9122 = vmatprep.subr.mxu0 0.0
    %9123 = vmatpush1.msra.mxu0 0.0
    %9124 = vmatprep.mubr.f32.mxu0 0.0
    %9125 = vmatmul.mubr.f32.gmra.mrb[0].mxu0 %v9024
    %v9126 = vpop.f32.mrb[0].mxu0
    %v9127 = vadd.f32 0.0, %v9126
    %v9128 = vpop.f32.mrb[0].mxu0
    %v9129 = vadd.f32 0.0, %v9128
    %9130 = vdwg.mxu0
    %9131 = vmatprep.subr.mxu0 %v9029
    %9132 = vmatpush1.msra.mxu0 %v9028
    %9133 = vmatprep.subr.mxu0 %v9031
    %9134 = vmatpush1.msra.mxu0 %v9030
    %9135 = vmatprep.subr.mxu0 %v9033
    %9136 = vmatpush1.msra.mxu0 %v9032
    %9137 = vmatprep.subr.mxu0 %v9035
    %9138 = vmatpush1.msra.mxu0 %v9034
    %9139 = vmatprep.subr.mxu0 %v9037
    %9140 = vmatpush1.msra.mxu0 %v9036
    %9141 = vmatprep.subr.mxu0 %v9039
    %9142 = vmatpush1.msra.mxu0 %v9038
    %9143 = vmatprep.subr.mxu0 %v9041
    %9144 = vmatpush1.msra.mxu0 %v9040
    %9145 = vmatprep.subr.mxu0 %v9043
    %9146 = vmatpush1.msra.mxu0 %v9042
    %9147 = vmatprep.subr.mxu0 %v9045
    %9148 = vmatpush1.msra.mxu0 %v9044
    %9149 = vmatprep.subr.mxu0 %v9047
    %9150 = vmatpush1.msra.mxu0 %v9046
    %9151 = vmatprep.subr.mxu0 %v9049
    %9152 = vmatpush1.msra.mxu0 %v9048
    %9153 = vmatprep.subr.mxu0 %v9051
    %9154 = vmatpush1.msra.mxu0 %v9050
    %9155 = vmatprep.subr.mxu0 %v9053
    %9156 = vmatpush1.msra.mxu0 %v9052
    %9157 = vmatprep.subr.mxu0 %v9055
    %9158 = vmatpush1.msra.mxu0 %v9054
    %9159 = vmatprep.subr.mxu0 %v9057
    %9160 = vmatpush1.msra.mxu0 %v9056
    %9161 = vmatprep.subr.mxu0 %v9059
    %9162 = vmatpush1.msra.mxu0 %v9058
    %9163 = vmatprep.subr.mxu0 0.0
    %9164 = vmatpush1.msra.mxu0 0.0
    %9165 = vmatprep.subr.mxu0 0.0
    %9166 = vmatpush1.msra.mxu0 0.0
    %9167 = vmatprep.subr.mxu0 0.0
    %9168 = vmatpush1.msra.mxu0 0.0
    %9169 = vmatprep.subr.mxu0 0.0
    %9170 = vmatpush1.msra.mxu0 0.0
    %9171 = vmatprep.subr.mxu0 0.0
    %9172 = vmatpush1.msra.mxu0 0.0
    %9173 = vmatprep.subr.mxu0 0.0
    %9174 = vmatpush1.msra.mxu0 0.0
    %9175 = vmatprep.subr.mxu0 0.0
    %9176 = vmatpush1.msra.mxu0 0.0
    %9177 = vmatprep.subr.mxu0 0.0
    %9178 = vmatpush1.msra.mxu0 0.0
    %9179 = vmatprep.subr.mxu0 0.0
    %9180 = vmatpush1.msra.mxu0 0.0
    %9181 = vmatprep.subr.mxu0 0.0
    %9182 = vmatpush1.msra.mxu0 0.0
    %9183 = vmatprep.subr.mxu0 0.0
    %9184 = vmatpush1.msra.mxu0 0.0
    %9185 = vmatprep.subr.mxu0 0.0
    %9186 = vmatpush1.msra.mxu0 0.0
    %9187 = vmatprep.subr.mxu0 0.0
    %9188 = vmatpush1.msra.mxu0 0.0
    %9189 = vmatprep.subr.mxu0 0.0
    %9190 = vmatpush1.msra.mxu0 0.0
    %9191 = vmatprep.subr.mxu0 0.0
    %9192 = vmatpush1.msra.mxu0 0.0
    %9193 = vmatprep.subr.mxu0 0.0
    %9194 = vmatpush1.msra.mxu0 0.0
    %9195 = vmatprep.mubr.f32.mxu0 0.0
    %9196 = vmatmul.mubr.f32.gmra.mrb[0].mxu0 %v9027
    %v9197 = vpop.f32.mrb[0].mxu0
    %v9198 = vadd.f32 0.0, %v9197
    %v9199 = vpop.f32.mrb[0].mxu0
    %v9200 = vadd.f32 0.0, %v9199
    %9201 = vdwg.mxu0
    %v9202 = vlaneseq
    %v9203 = vshrl.u32 %v9202, 7
    %v9204 = vsub.s32 0, %v9203
    %v9205 = vrot.slane %v9127, %v9204
    %v9206 = vlaneseq
    %v9207 = vshrl.u32 %v9206, 7
    %v9208 = vsub.s32 0, %v9207
    %v9209 = vrot.slane %v9129, %v9208
    %v9210 = vmul.f32 %v8816, %v9205
    %v9211 = vmul.f32 %v8817, %v9209
    %v9212 = vlaneseq
    %v9213 = vshrl.u32 %v9212, 7
    %v9214 = vsub.s32 0, %v9213
    %v9215 = vrot.slane %v9198, %v9214
    %v9216 = vlaneseq
    %v9217 = vshrl.u32 %v9216, 7
    %v9218 = vsub.s32 0, %v9217
    %v9219 = vrot.slane %v9200, %v9218
    %v9220 = vadd.f32 %v9210, %v9215
    %v9221 = vadd.f32 %v9211, %v9219
    %v9222 = vmax.f32 %v9220, 0.0
    %v9223 = vmax.f32 %v9221, 0.0
    %v9224 = vpack.c.bf16 %v9222, %v9222
    %v9225 = vpack.c.bf16 %v9223, %v9223
    %v9226 = vld [vmem:[#allocation24] sm:$0xf]
    %v9227 = vld [vmem:[#allocation24 + $0x10] sm:$0xf]
    %v9228 = vld [vmem:[#allocation24 + $0x20] sm:$0xf]
    %v9229 = vld [vmem:[#allocation24 + $0x30] sm:$0xf]
    %v9230 = vld [vmem:[#allocation24 + $0x40] sm:$0xf]
    %v9231 = vld [vmem:[#allocation24 + $0x50] sm:$0xf]
    %v9232 = vld [vmem:[#allocation24 + $0x60] sm:$0xf]
    %v9233 = vld [vmem:[#allocation24 + $0x70] sm:$0xf]
    %v9234 = vld [vmem:[#allocation24 + $0x80] sm:$0xf]
    %v9235 = vld [vmem:[#allocation24 + $0x90] sm:$0xf]
    %v9236 = vld [vmem:[#allocation24 + $0xa0] sm:$0xf]
    %v9237 = vld [vmem:[#allocation24 + $0xb0] sm:$0xf]
    %v9238 = vld [vmem:[#allocation24 + $0xc0] sm:$0xf]
    %v9239 = vld [vmem:[#allocation24 + $0xd0] sm:$0xf]
    %v9240 = vld [vmem:[#allocation24 + $0xe0] sm:$0xf]
    %v9241 = vld [vmem:[#allocation24 + $0xf0] sm:$0xf]
    %v9242 = vld [vmem:[#allocation24 + $0x100] sm:$0xf]
    %v9243 = vld [vmem:[#allocation24 + $0x110] sm:$0xf]
    %v9244 = vld [vmem:[#allocation24 + $0x120] sm:$0xf]
    %v9245 = vld [vmem:[#allocation24 + $0x130] sm:$0xf]
    %v9246 = vld [vmem:[#allocation24 + $0x140] sm:$0xf]
    %v9247 = vld [vmem:[#allocation24 + $0x150] sm:$0xf]
    %v9248 = vld [vmem:[#allocation24 + $0x160] sm:$0xf]
    %v9249 = vld [vmem:[#allocation24 + $0x170] sm:$0xf]
    %v9250 = vld [vmem:[#allocation24 + $0x180] sm:$0xf]
    %v9251 = vld [vmem:[#allocation24 + $0x190] sm:$0xf]
    %v9252 = vld [vmem:[#allocation24 + $0x1a0] sm:$0xf]
    %v9253 = vld [vmem:[#allocation24 + $0x1b0] sm:$0xf]
    %v9254 = vld [vmem:[#allocation24 + $0x1c0] sm:$0xf]
    %v9255 = vld [vmem:[#allocation24 + $0x1d0] sm:$0xf]
    %v9256 = vld [vmem:[#allocation24 + $0x1e0] sm:$0xf]
    %v9257 = vld [vmem:[#allocation24 + $0x1f0] sm:$0xf]
    %v9290 = vunpack.c.l.b16 %v9226
    %v9291 = vunpack.c.l.b16 %v9227
    %v9292 = vunpack.c.l.b16 %v9228
    %v9293 = vunpack.c.l.b16 %v9229
    %v9294 = vunpack.c.l.b16 %v9230
    %v9295 = vunpack.c.l.b16 %v9231
    %v9296 = vunpack.c.l.b16 %v9232
    %v9297 = vunpack.c.l.b16 %v9233
    %v9298 = vunpack.c.l.b16 %v9234
    %v9299 = vunpack.c.l.b16 %v9235
    %v9300 = vunpack.c.l.b16 %v9236
    %v9301 = vunpack.c.l.b16 %v9237
    %v9302 = vunpack.c.l.b16 %v9238
    %v9303 = vunpack.c.l.b16 %v9239
    %v9304 = vunpack.c.l.b16 %v9240
    %v9305 = vunpack.c.l.b16 %v9241
    %v9306 = vunpack.c.l.b16 %v9242
    %v9307 = vunpack.c.l.b16 %v9243
    %v9308 = vunpack.c.l.b16 %v9244
    %v9309 = vunpack.c.l.b16 %v9245
    %v9310 = vunpack.c.l.b16 %v9246
    %v9311 = vunpack.c.l.b16 %v9247
    %v9312 = vunpack.c.l.b16 %v9248
    %v9313 = vunpack.c.l.b16 %v9249
    %v9314 = vunpack.c.l.b16 %v9250
    %v9315 = vunpack.c.l.b16 %v9251
    %v9316 = vunpack.c.l.b16 %v9252
    %v9317 = vunpack.c.l.b16 %v9253
    %v9318 = vunpack.c.l.b16 %v9254
    %v9319 = vunpack.c.l.b16 %v9255
    %v9320 = vunpack.c.l.b16 %v9256
    %v9321 = vunpack.c.l.b16 %v9257
    %v9322 = vpack.c.b16 %v9291, %v9290
    %v9323 = vpack.c.b16 %v9293, %v9292
    %v9324 = vpack.c.b16 %v9295, %v9294
    %v9325 = vpack.c.b16 %v9297, %v9296
    %v9326 = vpack.c.b16 %v9299, %v9298
    %v9327 = vpack.c.b16 %v9301, %v9300
    %v9328 = vpack.c.b16 %v9303, %v9302
    %v9329 = vpack.c.b16 %v9305, %v9304
    %v9330 = vpack.c.b16 %v9307, %v9306
    %v9331 = vpack.c.b16 %v9309, %v9308
    %v9332 = vpack.c.b16 %v9311, %v9310
    %v9333 = vpack.c.b16 %v9313, %v9312
    %v9334 = vpack.c.b16 %v9315, %v9314
    %v9335 = vpack.c.b16 %v9317, %v9316
    %v9336 = vpack.c.b16 %v9319, %v9318
    %v9337 = vpack.c.b16 %v9321, %v9320
    %9354 = vmatprep.subr.bf16.mxu0 0
    %9355 = vmatpush1.bf16.msra.mxu0 %v9322
    %9356 = vmatprep.subr.bf16.mxu0 0
    %9357 = vmatpush1.bf16.msra.mxu0 %v9323
    %9358 = vmatprep.subr.bf16.mxu0 0
    %9359 = vmatpush1.bf16.msra.mxu0 %v9324
    %9360 = vmatprep.subr.bf16.mxu0 0
    %9361 = vmatpush1.bf16.msra.mxu0 %v9325
    %9362 = vmatprep.subr.bf16.mxu0 0
    %9363 = vmatpush1.bf16.msra.mxu0 %v9326
    %9364 = vmatprep.subr.bf16.mxu0 0
    %9365 = vmatpush1.bf16.msra.mxu0 %v9327
    %9366 = vmatprep.subr.bf16.mxu0 0
    %9367 = vmatpush1.bf16.msra.mxu0 %v9328
    %9368 = vmatprep.subr.bf16.mxu0 0
    %9369 = vmatpush1.bf16.msra.mxu0 %v9329
    %9370 = vmatprep.subr.bf16.mxu0 0
    %9371 = vmatpush1.bf16.msra.mxu0 %v9330
    %9372 = vmatprep.subr.bf16.mxu0 0
    %9373 = vmatpush1.bf16.msra.mxu0 %v9331
    %9374 = vmatprep.subr.bf16.mxu0 0
    %9375 = vmatpush1.bf16.msra.mxu0 %v9332
    %9376 = vmatprep.subr.bf16.mxu0 0
    %9377 = vmatpush1.bf16.msra.mxu0 %v9333
    %9378 = vmatprep.subr.bf16.mxu0 0
    %9379 = vmatpush1.bf16.msra.mxu0 %v9334
    %9380 = vmatprep.subr.bf16.mxu0 0
    %9381 = vmatpush1.bf16.msra.mxu0 %v9335
    %9382 = vmatprep.subr.bf16.mxu0 0
    %9383 = vmatpush1.bf16.msra.mxu0 %v9336
    %9384 = vmatprep.subr.bf16.mxu0 0
    %9385 = vmatpush1.bf16.msra.mxu0 %v9337
    %9386 = vmatprep.mubr.bf16.mxu0 %v9225
    %9387 = vmatmul.mubr.bf16.gmra.mrb[0].mxu0 %v9224
    %v9388 = vpop.f32.mrb[0].mxu0
    %v9389 = vadd.f32 0.0, %v9388
    %v9390 = vpop.f32.mrb[0].mxu0
    %v9391 = vpop.f32.mrb[0].mxu0
    %v9392 = vpop.f32.mrb[0].mxu0
    %9393 = vdwg.mxu0
    %v9394 = vld [vmem:[%s26] sm:$0x3]
    %v9395 = vld [vmem:[#allocation24 + $0x4] sm:$0xf]
    %v9396 = vld [vmem:[#allocation24 + $0x14] sm:$0xf]
    %v9397 = vld [vmem:[#allocation24 + $0x24] sm:$0xf]
    %v9398 = vld [vmem:[#allocation24 + $0x34] sm:$0xf]
    %v9399 = vld [vmem:[#allocation24 + $0x44] sm:$0xf]
    %v9400 = vld [vmem:[#allocation24 + $0x54] sm:$0xf]
    %v9401 = vld [vmem:[#allocation24 + $0x64] sm:$0xf]
    %v9402 = vld [vmem:[#allocation24 + $0x74] sm:$0xf]
    %v9403 = vld [vmem:[#allocation24 + $0x84] sm:$0xf]
    %v9404 = vld [vmem:[#allocation24 + $0x94] sm:$0xf]
    %v9405 = vld [vmem:[#allocation24 + $0xa4] sm:$0xf]
    %v9406 = vld [vmem:[#allocation24 + $0xb4] sm:$0xf]
    %v9407 = vld [vmem:[#allocation24 + $0xc4] sm:$0xf]
    %v9408 = vld [vmem:[#allocation24 + $0xd4] sm:$0xf]
    %v9409 = vld [vmem:[#allocation24 + $0xe4] sm:$0xf]
    %v9410 = vld [vmem:[#allocation24 + $0xf4] sm:$0xf]
    %v9411 = vld [vmem:[#allocation24 + $0x104] sm:$0xf]
    %v9412 = vld [vmem:[#allocation24 + $0x114] sm:$0xf]
    %v9413 = vld [vmem:[#allocation24 + $0x124] sm:$0xf]
    %v9414 = vld [vmem:[#allocation24 + $0x134] sm:$0xf]
    %v9415 = vld [vmem:[#allocation24 + $0x144] sm:$0xf]
    %v9416 = vld [vmem:[#allocation24 + $0x154] sm:$0xf]
    %v9417 = vld [vmem:[#allocation24 + $0x164] sm:$0xf]
    %v9418 = vld [vmem:[#allocation24 + $0x174] sm:$0xf]
    %v9419 = vld [vmem:[#allocation24 + $0x184] sm:$0xf]
    %v9420 = vld [vmem:[#allocation24 + $0x194] sm:$0xf]
    %v9421 = vld [vmem:[#allocation24 + $0x1a4] sm:$0xf]
    %v9422 = vld [vmem:[#allocation24 + $0x1b4] sm:$0xf]
    %v9423 = vld [vmem:[#allocation24 + $0x1c4] sm:$0xf]
    %v9424 = vld [vmem:[#allocation24 + $0x1d4] sm:$0xf]
    %v9425 = vld [vmem:[#allocation24 + $0x1e4] sm:$0xf]
    %v9426 = vld [vmem:[#allocation24 + $0x1f4] sm:$0xf]
    %v9459 = vunpack.c.l.b16 %v9395
    %v9460 = vunpack.c.l.b16 %v9396
    %v9461 = vunpack.c.l.b16 %v9397
    %v9462 = vunpack.c.l.b16 %v9398
    %v9463 = vunpack.c.l.b16 %v9399
    %v9464 = vunpack.c.l.b16 %v9400
    %v9465 = vunpack.c.l.b16 %v9401
    %v9466 = vunpack.c.l.b16 %v9402
    %v9467 = vunpack.c.l.b16 %v9403
    %v9468 = vunpack.c.l.b16 %v9404
    %v9469 = vunpack.c.l.b16 %v9405
    %v9470 = vunpack.c.l.b16 %v9406
    %v9471 = vunpack.c.l.b16 %v9407
    %v9472 = vunpack.c.l.b16 %v9408
    %v9473 = vunpack.c.l.b16 %v9409
    %v9474 = vunpack.c.l.b16 %v9410
    %v9475 = vunpack.c.l.b16 %v9411
    %v9476 = vunpack.c.l.b16 %v9412
    %v9477 = vunpack.c.l.b16 %v9413
    %v9478 = vunpack.c.l.b16 %v9414
    %v9479 = vunpack.c.l.b16 %v9415
    %v9480 = vunpack.c.l.b16 %v9416
    %v9481 = vunpack.c.l.b16 %v9417
    %v9482 = vunpack.c.l.b16 %v9418
    %v9483 = vunpack.c.l.b16 %v9419
    %v9484 = vunpack.c.l.b16 %v9420
    %v9485 = vunpack.c.l.b16 %v9421
    %v9486 = vunpack.c.l.b16 %v9422
    %v9487 = vunpack.c.l.b16 %v9423
    %v9488 = vunpack.c.l.b16 %v9424
    %v9489 = vunpack.c.l.b16 %v9425
    %v9490 = vunpack.c.l.b16 %v9426
    %v9491 = vpack.c.b16 %v9460, %v9459
    %v9492 = vpack.c.b16 %v9462, %v9461
    %v9493 = vpack.c.b16 %v9464, %v9463
    %v9494 = vpack.c.b16 %v9466, %v9465
    %v9495 = vpack.c.b16 %v9468, %v9467
    %v9496 = vpack.c.b16 %v9470, %v9469
    %v9497 = vpack.c.b16 %v9472, %v9471
    %v9498 = vpack.c.b16 %v9474, %v9473
    %v9499 = vpack.c.b16 %v9476, %v9475
    %v9500 = vpack.c.b16 %v9478, %v9477
    %v9501 = vpack.c.b16 %v9480, %v9479
    %v9502 = vpack.c.b16 %v9482, %v9481
    %v9503 = vpack.c.b16 %v9484, %v9483
    %v9504 = vpack.c.b16 %v9486, %v9485
    %v9505 = vpack.c.b16 %v9488, %v9487
    %v9506 = vpack.c.b16 %v9490, %v9489
    %9523 = vmatprep.subr.bf16.mxu0 0
    %9524 = vmatpush1.bf16.msra.mxu0 %v9491
    %9525 = vmatprep.subr.bf16.mxu0 0
    %9526 = vmatpush1.bf16.msra.mxu0 %v9492
    %9527 = vmatprep.subr.bf16.mxu0 0
    %9528 = vmatpush1.bf16.msra.mxu0 %v9493
    %9529 = vmatprep.subr.bf16.mxu0 0
    %9530 = vmatpush1.bf16.msra.mxu0 %v9494
    %9531 = vmatprep.subr.bf16.mxu0 0
    %9532 = vmatpush1.bf16.msra.mxu0 %v9495
    %9533 = vmatprep.subr.bf16.mxu0 0
    %9534 = vmatpush1.bf16.msra.mxu0 %v9496
    %9535 = vmatprep.subr.bf16.mxu0 0
    %9536 = vmatpush1.bf16.msra.mxu0 %v9497
    %9537 = vmatprep.subr.bf16.mxu0 0
    %9538 = vmatpush1.bf16.msra.mxu0 %v9498
    %9539 = vmatprep.subr.bf16.mxu0 0
    %9540 = vmatpush1.bf16.msra.mxu0 %v9499
    %9541 = vmatprep.subr.bf16.mxu0 0
    %9542 = vmatpush1.bf16.msra.mxu0 %v9500
    %9543 = vmatprep.subr.bf16.mxu0 0
    %9544 = vmatpush1.bf16.msra.mxu0 %v9501
    %9545 = vmatprep.subr.bf16.mxu0 0
    %9546 = vmatpush1.bf16.msra.mxu0 %v9502
    %9547 = vmatprep.subr.bf16.mxu0 0
    %9548 = vmatpush1.bf16.msra.mxu0 %v9503
    %9549 = vmatprep.subr.bf16.mxu0 0
    %9550 = vmatpush1.bf16.msra.mxu0 %v9504
    %9551 = vmatprep.subr.bf16.mxu0 0
    %9552 = vmatpush1.bf16.msra.mxu0 %v9505
    %9553 = vmatprep.subr.bf16.mxu0 0
    %9554 = vmatpush1.bf16.msra.mxu0 %v9506
    %9555 = vmatprep.mubr.bf16.mxu0 %v9225
    %9556 = vmatmul.mubr.bf16.gmra.mrb[0].mxu0 %v9224
    %v9557 = vpop.f32.mrb[0].mxu0
    %v9558 = vadd.f32 0.0, %v9557
    %v9559 = vpop.f32.mrb[0].mxu0
    %v9560 = vpop.f32.mrb[0].mxu0
    %v9561 = vpop.f32.mrb[0].mxu0
    %9562 = vdwg.mxu0
    %s9563 = scalar_lea.vmem %s26, 2
    %v9564 = vld [vmem:[%s9563] sm:$0x3]
    %vm9565 = vcmask 64512
    %v9567 = vsel %vm9565, %v9564, 0
    %9569 = vmatprep.subr.mxu0 0.0
    %9570 = vmatpush1.msra.mxu0 %v9558
    %9571 = vmatprep.subr.mxu0 0.0
    %9572 = vmatpush1.msra.mxu0 0.0
    %9573 = vmatprep.subr.mxu0 0.0
    %9574 = vmatpush1.msra.mxu0 0.0
    %9575 = vmatprep.subr.mxu0 0.0
    %9576 = vmatpush1.msra.mxu0 0.0
    %9577 = vmatprep.subr.mxu0 0.0
    %9578 = vmatpush1.msra.mxu0 0.0
    %9579 = vmatprep.subr.mxu0 0.0
    %9580 = vmatpush1.msra.mxu0 0.0
    %9581 = vmatprep.subr.mxu0 0.0
    %9582 = vmatpush1.msra.mxu0 0.0
    %9583 = vmatprep.subr.mxu0 0.0
    %9584 = vmatpush1.msra.mxu0 0.0
    %9585 = vmatprep.subr.mxu0 0.0
    %9586 = vmatpush1.msra.mxu0 0.0
    %9587 = vmatprep.subr.mxu0 0.0
    %9588 = vmatpush1.msra.mxu0 0.0
    %9589 = vmatprep.subr.mxu0 0.0
    %9590 = vmatpush1.msra.mxu0 0.0
    %9591 = vmatprep.subr.mxu0 0.0
    %9592 = vmatpush1.msra.mxu0 0.0
    %9593 = vmatprep.subr.mxu0 0.0
    %9594 = vmatpush1.msra.mxu0 0.0
    %9595 = vmatprep.subr.mxu0 0.0
    %9596 = vmatpush1.msra.mxu0 0.0
    %9597 = vmatprep.subr.mxu0 0.0
    %9598 = vmatpush1.msra.mxu0 0.0
    %9599 = vmatprep.subr.mxu0 0.0
    %9600 = vmatpush1.msra.mxu0 0.0
    %9601 = vmatprep.subr.mxu0 0.0
    %9602 = vmatpush1.msra.mxu0 0.0
    %9603 = vmatprep.subr.mxu0 0.0
    %9604 = vmatpush1.msra.mxu0 0.0
    %9605 = vmatprep.subr.mxu0 0.0
    %9606 = vmatpush1.msra.mxu0 0.0
    %9607 = vmatprep.subr.mxu0 0.0
    %9608 = vmatpush1.msra.mxu0 0.0
    %9609 = vmatprep.subr.mxu0 0.0
    %9610 = vmatpush1.msra.mxu0 0.0
    %9611 = vmatprep.subr.mxu0 0.0
    %9612 = vmatpush1.msra.mxu0 0.0
    %9613 = vmatprep.subr.mxu0 0.0
    %9614 = vmatpush1.msra.mxu0 0.0
    %9615 = vmatprep.subr.mxu0 0.0
    %9616 = vmatpush1.msra.mxu0 0.0
    %9617 = vmatprep.subr.mxu0 0.0
    %9618 = vmatpush1.msra.mxu0 0.0
    %9619 = vmatprep.subr.mxu0 0.0
    %9620 = vmatpush1.msra.mxu0 0.0
    %9621 = vmatprep.subr.mxu0 0.0
    %9622 = vmatpush1.msra.mxu0 0.0
    %9623 = vmatprep.subr.mxu0 0.0
    %9624 = vmatpush1.msra.mxu0 0.0
    %9625 = vmatprep.subr.mxu0 0.0
    %9626 = vmatpush1.msra.mxu0 0.0
    %9627 = vmatprep.subr.mxu0 0.0
    %9628 = vmatpush1.msra.mxu0 0.0
    %9629 = vmatprep.subr.mxu0 0.0
    %9630 = vmatpush1.msra.mxu0 0.0
    %9631 = vmatprep.subr.mxu0 0.0
    %9632 = vmatpush1.msra.mxu0 0.0
    %9633 = vmatprep.mubr.f32.mxu0 0.0
    %9634 = vmatmul.mubr.f32.gmra.mrb[0].mxu0 %v9567
    %v9635 = vpop.f32.mrb[0].mxu0
    %v9636 = vadd.f32 0.0, %v9635
    %v9637 = vpop.f32.mrb[0].mxu0
    %9638 = vdwg.mxu0
    %v9640 = vsel %vm9565, %v9394, 0
    %9642 = vmatprep.subr.mxu0 0.0
    %9643 = vmatpush1.msra.mxu0 %v9389
    %9644 = vmatprep.subr.mxu0 0.0
    %9645 = vmatpush1.msra.mxu0 0.0
    %9646 = vmatprep.subr.mxu0 0.0
    %9647 = vmatpush1.msra.mxu0 0.0
    %9648 = vmatprep.subr.mxu0 0.0
    %9649 = vmatpush1.msra.mxu0 0.0
    %9650 = vmatprep.subr.mxu0 0.0
    %9651 = vmatpush1.msra.mxu0 0.0
    %9652 = vmatprep.subr.mxu0 0.0
    %9653 = vmatpush1.msra.mxu0 0.0
    %9654 = vmatprep.subr.mxu0 0.0
    %9655 = vmatpush1.msra.mxu0 0.0
    %9656 = vmatprep.subr.mxu0 0.0
    %9657 = vmatpush1.msra.mxu0 0.0
    %9658 = vmatprep.subr.mxu0 0.0
    %9659 = vmatpush1.msra.mxu0 0.0
    %9660 = vmatprep.subr.mxu0 0.0
    %9661 = vmatpush1.msra.mxu0 0.0
    %9662 = vmatprep.subr.mxu0 0.0
    %9663 = vmatpush1.msra.mxu0 0.0
    %9664 = vmatprep.subr.mxu0 0.0
    %9665 = vmatpush1.msra.mxu0 0.0
    %9666 = vmatprep.subr.mxu0 0.0
    %9667 = vmatpush1.msra.mxu0 0.0
    %9668 = vmatprep.subr.mxu0 0.0
    %9669 = vmatpush1.msra.mxu0 0.0
    %9670 = vmatprep.subr.mxu0 0.0
    %9671 = vmatpush1.msra.mxu0 0.0
    %9672 = vmatprep.subr.mxu0 0.0
    %9673 = vmatpush1.msra.mxu0 0.0
    %9674 = vmatprep.subr.mxu0 0.0
    %9675 = vmatpush1.msra.mxu0 0.0
    %9676 = vmatprep.subr.mxu0 0.0
    %9677 = vmatpush1.msra.mxu0 0.0
    %9678 = vmatprep.subr.mxu0 0.0
    %9679 = vmatpush1.msra.mxu0 0.0
    %9680 = vmatprep.subr.mxu0 0.0
    %9681 = vmatpush1.msra.mxu0 0.0
    %9682 = vmatprep.subr.mxu0 0.0
    %9683 = vmatpush1.msra.mxu0 0.0
    %9684 = vmatprep.subr.mxu0 0.0
    %9685 = vmatpush1.msra.mxu0 0.0
    %9686 = vmatprep.subr.mxu0 0.0
    %9687 = vmatpush1.msra.mxu0 0.0
    %9688 = vmatprep.subr.mxu0 0.0
    %9689 = vmatpush1.msra.mxu0 0.0
    %9690 = vmatprep.subr.mxu0 0.0
    %9691 = vmatpush1.msra.mxu0 0.0
    %9692 = vmatprep.subr.mxu0 0.0
    %9693 = vmatpush1.msra.mxu0 0.0
    %9694 = vmatprep.subr.mxu0 0.0
    %9695 = vmatpush1.msra.mxu0 0.0
    %9696 = vmatprep.subr.mxu0 0.0
    %9697 = vmatpush1.msra.mxu0 0.0
    %9698 = vmatprep.subr.mxu0 0.0
    %9699 = vmatpush1.msra.mxu0 0.0
    %9700 = vmatprep.subr.mxu0 0.0
    %9701 = vmatpush1.msra.mxu0 0.0
    %9702 = vmatprep.subr.mxu0 0.0
    %9703 = vmatpush1.msra.mxu0 0.0
    %9704 = vmatprep.subr.mxu0 0.0
    %9705 = vmatpush1.msra.mxu0 0.0
    %9706 = vmatprep.mubr.f32.mxu0 0.0
    %9707 = vmatmul.mubr.f32.gmra.mrb[0].mxu0 %v9640
    %v9708 = vpop.f32.mrb[0].mxu0
    %v9709 = vadd.f32 %v9636, %v9708
    %v9710 = vpop.f32.mrb[0].mxu0
    %9711 = vdwg.mxu0
    %v9712 = vld [vmem:[#allocation24 + $0x8] sm:$0xf]
    %v9713 = vld [vmem:[#allocation24 + $0x18] sm:$0xf]
    %v9714 = vld [vmem:[#allocation24 + $0x28] sm:$0xf]
    %v9715 = vld [vmem:[#allocation24 + $0x38] sm:$0xf]
    %v9716 = vld [vmem:[#allocation24 + $0x48] sm:$0xf]
    %v9717 = vld [vmem:[#allocation24 + $0x58] sm:$0xf]
    %v9718 = vld [vmem:[#allocation24 + $0x68] sm:$0xf]
    %v9719 = vld [vmem:[#allocation24 + $0x78] sm:$0xf]
    %v9720 = vld [vmem:[#allocation24 + $0x88] sm:$0xf]
    %v9721 = vld [vmem:[#allocation24 + $0x98] sm:$0xf]
    %v9722 = vld [vmem:[#allocation24 + $0xa8] sm:$0xf]
    %v9723 = vld [vmem:[#allocation24 + $0xb8] sm:$0xf]
    %v9724 = vld [vmem:[#allocation24 + $0xc8] sm:$0xf]
    %v9725 = vld [vmem:[#allocation24 + $0xd8] sm:$0xf]
    %v9726 = vld [vmem:[#allocation24 + $0xe8] sm:$0xf]
    %v9727 = vld [vmem:[#allocation24 + $0xf8] sm:$0xf]
    %v9728 = vld [vmem:[#allocation24 + $0x108] sm:$0xf]
    %v9729 = vld [vmem:[#allocation24 + $0x118] sm:$0xf]
    %v9730 = vld [vmem:[#allocation24 + $0x128] sm:$0xf]
    %v9731 = vld [vmem:[#allocation24 + $0x138] sm:$0xf]
    %v9732 = vld [vmem:[#allocation24 + $0x148] sm:$0xf]
    %v9733 = vld [vmem:[#allocation24 + $0x158] sm:$0xf]
    %v9734 = vld [vmem:[#allocation24 + $0x168] sm:$0xf]
    %v9735 = vld [vmem:[#allocation24 + $0x178] sm:$0xf]
    %v9736 = vld [vmem:[#allocation24 + $0x188] sm:$0xf]
    %v9737 = vld [vmem:[#allocation24 + $0x198] sm:$0xf]
    %v9738 = vld [vmem:[#allocation24 + $0x1a8] sm:$0xf]
    %v9739 = vld [vmem:[#allocation24 + $0x1b8] sm:$0xf]
    %v9740 = vld [vmem:[#allocation24 + $0x1c8] sm:$0xf]
    %v9741 = vld [vmem:[#allocation24 + $0x1d8] sm:$0xf]
    %v9742 = vld [vmem:[#allocation24 + $0x1e8] sm:$0xf]
    %v9743 = vld [vmem:[#allocation24 + $0x1f8] sm:$0xf]
    %v9776 = vunpack.c.l.b16 %v9712
    %v9777 = vunpack.c.l.b16 %v9713
    %v9778 = vunpack.c.l.b16 %v9714
    %v9779 = vunpack.c.l.b16 %v9715
    %v9780 = vunpack.c.l.b16 %v9716
    %v9781 = vunpack.c.l.b16 %v9717
    %v9782 = vunpack.c.l.b16 %v9718
    %v9783 = vunpack.c.l.b16 %v9719
    %v9784 = vunpack.c.l.b16 %v9720
    %v9785 = vunpack.c.l.b16 %v9721
    %v9786 = vunpack.c.l.b16 %v9722
    %v9787 = vunpack.c.l.b16 %v9723
    %v9788 = vunpack.c.l.b16 %v9724
    %v9789 = vunpack.c.l.b16 %v9725
    %v9790 = vunpack.c.l.b16 %v9726
    %v9791 = vunpack.c.l.b16 %v9727
    %v9792 = vunpack.c.l.b16 %v9728
    %v9793 = vunpack.c.l.b16 %v9729
    %v9794 = vunpack.c.l.b16 %v9730
    %v9795 = vunpack.c.l.b16 %v9731
    %v9796 = vunpack.c.l.b16 %v9732
    %v9797 = vunpack.c.l.b16 %v9733
    %v9798 = vunpack.c.l.b16 %v9734
    %v9799 = vunpack.c.l.b16 %v9735
    %v9800 = vunpack.c.l.b16 %v9736
    %v9801 = vunpack.c.l.b16 %v9737
    %v9802 = vunpack.c.l.b16 %v9738
    %v9803 = vunpack.c.l.b16 %v9739
    %v9804 = vunpack.c.l.b16 %v9740
    %v9805 = vunpack.c.l.b16 %v9741
    %v9806 = vunpack.c.l.b16 %v9742
    %v9807 = vunpack.c.l.b16 %v9743
    %v9808 = vpack.c.b16 %v9777, %v9776
    %v9809 = vpack.c.b16 %v9779, %v9778
    %v9810 = vpack.c.b16 %v9781, %v9780
    %v9811 = vpack.c.b16 %v9783, %v9782
    %v9812 = vpack.c.b16 %v9785, %v9784
    %v9813 = vpack.c.b16 %v9787, %v9786
    %v9814 = vpack.c.b16 %v9789, %v9788
    %v9815 = vpack.c.b16 %v9791, %v9790
    %v9816 = vpack.c.b16 %v9793, %v9792
    %v9817 = vpack.c.b16 %v9795, %v9794
    %v9818 = vpack.c.b16 %v9797, %v9796
    %v9819 = vpack.c.b16 %v9799, %v9798
    %v9820 = vpack.c.b16 %v9801, %v9800
    %v9821 = vpack.c.b16 %v9803, %v9802
    %v9822 = vpack.c.b16 %v9805, %v9804
    %v9823 = vpack.c.b16 %v9807, %v9806
    %9840 = vmatprep.subr.bf16.mxu0 0
    %9841 = vmatpush1.bf16.msra.mxu0 %v9808
    %9842 = vmatprep.subr.bf16.mxu0 0
    %9843 = vmatpush1.bf16.msra.mxu0 %v9809
    %9844 = vmatprep.subr.bf16.mxu0 0
    %9845 = vmatpush1.bf16.msra.mxu0 %v9810
    %9846 = vmatprep.subr.bf16.mxu0 0
    %9847 = vmatpush1.bf16.msra.mxu0 %v9811
    %9848 = vmatprep.subr.bf16.mxu0 0
    %9849 = vmatpush1.bf16.msra.mxu0 %v9812
    %9850 = vmatprep.subr.bf16.mxu0 0
    %9851 = vmatpush1.bf16.msra.mxu0 %v9813
    %9852 = vmatprep.subr.bf16.mxu0 0
    %9853 = vmatpush1.bf16.msra.mxu0 %v9814
    %9854 = vmatprep.subr.bf16.mxu0 0
    %9855 = vmatpush1.bf16.msra.mxu0 %v9815
    %9856 = vmatprep.subr.bf16.mxu0 0
    %9857 = vmatpush1.bf16.msra.mxu0 %v9816
    %9858 = vmatprep.subr.bf16.mxu0 0
    %9859 = vmatpush1.bf16.msra.mxu0 %v9817
    %9860 = vmatprep.subr.bf16.mxu0 0
    %9861 = vmatpush1.bf16.msra.mxu0 %v9818
    %9862 = vmatprep.subr.bf16.mxu0 0
    %9863 = vmatpush1.bf16.msra.mxu0 %v9819
    %9864 = vmatprep.subr.bf16.mxu0 0
    %9865 = vmatpush1.bf16.msra.mxu0 %v9820
    %9866 = vmatprep.subr.bf16.mxu0 0
    %9867 = vmatpush1.bf16.msra.mxu0 %v9821
    %9868 = vmatprep.subr.bf16.mxu0 0
    %9869 = vmatpush1.bf16.msra.mxu0 %v9822
    %9870 = vmatprep.subr.bf16.mxu0 0
    %9871 = vmatpush1.bf16.msra.mxu0 %v9823
    %9872 = vmatprep.mubr.bf16.mxu0 %v9225
    %9873 = vmatmul.mubr.bf16.gmra.mrb[0].mxu0 %v9224
    %v9874 = vpop.f32.mrb[0].mxu0
    %v9875 = vadd.f32 0.0, %v9874
    %v9876 = vpop.f32.mrb[0].mxu0
    %v9877 = vpop.f32.mrb[0].mxu0
    %v9878 = vpop.f32.mrb[0].mxu0
    %9879 = vdwg.mxu0
    %s9880 = scalar_lea.vmem %s26, 4
    %v9881 = vld [vmem:[%s9880] sm:$0x3]
    %v9883 = vsel %vm9565, %v9881, 0
    %9885 = vmatprep.subr.mxu0 0.0
    %9886 = vmatpush1.msra.mxu0 %v9875
    %9887 = vmatprep.subr.mxu0 0.0
    %9888 = vmatpush1.msra.mxu0 0.0
    %9889 = vmatprep.subr.mxu0 0.0
    %9890 = vmatpush1.msra.mxu0 0.0
    %9891 = vmatprep.subr.mxu0 0.0
    %9892 = vmatpush1.msra.mxu0 0.0
    %9893 = vmatprep.subr.mxu0 0.0
    %9894 = vmatpush1.msra.mxu0 0.0
    %9895 = vmatprep.subr.mxu0 0.0
    %9896 = vmatpush1.msra.mxu0 0.0
    %9897 = vmatprep.subr.mxu0 0.0
    %9898 = vmatpush1.msra.mxu0 0.0
    %9899 = vmatprep.subr.mxu0 0.0
    %9900 = vmatpush1.msra.mxu0 0.0
    %9901 = vmatprep.subr.mxu0 0.0
    %9902 = vmatpush1.msra.mxu0 0.0
    %9903 = vmatprep.subr.mxu0 0.0
    %9904 = vmatpush1.msra.mxu0 0.0
    %9905 = vmatprep.subr.mxu0 0.0
    %9906 = vmatpush1.msra.mxu0 0.0
    %9907 = vmatprep.subr.mxu0 0.0
    %9908 = vmatpush1.msra.mxu0 0.0
    %9909 = vmatprep.subr.mxu0 0.0
    %9910 = vmatpush1.msra.mxu0 0.0
    %9911 = vmatprep.subr.mxu0 0.0
    %9912 = vmatpush1.msra.mxu0 0.0
    %9913 = vmatprep.subr.mxu0 0.0
    %9914 = vmatpush1.msra.mxu0 0.0
    %9915 = vmatprep.subr.mxu0 0.0
    %9916 = vmatpush1.msra.mxu0 0.0
    %9917 = vmatprep.subr.mxu0 0.0
    %9918 = vmatpush1.msra.mxu0 0.0
    %9919 = vmatprep.subr.mxu0 0.0
    %9920 = vmatpush1.msra.mxu0 0.0
    %9921 = vmatprep.subr.mxu0 0.0
    %9922 = vmatpush1.msra.mxu0 0.0
    %9923 = vmatprep.subr.mxu0 0.0
    %9924 = vmatpush1.msra.mxu0 0.0
    %9925 = vmatprep.subr.mxu0 0.0
    %9926 = vmatpush1.msra.mxu0 0.0
    %9927 = vmatprep.subr.mxu0 0.0
    %9928 = vmatpush1.msra.mxu0 0.0
    %9929 = vmatprep.subr.mxu0 0.0
    %9930 = vmatpush1.msra.mxu0 0.0
    %9931 = vmatprep.subr.mxu0 0.0
    %9932 = vmatpush1.msra.mxu0 0.0
    %9933 = vmatprep.subr.mxu0 0.0
    %9934 = vmatpush1.msra.mxu0 0.0
    %9935 = vmatprep.subr.mxu0 0.0
    %9936 = vmatpush1.msra.mxu0 0.0
    %9937 = vmatprep.subr.mxu0 0.0
    %9938 = vmatpush1.msra.mxu0 0.0
    %9939 = vmatprep.subr.mxu0 0.0
    %9940 = vmatpush1.msra.mxu0 0.0
    %9941 = vmatprep.subr.mxu0 0.0
    %9942 = vmatpush1.msra.mxu0 0.0
    %9943 = vmatprep.subr.mxu0 0.0
    %9944 = vmatpush1.msra.mxu0 0.0
    %9945 = vmatprep.subr.mxu0 0.0
    %9946 = vmatpush1.msra.mxu0 0.0
    %9947 = vmatprep.subr.mxu0 0.0
    %9948 = vmatpush1.msra.mxu0 0.0
    %9949 = vmatprep.mubr.f32.mxu0 0.0
    %9950 = vmatmul.mubr.f32.gmra.mrb[0].mxu0 %v9883
    %v9951 = vpop.f32.mrb[0].mxu0
    %v9952 = vadd.f32 0.0, %v9951
    %v9953 = vpop.f32.mrb[0].mxu0
    %9954 = vdwg.mxu0
    %v9955 = vadd.f32 %v9709, %v9952
    %v9956 = vld [vmem:[#allocation24 + $0xc] sm:$0xf]
    %v9957 = vld [vmem:[#allocation24 + $0x1c] sm:$0xf]
    %v9958 = vld [vmem:[#allocation24 + $0x2c] sm:$0xf]
    %v9959 = vld [vmem:[#allocation24 + $0x3c] sm:$0xf]
    %v9960 = vld [vmem:[#allocation24 + $0x4c] sm:$0xf]
    %v9961 = vld [vmem:[#allocation24 + $0x5c] sm:$0xf]
    %v9962 = vld [vmem:[#allocation24 + $0x6c] sm:$0xf]
    %v9963 = vld [vmem:[#allocation24 + $0x7c] sm:$0xf]
    %v9964 = vld [vmem:[#allocation24 + $0x8c] sm:$0xf]
    %v9965 = vld [vmem:[#allocation24 + $0x9c] sm:$0xf]
    %v9966 = vld [vmem:[#allocation24 + $0xac] sm:$0xf]
    %v9967 = vld [vmem:[#allocation24 + $0xbc] sm:$0xf]
    %v9968 = vld [vmem:[#allocation24 + $0xcc] sm:$0xf]
    %v9969 = vld [vmem:[#allocation24 + $0xdc] sm:$0xf]
    %v9970 = vld [vmem:[#allocation24 + $0xec] sm:$0xf]
    %v9971 = vld [vmem:[#allocation24 + $0xfc] sm:$0xf]
    %v9972 = vld [vmem:[#allocation24 + $0x10c] sm:$0xf]
    %v9973 = vld [vmem:[#allocation24 + $0x11c] sm:$0xf]
    %v9974 = vld [vmem:[#allocation24 + $0x12c] sm:$0xf]
    %v9975 = vld [vmem:[#allocation24 + $0x13c] sm:$0xf]
    %v9976 = vld [vmem:[#allocation24 + $0x14c] sm:$0xf]
    %v9977 = vld [vmem:[#allocation24 + $0x15c] sm:$0xf]
    %v9978 = vld [vmem:[#allocation24 + $0x16c] sm:$0xf]
    %v9979 = vld [vmem:[#allocation24 + $0x17c] sm:$0xf]
    %v9980 = vld [vmem:[#allocation24 + $0x18c] sm:$0xf]
    %v9981 = vld [vmem:[#allocation24 + $0x19c] sm:$0xf]
    %v9982 = vld [vmem:[#allocation24 + $0x1ac] sm:$0xf]
    %v9983 = vld [vmem:[#allocation24 + $0x1bc] sm:$0xf]
    %v9984 = vld [vmem:[#allocation24 + $0x1cc] sm:$0xf]
    %v9985 = vld [vmem:[#allocation24 + $0x1dc] sm:$0xf]
    %v9986 = vld [vmem:[#allocation24 + $0x1ec] sm:$0xf]
    %v9987 = vld [vmem:[#allocation24 + $0x1fc] sm:$0xf]
    %v10020 = vunpack.c.l.b16 %v9956
    %v10021 = vunpack.c.l.b16 %v9957
    %v10022 = vunpack.c.l.b16 %v9958
    %v10023 = vunpack.c.l.b16 %v9959
    %v10024 = vunpack.c.l.b16 %v9960
    %v10025 = vunpack.c.l.b16 %v9961
    %v10026 = vunpack.c.l.b16 %v9962
    %v10027 = vunpack.c.l.b16 %v9963
    %v10028 = vunpack.c.l.b16 %v9964
    %v10029 = vunpack.c.l.b16 %v9965
    %v10030 = vunpack.c.l.b16 %v9966
    %v10031 = vunpack.c.l.b16 %v9967
    %v10032 = vunpack.c.l.b16 %v9968
    %v10033 = vunpack.c.l.b16 %v9969
    %v10034 = vunpack.c.l.b16 %v9970
    %v10035 = vunpack.c.l.b16 %v9971
    %v10036 = vunpack.c.l.b16 %v9972
    %v10037 = vunpack.c.l.b16 %v9973
    %v10038 = vunpack.c.l.b16 %v9974
    %v10039 = vunpack.c.l.b16 %v9975
    %v10040 = vunpack.c.l.b16 %v9976
    %v10041 = vunpack.c.l.b16 %v9977
    %v10042 = vunpack.c.l.b16 %v9978
    %v10043 = vunpack.c.l.b16 %v9979
    %v10044 = vunpack.c.l.b16 %v9980
    %v10045 = vunpack.c.l.b16 %v9981
    %v10046 = vunpack.c.l.b16 %v9982
    %v10047 = vunpack.c.l.b16 %v9983
    %v10048 = vunpack.c.l.b16 %v9984
    %v10049 = vunpack.c.l.b16 %v9985
    %v10050 = vunpack.c.l.b16 %v9986
    %v10051 = vunpack.c.l.b16 %v9987
    %v10052 = vpack.c.b16 %v10021, %v10020
    %v10053 = vpack.c.b16 %v10023, %v10022
    %v10054 = vpack.c.b16 %v10025, %v10024
    %v10055 = vpack.c.b16 %v10027, %v10026
    %v10056 = vpack.c.b16 %v10029, %v10028
    %v10057 = vpack.c.b16 %v10031, %v10030
    %v10058 = vpack.c.b16 %v10033, %v10032
    %v10059 = vpack.c.b16 %v10035, %v10034
    %v10060 = vpack.c.b16 %v10037, %v10036
    %v10061 = vpack.c.b16 %v10039, %v10038
    %v10062 = vpack.c.b16 %v10041, %v10040
    %v10063 = vpack.c.b16 %v10043, %v10042
    %v10064 = vpack.c.b16 %v10045, %v10044
    %v10065 = vpack.c.b16 %v10047, %v10046
    %v10066 = vpack.c.b16 %v10049, %v10048
    %v10067 = vpack.c.b16 %v10051, %v10050
    %10084 = vmatprep.subr.bf16.mxu0 0
    %10085 = vmatpush1.bf16.msra.mxu0 %v10052
    %10086 = vmatprep.subr.bf16.mxu0 0
    %10087 = vmatpush1.bf16.msra.mxu0 %v10053
    %10088 = vmatprep.subr.bf16.mxu0 0
    %10089 = vmatpush1.bf16.msra.mxu0 %v10054
    %10090 = vmatprep.subr.bf16.mxu0 0
    %10091 = vmatpush1.bf16.msra.mxu0 %v10055
    %10092 = vmatprep.subr.bf16.mxu0 0
    %10093 = vmatpush1.bf16.msra.mxu0 %v10056
    %10094 = vmatprep.subr.bf16.mxu0 0
    %10095 = vmatpush1.bf16.msra.mxu0 %v10057
    %10096 = vmatprep.subr.bf16.mxu0 0
    %10097 = vmatpush1.bf16.msra.mxu0 %v10058
    %10098 = vmatprep.subr.bf16.mxu0 0
    %10099 = vmatpush1.bf16.msra.mxu0 %v10059
    %10100 = vmatprep.subr.bf16.mxu0 0
    %10101 = vmatpush1.bf16.msra.mxu0 %v10060
    %10102 = vmatprep.subr.bf16.mxu0 0
    %10103 = vmatpush1.bf16.msra.mxu0 %v10061
    %10104 = vmatprep.subr.bf16.mxu0 0
    %10105 = vmatpush1.bf16.msra.mxu0 %v10062
    %10106 = vmatprep.subr.bf16.mxu0 0
    %10107 = vmatpush1.bf16.msra.mxu0 %v10063
    %10108 = vmatprep.subr.bf16.mxu0 0
    %10109 = vmatpush1.bf16.msra.mxu0 %v10064
    %10110 = vmatprep.subr.bf16.mxu0 0
    %10111 = vmatpush1.bf16.msra.mxu0 %v10065
    %10112 = vmatprep.subr.bf16.mxu0 0
    %10113 = vmatpush1.bf16.msra.mxu0 %v10066
    %10114 = vmatprep.subr.bf16.mxu0 0
    %10115 = vmatpush1.bf16.msra.mxu0 %v10067
    %10116 = vmatprep.mubr.bf16.mxu0 %v9225
    %10117 = vmatmul.mubr.bf16.gmra.mrb[0].mxu0 %v9224
    %v10118 = vpop.f32.mrb[0].mxu0
    %v10119 = vadd.f32 0.0, %v10118
    %v10120 = vpop.f32.mrb[0].mxu0
    %v10121 = vpop.f32.mrb[0].mxu0
    %v10122 = vpop.f32.mrb[0].mxu0
    %10123 = vdwg.mxu0
    %s10124 = scalar_lea.vmem %s26, 6
    %v10125 = vld [vmem:[%s10124] sm:$0x3]
    %v10127 = vsel %vm9565, %v10125, 0
    %10129 = vmatprep.subr.mxu0 0.0
    %10130 = vmatpush1.msra.mxu0 %v10119
    %10131 = vmatprep.subr.mxu0 0.0
    %10132 = vmatpush1.msra.mxu0 0.0
    %10133 = vmatprep.subr.mxu0 0.0
    %10134 = vmatpush1.msra.mxu0 0.0
    %10135 = vmatprep.subr.mxu0 0.0
    %10136 = vmatpush1.msra.mxu0 0.0
    %10137 = vmatprep.subr.mxu0 0.0
    %10138 = vmatpush1.msra.mxu0 0.0
    %10139 = vmatprep.subr.mxu0 0.0
    %10140 = vmatpush1.msra.mxu0 0.0
    %10141 = vmatprep.subr.mxu0 0.0
    %10142 = vmatpush1.msra.mxu0 0.0
    %10143 = vmatprep.subr.mxu0 0.0
    %10144 = vmatpush1.msra.mxu0 0.0
    %10145 = vmatprep.subr.mxu0 0.0
    %10146 = vmatpush1.msra.mxu0 0.0
    %10147 = vmatprep.subr.mxu0 0.0
    %10148 = vmatpush1.msra.mxu0 0.0
    %10149 = vmatprep.subr.mxu0 0.0
    %10150 = vmatpush1.msra.mxu0 0.0
    %10151 = vmatprep.subr.mxu0 0.0
    %10152 = vmatpush1.msra.mxu0 0.0
    %10153 = vmatprep.subr.mxu0 0.0
    %10154 = vmatpush1.msra.mxu0 0.0
    %10155 = vmatprep.subr.mxu0 0.0
    %10156 = vmatpush1.msra.mxu0 0.0
    %10157 = vmatprep.subr.mxu0 0.0
    %10158 = vmatpush1.msra.mxu0 0.0
    %10159 = vmatprep.subr.mxu0 0.0
    %10160 = vmatpush1.msra.mxu0 0.0
    %10161 = vmatprep.subr.mxu0 0.0
    %10162 = vmatpush1.msra.mxu0 0.0
    %10163 = vmatprep.subr.mxu0 0.0
    %10164 = vmatpush1.msra.mxu0 0.0
    %10165 = vmatprep.subr.mxu0 0.0
    %10166 = vmatpush1.msra.mxu0 0.0
    %10167 = vmatprep.subr.mxu0 0.0
    %10168 = vmatpush1.msra.mxu0 0.0
    %10169 = vmatprep.subr.mxu0 0.0
    %10170 = vmatpush1.msra.mxu0 0.0
    %10171 = vmatprep.subr.mxu0 0.0
    %10172 = vmatpush1.msra.mxu0 0.0
    %10173 = vmatprep.subr.mxu0 0.0
    %10174 = vmatpush1.msra.mxu0 0.0
    %10175 = vmatprep.subr.mxu0 0.0
    %10176 = vmatpush1.msra.mxu0 0.0
    %10177 = vmatprep.subr.mxu0 0.0
    %10178 = vmatpush1.msra.mxu0 0.0
    %10179 = vmatprep.subr.mxu0 0.0
    %10180 = vmatpush1.msra.mxu0 0.0
    %10181 = vmatprep.subr.mxu0 0.0
    %10182 = vmatpush1.msra.mxu0 0.0
    %10183 = vmatprep.subr.mxu0 0.0
    %10184 = vmatpush1.msra.mxu0 0.0
    %10185 = vmatprep.subr.mxu0 0.0
    %10186 = vmatpush1.msra.mxu0 0.0
    %10187 = vmatprep.subr.mxu0 0.0
    %10188 = vmatpush1.msra.mxu0 0.0
    %10189 = vmatprep.subr.mxu0 0.0
    %10190 = vmatpush1.msra.mxu0 0.0
    %10191 = vmatprep.subr.mxu0 0.0
    %10192 = vmatpush1.msra.mxu0 0.0
    %10193 = vmatprep.mubr.f32.mxu0 0.0
    %10194 = vmatmul.mubr.f32.gmra.mrb[0].mxu0 %v10127
    %v10195 = vpop.f32.mrb[0].mxu0
    %v10196 = vadd.f32 0.0, %v10195
    %v10197 = vpop.f32.mrb[0].mxu0
    %10198 = vdwg.mxu0
    %v10199 = vadd.f32 %v9955, %v10196
    %v10200 = vld [vmem:[%s27] sm:$0x1]
    %v10202 = vlaneseq
    %v10203 = vshrl.u32 %v10202, 7
    %v10204 = vsub.s32 0, %v10203
    %v10205 = vrot.slane %v10200, %v10204
    %v10207 = vadd.f32 %v10199, %v10205
    %v10208 = vlaneseq
    %v10209 = vand.u32 %v10208, 127
    %vm10210 = vcmp.ge.s32.totalorder %v10209, 32
    %v10211 = vmax.f32 %v10207, 0.0
    %vm10212 = vcmp.ne.f32.partialorder %v10207, %v10207
    %v10213 = vadd.f32 %v10207, 0.0
    %v10214 = vand.u32 2147483647, %v10207
    %v10215 = vsub.f32 0.0, %v10214
    %v10216 = vmul.f32 %v10215, 1.442695
    %v10217 = vpow.pop %v10216
    %v10218 = vadd.f32 %v10217, 1.0
    %v10219 = vlog2.pop %v10218
    %v10220 = vmul.f32 %v10219, 0.6931472
    %v10221 = vmul.f32 -0.5, %v10217
    %v10222 = vadd.f32 %v10221, 1.0
    %v10223 = vmul.f32 %v10222, %v10217
    %v10224 = vand.u32 2147483647, %v10217
    %vm10225 = vcmp.lt.f32.partialorder %v10224, 0.0004427343
    %v10226 = vsel %vm10225, %v10223, %v10220
    %v10227 = vadd.f32 %v10211, %v10226
    %v10228 = vsel %vm10212, %v10213, %v10227
    %v10229 = vadd.f32 %v10228, 1e-06
    %v10230 = vsel %vm10210, %v10229, %v10207
    %10231 = vst [vmem:[%s28] sm:$0x3] %v10230
    // Predicated region
    $region174: #{encoder_forward.1} parent=1 // pred_check
      _
    $region175: #{encoder_forward.1} parent=1 // pred_check_branch
      %10233 = sbr.rel (0) target = $region177
    $region176: #{encoder_forward.1} parent=1 // pred_region
      _
    $region177: #{encoder_forward.1} parent=1 // pred_fallthru
      _
    // Predicated region
    $region178: #{encoder_forward.1} parent=1 // pred_check
      _
    $region179: #{encoder_forward.1} parent=1 // pred_check_branch
      %10235 = sbr.rel (0) target = $region181
    $region180: #{encoder_forward.1} parent=1 // pred_region
      _
    $region181: #{encoder_forward.1} parent=1 // pred_fallthru
      _
    %10236 = vsyncpa [#allocation3], 1
    %10237 = vsyncpa [#allocation5], 1
    %10238 = vsyncpa [#allocation8], 1
    %10239 = vsyncpa [#allocation11], 1
    %10240 = vsyncpa [#allocation14], 1
    %10241 = vsyncpa [#allocation17], 1
    %10242 = vsyncpa [#allocation20], 1
    %10243 = vsyncpa [#allocation23], 1

</llo_original>
